<compile_context>
chip_gen: v6e
topology: v6e:2x2x1
jax: 0.10.0
libtpu: 0.0.40
codegen_flags: <defaults>
</compile_context>

<pallas_src>
import functools

import jax
import jax.numpy as jnp
from jax.experimental import pallas as pl
from jax.experimental.pallas import tpu as pltpu

EPS = 1e-5


def _round_up(x, m):
    return (x + m - 1) // m * m


def _maybe_single_buffered(block_shape, index_map, single):
    """Grid-invariant operands: request a single pipeline buffer (saves VMEM).

    Falls back to the default (double-buffered) spec if the installed Pallas
    does not accept the pipeline_mode kwarg.
    """
    if single:
        try:
            return pl.BlockSpec(block_shape, index_map,
                                pipeline_mode=pl.Buffered(1))
        except (TypeError, AttributeError):
            pass
    return pl.BlockSpec(block_shape, index_map)


# ---------------------------------------------------------------------------
# Pallas kernel: fused  conv3x3 (as 9 slab matmuls) * scale + shift
#                       [+ identity residual | + fused 1x1 projection]  [ReLU]
# ---------------------------------------------------------------------------
def _conv3x3_kernel(*refs, taps, mp, relu, skip_mode):
    """One batch sample x one output-channel tile.

    x_ref holds the spatially padded, stride-phase-decomposed, row-pitched
    activation; every 3x3 tap is a contiguous (mp, Cin_p) row slab, so the
    conv is 9 dense bf16 matmuls accumulated in fp32 VMEM scratch (im2col is
    fused in -- no patch tensor in HBM).
    """
    if skip_mode == "identity":
        x_ref, w_ref, scale_ref, shift_ref, res_ref, o_ref, acc_ref = refs
    elif skip_mode == "project":
        x_ref, w_ref, scale_ref, shift_ref, px_ref, pw_ref, o_ref, acc_ref = refs
    else:
        x_ref, w_ref, scale_ref, shift_ref, o_ref, acc_ref = refs

    # 3x3 conv as 9 shifted matmuls (bf16 MXU, fp32 accumulation).
    for t, (phase, off) in enumerate(taps):
        xs = x_ref[0, phase, off:off + mp, :]                  # (mp, Cin_p) bf16
        part = jnp.dot(xs, w_ref[t], preferred_element_type=jnp.float32)
        if t == 0:
            acc_ref[...] = part
        else:
            acc_ref[...] += part

    # Fused epilogue: folded BatchNorm + conv bias, skip connection, ReLU.
    y = acc_ref[...] * scale_ref[...] + shift_ref[...]
    if skip_mode == "identity":
        y = y + res_ref[0]                                     # fp32 residual add
    elif skip_mode == "project":
        y = y + jnp.dot(px_ref[0], pw_ref[...],                # fused 1x1 projection
                        preferred_element_type=jnp.float32)
    if relu:
        y = jnp.maximum(y, 0.0)
    o_ref[0] = y.astype(o_ref.dtype)


# ---------------------------------------------------------------------------
# Wrapper-side lowering: spatial pad, stride-phase decomposition, row pitching
# (pure data rearrangement, ~1x the activation size; no 9x expansion)
# ---------------------------------------------------------------------------
def _lower_conv_input(x_nhwc, stride):
    n, h, w, c = x_nhwc.shape
    s = stride
    h_out = (h - 1) // s + 1
    w_out = (w - 1) // s + 1

    xp = jnp.pad(x_nhwc, ((0, 0), (1, 1), (1, 1), (0, 0)))     # conv padding = 1
    hp, wp = h + 2, w + 2
    hph, wph = -(-hp // s), -(-wp // s)
    xp = jnp.pad(xp, ((0, 0), (0, hph * s - hp), (0, wph * s - wp), (0, 0)))

    # phase (rh, rw)[i, j] = xp[i*s + rh, j*s + rw]
    x6 = xp.reshape(n, hph, s, wph, s, c).transpose(0, 2, 4, 1, 3, 5)
    xf = x6.reshape(n, s * s, hph * wph, c)

    mp = h_out * wph                       # pitched M (wph - w_out junk cols / row)
    max_off = (2 // s) * wph + (2 // s)
    lp = _round_up(max(max_off + mp, hph * wph), 16)
    xf = jnp.pad(xf, ((0, 0), (0, 0), (0, lp - hph * wph), (0, 0)))

    # Tap (dy, dx) -> (phase index, flat row offset); every tap is a contiguous slab.
    taps = tuple(((dy % s) * s + (dx % s), (dy // s) * wph + (dx // s))
                 for dy in range(3) for dx in range(3))
    return xf, taps, h_out, w_out, wph, mp


# ---------------------------------------------------------------------------
# Fused conv3x3 + scale/shift (+ skip) + ReLU
# ---------------------------------------------------------------------------
def fused_conv3x3_bn_act(x_nhwc, w_oihw, scale, shift, *, stride=1, relu=True,
                         identity_res=None, proj=None, out_dtype=jnp.float32):
    """y = act( conv3x3(x; stride, pad=1) * scale + shift [+ skip] )

    identity_res : NHWC tensor added in fp32 (stride must be 1).
    proj         : (x_in_nhwc_strided, w1x1_oihw); its bias must already be
                   folded into `shift`.
    """
    n, h, w, cin = x_nhwc.shape
    cout = w_oihw.shape[0]
    cin_p, cout_p = _round_up(cin, 128), _round_up(cout, 128)

    # bf16 MXU inputs; channels padded to lane-dense multiples of 128.
    xcp = jnp.pad(x_nhwc, ((0, 0), (0, 0), (0, 0), (0, cin_p - cin)))
    xcp = xcp.astype(jnp.bfloat16)
    xf, taps, h_out, w_out, wph, mp = _lower_conv_input(xcp, stride)
    s2 = stride * stride
    lp = xf.shape[2]

    wm = jnp.transpose(w_oihw, (2, 3, 1, 0)).reshape(9, cin, cout)
    wm = jnp.pad(wm, ((0, 0), (0, cin_p - cin), (0, cout_p - cout)))
    wm = wm.astype(jnp.bfloat16)
    scale_p = jnp.pad(scale.astype(jnp.float32), (0, cout_p - cout)).reshape(1, cout_p)
    shift_p = jnp.pad(shift.astype(jnp.float32), (0, cout_p - cout)).reshape(1, cout_p)

    # Output-channel tiling (keeps wide layers within VMEM on v5e/v7x; 256-wide
    # tiles when possible to match the v6e/v7x 256x256 MXU).
    tn = 256 if cout_p % 256 == 0 else 128
    n_j = cout_p // tn
    single = (n_j == 1)                 # weights/scale/shift are grid-invariant
    out_itemsize = jnp.dtype(out_dtype).itemsize

    in_specs = [
        pl.BlockSpec((1, s2, lp, cin_p), lambda i, j: (i, 0, 0, 0)),
        _maybe_single_buffered((9, cin_p, tn), lambda i, j: (0, 0, j), single),
        _maybe_single_buffered((1, tn), lambda i, j: (0, j), single),
        _maybe_single_buffered((1, tn), lambda i, j: (0, j), single),
    ]
    args = [xf, wm, scale_p, shift_p]
    flops = 2 * n * mp * cin_p * cout_p * 9
    extra_vmem = 0

    skip_mode = None
    if identity_res is not None:
        skip_mode = "identity"
        res = jnp.pad(identity_res.astype(jnp.float32),
                      ((0, 0), (0, 0), (0, wph - w_out), (0, cout_p - cout)))
        res = res.reshape(n, mp, cout_p)
        in_specs.append(pl.BlockSpec((1, mp, tn), lambda i, j: (i, 0, j)))
        args.append(res)
        extra_vmem += 2 * mp * tn * 4
    elif proj is not None:
        skip_mode = "project"
        px, pw = proj
        cin_px = px.shape[-1]
        cin_px_p = _round_up(cin_px, 128)
        pxp = jnp.pad(px, ((0, 0), (0, 0), (0, wph - w_out), (0, cin_px_p - cin_px)))
        pxp = pxp.astype(jnp.bfloat16).reshape(n, mp, cin_px_p)
        pwm = jnp.pad(pw.reshape(cout, cin_px).T,
                      ((0, cin_px_p - cin_px), (0, cout_p - cout))).astype(jnp.bfloat16)
        in_specs.append(pl.BlockSpec((1, mp, cin_px_p), lambda i, j: (i, 0, 0)))
        in_specs.append(_maybe_single_buffered((cin_px_p, tn), lambda i, j: (0, j), single))
        args.extend([pxp, pwm])
        flops += 2 * n * mp * cin_px_p * cout_p
        extra_vmem += 2 * mp * cin_px_p * 2 + 2 * cin_px_p * tn * 2

    bytes_accessed = sum(a.size * a.dtype.itemsize for a in args)
    bytes_accessed += n * mp * cout_p * out_itemsize

    # Explicit VMEM budget: double-buffered input/output blocks, weights,
    # scale/shift, fp32 accumulator scratch, skip operands, plus slack.
    est = (2 * s2 * lp * cin_p * 2
           + 2 * 9 * cin_p * tn * 2
           + 4 * tn * 4
           + 2 * mp * tn * out_itemsize
           + mp * tn * 4
           + extra_vmem)
    vmem_limit = int(min(max(2 * est + (2 << 20), 16 << 20), 64 << 20))

    kernel = functools.partial(_conv3x3_kernel, taps=taps, mp=mp,
                               relu=relu, skip_mode=skip_mode)
    out = pl.pallas_call(
        kernel,
        out_shape=jax.ShapeDtypeStruct((n, mp, cout_p), out_dtype),
        grid_spec=pltpu.PrefetchScalarGridSpec(
            num_scalar_prefetch=0,
            grid=(n, n_j),
            in_specs=in_specs,
            out_specs=pl.BlockSpec((1, mp, tn), lambda i, j: (i, 0, j)),
            scratch_shapes=[pltpu.VMEM((mp, tn), jnp.float32)],
        ),
        compiler_params=pltpu.CompilerParams(
            dimension_semantics=("parallel", "parallel"),
            vmem_limit_bytes=vmem_limit,
        ),
        cost_estimate=pl.CostEstimate(flops=int(flops), transcendentals=0,
                                      bytes_accessed=int(bytes_accessed)),
    )(*args)

    # Drop the row-pitch junk columns and the channel padding.
    out = out.reshape(n, h_out, wph, cout_p)[:, :, :w_out, :cout]
    return out


# ---------------------------------------------------------------------------
# ResidualBlock forward (inference-mode BN folded into scale/shift)
# ---------------------------------------------------------------------------
@functools.partial(jax.jit, static_argnames=("use_1x1_conv", "stride"))
def residual_block_forward(x_nchw, params, use_1x1_conv=False, stride=1):
    x = jnp.transpose(x_nchw, (0, 2, 3, 1)).astype(jnp.float32)   # NCHW -> NHWC
    cin = x.shape[-1]
    cout = params["conv1_w"].shape[0]

    # ---- conv1 + bn1 + relu (stored bf16 to feed the next bf16 matmul) -----
    scale1 = params["bn1_gamma"] * jax.lax.rsqrt(params["bn1_var"] + EPS)
    shift1 = params["bn1_beta"] + (params["conv1_b"] - params["bn1_mean"]) * scale1
    y = fused_conv3x3_bn_act(x, params["conv1_w"], scale1, shift1,
                             stride=stride, relu=True, out_dtype=jnp.bfloat16)

    # ---- conv2 + bn2 + skip + relu (skip fused into the same kernel) -------
    scale2 = params["bn2_gamma"] * jax.lax.rsqrt(params["bn2_var"] + EPS)
    shift2 = params["bn2_beta"] + (params["conv2_b"] - params["bn2_mean"]) * scale2

    if use_1x1_conv:
        xs = x[:, ::stride, ::stride, :]                 # strided 1x1-conv input
        shift2 = shift2 + params["conv3_b"]              # fold projection bias
        out = fused_conv3x3_bn_act(y, params["conv2_w"], scale2, shift2,
                                   stride=1, relu=True,
                                   proj=(xs, params["conv3_w"]),
                                   out_dtype=jnp.float32)
    else:
        if stride != 1 or cin != cout:
            raise ValueError("identity skip requires stride == 1 and "
                             "in_channel == out_channel (set use_1x1_conv=True)")
        out = fused_conv3x3_bn_act(y, params["conv2_w"], scale2, shift2,
                                   stride=1, relu=True,
                                   identity_res=x,
                                   out_dtype=jnp.float32)
    return jnp.transpose(out, (0, 3, 1, 2))              # NHWC -> NCHW


# ---------------------------------------------------------------------------
# Pure-XLA reference with matching bf16-input / fp32-accumulate numerics
# ---------------------------------------------------------------------------
def reference_forward(x, params, use_1x1_conv, stride):
    def conv(t, w, b, s, pad):
        y = jax.lax.conv_general_dilated(
            t.astype(jnp.bfloat16), w.astype(jnp.bfloat16), (s, s),
            [(pad, pad), (pad, pad)],
            dimension_numbers=("NCHW", "OIHW", "NCHW"),
            preferred_element_type=jnp.float32)
        return y + b[None, :, None, None]

    def bn(t, g, beta, m, v):
        inv = jax.lax.rsqrt(v + EPS)
        return (t - m[None, :, None, None]) * (g * inv)[None, :, None, None] \
            + beta[None, :, None, None]

    y = jax.nn.relu(bn(conv(x, params["conv1_w"], params["conv1_b"], stride, 1),
                       params["bn1_gamma"], params["bn1_beta"],
                       params["bn1_mean"], params["bn1_var"]))
    y = y.astype(jnp.bfloat16).astype(jnp.float32)   # kernel keeps this in bf16
    y = bn(conv(y, params["conv2_w"], params["conv2_b"], 1, 1),
           params["bn2_gamma"], params["bn2_beta"],
           params["bn2_mean"], params["bn2_var"])
    skip = x
    if use_1x1_conv:
        skip = conv(x, params["conv3_w"], params["conv3_b"], stride, 0)
    return jax.nn.relu(skip + y)


# ---------------------------------------------------------------------------
# Deterministic parameter construction (synthetic; not a checkpoint load)
# ---------------------------------------------------------------------------
def make_params(key, cin, cout, use_1x1_conv):
    ks = jax.random.split(key, 14)
    p = {
        "conv1_w": 0.1 * jax.random.normal(ks[0], (cout, cin, 3, 3), jnp.float32),
        "conv1_b": 0.1 * jax.random.normal(ks[1], (cout,), jnp.float32),
        "conv2_w": 0.1 * jax.random.normal(ks[2], (cout, cout, 3, 3), jnp.float32),
        "conv2_b": 0.1 * jax.random.normal(ks[3], (cout,), jnp.float32),
        "bn1_gamma": 1.0 + 0.1 * jax.random.normal(ks[4], (cout,), jnp.float32),
        "bn1_beta": 0.1 * jax.random.normal(ks[5], (cout,), jnp.float32),
        "bn1_mean": 0.1 * jax.random.normal(ks[6], (cout,), jnp.float32),
        "bn1_var": 0.5 + 0.5 * jnp.abs(jax.random.normal(ks[7], (cout,), jnp.float32)),
        "bn2_gamma": 1.0 + 0.1 * jax.random.normal(ks[8], (cout,), jnp.float32),
        "bn2_beta": 0.1 * jax.random.normal(ks[9], (cout,), jnp.float32),
        "bn2_mean": 0.1 * jax.random.normal(ks[10], (cout,), jnp.float32),
        "bn2_var": 0.5 + 0.5 * jnp.abs(jax.random.normal(ks[11], (cout,), jnp.float32)),
    }
    if use_1x1_conv:
        p["conv3_w"] = 0.1 * jax.random.normal(ks[12], (cout, cin, 1, 1), jnp.float32)
        p["conv3_b"] = 0.1 * jax.random.normal(ks[13], (cout,), jnp.float32)
    return p


if __name__ == "__main__":
    key = jax.random.PRNGKey(0)
    kx, kp1, kp2 = jax.random.split(key, 3)

    x = jax.random.normal(kx, (2, 4, 16, 16), jnp.float32)

    # Case A: identity skip (in_channel == out_channel, stride = 1)
    params_a = make_params(kp1, 4, 4, use_1x1_conv=False)
    out_a = jax.block_until_ready(
        residual_block_forward(x, params_a, use_1x1_conv=False, stride=1))
    ref_a = reference_forward(x, params_a, False, 1)
    assert out_a.shape == (2, 4, 16, 16)
    assert jnp.allclose(out_a, ref_a, rtol=2e-3, atol=2e-3), \
        float(jnp.max(jnp.abs(out_a - ref_a)))

    # Case B: 1x1-conv projection skip with stride 2 (4 -> 8 channels)
    params_b = make_params(kp2, 4, 8, use_1x1_conv=True)
    out_b = jax.block_until_ready(
        residual_block_forward(x, params_b, use_1x1_conv=True, stride=2))
    ref_b = reference_forward(x, params_b, True, 2)
    assert out_b.shape == (2, 8, 8, 8)
    assert jnp.allclose(out_b, ref_b, rtol=2e-3, atol=2e-3), \
        float(jnp.max(jnp.abs(out_b - ref_b)))

    print("KERNEL_OK")
</pallas_src>

<mosaic_0001>
module attributes {stable_mosaic.version = 11 : i64} {
  func.func @_conv3x3_kernel(%arg0: i32, %arg1: i32, %arg2: memref<1x1x336x128xbf16, #tpu.memory_space<vmem>>, %arg3: memref<9x128x128xbf16, #tpu.memory_space<vmem>>, %arg4: memref<1x128xf32, #tpu.memory_space<vmem>>, %arg5: memref<1x128xf32, #tpu.memory_space<vmem>>, %arg6: memref<1x288x128xbf16, #tpu.memory_space<vmem>>, %arg7: memref<288x128xf32, #tpu.memory_space<vmem>>) attributes {dimension_semantics = [#tpu.dimension_semantics<parallel>, #tpu.dimension_semantics<parallel>], iteration_bounds = array<i64: 2, 1>, scalar_prefetch = 0 : i64, scratch_operands = 1 : i64, tpu.core_type = #tpu.core_type<tc>, window_params = [{transform_indices = @transform_0, window_bounds = array<i64: 1, 1, 336, 128>}, {pipeline_mode = #tpu.pipeline_mode<synchronous>, transform_indices = @transform_1, window_bounds = array<i64: 9, 128, 128>}, {pipeline_mode = #tpu.pipeline_mode<synchronous>, transform_indices = @transform_2, window_bounds = array<i64: 1, 128>}, {pipeline_mode = #tpu.pipeline_mode<synchronous>, transform_indices = @transform_3, window_bounds = array<i64: 1, 128>}, {transform_indices = @transform_4, window_bounds = array<i64: 1, 288, 128>}]} {
    %c0 = arith.constant 0 : index
    %c0_0 = arith.constant 0 : index
    %c0_1 = arith.constant 0 : index
    %c0_2 = arith.constant 0 : index
    %0 = vector.load %arg2[%c0, %c0_0, %c0_1, %c0_2] : memref<1x1x336x128xbf16, #tpu.memory_space<vmem>>, vector<1x1x288x128xbf16>
    %1 = vector.shape_cast %0 : vector<1x1x288x128xbf16> to vector<288x128xbf16>
    %c0_3 = arith.constant 0 : index
    %c0_4 = arith.constant 0 : index
    %c0_5 = arith.constant 0 : index
    %2 = vector.load %arg3[%c0_3, %c0_4, %c0_5] : memref<9x128x128xbf16, #tpu.memory_space<vmem>>, vector<1x128x128xbf16>
    %3 = vector.shape_cast %2 : vector<1x128x128xbf16> to vector<128x128xbf16>
    %cst = arith.constant dense<0.000000e+00> : vector<288x128xf32>
    %4 = tpu.matmul %1, %3, %cst {dimension_numbers = #tpu.dot_dimension_numbers<[1], [0], [0], [1], [0, 0, 1, 1], [], []>} : vector<288x128xbf16>, vector<128x128xbf16>, vector<288x128xf32> -> vector<288x128xf32>
    %c0_6 = arith.constant 0 : index
    %c0_7 = arith.constant 0 : index
    %5 = vector.load %arg7[%c0_6, %c0_7] : memref<288x128xf32, #tpu.memory_space<vmem>>, vector<288x128xf32>
    tpu.vector_store %arg7[%c0_6, %c0_7], %4 {strides = array<i32>} : memref<288x128xf32, #tpu.memory_space<vmem>>, vector<288x128xf32>,
    %c0_8 = arith.constant 0 : index
    %c0_9 = arith.constant 0 : index
    %c1 = arith.constant 1 : index
    %c0_10 = arith.constant 0 : index
    %6 = vector.load %arg2[%c0_8, %c0_9, %c1, %c0_10] : memref<1x1x336x128xbf16, #tpu.memory_space<vmem>>, vector<1x1x288x128xbf16>
    %7 = vector.shape_cast %6 : vector<1x1x288x128xbf16> to vector<288x128xbf16>
    %c1_11 = arith.constant 1 : index
    %c0_12 = arith.constant 0 : index
    %c0_13 = arith.constant 0 : index
    %8 = vector.load %arg3[%c1_11, %c0_12, %c0_13] : memref<9x128x128xbf16, #tpu.memory_space<vmem>>, vector<1x128x128xbf16>
    %9 = vector.shape_cast %8 : vector<1x128x128xbf16> to vector<128x128xbf16>
    %cst_14 = arith.constant dense<0.000000e+00> : vector<288x128xf32>
    %10 = tpu.matmul %7, %9, %cst_14 {dimension_numbers = #tpu.dot_dimension_numbers<[1], [0], [0], [1], [0, 0, 1, 1], [], []>} : vector<288x128xbf16>, vector<128x128xbf16>, vector<288x128xf32> -> vector<288x128xf32>
    %c0_15 = arith.constant 0 : index
    %c0_16 = arith.constant 0 : index
    %11 = vector.load %arg7[%c0_15, %c0_16] : memref<288x128xf32, #tpu.memory_space<vmem>>, vector<288x128xf32>
    %12 = arith.addf %11, %10 : vector<288x128xf32>
    %c0_17 = arith.constant 0 : index
    %c0_18 = arith.constant 0 : index
    %13 = vector.load %arg7[%c0_17, %c0_18] : memref<288x128xf32, #tpu.memory_space<vmem>>, vector<288x128xf32>
    tpu.vector_store %arg7[%c0_17, %c0_18], %12 {strides = array<i32>} : memref<288x128xf32, #tpu.memory_space<vmem>>, vector<288x128xf32>,
    %c0_19 = arith.constant 0 : index
    %c0_20 = arith.constant 0 : index
    %c2 = arith.constant 2 : index
    %c0_21 = arith.constant 0 : index
    %14 = vector.load %arg2[%c0_19, %c0_20, %c2, %c0_21] : memref<1x1x336x128xbf16, #tpu.memory_space<vmem>>, vector<1x1x288x128xbf16>
    %15 = vector.shape_cast %14 : vector<1x1x288x128xbf16> to vector<288x128xbf16>
    %c2_22 = arith.constant 2 : index
    %c0_23 = arith.constant 0 : index
    %c0_24 = arith.constant 0 : index
    %16 = vector.load %arg3[%c2_22, %c0_23, %c0_24] : memref<9x128x128xbf16, #tpu.memory_space<vmem>>, vector<1x128x128xbf16>
    %17 = vector.shape_cast %16 : vector<1x128x128xbf16> to vector<128x128xbf16>
    %cst_25 = arith.constant dense<0.000000e+00> : vector<288x128xf32>
    %18 = tpu.matmul %15, %17, %cst_25 {dimension_numbers = #tpu.dot_dimension_numbers<[1], [0], [0], [1], [0, 0, 1, 1], [], []>} : vector<288x128xbf16>, vector<128x128xbf16>, vector<288x128xf32> -> vector<288x128xf32>
    %c0_26 = arith.constant 0 : index
    %c0_27 = arith.constant 0 : index
    %19 = vector.load %arg7[%c0_26, %c0_27] : memref<288x128xf32, #tpu.memory_space<vmem>>, vector<288x128xf32>
    %20 = arith.addf %19, %18 : vector<288x128xf32>
    %c0_28 = arith.constant 0 : index
    %c0_29 = arith.constant 0 : index
    %21 = vector.load %arg7[%c0_28, %c0_29] : memref<288x128xf32, #tpu.memory_space<vmem>>, vector<288x128xf32>
    tpu.vector_store %arg7[%c0_28, %c0_29], %20 {strides = array<i32>} : memref<288x128xf32, #tpu.memory_space<vmem>>, vector<288x128xf32>,
    %c0_30 = arith.constant 0 : index
    %c0_31 = arith.constant 0 : index
    %c18 = arith.constant 18 : index
    %c0_32 = arith.constant 0 : index
    %22 = vector.load %arg2[%c0_30, %c0_31, %c18, %c0_32] : memref<1x1x336x128xbf16, #tpu.memory_space<vmem>>, vector<1x1x288x128xbf16>
    %23 = vector.shape_cast %22 : vector<1x1x288x128xbf16> to vector<288x128xbf16>
    %c3 = arith.constant 3 : index
    %c0_33 = arith.constant 0 : index
    %c0_34 = arith.constant 0 : index
    %24 = vector.load %arg3[%c3, %c0_33, %c0_34] : memref<9x128x128xbf16, #tpu.memory_space<vmem>>, vector<1x128x128xbf16>
    %25 = vector.shape_cast %24 : vector<1x128x128xbf16> to vector<128x128xbf16>
    %cst_35 = arith.constant dense<0.000000e+00> : vector<288x128xf32>
    %26 = tpu.matmul %23, %25, %cst_35 {dimension_numbers = #tpu.dot_dimension_numbers<[1], [0], [0], [1], [0, 0, 1, 1], [], []>} : vector<288x128xbf16>, vector<128x128xbf16>, vector<288x128xf32> -> vector<288x128xf32>
    %c0_36 = arith.constant 0 : index
    %c0_37 = arith.constant 0 : index
    %27 = vector.load %arg7[%c0_36, %c0_37] : memref<288x128xf32, #tpu.memory_space<vmem>>, vector<288x128xf32>
    %28 = arith.addf %27, %26 : vector<288x128xf32>
    %c0_38 = arith.constant 0 : index
    %c0_39 = arith.constant 0 : index
    %29 = vector.load %arg7[%c0_38, %c0_39] : memref<288x128xf32, #tpu.memory_space<vmem>>, vector<288x128xf32>
    tpu.vector_store %arg7[%c0_38, %c0_39], %28 {strides = array<i32>} : memref<288x128xf32, #tpu.memory_space<vmem>>, vector<288x128xf32>,
    %c0_40 = arith.constant 0 : index
    %c0_41 = arith.constant 0 : index
    %c19 = arith.constant 19 : index
    %c0_42 = arith.constant 0 : index
    %30 = vector.load %arg2[%c0_40, %c0_41, %c19, %c0_42] : memref<1x1x336x128xbf16, #tpu.memory_space<vmem>>, vector<1x1x288x128xbf16>
    %31 = vector.shape_cast %30 : vector<1x1x288x128xbf16> to vector<288x128xbf16>
    %c4 = arith.constant 4 : index
    %c0_43 = arith.constant 0 : index
    %c0_44 = arith.constant 0 : index
    %32 = vector.load %arg3[%c4, %c0_43, %c0_44] : memref<9x128x128xbf16, #tpu.memory_space<vmem>>, vector<1x128x128xbf16>
    %33 = vector.shape_cast %32 : vector<1x128x128xbf16> to vector<128x128xbf16>
    %cst_45 = arith.constant dense<0.000000e+00> : vector<288x128xf32>
    %34 = tpu.matmul %31, %33, %cst_45 {dimension_numbers = #tpu.dot_dimension_numbers<[1], [0], [0], [1], [0, 0, 1, 1], [], []>} : vector<288x128xbf16>, vector<128x128xbf16>, vector<288x128xf32> -> vector<288x128xf32>
    %c0_46 = arith.constant 0 : index
    %c0_47 = arith.constant 0 : index
    %35 = vector.load %arg7[%c0_46, %c0_47] : memref<288x128xf32, #tpu.memory_space<vmem>>, vector<288x128xf32>
    %36 = arith.addf %35, %34 : vector<288x128xf32>
    %c0_48 = arith.constant 0 : index
    %c0_49 = arith.constant 0 : index
    %37 = vector.load %arg7[%c0_48, %c0_49] : memref<288x128xf32, #tpu.memory_space<vmem>>, vector<288x128xf32>
    tpu.vector_store %arg7[%c0_48, %c0_49], %36 {strides = array<i32>} : memref<288x128xf32, #tpu.memory_space<vmem>>, vector<288x128xf32>,
    %c0_50 = arith.constant 0 : index
    %c0_51 = arith.constant 0 : index
    %c20 = arith.constant 20 : index
    %c0_52 = arith.constant 0 : index
    %38 = vector.load %arg2[%c0_50, %c0_51, %c20, %c0_52] : memref<1x1x336x128xbf16, #tpu.memory_space<vmem>>, vector<1x1x288x128xbf16>
    %39 = vector.shape_cast %38 : vector<1x1x288x128xbf16> to vector<288x128xbf16>
    %c5 = arith.constant 5 : index
    %c0_53 = arith.constant 0 : index
    %c0_54 = arith.constant 0 : index
    %40 = vector.load %arg3[%c5, %c0_53, %c0_54] : memref<9x128x128xbf16, #tpu.memory_space<vmem>>, vector<1x128x128xbf16>
    %41 = vector.shape_cast %40 : vector<1x128x128xbf16> to vector<128x128xbf16>
    %cst_55 = arith.constant dense<0.000000e+00> : vector<288x128xf32>
    %42 = tpu.matmul %39, %41, %cst_55 {dimension_numbers = #tpu.dot_dimension_numbers<[1], [0], [0], [1], [0, 0, 1, 1], [], []>} : vector<288x128xbf16>, vector<128x128xbf16>, vector<288x128xf32> -> vector<288x128xf32>
    %c0_56 = arith.constant 0 : index
    %c0_57 = arith.constant 0 : index
    %43 = vector.load %arg7[%c0_56, %c0_57] : memref<288x128xf32, #tpu.memory_space<vmem>>, vector<288x128xf32>
    %44 = arith.addf %43, %42 : vector<288x128xf32>
    %c0_58 = arith.constant 0 : index
    %c0_59 = arith.constant 0 : index
    %45 = vector.load %arg7[%c0_58, %c0_59] : memref<288x128xf32, #tpu.memory_space<vmem>>, vector<288x128xf32>
    tpu.vector_store %arg7[%c0_58, %c0_59], %44 {strides = array<i32>} : memref<288x128xf32, #tpu.memory_space<vmem>>, vector<288x128xf32>,
    %c0_60 = arith.constant 0 : index
    %c0_61 = arith.constant 0 : index
    %c36 = arith.constant 36 : index
    %c0_62 = arith.constant 0 : index
    %46 = vector.load %arg2[%c0_60, %c0_61, %c36, %c0_62] : memref<1x1x336x128xbf16, #tpu.memory_space<vmem>>, vector<1x1x288x128xbf16>
    %47 = vector.shape_cast %46 : vector<1x1x288x128xbf16> to vector<288x128xbf16>
    %c6 = arith.constant 6 : index
    %c0_63 = arith.constant 0 : index
    %c0_64 = arith.constant 0 : index
    %48 = vector.load %arg3[%c6, %c0_63, %c0_64] : memref<9x128x128xbf16, #tpu.memory_space<vmem>>, vector<1x128x128xbf16>
    %49 = vector.shape_cast %48 : vector<1x128x128xbf16> to vector<128x128xbf16>
    %cst_65 = arith.constant dense<0.000000e+00> : vector<288x128xf32>
    %50 = tpu.matmul %47, %49, %cst_65 {dimension_numbers = #tpu.dot_dimension_numbers<[1], [0], [0], [1], [0, 0, 1, 1], [], []>} : vector<288x128xbf16>, vector<128x128xbf16>, vector<288x128xf32> -> vector<288x128xf32>
    %c0_66 = arith.constant 0 : index
    %c0_67 = arith.constant 0 : index
    %51 = vector.load %arg7[%c0_66, %c0_67] : memref<288x128xf32, #tpu.memory_space<vmem>>, vector<288x128xf32>
    %52 = arith.addf %51, %50 : vector<288x128xf32>
    %c0_68 = arith.constant 0 : index
    %c0_69 = arith.constant 0 : index
    %53 = vector.load %arg7[%c0_68, %c0_69] : memref<288x128xf32, #tpu.memory_space<vmem>>, vector<288x128xf32>
    tpu.vector_store %arg7[%c0_68, %c0_69], %52 {strides = array<i32>} : memref<288x128xf32, #tpu.memory_space<vmem>>, vector<288x128xf32>,
    %c0_70 = arith.constant 0 : index
    %c0_71 = arith.constant 0 : index
    %c37 = arith.constant 37 : index
    %c0_72 = arith.constant 0 : index
    %54 = vector.load %arg2[%c0_70, %c0_71, %c37, %c0_72] : memref<1x1x336x128xbf16, #tpu.memory_space<vmem>>, vector<1x1x288x128xbf16>
    %55 = vector.shape_cast %54 : vector<1x1x288x128xbf16> to vector<288x128xbf16>
    %c7 = arith.constant 7 : index
    %c0_73 = arith.constant 0 : index
    %c0_74 = arith.constant 0 : index
    %56 = vector.load %arg3[%c7, %c0_73, %c0_74] : memref<9x128x128xbf16, #tpu.memory_space<vmem>>, vector<1x128x128xbf16>
    %57 = vector.shape_cast %56 : vector<1x128x128xbf16> to vector<128x128xbf16>
    %cst_75 = arith.constant dense<0.000000e+00> : vector<288x128xf32>
    %58 = tpu.matmul %55, %57, %cst_75 {dimension_numbers = #tpu.dot_dimension_numbers<[1], [0], [0], [1], [0, 0, 1, 1], [], []>} : vector<288x128xbf16>, vector<128x128xbf16>, vector<288x128xf32> -> vector<288x128xf32>
    %c0_76 = arith.constant 0 : index
    %c0_77 = arith.constant 0 : index
    %59 = vector.load %arg7[%c0_76, %c0_77] : memref<288x128xf32, #tpu.memory_space<vmem>>, vector<288x128xf32>
    %60 = arith.addf %59, %58 : vector<288x128xf32>
    %c0_78 = arith.constant 0 : index
    %c0_79 = arith.constant 0 : index
    %61 = vector.load %arg7[%c0_78, %c0_79] : memref<288x128xf32, #tpu.memory_space<vmem>>, vector<288x128xf32>
    tpu.vector_store %arg7[%c0_78, %c0_79], %60 {strides = array<i32>} : memref<288x128xf32, #tpu.memory_space<vmem>>, vector<288x128xf32>,
    %c0_80 = arith.constant 0 : index
    %c0_81 = arith.constant 0 : index
    %c38 = arith.constant 38 : index
    %c0_82 = arith.constant 0 : index
    %62 = vector.load %arg2[%c0_80, %c0_81, %c38, %c0_82] : memref<1x1x336x128xbf16, #tpu.memory_space<vmem>>, vector<1x1x288x128xbf16>
    %63 = vector.shape_cast %62 : vector<1x1x288x128xbf16> to vector<288x128xbf16>
    %c8 = arith.constant 8 : index
    %c0_83 = arith.constant 0 : index
    %c0_84 = arith.constant 0 : index
    %64 = vector.load %arg3[%c8, %c0_83, %c0_84] : memref<9x128x128xbf16, #tpu.memory_space<vmem>>, vector<1x128x128xbf16>
    %65 = vector.shape_cast %64 : vector<1x128x128xbf16> to vector<128x128xbf16>
    %cst_85 = arith.constant dense<0.000000e+00> : vector<288x128xf32>
    %66 = tpu.matmul %63, %65, %cst_85 {dimension_numbers = #tpu.dot_dimension_numbers<[1], [0], [0], [1], [0, 0, 1, 1], [], []>} : vector<288x128xbf16>, vector<128x128xbf16>, vector<288x128xf32> -> vector<288x128xf32>
    %c0_86 = arith.constant 0 : index
    %c0_87 = arith.constant 0 : index
    %67 = vector.load %arg7[%c0_86, %c0_87] : memref<288x128xf32, #tpu.memory_space<vmem>>, vector<288x128xf32>
    %68 = arith.addf %67, %66 : vector<288x128xf32>
    %c0_88 = arith.constant 0 : index
    %c0_89 = arith.constant 0 : index
    %69 = vector.load %arg7[%c0_88, %c0_89] : memref<288x128xf32, #tpu.memory_space<vmem>>, vector<288x128xf32>
    tpu.vector_store %arg7[%c0_88, %c0_89], %68 {strides = array<i32>} : memref<288x128xf32, #tpu.memory_space<vmem>>, vector<288x128xf32>,
    %c0_90 = arith.constant 0 : index
    %c0_91 = arith.constant 0 : index
    %70 = vector.load %arg7[%c0_90, %c0_91] : memref<288x128xf32, #tpu.memory_space<vmem>>, vector<288x128xf32>
    %c0_92 = arith.constant 0 : index
    %c0_93 = arith.constant 0 : index
    %71 = vector.load %arg4[%c0_92, %c0_93] : memref<1x128xf32, #tpu.memory_space<vmem>>, vector<1x128xf32>
    %72 = vector.broadcast %71 : vector<1x128xf32> to vector<288x128xf32>
    %73 = arith.mulf %70, %72 : vector<288x128xf32>
    %c0_94 = arith.constant 0 : index
    %c0_95 = arith.constant 0 : index
    %74 = vector.load %arg5[%c0_94, %c0_95] : memref<1x128xf32, #tpu.memory_space<vmem>>, vector<1x128xf32>
    %75 = vector.broadcast %74 : vector<1x128xf32> to vector<288x128xf32>
    %76 = arith.addf %73, %75 : vector<288x128xf32>
    %cst_96 = arith.constant 0.000000e+00 : f32
    %77 = vector.broadcast %cst_96 : f32 to vector<288x128xf32>
    %78 = arith.maximumf %76, %77 : vector<288x128xf32>
    %79 = arith.truncf %78 : vector<288x128xf32> to vector<288x128xbf16>
    %c0_97 = arith.constant 0 : index
    %c0_98 = arith.constant 0 : index
    %c0_99 = arith.constant 0 : index
    %80 = vector.load %arg6[%c0_97, %c0_98, %c0_99] : memref<1x288x128xbf16, #tpu.memory_space<vmem>>, vector<1x288x128xbf16>
    %81 = vector.shape_cast %80 : vector<1x288x128xbf16> to vector<288x128xbf16>
    %82 = vector.shape_cast %79 : vector<288x128xbf16> to vector<1x288x128xbf16>
    tpu.vector_store %arg6[%c0_97, %c0_98, %c0_99], %82 {strides = array<i32>} : memref<1x288x128xbf16, #tpu.memory_space<vmem>>, vector<1x288x128xbf16>,
    return
  }
  func.func @transform_0(%arg0: i32, %arg1: i32) -> (i32, i32, i32, i32) {
    %c0_i32 = arith.constant 0 : i32
    %c0_i32_0 = arith.constant 0 : i32
    %c0_i32_1 = arith.constant 0 : i32
    %c0_i32_2 = arith.constant 0 : i32
    return %arg0, %c0_i32, %c0_i32_0, %c0_i32_1 : i32, i32, i32, i32
  }
  func.func @transform_1(%arg0: i32, %arg1: i32) -> (i32, i32, i32) {
    %c0_i32 = arith.constant 0 : i32
    %c0_i32_0 = arith.constant 0 : i32
    %c0_i32_1 = arith.constant 0 : i32
    return %c0_i32, %c0_i32_0, %arg1 : i32, i32, i32
  }
  func.func @transform_2(%arg0: i32, %arg1: i32) -> (i32, i32) {
    %c0_i32 = arith.constant 0 : i32
    %c0_i32_0 = arith.constant 0 : i32
    return %c0_i32, %arg1 : i32, i32
  }
  func.func @transform_3(%arg0: i32, %arg1: i32) -> (i32, i32) {
    %c0_i32 = arith.constant 0 : i32
    %c0_i32_0 = arith.constant 0 : i32
    return %c0_i32, %arg1 : i32, i32
  }
  func.func @transform_4(%arg0: i32, %arg1: i32) -> (i32, i32, i32) {
    %c0_i32 = arith.constant 0 : i32
    %c0_i32_0 = arith.constant 0 : i32
    return %arg0, %c0_i32, %arg1 : i32, i32, i32
  }
}

module attributes {stable_mosaic.version = 11 : i64} {
  func.func @_conv3x3_kernel(%arg0: i32, %arg1: i32, %arg2: memref<1x1x336x128xbf16, #tpu.memory_space<vmem>>, %arg3: memref<9x128x128xbf16, #tpu.memory_space<vmem>>, %arg4: memref<1x128xf32, #tpu.memory_space<vmem>>, %arg5: memref<1x128xf32, #tpu.memory_space<vmem>>, %arg6: memref<1x288x128xf32, #tpu.memory_space<vmem>>, %arg7: memref<1x288x128xf32, #tpu.memory_space<vmem>>, %arg8: memref<288x128xf32, #tpu.memory_space<vmem>>) attributes {dimension_semantics = [#tpu.dimension_semantics<parallel>, #tpu.dimension_semantics<parallel>], iteration_bounds = array<i64: 2, 1>, scalar_prefetch = 0 : i64, scratch_operands = 1 : i64, tpu.core_type = #tpu.core_type<tc>, window_params = [{transform_indices = @transform_0, window_bounds = array<i64: 1, 1, 336, 128>}, {pipeline_mode = #tpu.pipeline_mode<synchronous>, transform_indices = @transform_1, window_bounds = array<i64: 9, 128, 128>}, {pipeline_mode = #tpu.pipeline_mode<synchronous>, transform_indices = @transform_2, window_bounds = array<i64: 1, 128>}, {pipeline_mode = #tpu.pipeline_mode<synchronous>, transform_indices = @transform_3, window_bounds = array<i64: 1, 128>}, {transform_indices = @transform_4, window_bounds = array<i64: 1, 288, 128>}, {transform_indices = @transform_5, window_bounds = array<i64: 1, 288, 128>}]} {
    %c0 = arith.constant 0 : index
    %c0_0 = arith.constant 0 : index
    %c0_1 = arith.constant 0 : index
    %c0_2 = arith.constant 0 : index
    %0 = vector.load %arg2[%c0, %c0_0, %c0_1, %c0_2] : memref<1x1x336x128xbf16, #tpu.memory_space<vmem>>, vector<1x1x288x128xbf16>
    %1 = vector.shape_cast %0 : vector<1x1x288x128xbf16> to vector<288x128xbf16>
    %c0_3 = arith.constant 0 : index
    %c0_4 = arith.constant 0 : index
    %c0_5 = arith.constant 0 : index
    %2 = vector.load %arg3[%c0_3, %c0_4, %c0_5] : memref<9x128x128xbf16, #tpu.memory_space<vmem>>, vector<1x128x128xbf16>
    %3 = vector.shape_cast %2 : vector<1x128x128xbf16> to vector<128x128xbf16>
    %cst = arith.constant dense<0.000000e+00> : vector<288x128xf32>
    %4 = tpu.matmul %1, %3, %cst {dimension_numbers = #tpu.dot_dimension_numbers<[1], [0], [0], [1], [0, 0, 1, 1], [], []>} : vector<288x128xbf16>, vector<128x128xbf16>, vector<288x128xf32> -> vector<288x128xf32>
    %c0_6 = arith.constant 0 : index
    %c0_7 = arith.constant 0 : index
    %5 = vector.load %arg8[%c0_6, %c0_7] : memref<288x128xf32, #tpu.memory_space<vmem>>, vector<288x128xf32>
    tpu.vector_store %arg8[%c0_6, %c0_7], %4 {strides = array<i32>} : memref<288x128xf32, #tpu.memory_space<vmem>>, vector<288x128xf32>,
    %c0_8 = arith.constant 0 : index
    %c0_9 = arith.constant 0 : index
    %c1 = arith.constant 1 : index
    %c0_10 = arith.constant 0 : index
    %6 = vector.load %arg2[%c0_8, %c0_9, %c1, %c0_10] : memref<1x1x336x128xbf16, #tpu.memory_space<vmem>>, vector<1x1x288x128xbf16>
    %7 = vector.shape_cast %6 : vector<1x1x288x128xbf16> to vector<288x128xbf16>
    %c1_11 = arith.constant 1 : index
    %c0_12 = arith.constant 0 : index
    %c0_13 = arith.constant 0 : index
    %8 = vector.load %arg3[%c1_11, %c0_12, %c0_13] : memref<9x128x128xbf16, #tpu.memory_space<vmem>>, vector<1x128x128xbf16>
    %9 = vector.shape_cast %8 : vector<1x128x128xbf16> to vector<128x128xbf16>
    %cst_14 = arith.constant dense<0.000000e+00> : vector<288x128xf32>
    %10 = tpu.matmul %7, %9, %cst_14 {dimension_numbers = #tpu.dot_dimension_numbers<[1], [0], [0], [1], [0, 0, 1, 1], [], []>} : vector<288x128xbf16>, vector<128x128xbf16>, vector<288x128xf32> -> vector<288x128xf32>
    %c0_15 = arith.constant 0 : index
    %c0_16 = arith.constant 0 : index
    %11 = vector.load %arg8[%c0_15, %c0_16] : memref<288x128xf32, #tpu.memory_space<vmem>>, vector<288x128xf32>
    %12 = arith.addf %11, %10 : vector<288x128xf32>
    %c0_17 = arith.constant 0 : index
    %c0_18 = arith.constant 0 : index
    %13 = vector.load %arg8[%c0_17, %c0_18] : memref<288x128xf32, #tpu.memory_space<vmem>>, vector<288x128xf32>
    tpu.vector_store %arg8[%c0_17, %c0_18], %12 {strides = array<i32>} : memref<288x128xf32, #tpu.memory_space<vmem>>, vector<288x128xf32>,
    %c0_19 = arith.constant 0 : index
    %c0_20 = arith.constant 0 : index
    %c2 = arith.constant 2 : index
    %c0_21 = arith.constant 0 : index
    %14 = vector.load %arg2[%c0_19, %c0_20, %c2, %c0_21] : memref<1x1x336x128xbf16, #tpu.memory_space<vmem>>, vector<1x1x288x128xbf16>
    %15 = vector.shape_cast %14 : vector<1x1x288x128xbf16> to vector<288x128xbf16>
    %c2_22 = arith.constant 2 : index
    %c0_23 = arith.constant 0 : index
    %c0_24 = arith.constant 0 : index
    %16 = vector.load %arg3[%c2_22, %c0_23, %c0_24] : memref<9x128x128xbf16, #tpu.memory_space<vmem>>, vector<1x128x128xbf16>
    %17 = vector.shape_cast %16 : vector<1x128x128xbf16> to vector<128x128xbf16>
    %cst_25 = arith.constant dense<0.000000e+00> : vector<288x128xf32>
    %18 = tpu.matmul %15, %17, %cst_25 {dimension_numbers = #tpu.dot_dimension_numbers<[1], [0], [0], [1], [0, 0, 1, 1], [], []>} : vector<288x128xbf16>, vector<128x128xbf16>, vector<288x128xf32> -> vector<288x128xf32>
    %c0_26 = arith.constant 0 : index
    %c0_27 = arith.constant 0 : index
    %19 = vector.load %arg8[%c0_26, %c0_27] : memref<288x128xf32, #tpu.memory_space<vmem>>, vector<288x128xf32>
    %20 = arith.addf %19, %18 : vector<288x128xf32>
    %c0_28 = arith.constant 0 : index
    %c0_29 = arith.constant 0 : index
    %21 = vector.load %arg8[%c0_28, %c0_29] : memref<288x128xf32, #tpu.memory_space<vmem>>, vector<288x128xf32>
    tpu.vector_store %arg8[%c0_28, %c0_29], %20 {strides = array<i32>} : memref<288x128xf32, #tpu.memory_space<vmem>>, vector<288x128xf32>,
    %c0_30 = arith.constant 0 : index
    %c0_31 = arith.constant 0 : index
    %c18 = arith.constant 18 : index
    %c0_32 = arith.constant 0 : index
    %22 = vector.load %arg2[%c0_30, %c0_31, %c18, %c0_32] : memref<1x1x336x128xbf16, #tpu.memory_space<vmem>>, vector<1x1x288x128xbf16>
    %23 = vector.shape_cast %22 : vector<1x1x288x128xbf16> to vector<288x128xbf16>
    %c3 = arith.constant 3 : index
    %c0_33 = arith.constant 0 : index
    %c0_34 = arith.constant 0 : index
    %24 = vector.load %arg3[%c3, %c0_33, %c0_34] : memref<9x128x128xbf16, #tpu.memory_space<vmem>>, vector<1x128x128xbf16>
    %25 = vector.shape_cast %24 : vector<1x128x128xbf16> to vector<128x128xbf16>
    %cst_35 = arith.constant dense<0.000000e+00> : vector<288x128xf32>
    %26 = tpu.matmul %23, %25, %cst_35 {dimension_numbers = #tpu.dot_dimension_numbers<[1], [0], [0], [1], [0, 0, 1, 1], [], []>} : vector<288x128xbf16>, vector<128x128xbf16>, vector<288x128xf32> -> vector<288x128xf32>
    %c0_36 = arith.constant 0 : index
    %c0_37 = arith.constant 0 : index
    %27 = vector.load %arg8[%c0_36, %c0_37] : memref<288x128xf32, #tpu.memory_space<vmem>>, vector<288x128xf32>
    %28 = arith.addf %27, %26 : vector<288x128xf32>
    %c0_38 = arith.constant 0 : index
    %c0_39 = arith.constant 0 : index
    %29 = vector.load %arg8[%c0_38, %c0_39] : memref<288x128xf32, #tpu.memory_space<vmem>>, vector<288x128xf32>
    tpu.vector_store %arg8[%c0_38, %c0_39], %28 {strides = array<i32>} : memref<288x128xf32, #tpu.memory_space<vmem>>, vector<288x128xf32>,
    %c0_40 = arith.constant 0 : index
    %c0_41 = arith.constant 0 : index
    %c19 = arith.constant 19 : index
    %c0_42 = arith.constant 0 : index
    %30 = vector.load %arg2[%c0_40, %c0_41, %c19, %c0_42] : memref<1x1x336x128xbf16, #tpu.memory_space<vmem>>, vector<1x1x288x128xbf16>
    %31 = vector.shape_cast %30 : vector<1x1x288x128xbf16> to vector<288x128xbf16>
    %c4 = arith.constant 4 : index
    %c0_43 = arith.constant 0 : index
    %c0_44 = arith.constant 0 : index
    %32 = vector.load %arg3[%c4, %c0_43, %c0_44] : memref<9x128x128xbf16, #tpu.memory_space<vmem>>, vector<1x128x128xbf16>
    %33 = vector.shape_cast %32 : vector<1x128x128xbf16> to vector<128x128xbf16>
    %cst_45 = arith.constant dense<0.000000e+00> : vector<288x128xf32>
    %34 = tpu.matmul %31, %33, %cst_45 {dimension_numbers = #tpu.dot_dimension_numbers<[1], [0], [0], [1], [0, 0, 1, 1], [], []>} : vector<288x128xbf16>, vector<128x128xbf16>, vector<288x128xf32> -> vector<288x128xf32>
    %c0_46 = arith.constant 0 : index
    %c0_47 = arith.constant 0 : index
    %35 = vector.load %arg8[%c0_46, %c0_47] : memref<288x128xf32, #tpu.memory_space<vmem>>, vector<288x128xf32>
    %36 = arith.addf %35, %34 : vector<288x128xf32>
    %c0_48 = arith.constant 0 : index
    %c0_49 = arith.constant 0 : index
    %37 = vector.load %arg8[%c0_48, %c0_49] : memref<288x128xf32, #tpu.memory_space<vmem>>, vector<288x128xf32>
    tpu.vector_store %arg8[%c0_48, %c0_49], %36 {strides = array<i32>} : memref<288x128xf32, #tpu.memory_space<vmem>>, vector<288x128xf32>,
    %c0_50 = arith.constant 0 : index
    %c0_51 = arith.constant 0 : index
    %c20 = arith.constant 20 : index
    %c0_52 = arith.constant 0 : index
    %38 = vector.load %arg2[%c0_50, %c0_51, %c20, %c0_52] : memref<1x1x336x128xbf16, #tpu.memory_space<vmem>>, vector<1x1x288x128xbf16>
    %39 = vector.shape_cast %38 : vector<1x1x288x128xbf16> to vector<288x128xbf16>
    %c5 = arith.constant 5 : index
    %c0_53 = arith.constant 0 : index
    %c0_54 = arith.constant 0 : index
    %40 = vector.load %arg3[%c5, %c0_53, %c0_54] : memref<9x128x128xbf16, #tpu.memory_space<vmem>>, vector<1x128x128xbf16>
    %41 = vector.shape_cast %40 : vector<1x128x128xbf16> to vector<128x128xbf16>
    %cst_55 = arith.constant dense<0.000000e+00> : vector<288x128xf32>
    %42 = tpu.matmul %39, %41, %cst_55 {dimension_numbers = #tpu.dot_dimension_numbers<[1], [0], [0], [1], [0, 0, 1, 1], [], []>} : vector<288x128xbf16>, vector<128x128xbf16>, vector<288x128xf32> -> vector<288x128xf32>
    %c0_56 = arith.constant 0 : index
    %c0_57 = arith.constant 0 : index
    %43 = vector.load %arg8[%c0_56, %c0_57] : memref<288x128xf32, #tpu.memory_space<vmem>>, vector<288x128xf32>
    %44 = arith.addf %43, %42 : vector<288x128xf32>
    %c0_58 = arith.constant 0 : index
    %c0_59 = arith.constant 0 : index
    %45 = vector.load %arg8[%c0_58, %c0_59] : memref<288x128xf32, #tpu.memory_space<vmem>>, vector<288x128xf32>
    tpu.vector_store %arg8[%c0_58, %c0_59], %44 {strides = array<i32>} : memref<288x128xf32, #tpu.memory_space<vmem>>, vector<288x128xf32>,
    %c0_60 = arith.constant 0 : index
    %c0_61 = arith.constant 0 : index
    %c36 = arith.constant 36 : index
    %c0_62 = arith.constant 0 : index
    %46 = vector.load %arg2[%c0_60, %c0_61, %c36, %c0_62] : memref<1x1x336x128xbf16, #tpu.memory_space<vmem>>, vector<1x1x288x128xbf16>
    %47 = vector.shape_cast %46 : vector<1x1x288x128xbf16> to vector<288x128xbf16>
    %c6 = arith.constant 6 : index
    %c0_63 = arith.constant 0 : index
    %c0_64 = arith.constant 0 : index
    %48 = vector.load %arg3[%c6, %c0_63, %c0_64] : memref<9x128x128xbf16, #tpu.memory_space<vmem>>, vector<1x128x128xbf16>
    %49 = vector.shape_cast %48 : vector<1x128x128xbf16> to vector<128x128xbf16>
    %cst_65 = arith.constant dense<0.000000e+00> : vector<288x128xf32>
    %50 = tpu.matmul %47, %49, %cst_65 {dimension_numbers = #tpu.dot_dimension_numbers<[1], [0], [0], [1], [0, 0, 1, 1], [], []>} : vector<288x128xbf16>, vector<128x128xbf16>, vector<288x128xf32> -> vector<288x128xf32>
    %c0_66 = arith.constant 0 : index
    %c0_67 = arith.constant 0 : index
    %51 = vector.load %arg8[%c0_66, %c0_67] : memref<288x128xf32, #tpu.memory_space<vmem>>, vector<288x128xf32>
    %52 = arith.addf %51, %50 : vector<288x128xf32>
    %c0_68 = arith.constant 0 : index
    %c0_69 = arith.constant 0 : index
    %53 = vector.load %arg8[%c0_68, %c0_69] : memref<288x128xf32, #tpu.memory_space<vmem>>, vector<288x128xf32>
    tpu.vector_store %arg8[%c0_68, %c0_69], %52 {strides = array<i32>} : memref<288x128xf32, #tpu.memory_space<vmem>>, vector<288x128xf32>,
    %c0_70 = arith.constant 0 : index
    %c0_71 = arith.constant 0 : index
    %c37 = arith.constant 37 : index
    %c0_72 = arith.constant 0 : index
    %54 = vector.load %arg2[%c0_70, %c0_71, %c37, %c0_72] : memref<1x1x336x128xbf16, #tpu.memory_space<vmem>>, vector<1x1x288x128xbf16>
    %55 = vector.shape_cast %54 : vector<1x1x288x128xbf16> to vector<288x128xbf16>
    %c7 = arith.constant 7 : index
    %c0_73 = arith.constant 0 : index
    %c0_74 = arith.constant 0 : index
    %56 = vector.load %arg3[%c7, %c0_73, %c0_74] : memref<9x128x128xbf16, #tpu.memory_space<vmem>>, vector<1x128x128xbf16>
    %57 = vector.shape_cast %56 : vector<1x128x128xbf16> to vector<128x128xbf16>
    %cst_75 = arith.constant dense<0.000000e+00> : vector<288x128xf32>
    %58 = tpu.matmul %55, %57, %cst_75 {dimension_numbers = #tpu.dot_dimension_numbers<[1], [0], [0], [1], [0, 0, 1, 1], [], []>} : vector<288x128xbf16>, vector<128x128xbf16>, vector<288x128xf32> -> vector<288x128xf32>
    %c0_76 = arith.constant 0 : index
    %c0_77 = arith.constant 0 : index
    %59 = vector.load %arg8[%c0_76, %c0_77] : memref<288x128xf32, #tpu.memory_space<vmem>>, vector<288x128xf32>
    %60 = arith.addf %59, %58 : vector<288x128xf32>
    %c0_78 = arith.constant 0 : index
    %c0_79 = arith.constant 0 : index
    %61 = vector.load %arg8[%c0_78, %c0_79] : memref<288x128xf32, #tpu.memory_space<vmem>>, vector<288x128xf32>
    tpu.vector_store %arg8[%c0_78, %c0_79], %60 {strides = array<i32>} : memref<288x128xf32, #tpu.memory_space<vmem>>, vector<288x128xf32>,
    %c0_80 = arith.constant 0 : index
    %c0_81 = arith.constant 0 : index
    %c38 = arith.constant 38 : index
    %c0_82 = arith.constant 0 : index
    %62 = vector.load %arg2[%c0_80, %c0_81, %c38, %c0_82] : memref<1x1x336x128xbf16, #tpu.memory_space<vmem>>, vector<1x1x288x128xbf16>
    %63 = vector.shape_cast %62 : vector<1x1x288x128xbf16> to vector<288x128xbf16>
    %c8 = arith.constant 8 : index
    %c0_83 = arith.constant 0 : index
    %c0_84 = arith.constant 0 : index
    %64 = vector.load %arg3[%c8, %c0_83, %c0_84] : memref<9x128x128xbf16, #tpu.memory_space<vmem>>, vector<1x128x128xbf16>
    %65 = vector.shape_cast %64 : vector<1x128x128xbf16> to vector<128x128xbf16>
    %cst_85 = arith.constant dense<0.000000e+00> : vector<288x128xf32>
    %66 = tpu.matmul %63, %65, %cst_85 {dimension_numbers = #tpu.dot_dimension_numbers<[1], [0], [0], [1], [0, 0, 1, 1], [], []>} : vector<288x128xbf16>, vector<128x128xbf16>, vector<288x128xf32> -> vector<288x128xf32>
    %c0_86 = arith.constant 0 : index
    %c0_87 = arith.constant 0 : index
    %67 = vector.load %arg8[%c0_86, %c0_87] : memref<288x128xf32, #tpu.memory_space<vmem>>, vector<288x128xf32>
    %68 = arith.addf %67, %66 : vector<288x128xf32>
    %c0_88 = arith.constant 0 : index
    %c0_89 = arith.constant 0 : index
    %69 = vector.load %arg8[%c0_88, %c0_89] : memref<288x128xf32, #tpu.memory_space<vmem>>, vector<288x128xf32>
    tpu.vector_store %arg8[%c0_88, %c0_89], %68 {strides = array<i32>} : memref<288x128xf32, #tpu.memory_space<vmem>>, vector<288x128xf32>,
    %c0_90 = arith.constant 0 : index
    %c0_91 = arith.constant 0 : index
    %70 = vector.load %arg8[%c0_90, %c0_91] : memref<288x128xf32, #tpu.memory_space<vmem>>, vector<288x128xf32>
    %c0_92 = arith.constant 0 : index
    %c0_93 = arith.constant 0 : index
    %71 = vector.load %arg4[%c0_92, %c0_93] : memref<1x128xf32, #tpu.memory_space<vmem>>, vector<1x128xf32>
    %72 = vector.broadcast %71 : vector<1x128xf32> to vector<288x128xf32>
    %73 = arith.mulf %70, %72 : vector<288x128xf32>
    %c0_94 = arith.constant 0 : index
    %c0_95 = arith.constant 0 : index
    %74 = vector.load %arg5[%c0_94, %c0_95] : memref<1x128xf32, #tpu.memory_space<vmem>>, vector<1x128xf32>
    %75 = vector.broadcast %74 : vector<1x128xf32> to vector<288x128xf32>
    %76 = arith.addf %73, %75 : vector<288x128xf32>
    %c0_96 = arith.constant 0 : index
    %c0_97 = arith.constant 0 : index
    %c0_98 = arith.constant 0 : index
    %77 = vector.load %arg6[%c0_96, %c0_97, %c0_98] : memref<1x288x128xf32, #tpu.memory_space<vmem>>, vector<1x288x128xf32>
    %78 = vector.shape_cast %77 : vector<1x288x128xf32> to vector<288x128xf32>
    %79 = arith.addf %76, %78 : vector<288x128xf32>
    %cst_99 = arith.constant 0.000000e+00 : f32
    %80 = vector.broadcast %cst_99 : f32 to vector<288x128xf32>
    %81 = arith.maximumf %79, %80 : vector<288x128xf32>
    %c0_100 = arith.constant 0 : index
    %c0_101 = arith.constant 0 : index
    %c0_102 = arith.constant 0 : index
    %82 = vector.load %arg7[%c0_100, %c0_101, %c0_102] : memref<1x288x128xf32, #tpu.memory_space<vmem>>, vector<1x288x128xf32>
    %83 = vector.shape_cast %82 : vector<1x288x128xf32> to vector<288x128xf32>
    %84 = vector.shape_cast %81 : vector<288x128xf32> to vector<1x288x128xf32>
    tpu.vector_store %arg7[%c0_100, %c0_101, %c0_102], %84 {strides = array<i32>} : memref<1x288x128xf32, #tpu.memory_space<vmem>>, vector<1x288x128xf32>,
    return
  }
  func.func @transform_0(%arg0: i32, %arg1: i32) -> (i32, i32, i32, i32) {
    %c0_i32 = arith.constant 0 : i32
    %c0_i32_0 = arith.constant 0 : i32
    %c0_i32_1 = arith.constant 0 : i32
    %c0_i32_2 = arith.constant 0 : i32
    return %arg0, %c0_i32, %c0_i32_0, %c0_i32_1 : i32, i32, i32, i32
  }
  func.func @transform_1(%arg0: i32, %arg1: i32) -> (i32, i32, i32) {
    %c0_i32 = arith.constant 0 : i32
    %c0_i32_0 = arith.constant 0 : i32
    %c0_i32_1 = arith.constant 0 : i32
    return %c0_i32, %c0_i32_0, %arg1 : i32, i32, i32
  }
  func.func @transform_2(%arg0: i32, %arg1: i32) -> (i32, i32) {
    %c0_i32 = arith.constant 0 : i32
    %c0_i32_0 = arith.constant 0 : i32
    return %c0_i32, %arg1 : i32, i32
  }
  func.func @transform_3(%arg0: i32, %arg1: i32) -> (i32, i32) {
    %c0_i32 = arith.constant 0 : i32
    %c0_i32_0 = arith.constant 0 : i32
    return %c0_i32, %arg1 : i32, i32
  }
  func.func @transform_4(%arg0: i32, %arg1: i32) -> (i32, i32, i32) {
    %c0_i32 = arith.constant 0 : i32
    %c0_i32_0 = arith.constant 0 : i32
    return %arg0, %c0_i32, %arg1 : i32, i32, i32
  }
  func.func @transform_5(%arg0: i32, %arg1: i32) -> (i32, i32, i32) {
    %c0_i32 = arith.constant 0 : i32
    %c0_i32_0 = arith.constant 0 : i32
    return %arg0, %c0_i32, %arg1 : i32, i32, i32
  }
}

</mosaic_0001>

<llo_original>
// kernel: residual_block_forward.2
$region0: #{residual_block_forward.2}
  #allocation0 [shape = 'u32[]', space=smem, size = 0x4, offset = 0x4, fixed_abs, tag = 'smem constant byte address 0x4 - core index']
  #allocation1 [shape = 'u32[144,128]{1,0:T(1,128)}', space=vmem, size = 0x12000, scoped, tag = 'internal scratch']
  #allocation2 [shape = 'f32[288,128]{1,0:T(8,128)}', space=vmem, size = 0x24000, scoped, tag = 'scratch operand']
  %s0 = inlined_call_operand.vmem [shape: bf16[2,1,336,128], index: 0, kind: input, shape index: {}]
  %s1 = inlined_call_operand.vmem [shape: bf16[9,128,128], index: 1, kind: input, shape index: {}]
  %s2 = inlined_call_operand.vmem [shape: f32[1,128], index: 2, kind: input, shape index: {}]
  %s3 = inlined_call_operand.vmem [shape: f32[1,128], index: 3, kind: input, shape index: {}]
  %s4 = inlined_call_operand.vmem [shape: bf16[2,288,128], index: 4, kind: output, shape index: {}]
  %s5 = sld [smem:[#allocation0]]
  $region49: #{residual_block_forward.2} parent=0
    _
  %s7 = ssub.s32 1, %s5
  %s8 = scalar_select 0, %s7, %s5
  loop: start=0, step=1, limit=4
  $region2: #{residual_block_forward.2} parent=0 // loop_pre_header
    _
  $region3: #{residual_block_forward.2} parent=0 // loop_header
    %s10 = sphi 0, %s14
    %p11 = scmp.ge.s32.totalorder %s10, 4
    %s17 = sphi 0, %s29
    %s18 = sphi 0, %s25
    %s19 = sphi 0, %s17
    %s20 = sphi 0, %s18
    %s21 = sphi 0, %s19
    %s22 = sphi 0, %s20
    %s32 = sphi 0, %s34
    %s35 = sphi 0, %s32
    %s36 = sphi 0, %s35
    %s52 = sphi 0, %s36
    %s58 = sphi 0, %s60
    %s61 = sphi 0, %s58
    %s62 = sphi 0, %s61
    %s78 = sphi 0, %s62
    %s84 = sphi 0, %s86
    %s87 = sphi 0, %s84
    %s88 = sphi 0, %s87
    %s104 = sphi 0, %s88
    %s110 = sphi 0, %s112
    %s113 = sphi 0, %s110
    %s114 = sphi 0, %s113
    %s130 = sphi 0, %s114
    %s138 = sphi 0, %s140
    %s141 = sphi 0, %s138
    %s142 = sphi 0, %s141
    %s158 = sphi 0, %s142
  $region4: #{residual_block_forward.2} parent=0 // loop_header_branch
    %13 = sbr.rel (%p11) target = $region8
  $region5: #{residual_block_forward.2} parent=0 // loop_body
    %s15 = ssub.s32 %s10, 1
    %s16 = ssub.s32 %s10, 2
    %s23 = sadd.s32 1, %s18
    %p24 = scmp.ge.s32.totalorder %s23, 1
    %s25 = scalar_select %p24, 0, %s23
    %s26 = sadd.s32 1, %s17
    %s27 = scalar_select %p24, %s26, %s17
    %p28 = scmp.ge.s32.totalorder %s27, 2
    %s29 = scalar_select %p28, 0, %s27
    %s30 = ssub.s32 %s17, %s29
    %p31 = scmp.eq.s32.totalorder %s30, 0
    %s33 = sadd.s32 %s32, 1
    %s34 = scalar_select %p31, %s32, %s33
    %p37 = pneg %p31
    %p38 = scmp.eq.s32.totalorder %s10, 1
    %p39 = por %p37, %p38
    %p40 = scmp.ne.s32.totalorder %s32, %s35
    %p41 = scmp.eq.s32.totalorder %s10, 0
    %p42 = por %p40, %p41
    %p43 = scmp.ne.s32.totalorder %s32, %s35
    %p44 = scmp.eq.s32.totalorder %s15, 1
    %p45 = por %p43, %p44
    %p46 = scmp.ne.s32.totalorder %s35, %s36
    %p47 = scmp.eq.s32.totalorder %s15, 0
    %p48 = por %p46, %p47
    %p49 = scmp.ne.s32.totalorder %s35, %s36
    %p50 = scmp.eq.s32.totalorder %s16, 1
    %p51 = por %p49, %p50
    %p53 = scmp.ne.s32.totalorder %s36, %s52
    %p54 = scmp.eq.s32.totalorder %s16, 0
    %p55 = por %p53, %p54
    %s56 = ssub.s32 %s18, %s25
    %p57 = scmp.eq.s32.totalorder %s56, 0
    %s59 = sadd.s32 %s58, 1
    %s60 = scalar_select %p57, %s58, %s59
    %p63 = pneg %p57
    %p64 = scmp.eq.s32.totalorder %s10, 1
    %p65 = por %p63, %p64
    %p66 = scmp.ne.s32.totalorder %s58, %s61
    %p67 = scmp.eq.s32.totalorder %s10, 0
    %p68 = por %p66, %p67
    %p69 = scmp.ne.s32.totalorder %s58, %s61
    %p70 = scmp.eq.s32.totalorder %s15, 1
    %p71 = por %p69, %p70
    %p72 = scmp.ne.s32.totalorder %s61, %s62
    %p73 = scmp.eq.s32.totalorder %s15, 0
    %p74 = por %p72, %p73
    %p75 = scmp.ne.s32.totalorder %s61, %s62
    %p76 = scmp.eq.s32.totalorder %s16, 1
    %p77 = por %p75, %p76
    %p79 = scmp.ne.s32.totalorder %s62, %s78
    %p80 = scmp.eq.s32.totalorder %s16, 0
    %p81 = por %p79, %p80
    %s82 = ssub.s32 %s18, %s25
    %p83 = scmp.eq.s32.totalorder %s82, 0
    %s85 = sadd.s32 %s84, 1
    %s86 = scalar_select %p83, %s84, %s85
    %p89 = pneg %p83
    %p90 = scmp.eq.s32.totalorder %s10, 1
    %p91 = por %p89, %p90
    %p92 = scmp.ne.s32.totalorder %s84, %s87
    %p93 = scmp.eq.s32.totalorder %s10, 0
    %p94 = por %p92, %p93
    %p95 = scmp.ne.s32.totalorder %s84, %s87
    %p96 = scmp.eq.s32.totalorder %s15, 1
    %p97 = por %p95, %p96
    %p98 = scmp.ne.s32.totalorder %s87, %s88
    %p99 = scmp.eq.s32.totalorder %s15, 0
    %p100 = por %p98, %p99
    %p101 = scmp.ne.s32.totalorder %s87, %s88
    %p102 = scmp.eq.s32.totalorder %s16, 1
    %p103 = por %p101, %p102
    %p105 = scmp.ne.s32.totalorder %s88, %s104
    %p106 = scmp.eq.s32.totalorder %s16, 0
    %p107 = por %p105, %p106
    %s108 = ssub.s32 %s18, %s25
    %p109 = scmp.eq.s32.totalorder %s108, 0
    %s111 = sadd.s32 %s110, 1
    %s112 = scalar_select %p109, %s110, %s111
    %p115 = pneg %p109
    %p116 = scmp.eq.s32.totalorder %s10, 1
    %p117 = por %p115, %p116
    %p118 = scmp.ne.s32.totalorder %s110, %s113
    %p119 = scmp.eq.s32.totalorder %s10, 0
    %p120 = por %p118, %p119
    %p121 = scmp.ne.s32.totalorder %s110, %s113
    %p122 = scmp.eq.s32.totalorder %s15, 1
    %p123 = por %p121, %p122
    %p124 = scmp.ne.s32.totalorder %s113, %s114
    %p125 = scmp.eq.s32.totalorder %s15, 0
    %p126 = por %p124, %p125
    %p127 = scmp.ne.s32.totalorder %s113, %s114
    %p128 = scmp.eq.s32.totalorder %s16, 1
    %p129 = por %p127, %p128
    %p131 = scmp.ne.s32.totalorder %s114, %s130
    %p132 = scmp.eq.s32.totalorder %s16, 0
    %p133 = por %p131, %p132
    %s134 = ssub.s32 %s17, %s29
    %s135 = ssub.s32 %s18, %s25
    %s136 = sor.u32 %s134, %s135
    %p137 = scmp.eq.s32.totalorder %s136, 0
    %s139 = sadd.s32 %s138, 1
    %s140 = scalar_select %p137, %s138, %s139
    %p143 = pneg %p137
    %p144 = scmp.eq.s32.totalorder %s10, 1
    %p145 = por %p143, %p144
    %p146 = scmp.ne.s32.totalorder %s138, %s141
    %p147 = scmp.eq.s32.totalorder %s10, 0
    %p148 = por %p146, %p147
    %p149 = scmp.ne.s32.totalorder %s138, %s141
    %p150 = scmp.eq.s32.totalorder %s15, 1
    %p151 = por %p149, %p150
    %p152 = scmp.ne.s32.totalorder %s141, %s142
    %p153 = scmp.eq.s32.totalorder %s15, 0
    %p154 = por %p152, %p153
    %p155 = scmp.ne.s32.totalorder %s141, %s142
    %p156 = scmp.eq.s32.totalorder %s16, 1
    %p157 = por %p155, %p156
    %p159 = scmp.ne.s32.totalorder %s142, %s158
    %p160 = scmp.eq.s32.totalorder %s16, 0
    %p161 = por %p159, %p160
    %p162 = scmp.le.s32.totalorder 1, %s10
    %p163 = scmp.lt.s32.totalorder %s10, 3
    %p164 = pnand %p162, %p163
    %p165 = pneg %p164
    // Predicated region
    $region9: #{residual_block_forward.2} parent=5 // pred_check
      _
    $region10: #{residual_block_forward.2} parent=5 // pred_check_branch
      %167 = sbr.rel (%p164) target = $region12
    $region11: #{residual_block_forward.2} parent=5 // pred_region
      %s168 = ssub.s32 %s10, 1
      // Predicated region
      $region13: #{residual_block_forward.2} parent=11 // pred_check
        %p169 = pneg %p74
      $region14: #{residual_block_forward.2} parent=11 // pred_check_branch
        %171 = sbr.rel (%p169) target = $region16
      $region15: #{residual_block_forward.2} parent=11 // pred_region
        %p172 = scmp.lt.s32.totalorder %s20, 0
        %s173 = scalar_select %p172, %s20, 0
        %s174 = smul.addr %s173, 4
        %s175 = scalar_lea.vmem %s1, %s174
      $region16: #{residual_block_forward.2} parent=11 // pred_fallthru
        _
      // Predicated region
      $region17: #{residual_block_forward.2} parent=11 // pred_check
        %p176 = pneg %p100
      $region18: #{residual_block_forward.2} parent=11 // pred_check_branch
        %178 = sbr.rel (%p176) target = $region20
      $region19: #{residual_block_forward.2} parent=11 // pred_region
        %p179 = scmp.lt.s32.totalorder %s20, 0
        %s180 = scalar_select %p179, %s20, 0
        %s181 = scalar_lea.vmem %s2, %s180
      $region20: #{residual_block_forward.2} parent=11 // pred_fallthru
        _
      // Predicated region
      $region21: #{residual_block_forward.2} parent=11 // pred_check
        %p182 = pneg %p126
      $region22: #{residual_block_forward.2} parent=11 // pred_check_branch
        %184 = sbr.rel (%p182) target = $region24
      $region23: #{residual_block_forward.2} parent=11 // pred_region
        %p185 = scmp.lt.s32.totalorder %s20, 0
        %s186 = scalar_select %p185, %s20, 0
        %s187 = scalar_lea.vmem %s3, %s186
      $region24: #{residual_block_forward.2} parent=11 // pred_fallthru
        _
    $region12: #{residual_block_forward.2} parent=5 // pred_fallthru
      _
    %p188 = scmp.lt.s32.totalorder %s10, 2
    // Predicated region
    $region25: #{residual_block_forward.2} parent=5 // pred_check
      %p189 = pneg %p188
    $region26: #{residual_block_forward.2} parent=5 // pred_check_branch
      %191 = sbr.rel (%p189) target = $region28
    $region27: #{residual_block_forward.2} parent=5 // pred_region
      // Predicated region
      $region29: #{residual_block_forward.2} parent=27 // pred_check
        %p192 = pneg %p42
      $region30: #{residual_block_forward.2} parent=27 // pred_check_branch
        %194 = sbr.rel (%p192) target = $region32
      $region31: #{residual_block_forward.2} parent=27 // pred_region
        %p195 = scmp.lt.s32.totalorder %s17, 1
        %s196 = scalar_select %p195, %s17, 1
        %s197 = smul.addr %s196, 42
        %s198 = smul.addr %s197, 4
        %s199 = scalar_lea.vmem %s0, %s198
      $region32: #{residual_block_forward.2} parent=27 // pred_fallthru
        _
    $region28: #{residual_block_forward.2} parent=5 // pred_fallthru
      _
    %p200 = scmp.le.s32.totalorder 1, %s10
    %p201 = scmp.lt.s32.totalorder %s10, 3
    %p202 = pnand %p200, %p201
    %p203 = pneg %p202
    // Predicated region
    $region33: #{residual_block_forward.2} parent=5 // pred_check
      _
    $region34: #{residual_block_forward.2} parent=5 // pred_check_branch
      %205 = sbr.rel (%p202) target = $region36
    $region35: #{residual_block_forward.2} parent=5 // pred_region
      %s206 = ssub.s32 %s10, 1
      %p207 = scmp.lt.s32.totalorder %s19, 1
      %s208 = scalar_select %p207, %s19, 1
      %s209 = smul.addr %s208, 42
      %s210 = smul.addr %s209, 4
      %s211 = scalar_lea.vmem %s0, %s210
      %p212 = pneg %p48
      %p213 = pneg %p45
      %p214 = scmp.lt.s32.totalorder %s20, 0
      %s215 = scalar_select %p214, %s20, 0
      %s216 = smul.addr %s215, 4
      %s217 = scalar_lea.vmem %s1, %s216
      %p218 = pneg %p74
      %p219 = pneg %p71
      %p220 = scmp.lt.s32.totalorder %s20, 0
      %s221 = scalar_select %p220, %s20, 0
      %s222 = scalar_lea.vmem %s2, %s221
      %p223 = pneg %p100
      %p224 = pneg %p97
      %p225 = scmp.lt.s32.totalorder %s20, 0
      %s226 = scalar_select %p225, %s20, 0
      %s227 = scalar_lea.vmem %s3, %s226
      %p228 = pneg %p126
      %p229 = pneg %p123
      %p230 = pneg %p154
      %p231 = pneg %p151
      %p232 = scmp.lt.s32.totalorder %s19, 1
      %s233 = scalar_select %p232, %s19, 1
      %p234 = scmp.lt.s32.totalorder %s20, 0
      %s235 = scalar_select %p234, %s20, 0
      %s236 = smul.addr %s233, 36
      %s237 = sadd.s32 %s235, %s236
      %s238 = smul.addr %s237, 4
      %s239 = scalar_lea.vmem %s4, %s238
      %p240 = scmp.lt.s32.totalorder %s19, 1
      %s241 = scalar_select %p240, %s19, 1
      %s242 = smul.addr %s241, 42
      %s243 = smul.addr %s242, 4
      %s244 = scalar_lea.vmem %s0, %s243
      %p245 = scmp.lt.s32.totalorder %s20, 0
      %s246 = scalar_select %p245, %s20, 0
      %s247 = smul.addr %s246, 4
      %s248 = scalar_lea.vmem %s1, %s247
      %p249 = scmp.lt.s32.totalorder %s20, 0
      %s250 = scalar_select %p249, %s20, 0
      %s251 = scalar_lea.vmem %s2, %s250
      %p252 = scmp.lt.s32.totalorder %s20, 0
      %s253 = scalar_select %p252, %s20, 0
      %s254 = scalar_lea.vmem %s3, %s253
      %p255 = scmp.lt.s32.totalorder %s19, 1
      %s256 = scalar_select %p255, %s19, 1
      %p257 = scmp.lt.s32.totalorder %s20, 0
      %s258 = scalar_select %p257, %s20, 0
      %s259 = smul.addr %s256, 36
      %s260 = sadd.s32 %s258, %s259
      %s261 = smul.addr %s260, 4
      %s262 = scalar_lea.vmem %s4, %s261
      %v264 = vld [vmem:[%s244] sm:$0xf]
      %v265 = vld [vmem:[%s244 + $0x4] sm:$0xf]
      %v266 = vld [vmem:[%s244 + $0x8] sm:$0xf]
      %v267 = vld [vmem:[%s244 + $0xc] sm:$0xf]
      %v268 = vld [vmem:[%s244 + $0x10] sm:$0xf]
      %v269 = vld [vmem:[%s244 + $0x14] sm:$0xf]
      %v270 = vld [vmem:[%s244 + $0x18] sm:$0xf]
      %v271 = vld [vmem:[%s244 + $0x1c] sm:$0xf]
      %v272 = vld [vmem:[%s244 + $0x20] sm:$0xf]
      %v273 = vld [vmem:[%s244 + $0x24] sm:$0xf]
      %v274 = vld [vmem:[%s244 + $0x28] sm:$0xf]
      %v275 = vld [vmem:[%s244 + $0x2c] sm:$0xf]
      %v276 = vld [vmem:[%s244 + $0x30] sm:$0xf]
      %v277 = vld [vmem:[%s244 + $0x34] sm:$0xf]
      %v278 = vld [vmem:[%s244 + $0x38] sm:$0xf]
      %v279 = vld [vmem:[%s244 + $0x3c] sm:$0xf]
      %v280 = vld [vmem:[%s244 + $0x40] sm:$0xf]
      %v281 = vld [vmem:[%s244 + $0x44] sm:$0xf]
      %v282 = vld [vmem:[%s244 + $0x48] sm:$0xf]
      %v283 = vld [vmem:[%s244 + $0x4c] sm:$0xf]
      %v284 = vld [vmem:[%s244 + $0x50] sm:$0xf]
      %v285 = vld [vmem:[%s244 + $0x54] sm:$0xf]
      %v286 = vld [vmem:[%s244 + $0x58] sm:$0xf]
      %v287 = vld [vmem:[%s244 + $0x5c] sm:$0xf]
      %v288 = vld [vmem:[%s244 + $0x60] sm:$0xf]
      %v289 = vld [vmem:[%s244 + $0x64] sm:$0xf]
      %v290 = vld [vmem:[%s244 + $0x68] sm:$0xf]
      %v291 = vld [vmem:[%s244 + $0x6c] sm:$0xf]
      %v292 = vld [vmem:[%s244 + $0x70] sm:$0xf]
      %v293 = vld [vmem:[%s244 + $0x74] sm:$0xf]
      %v294 = vld [vmem:[%s244 + $0x78] sm:$0xf]
      %v295 = vld [vmem:[%s244 + $0x7c] sm:$0xf]
      %v296 = vld [vmem:[%s244 + $0x80] sm:$0xf]
      %v297 = vld [vmem:[%s244 + $0x84] sm:$0xf]
      %v298 = vld [vmem:[%s244 + $0x88] sm:$0xf]
      %v299 = vld [vmem:[%s244 + $0x8c] sm:$0xf]
      %v300 = vld [vmem:[%s248] sm:$0xf]
      %v301 = vld [vmem:[%s248 + $0x4] sm:$0xf]
      %v302 = vld [vmem:[%s248 + $0x8] sm:$0xf]
      %v303 = vld [vmem:[%s248 + $0xc] sm:$0xf]
      %v304 = vld [vmem:[%s248 + $0x10] sm:$0xf]
      %v305 = vld [vmem:[%s248 + $0x14] sm:$0xf]
      %v306 = vld [vmem:[%s248 + $0x18] sm:$0xf]
      %v307 = vld [vmem:[%s248 + $0x1c] sm:$0xf]
      %v308 = vld [vmem:[%s248 + $0x20] sm:$0xf]
      %v309 = vld [vmem:[%s248 + $0x24] sm:$0xf]
      %v310 = vld [vmem:[%s248 + $0x28] sm:$0xf]
      %v311 = vld [vmem:[%s248 + $0x2c] sm:$0xf]
      %v312 = vld [vmem:[%s248 + $0x30] sm:$0xf]
      %v313 = vld [vmem:[%s248 + $0x34] sm:$0xf]
      %v314 = vld [vmem:[%s248 + $0x38] sm:$0xf]
      %v315 = vld [vmem:[%s248 + $0x3c] sm:$0xf]
      %v352 = vunpack.c.l.b16 %v264
      %v353 = vunpack.c.l.b16 %v265
      %v354 = vunpack.c.l.b16 %v266
      %v355 = vunpack.c.l.b16 %v267
      %v356 = vunpack.c.l.b16 %v268
      %v357 = vunpack.c.l.b16 %v269
      %v358 = vunpack.c.l.b16 %v270
      %v359 = vunpack.c.l.b16 %v271
      %v360 = vunpack.c.l.b16 %v272
      %v361 = vunpack.c.l.b16 %v273
      %v362 = vunpack.c.l.b16 %v274
      %v363 = vunpack.c.l.b16 %v275
      %v364 = vunpack.c.l.b16 %v276
      %v365 = vunpack.c.l.b16 %v277
      %v366 = vunpack.c.l.b16 %v278
      %v367 = vunpack.c.l.b16 %v279
      %v368 = vunpack.c.l.b16 %v280
      %v369 = vunpack.c.l.b16 %v281
      %v370 = vunpack.c.l.b16 %v282
      %v371 = vunpack.c.l.b16 %v283
      %v372 = vunpack.c.l.b16 %v284
      %v373 = vunpack.c.l.b16 %v285
      %v374 = vunpack.c.l.b16 %v286
      %v375 = vunpack.c.l.b16 %v287
      %v376 = vunpack.c.l.b16 %v288
      %v377 = vunpack.c.l.b16 %v289
      %v378 = vunpack.c.l.b16 %v290
      %v379 = vunpack.c.l.b16 %v291
      %v380 = vunpack.c.l.b16 %v292
      %v381 = vunpack.c.l.b16 %v293
      %v382 = vunpack.c.l.b16 %v294
      %v383 = vunpack.c.l.b16 %v295
      %v384 = vunpack.c.l.b16 %v296
      %v385 = vunpack.c.l.b16 %v297
      %v386 = vunpack.c.l.b16 %v298
      %v387 = vunpack.c.l.b16 %v299
      %v388 = vpack.c.b16 %v353, %v352
      %v389 = vpack.c.b16 %v355, %v354
      %v390 = vpack.c.b16 %v357, %v356
      %v391 = vpack.c.b16 %v359, %v358
      %v392 = vpack.c.b16 %v361, %v360
      %v393 = vpack.c.b16 %v363, %v362
      %v394 = vpack.c.b16 %v365, %v364
      %v395 = vpack.c.b16 %v367, %v366
      %v396 = vpack.c.b16 %v369, %v368
      %v397 = vpack.c.b16 %v371, %v370
      %v398 = vpack.c.b16 %v373, %v372
      %v399 = vpack.c.b16 %v375, %v374
      %v400 = vpack.c.b16 %v377, %v376
      %v401 = vpack.c.b16 %v379, %v378
      %v402 = vpack.c.b16 %v381, %v380
      %v403 = vpack.c.b16 %v383, %v382
      %v404 = vpack.c.b16 %v385, %v384
      %v405 = vpack.c.b16 %v387, %v386
      %v440 = vunpack.c.l.b16 %v300
      %v441 = vunpack.c.l.b16 %v301
      %v442 = vunpack.c.l.b16 %v302
      %v443 = vunpack.c.l.b16 %v303
      %v444 = vunpack.c.l.b16 %v304
      %v445 = vunpack.c.l.b16 %v305
      %v446 = vunpack.c.l.b16 %v306
      %v447 = vunpack.c.l.b16 %v307
      %v448 = vunpack.c.l.b16 %v308
      %v449 = vunpack.c.l.b16 %v309
      %v450 = vunpack.c.l.b16 %v310
      %v451 = vunpack.c.l.b16 %v311
      %v452 = vunpack.c.l.b16 %v312
      %v453 = vunpack.c.l.b16 %v313
      %v454 = vunpack.c.l.b16 %v314
      %v455 = vunpack.c.l.b16 %v315
      %v456 = vpack.c.b16 %v441, %v440
      %v457 = vpack.c.b16 %v443, %v442
      %v458 = vpack.c.b16 %v445, %v444
      %v459 = vpack.c.b16 %v447, %v446
      %v460 = vpack.c.b16 %v449, %v448
      %v461 = vpack.c.b16 %v451, %v450
      %v462 = vpack.c.b16 %v453, %v452
      %v463 = vpack.c.b16 %v455, %v454
      %472 = vmatprep.subr.bf16.mxu0 0
      %473 = vmatpush1.bf16.msra.mxu0 %v463
      %474 = vmatprep.subr.bf16.mxu0 0
      %475 = vmatpush1.bf16.msra.mxu0 %v462
      %476 = vmatprep.subr.bf16.mxu0 0
      %477 = vmatpush1.bf16.msra.mxu0 %v461
      %478 = vmatprep.subr.bf16.mxu0 0
      %479 = vmatpush1.bf16.msra.mxu0 %v460
      %480 = vmatprep.subr.bf16.mxu0 0
      %481 = vmatpush1.bf16.msra.mxu0 %v459
      %482 = vmatprep.subr.bf16.mxu0 0
      %483 = vmatpush1.bf16.msra.mxu0 %v458
      %484 = vmatprep.subr.bf16.mxu0 0
      %485 = vmatpush1.bf16.msra.mxu0 %v457
      %486 = vmatprep.subr.bf16.mxu0 0
      %487 = vmatpush1.bf16.msra.mxu0 %v456
      %488 = vmatprep.subr.bf16.mxu0 0
      %489 = vmatpush2.bf16.msra.mxu0 0
      %490 = vmatprep.subr.bf16.mxu0 0
      %491 = vmatpush2.bf16.msra.mxu0 0
      %492 = vmatprep.subr.bf16.mxu0 0
      %493 = vmatpush2.bf16.msra.mxu0 0
      %494 = vmatprep.subr.bf16.mxu0 0
      %495 = vmatpush2.bf16.msra.mxu0 0
      %496 = vmatprep.subr.bf16.mxu0 0
      %497 = vmatpush2.bf16.msra.mxu0 0
      %498 = vmatprep.subr.bf16.mxu0 0
      %499 = vmatpush2.bf16.msra.mxu0 0
      %500 = vmatprep.subr.bf16.mxu0 0
      %501 = vmatpush2.bf16.msra.mxu0 0
      %502 = vmatprep.subr.bf16.mxu0 0
      %503 = vmatpush2.bf16.msra.mxu0 0
      %504 = vmatprep.mubr.bf16.mxu0 0
      %505 = vmatmul.mubr.bf16.gmra.mxu0 %v388
      %v506 = vpop.f32.mrf.mxu0
      %v507 = vadd.f32 0.0, %v506
      %v508 = vpop.f32.mrf.mxu0
      %v509 = vpop.f32.mrf.mxu0
      %v510 = vadd.f32 0.0, %v509
      %v511 = vpop.f32.mrf.mxu0
      %512 = vmatprep.mubr.bf16.mxu0 0
      %513 = vmatmul.mubr.bf16.gmra.mxu0 %v389
      %v514 = vpop.f32.mrf.mxu0
      %v515 = vadd.f32 0.0, %v514
      %v516 = vpop.f32.mrf.mxu0
      %v517 = vpop.f32.mrf.mxu0
      %v518 = vadd.f32 0.0, %v517
      %v519 = vpop.f32.mrf.mxu0
      %520 = vmatprep.mubr.bf16.mxu0 0
      %521 = vmatmul.mubr.bf16.gmra.mxu0 %v390
      %v522 = vpop.f32.mrf.mxu0
      %v523 = vadd.f32 0.0, %v522
      %v524 = vpop.f32.mrf.mxu0
      %v525 = vpop.f32.mrf.mxu0
      %v526 = vadd.f32 0.0, %v525
      %v527 = vpop.f32.mrf.mxu0
      %528 = vmatprep.mubr.bf16.mxu0 0
      %529 = vmatmul.mubr.bf16.gmra.mxu0 %v391
      %v530 = vpop.f32.mrf.mxu0
      %v531 = vadd.f32 0.0, %v530
      %v532 = vpop.f32.mrf.mxu0
      %v533 = vpop.f32.mrf.mxu0
      %v534 = vadd.f32 0.0, %v533
      %v535 = vpop.f32.mrf.mxu0
      %536 = vmatprep.mubr.bf16.mxu0 0
      %537 = vmatmul.mubr.bf16.gmra.mxu0 %v392
      %v538 = vpop.f32.mrf.mxu0
      %v539 = vadd.f32 0.0, %v538
      %v540 = vpop.f32.mrf.mxu0
      %v541 = vpop.f32.mrf.mxu0
      %v542 = vadd.f32 0.0, %v541
      %v543 = vpop.f32.mrf.mxu0
      %544 = vmatprep.mubr.bf16.mxu0 0
      %545 = vmatmul.mubr.bf16.gmra.mxu0 %v393
      %v546 = vpop.f32.mrf.mxu0
      %v547 = vadd.f32 0.0, %v546
      %v548 = vpop.f32.mrf.mxu0
      %v549 = vpop.f32.mrf.mxu0
      %v550 = vadd.f32 0.0, %v549
      %v551 = vpop.f32.mrf.mxu0
      %552 = vmatprep.mubr.bf16.mxu0 0
      %553 = vmatmul.mubr.bf16.gmra.mxu0 %v394
      %v554 = vpop.f32.mrf.mxu0
      %v555 = vadd.f32 0.0, %v554
      %v556 = vpop.f32.mrf.mxu0
      %v557 = vpop.f32.mrf.mxu0
      %v558 = vadd.f32 0.0, %v557
      %v559 = vpop.f32.mrf.mxu0
      %560 = vmatprep.mubr.bf16.mxu0 0
      %561 = vmatmul.mubr.bf16.gmra.mxu0 %v395
      %v562 = vpop.f32.mrf.mxu0
      %v563 = vadd.f32 0.0, %v562
      %v564 = vpop.f32.mrf.mxu0
      %v565 = vpop.f32.mrf.mxu0
      %v566 = vadd.f32 0.0, %v565
      %v567 = vpop.f32.mrf.mxu0
      %568 = vmatprep.mubr.bf16.mxu0 0
      %569 = vmatmul.mubr.bf16.gmra.mxu0 %v396
      %v570 = vpop.f32.mrf.mxu0
      %v571 = vadd.f32 0.0, %v570
      %v572 = vpop.f32.mrf.mxu0
      %v573 = vpop.f32.mrf.mxu0
      %v574 = vadd.f32 0.0, %v573
      %v575 = vpop.f32.mrf.mxu0
      %576 = vmatprep.mubr.bf16.mxu0 0
      %577 = vmatmul.mubr.bf16.gmra.mxu0 %v397
      %v578 = vpop.f32.mrf.mxu0
      %v579 = vadd.f32 0.0, %v578
      %v580 = vpop.f32.mrf.mxu0
      %v581 = vpop.f32.mrf.mxu0
      %v582 = vadd.f32 0.0, %v581
      %v583 = vpop.f32.mrf.mxu0
      %584 = vmatprep.mubr.bf16.mxu0 0
      %585 = vmatmul.mubr.bf16.gmra.mxu0 %v398
      %v586 = vpop.f32.mrf.mxu0
      %v587 = vadd.f32 0.0, %v586
      %v588 = vpop.f32.mrf.mxu0
      %v589 = vpop.f32.mrf.mxu0
      %v590 = vadd.f32 0.0, %v589
      %v591 = vpop.f32.mrf.mxu0
      %592 = vmatprep.mubr.bf16.mxu0 0
      %593 = vmatmul.mubr.bf16.gmra.mxu0 %v399
      %v594 = vpop.f32.mrf.mxu0
      %v595 = vadd.f32 0.0, %v594
      %v596 = vpop.f32.mrf.mxu0
      %v597 = vpop.f32.mrf.mxu0
      %v598 = vadd.f32 0.0, %v597
      %v599 = vpop.f32.mrf.mxu0
      %600 = vmatprep.mubr.bf16.mxu0 0
      %601 = vmatmul.mubr.bf16.gmra.mxu0 %v400
      %v602 = vpop.f32.mrf.mxu0
      %v603 = vadd.f32 0.0, %v602
      %v604 = vpop.f32.mrf.mxu0
      %v605 = vpop.f32.mrf.mxu0
      %v606 = vadd.f32 0.0, %v605
      %v607 = vpop.f32.mrf.mxu0
      %608 = vmatprep.mubr.bf16.mxu0 0
      %609 = vmatmul.mubr.bf16.gmra.mxu0 %v401
      %v610 = vpop.f32.mrf.mxu0
      %v611 = vadd.f32 0.0, %v610
      %v612 = vpop.f32.mrf.mxu0
      %v613 = vpop.f32.mrf.mxu0
      %v614 = vadd.f32 0.0, %v613
      %v615 = vpop.f32.mrf.mxu0
      %616 = vmatprep.mubr.bf16.mxu0 0
      %617 = vmatmul.mubr.bf16.gmra.mxu0 %v402
      %v618 = vpop.f32.mrf.mxu0
      %v619 = vadd.f32 0.0, %v618
      %v620 = vpop.f32.mrf.mxu0
      %v621 = vpop.f32.mrf.mxu0
      %v622 = vadd.f32 0.0, %v621
      %v623 = vpop.f32.mrf.mxu0
      %624 = vmatprep.mubr.bf16.mxu0 0
      %625 = vmatmul.mubr.bf16.gmra.mxu0 %v403
      %v626 = vpop.f32.mrf.mxu0
      %v627 = vadd.f32 0.0, %v626
      %v628 = vpop.f32.mrf.mxu0
      %v629 = vpop.f32.mrf.mxu0
      %v630 = vadd.f32 0.0, %v629
      %v631 = vpop.f32.mrf.mxu0
      %632 = vmatprep.mubr.bf16.mxu0 0
      %633 = vmatmul.mubr.bf16.gmra.mxu0 %v404
      %v634 = vpop.f32.mrf.mxu0
      %v635 = vadd.f32 0.0, %v634
      %v636 = vpop.f32.mrf.mxu0
      %v637 = vpop.f32.mrf.mxu0
      %v638 = vadd.f32 0.0, %v637
      %v639 = vpop.f32.mrf.mxu0
      %640 = vmatprep.mubr.bf16.mxu0 0
      %641 = vmatmul.mubr.bf16.gmra.mxu0 %v405
      %v642 = vpop.f32.mrf.mxu0
      %v643 = vadd.f32 0.0, %v642
      %v644 = vpop.f32.mrf.mxu0
      %v645 = vpop.f32.mrf.mxu0
      %v646 = vadd.f32 0.0, %v645
      %v647 = vpop.f32.mrf.mxu0
      %648 = vdwg.mxu0
      %649 = vst [vmem:[#allocation2] sm:$0xff] %v507
      %650 = vst [vmem:[#allocation2 + $0x8] sm:$0xff] %v510
      %651 = vst [vmem:[#allocation2 + $0x10] sm:$0xff] %v515
      %652 = vst [vmem:[#allocation2 + $0x18] sm:$0xff] %v518
      %653 = vst [vmem:[#allocation2 + $0x20] sm:$0xff] %v523
      %654 = vst [vmem:[#allocation2 + $0x28] sm:$0xff] %v526
      %655 = vst [vmem:[#allocation2 + $0x30] sm:$0xff] %v531
      %656 = vst [vmem:[#allocation2 + $0x38] sm:$0xff] %v534
      %657 = vst [vmem:[#allocation2 + $0x40] sm:$0xff] %v539
      %658 = vst [vmem:[#allocation2 + $0x48] sm:$0xff] %v542
      %659 = vst [vmem:[#allocation2 + $0x50] sm:$0xff] %v547
      %660 = vst [vmem:[#allocation2 + $0x58] sm:$0xff] %v550
      %661 = vst [vmem:[#allocation2 + $0x60] sm:$0xff] %v555
      %662 = vst [vmem:[#allocation2 + $0x68] sm:$0xff] %v558
      %663 = vst [vmem:[#allocation2 + $0x70] sm:$0xff] %v563
      %664 = vst [vmem:[#allocation2 + $0x78] sm:$0xff] %v566
      %665 = vst [vmem:[#allocation2 + $0x80] sm:$0xff] %v571
      %666 = vst [vmem:[#allocation2 + $0x88] sm:$0xff] %v574
      %667 = vst [vmem:[#allocation2 + $0x90] sm:$0xff] %v579
      %668 = vst [vmem:[#allocation2 + $0x98] sm:$0xff] %v582
      %669 = vst [vmem:[#allocation2 + $0xa0] sm:$0xff] %v587
      %670 = vst [vmem:[#allocation2 + $0xa8] sm:$0xff] %v590
      %671 = vst [vmem:[#allocation2 + $0xb0] sm:$0xff] %v595
      %672 = vst [vmem:[#allocation2 + $0xb8] sm:$0xff] %v598
      %673 = vst [vmem:[#allocation2 + $0xc0] sm:$0xff] %v603
      %674 = vst [vmem:[#allocation2 + $0xc8] sm:$0xff] %v606
      %675 = vst [vmem:[#allocation2 + $0xd0] sm:$0xff] %v611
      %676 = vst [vmem:[#allocation2 + $0xd8] sm:$0xff] %v614
      %677 = vst [vmem:[#allocation2 + $0xe0] sm:$0xff] %v619
      %678 = vst [vmem:[#allocation2 + $0xe8] sm:$0xff] %v622
      %679 = vst [vmem:[#allocation2 + $0xf0] sm:$0xff] %v627
      %680 = vst [vmem:[#allocation2 + $0xf8] sm:$0xff] %v630
      %681 = vst [vmem:[#allocation2 + $0x100] sm:$0xff] %v635
      %682 = vst [vmem:[#allocation2 + $0x108] sm:$0xff] %v638
      %683 = vst [vmem:[#allocation2 + $0x110] sm:$0xff] %v643
      %684 = vst [vmem:[#allocation2 + $0x118] sm:$0xff] %v646
      %v685 = vld [vmem:[%s244] sm:$0xf]
      %v686 = vld [vmem:[%s244 + $0x4] sm:$0xf]
      %v687 = vld [vmem:[%s244 + $0x8] sm:$0xf]
      %v688 = vld [vmem:[%s244 + $0xc] sm:$0xf]
      %v689 = vld [vmem:[%s244 + $0x10] sm:$0xf]
      %v690 = vld [vmem:[%s244 + $0x14] sm:$0xf]
      %v691 = vld [vmem:[%s244 + $0x18] sm:$0xf]
      %v692 = vld [vmem:[%s244 + $0x1c] sm:$0xf]
      %v693 = vld [vmem:[%s244 + $0x20] sm:$0xf]
      %v694 = vld [vmem:[%s244 + $0x24] sm:$0xf]
      %v695 = vld [vmem:[%s244 + $0x28] sm:$0xf]
      %v696 = vld [vmem:[%s244 + $0x2c] sm:$0xf]
      %v697 = vld [vmem:[%s244 + $0x30] sm:$0xf]
      %v698 = vld [vmem:[%s244 + $0x34] sm:$0xf]
      %v699 = vld [vmem:[%s244 + $0x38] sm:$0xf]
      %v700 = vld [vmem:[%s244 + $0x3c] sm:$0xf]
      %v701 = vld [vmem:[%s244 + $0x40] sm:$0xf]
      %v702 = vld [vmem:[%s244 + $0x44] sm:$0xf]
      %v703 = vld [vmem:[%s244 + $0x48] sm:$0xf]
      %v704 = vld [vmem:[%s244 + $0x4c] sm:$0xf]
      %v705 = vld [vmem:[%s244 + $0x50] sm:$0xf]
      %v706 = vld [vmem:[%s244 + $0x54] sm:$0xf]
      %v707 = vld [vmem:[%s244 + $0x58] sm:$0xf]
      %v708 = vld [vmem:[%s244 + $0x5c] sm:$0xf]
      %v709 = vld [vmem:[%s244 + $0x60] sm:$0xf]
      %v710 = vld [vmem:[%s244 + $0x64] sm:$0xf]
      %v711 = vld [vmem:[%s244 + $0x68] sm:$0xf]
      %v712 = vld [vmem:[%s244 + $0x6c] sm:$0xf]
      %v713 = vld [vmem:[%s244 + $0x70] sm:$0xf]
      %v714 = vld [vmem:[%s244 + $0x74] sm:$0xf]
      %v715 = vld [vmem:[%s244 + $0x78] sm:$0xf]
      %v716 = vld [vmem:[%s244 + $0x7c] sm:$0xf]
      %v717 = vld [vmem:[%s244 + $0x80] sm:$0xf]
      %v718 = vld [vmem:[%s244 + $0x84] sm:$0xf]
      %v719 = vld [vmem:[%s244 + $0x88] sm:$0xf]
      %v720 = vld [vmem:[%s244 + $0x8c] sm:$0xf]
      %v721 = vld [vmem:[%s244 + $0x90] sm:$0x1]
      %s722 = scalar_lea.vmem %s248, 64
      %v723 = vld [vmem:[%s722] sm:$0xf]
      %v724 = vld [vmem:[%s722 + $0x4] sm:$0xf]
      %v725 = vld [vmem:[%s722 + $0x8] sm:$0xf]
      %v726 = vld [vmem:[%s722 + $0xc] sm:$0xf]
      %v727 = vld [vmem:[%s722 + $0x10] sm:$0xf]
      %v728 = vld [vmem:[%s722 + $0x14] sm:$0xf]
      %v729 = vld [vmem:[%s722 + $0x18] sm:$0xf]
      %v730 = vld [vmem:[%s722 + $0x1c] sm:$0xf]
      %v731 = vld [vmem:[%s722 + $0x20] sm:$0xf]
      %v732 = vld [vmem:[%s722 + $0x24] sm:$0xf]
      %v733 = vld [vmem:[%s722 + $0x28] sm:$0xf]
      %v734 = vld [vmem:[%s722 + $0x2c] sm:$0xf]
      %v735 = vld [vmem:[%s722 + $0x30] sm:$0xf]
      %v736 = vld [vmem:[%s722 + $0x34] sm:$0xf]
      %v737 = vld [vmem:[%s722 + $0x38] sm:$0xf]
      %v738 = vld [vmem:[%s722 + $0x3c] sm:$0xf]
      %v776 = vunpack.c.l.b16 %v685
      %v777 = vunpack.c.l.b16 %v686
      %v778 = vunpack.c.l.b16 %v687
      %v779 = vunpack.c.l.b16 %v688
      %v780 = vunpack.c.l.b16 %v689
      %v781 = vunpack.c.l.b16 %v690
      %v782 = vunpack.c.l.b16 %v691
      %v783 = vunpack.c.l.b16 %v692
      %v784 = vunpack.c.l.b16 %v693
      %v785 = vunpack.c.l.b16 %v694
      %v786 = vunpack.c.l.b16 %v695
      %v787 = vunpack.c.l.b16 %v696
      %v788 = vunpack.c.l.b16 %v697
      %v789 = vunpack.c.l.b16 %v698
      %v790 = vunpack.c.l.b16 %v699
      %v791 = vunpack.c.l.b16 %v700
      %v792 = vunpack.c.l.b16 %v701
      %v793 = vunpack.c.l.b16 %v702
      %v794 = vunpack.c.l.b16 %v703
      %v795 = vunpack.c.l.b16 %v704
      %v796 = vunpack.c.l.b16 %v705
      %v797 = vunpack.c.l.b16 %v706
      %v798 = vunpack.c.l.b16 %v707
      %v799 = vunpack.c.l.b16 %v708
      %v800 = vunpack.c.l.b16 %v709
      %v801 = vunpack.c.l.b16 %v710
      %v802 = vunpack.c.l.b16 %v711
      %v803 = vunpack.c.l.b16 %v712
      %v804 = vunpack.c.l.b16 %v713
      %v805 = vunpack.c.l.b16 %v714
      %v806 = vunpack.c.l.b16 %v715
      %v807 = vunpack.c.l.b16 %v716
      %v808 = vunpack.c.l.b16 %v717
      %v809 = vunpack.c.l.b16 %v718
      %v810 = vunpack.c.l.b16 %v719
      %v811 = vunpack.c.l.b16 %v720
      %v812 = vunpack.c.l.b16 %v721
      %v813 = vpack.c.b16 %v777, %v776
      %v814 = vpack.c.b16 %v779, %v778
      %v815 = vpack.c.b16 %v781, %v780
      %v816 = vpack.c.b16 %v783, %v782
      %v817 = vpack.c.b16 %v785, %v784
      %v818 = vpack.c.b16 %v787, %v786
      %v819 = vpack.c.b16 %v789, %v788
      %v820 = vpack.c.b16 %v791, %v790
      %v821 = vpack.c.b16 %v793, %v792
      %v822 = vpack.c.b16 %v795, %v794
      %v823 = vpack.c.b16 %v797, %v796
      %v824 = vpack.c.b16 %v799, %v798
      %v825 = vpack.c.b16 %v801, %v800
      %v826 = vpack.c.b16 %v803, %v802
      %v827 = vpack.c.b16 %v805, %v804
      %v828 = vpack.c.b16 %v807, %v806
      %v829 = vpack.c.b16 %v809, %v808
      %v830 = vpack.c.b16 %v811, %v810
      %v831 = vpack.c.b16 %v812, %v812
      %vm832 = vsmask.f32 7424
      %v834 = vshrl.u32 %v813, 16
      %v836 = vshll.u32 %v813, 16
      %v838 = vrot.slane %v836, 1
      %v839 = vor.u32 %v834, %v838
      %v841 = vshll.u32 %v814, 16
      %v843 = vrot.slane %v841, 1
      %v844 = vsel %vm832, %v839, %v843
      %v845 = vshrl.u32 %v814, 16
      %v847 = vor.u32 %v845, %v843
      %v849 = vshll.u32 %v815, 16
      %v851 = vrot.slane %v849, 1
      %v852 = vsel %vm832, %v847, %v851
      %v853 = vshrl.u32 %v815, 16
      %v855 = vor.u32 %v853, %v851
      %v857 = vshll.u32 %v816, 16
      %v859 = vrot.slane %v857, 1
      %v860 = vsel %vm832, %v855, %v859
      %v861 = vshrl.u32 %v816, 16
      %v863 = vor.u32 %v861, %v859
      %v865 = vshll.u32 %v817, 16
      %v867 = vrot.slane %v865, 1
      %v868 = vsel %vm832, %v863, %v867
      %v869 = vshrl.u32 %v817, 16
      %v871 = vor.u32 %v869, %v867
      %v873 = vshll.u32 %v818, 16
      %v875 = vrot.slane %v873, 1
      %v876 = vsel %vm832, %v871, %v875
      %v877 = vshrl.u32 %v818, 16
      %v879 = vor.u32 %v877, %v875
      %v881 = vshll.u32 %v819, 16
      %v883 = vrot.slane %v881, 1
      %v884 = vsel %vm832, %v879, %v883
      %v885 = vshrl.u32 %v819, 16
      %v887 = vor.u32 %v885, %v883
      %v889 = vshll.u32 %v820, 16
      %v891 = vrot.slane %v889, 1
      %v892 = vsel %vm832, %v887, %v891
      %v893 = vshrl.u32 %v820, 16
      %v895 = vor.u32 %v893, %v891
      %v897 = vshll.u32 %v821, 16
      %v899 = vrot.slane %v897, 1
      %v900 = vsel %vm832, %v895, %v899
      %v901 = vshrl.u32 %v821, 16
      %v903 = vor.u32 %v901, %v899
      %v905 = vshll.u32 %v822, 16
      %v907 = vrot.slane %v905, 1
      %v908 = vsel %vm832, %v903, %v907
      %v909 = vshrl.u32 %v822, 16
      %v911 = vor.u32 %v909, %v907
      %v913 = vshll.u32 %v823, 16
      %v915 = vrot.slane %v913, 1
      %v916 = vsel %vm832, %v911, %v915
      %v917 = vshrl.u32 %v823, 16
      %v919 = vor.u32 %v917, %v915
      %v921 = vshll.u32 %v824, 16
      %v923 = vrot.slane %v921, 1
      %v924 = vsel %vm832, %v919, %v923
      %v925 = vshrl.u32 %v824, 16
      %v927 = vor.u32 %v925, %v923
      %v929 = vshll.u32 %v825, 16
      %v931 = vrot.slane %v929, 1
      %v932 = vsel %vm832, %v927, %v931
      %v933 = vshrl.u32 %v825, 16
      %v935 = vor.u32 %v933, %v931
      %v937 = vshll.u32 %v826, 16
      %v939 = vrot.slane %v937, 1
      %v940 = vsel %vm832, %v935, %v939
      %v941 = vshrl.u32 %v826, 16
      %v943 = vor.u32 %v941, %v939
      %v945 = vshll.u32 %v827, 16
      %v947 = vrot.slane %v945, 1
      %v948 = vsel %vm832, %v943, %v947
      %v949 = vshrl.u32 %v827, 16
      %v951 = vor.u32 %v949, %v947
      %v953 = vshll.u32 %v828, 16
      %v955 = vrot.slane %v953, 1
      %v956 = vsel %vm832, %v951, %v955
      %v957 = vshrl.u32 %v828, 16
      %v959 = vor.u32 %v957, %v955
      %v961 = vshll.u32 %v829, 16
      %v963 = vrot.slane %v961, 1
      %v964 = vsel %vm832, %v959, %v963
      %v965 = vshrl.u32 %v829, 16
      %v967 = vor.u32 %v965, %v963
      %v969 = vshll.u32 %v830, 16
      %v971 = vrot.slane %v969, 1
      %v972 = vsel %vm832, %v967, %v971
      %v973 = vshrl.u32 %v830, 16
      %v975 = vor.u32 %v973, %v971
      %v977 = vshll.u32 %v831, 16
      %v979 = vrot.slane %v977, 1
      %v980 = vsel %vm832, %v975, %v979
      %v1015 = vunpack.c.l.b16 %v723
      %v1016 = vunpack.c.l.b16 %v724
      %v1017 = vunpack.c.l.b16 %v725
      %v1018 = vunpack.c.l.b16 %v726
      %v1019 = vunpack.c.l.b16 %v727
      %v1020 = vunpack.c.l.b16 %v728
      %v1021 = vunpack.c.l.b16 %v729
      %v1022 = vunpack.c.l.b16 %v730
      %v1023 = vunpack.c.l.b16 %v731
      %v1024 = vunpack.c.l.b16 %v732
      %v1025 = vunpack.c.l.b16 %v733
      %v1026 = vunpack.c.l.b16 %v734
      %v1027 = vunpack.c.l.b16 %v735
      %v1028 = vunpack.c.l.b16 %v736
      %v1029 = vunpack.c.l.b16 %v737
      %v1030 = vunpack.c.l.b16 %v738
      %v1031 = vpack.c.b16 %v1016, %v1015
      %v1032 = vpack.c.b16 %v1018, %v1017
      %v1033 = vpack.c.b16 %v1020, %v1019
      %v1034 = vpack.c.b16 %v1022, %v1021
      %v1035 = vpack.c.b16 %v1024, %v1023
      %v1036 = vpack.c.b16 %v1026, %v1025
      %v1037 = vpack.c.b16 %v1028, %v1027
      %v1038 = vpack.c.b16 %v1030, %v1029
      %1047 = vmatprep.subr.bf16.mxu0 0
      %1048 = vmatpush1.bf16.msra.mxu0 %v1038
      %1049 = vmatprep.subr.bf16.mxu0 0
      %1050 = vmatpush1.bf16.msra.mxu0 %v1037
      %1051 = vmatprep.subr.bf16.mxu0 0
      %1052 = vmatpush1.bf16.msra.mxu0 %v1036
      %1053 = vmatprep.subr.bf16.mxu0 0
      %1054 = vmatpush1.bf16.msra.mxu0 %v1035
      %1055 = vmatprep.subr.bf16.mxu0 0
      %1056 = vmatpush1.bf16.msra.mxu0 %v1034
      %1057 = vmatprep.subr.bf16.mxu0 0
      %1058 = vmatpush1.bf16.msra.mxu0 %v1033
      %1059 = vmatprep.subr.bf16.mxu0 0
      %1060 = vmatpush1.bf16.msra.mxu0 %v1032
      %1061 = vmatprep.subr.bf16.mxu0 0
      %1062 = vmatpush1.bf16.msra.mxu0 %v1031
      %1063 = vmatprep.subr.bf16.mxu0 0
      %1064 = vmatpush2.bf16.msra.mxu0 0
      %1065 = vmatprep.subr.bf16.mxu0 0
      %1066 = vmatpush2.bf16.msra.mxu0 0
      %1067 = vmatprep.subr.bf16.mxu0 0
      %1068 = vmatpush2.bf16.msra.mxu0 0
      %1069 = vmatprep.subr.bf16.mxu0 0
      %1070 = vmatpush2.bf16.msra.mxu0 0
      %1071 = vmatprep.subr.bf16.mxu0 0
      %1072 = vmatpush2.bf16.msra.mxu0 0
      %1073 = vmatprep.subr.bf16.mxu0 0
      %1074 = vmatpush2.bf16.msra.mxu0 0
      %1075 = vmatprep.subr.bf16.mxu0 0
      %1076 = vmatpush2.bf16.msra.mxu0 0
      %1077 = vmatprep.subr.bf16.mxu0 0
      %1078 = vmatpush2.bf16.msra.mxu0 0
      %1079 = vmatprep.mubr.bf16.mxu0 0
      %1080 = vmatmul.mubr.bf16.gmra.mxu0 %v844
      %v1081 = vpop.f32.mrf.mxu0
      %v1082 = vadd.f32 0.0, %v1081
      %v1083 = vpop.f32.mrf.mxu0
      %v1084 = vpop.f32.mrf.mxu0
      %v1085 = vadd.f32 0.0, %v1084
      %v1086 = vpop.f32.mrf.mxu0
      %1087 = vmatprep.mubr.bf16.mxu0 0
      %1088 = vmatmul.mubr.bf16.gmra.mxu0 %v852
      %v1089 = vpop.f32.mrf.mxu0
      %v1090 = vadd.f32 0.0, %v1089
      %v1091 = vpop.f32.mrf.mxu0
      %v1092 = vpop.f32.mrf.mxu0
      %v1093 = vadd.f32 0.0, %v1092
      %v1094 = vpop.f32.mrf.mxu0
      %1095 = vmatprep.mubr.bf16.mxu0 0
      %1096 = vmatmul.mubr.bf16.gmra.mxu0 %v860
      %v1097 = vpop.f32.mrf.mxu0
      %v1098 = vadd.f32 0.0, %v1097
      %v1099 = vpop.f32.mrf.mxu0
      %v1100 = vpop.f32.mrf.mxu0
      %v1101 = vadd.f32 0.0, %v1100
      %v1102 = vpop.f32.mrf.mxu0
      %1103 = vmatprep.mubr.bf16.mxu0 0
      %1104 = vmatmul.mubr.bf16.gmra.mxu0 %v868
      %v1105 = vpop.f32.mrf.mxu0
      %v1106 = vadd.f32 0.0, %v1105
      %v1107 = vpop.f32.mrf.mxu0
      %v1108 = vpop.f32.mrf.mxu0
      %v1109 = vadd.f32 0.0, %v1108
      %v1110 = vpop.f32.mrf.mxu0
      %1111 = vmatprep.mubr.bf16.mxu0 0
      %1112 = vmatmul.mubr.bf16.gmra.mxu0 %v876
      %v1113 = vpop.f32.mrf.mxu0
      %v1114 = vadd.f32 0.0, %v1113
      %v1115 = vpop.f32.mrf.mxu0
      %v1116 = vpop.f32.mrf.mxu0
      %v1117 = vadd.f32 0.0, %v1116
      %v1118 = vpop.f32.mrf.mxu0
      %1119 = vmatprep.mubr.bf16.mxu0 0
      %1120 = vmatmul.mubr.bf16.gmra.mxu0 %v884
      %v1121 = vpop.f32.mrf.mxu0
      %v1122 = vadd.f32 0.0, %v1121
      %v1123 = vpop.f32.mrf.mxu0
      %v1124 = vpop.f32.mrf.mxu0
      %v1125 = vadd.f32 0.0, %v1124
      %v1126 = vpop.f32.mrf.mxu0
      %1127 = vmatprep.mubr.bf16.mxu0 0
      %1128 = vmatmul.mubr.bf16.gmra.mxu0 %v892
      %v1129 = vpop.f32.mrf.mxu0
      %v1130 = vadd.f32 0.0, %v1129
      %v1131 = vpop.f32.mrf.mxu0
      %v1132 = vpop.f32.mrf.mxu0
      %v1133 = vadd.f32 0.0, %v1132
      %v1134 = vpop.f32.mrf.mxu0
      %1135 = vmatprep.mubr.bf16.mxu0 0
      %1136 = vmatmul.mubr.bf16.gmra.mxu0 %v900
      %v1137 = vpop.f32.mrf.mxu0
      %v1138 = vadd.f32 0.0, %v1137
      %v1139 = vpop.f32.mrf.mxu0
      %v1140 = vpop.f32.mrf.mxu0
      %v1141 = vadd.f32 0.0, %v1140
      %v1142 = vpop.f32.mrf.mxu0
      %1143 = vmatprep.mubr.bf16.mxu0 0
      %1144 = vmatmul.mubr.bf16.gmra.mxu0 %v908
      %v1145 = vpop.f32.mrf.mxu0
      %v1146 = vadd.f32 0.0, %v1145
      %v1147 = vpop.f32.mrf.mxu0
      %v1148 = vpop.f32.mrf.mxu0
      %v1149 = vadd.f32 0.0, %v1148
      %v1150 = vpop.f32.mrf.mxu0
      %1151 = vmatprep.mubr.bf16.mxu0 0
      %1152 = vmatmul.mubr.bf16.gmra.mxu0 %v916
      %v1153 = vpop.f32.mrf.mxu0
      %v1154 = vadd.f32 0.0, %v1153
      %v1155 = vpop.f32.mrf.mxu0
      %v1156 = vpop.f32.mrf.mxu0
      %v1157 = vadd.f32 0.0, %v1156
      %v1158 = vpop.f32.mrf.mxu0
      %1159 = vmatprep.mubr.bf16.mxu0 0
      %1160 = vmatmul.mubr.bf16.gmra.mxu0 %v924
      %v1161 = vpop.f32.mrf.mxu0
      %v1162 = vadd.f32 0.0, %v1161
      %v1163 = vpop.f32.mrf.mxu0
      %v1164 = vpop.f32.mrf.mxu0
      %v1165 = vadd.f32 0.0, %v1164
      %v1166 = vpop.f32.mrf.mxu0
      %1167 = vmatprep.mubr.bf16.mxu0 0
      %1168 = vmatmul.mubr.bf16.gmra.mxu0 %v932
      %v1169 = vpop.f32.mrf.mxu0
      %v1170 = vadd.f32 0.0, %v1169
      %v1171 = vpop.f32.mrf.mxu0
      %v1172 = vpop.f32.mrf.mxu0
      %v1173 = vadd.f32 0.0, %v1172
      %v1174 = vpop.f32.mrf.mxu0
      %1175 = vmatprep.mubr.bf16.mxu0 0
      %1176 = vmatmul.mubr.bf16.gmra.mxu0 %v940
      %v1177 = vpop.f32.mrf.mxu0
      %v1178 = vadd.f32 0.0, %v1177
      %v1179 = vpop.f32.mrf.mxu0
      %v1180 = vpop.f32.mrf.mxu0
      %v1181 = vadd.f32 0.0, %v1180
      %v1182 = vpop.f32.mrf.mxu0
      %1183 = vmatprep.mubr.bf16.mxu0 0
      %1184 = vmatmul.mubr.bf16.gmra.mxu0 %v948
      %v1185 = vpop.f32.mrf.mxu0
      %v1186 = vadd.f32 0.0, %v1185
      %v1187 = vpop.f32.mrf.mxu0
      %v1188 = vpop.f32.mrf.mxu0
      %v1189 = vadd.f32 0.0, %v1188
      %v1190 = vpop.f32.mrf.mxu0
      %1191 = vmatprep.mubr.bf16.mxu0 0
      %1192 = vmatmul.mubr.bf16.gmra.mxu0 %v956
      %v1193 = vpop.f32.mrf.mxu0
      %v1194 = vadd.f32 0.0, %v1193
      %v1195 = vpop.f32.mrf.mxu0
      %v1196 = vpop.f32.mrf.mxu0
      %v1197 = vadd.f32 0.0, %v1196
      %v1198 = vpop.f32.mrf.mxu0
      %1199 = vmatprep.mubr.bf16.mxu0 0
      %1200 = vmatmul.mubr.bf16.gmra.mxu0 %v964
      %v1201 = vpop.f32.mrf.mxu0
      %v1202 = vadd.f32 0.0, %v1201
      %v1203 = vpop.f32.mrf.mxu0
      %v1204 = vpop.f32.mrf.mxu0
      %v1205 = vadd.f32 0.0, %v1204
      %v1206 = vpop.f32.mrf.mxu0
      %1207 = vmatprep.mubr.bf16.mxu0 0
      %1208 = vmatmul.mubr.bf16.gmra.mxu0 %v972
      %v1209 = vpop.f32.mrf.mxu0
      %v1210 = vadd.f32 0.0, %v1209
      %v1211 = vpop.f32.mrf.mxu0
      %v1212 = vpop.f32.mrf.mxu0
      %v1213 = vadd.f32 0.0, %v1212
      %v1214 = vpop.f32.mrf.mxu0
      %1215 = vmatprep.mubr.bf16.mxu0 0
      %1216 = vmatmul.mubr.bf16.gmra.mxu0 %v980
      %v1217 = vpop.f32.mrf.mxu0
      %v1218 = vadd.f32 0.0, %v1217
      %v1219 = vpop.f32.mrf.mxu0
      %v1220 = vpop.f32.mrf.mxu0
      %v1221 = vadd.f32 0.0, %v1220
      %v1222 = vpop.f32.mrf.mxu0
      %1223 = vdwg.mxu0
      %v1224 = vld [vmem:[#allocation2] sm:$0xff]
      %v1225 = vld [vmem:[#allocation2 + $0x8] sm:$0xff]
      %v1226 = vld [vmem:[#allocation2 + $0x10] sm:$0xff]
      %v1227 = vld [vmem:[#allocation2 + $0x18] sm:$0xff]
      %v1228 = vld [vmem:[#allocation2 + $0x20] sm:$0xff]
      %v1229 = vld [vmem:[#allocation2 + $0x28] sm:$0xff]
      %v1230 = vld [vmem:[#allocation2 + $0x30] sm:$0xff]
      %v1231 = vld [vmem:[#allocation2 + $0x38] sm:$0xff]
      %v1232 = vld [vmem:[#allocation2 + $0x40] sm:$0xff]
      %v1233 = vld [vmem:[#allocation2 + $0x48] sm:$0xff]
      %v1234 = vld [vmem:[#allocation2 + $0x50] sm:$0xff]
      %v1235 = vld [vmem:[#allocation2 + $0x58] sm:$0xff]
      %v1236 = vld [vmem:[#allocation2 + $0x60] sm:$0xff]
      %v1237 = vld [vmem:[#allocation2 + $0x68] sm:$0xff]
      %v1238 = vld [vmem:[#allocation2 + $0x70] sm:$0xff]
      %v1239 = vld [vmem:[#allocation2 + $0x78] sm:$0xff]
      %v1240 = vld [vmem:[#allocation2 + $0x80] sm:$0xff]
      %v1241 = vld [vmem:[#allocation2 + $0x88] sm:$0xff]
      %v1242 = vld [vmem:[#allocation2 + $0x90] sm:$0xff]
      %v1243 = vld [vmem:[#allocation2 + $0x98] sm:$0xff]
      %v1244 = vld [vmem:[#allocation2 + $0xa0] sm:$0xff]
      %v1245 = vld [vmem:[#allocation2 + $0xa8] sm:$0xff]
      %v1246 = vld [vmem:[#allocation2 + $0xb0] sm:$0xff]
      %v1247 = vld [vmem:[#allocation2 + $0xb8] sm:$0xff]
      %v1248 = vld [vmem:[#allocation2 + $0xc0] sm:$0xff]
      %v1249 = vld [vmem:[#allocation2 + $0xc8] sm:$0xff]
      %v1250 = vld [vmem:[#allocation2 + $0xd0] sm:$0xff]
      %v1251 = vld [vmem:[#allocation2 + $0xd8] sm:$0xff]
      %v1252 = vld [vmem:[#allocation2 + $0xe0] sm:$0xff]
      %v1253 = vld [vmem:[#allocation2 + $0xe8] sm:$0xff]
      %v1254 = vld [vmem:[#allocation2 + $0xf0] sm:$0xff]
      %v1255 = vld [vmem:[#allocation2 + $0xf8] sm:$0xff]
      %v1256 = vld [vmem:[#allocation2 + $0x100] sm:$0xff]
      %v1257 = vld [vmem:[#allocation2 + $0x108] sm:$0xff]
      %v1258 = vld [vmem:[#allocation2 + $0x110] sm:$0xff]
      %v1259 = vld [vmem:[#allocation2 + $0x118] sm:$0xff]
      %v1260 = vadd.f32 %v1224, %v1082
      %v1261 = vadd.f32 %v1225, %v1085
      %v1262 = vadd.f32 %v1226, %v1090
      %v1263 = vadd.f32 %v1227, %v1093
      %v1264 = vadd.f32 %v1228, %v1098
      %v1265 = vadd.f32 %v1229, %v1101
      %v1266 = vadd.f32 %v1230, %v1106
      %v1267 = vadd.f32 %v1231, %v1109
      %v1268 = vadd.f32 %v1232, %v1114
      %v1269 = vadd.f32 %v1233, %v1117
      %v1270 = vadd.f32 %v1234, %v1122
      %v1271 = vadd.f32 %v1235, %v1125
      %v1272 = vadd.f32 %v1236, %v1130
      %v1273 = vadd.f32 %v1237, %v1133
      %v1274 = vadd.f32 %v1238, %v1138
      %v1275 = vadd.f32 %v1239, %v1141
      %v1276 = vadd.f32 %v1240, %v1146
      %v1277 = vadd.f32 %v1241, %v1149
      %v1278 = vadd.f32 %v1242, %v1154
      %v1279 = vadd.f32 %v1243, %v1157
      %v1280 = vadd.f32 %v1244, %v1162
      %v1281 = vadd.f32 %v1245, %v1165
      %v1282 = vadd.f32 %v1246, %v1170
      %v1283 = vadd.f32 %v1247, %v1173
      %v1284 = vadd.f32 %v1248, %v1178
      %v1285 = vadd.f32 %v1249, %v1181
      %v1286 = vadd.f32 %v1250, %v1186
      %v1287 = vadd.f32 %v1251, %v1189
      %v1288 = vadd.f32 %v1252, %v1194
      %v1289 = vadd.f32 %v1253, %v1197
      %v1290 = vadd.f32 %v1254, %v1202
      %v1291 = vadd.f32 %v1255, %v1205
      %v1292 = vadd.f32 %v1256, %v1210
      %v1293 = vadd.f32 %v1257, %v1213
      %v1294 = vadd.f32 %v1258, %v1218
      %v1295 = vadd.f32 %v1259, %v1221
      %1296 = vst [vmem:[#allocation2] sm:$0xff] %v1260
      %1297 = vst [vmem:[#allocation2 + $0x8] sm:$0xff] %v1261
      %1298 = vst [vmem:[#allocation2 + $0x10] sm:$0xff] %v1262
      %1299 = vst [vmem:[#allocation2 + $0x18] sm:$0xff] %v1263
      %1300 = vst [vmem:[#allocation2 + $0x20] sm:$0xff] %v1264
      %1301 = vst [vmem:[#allocation2 + $0x28] sm:$0xff] %v1265
      %1302 = vst [vmem:[#allocation2 + $0x30] sm:$0xff] %v1266
      %1303 = vst [vmem:[#allocation2 + $0x38] sm:$0xff] %v1267
      %1304 = vst [vmem:[#allocation2 + $0x40] sm:$0xff] %v1268
      %1305 = vst [vmem:[#allocation2 + $0x48] sm:$0xff] %v1269
      %1306 = vst [vmem:[#allocation2 + $0x50] sm:$0xff] %v1270
      %1307 = vst [vmem:[#allocation2 + $0x58] sm:$0xff] %v1271
      %1308 = vst [vmem:[#allocation2 + $0x60] sm:$0xff] %v1272
      %1309 = vst [vmem:[#allocation2 + $0x68] sm:$0xff] %v1273
      %1310 = vst [vmem:[#allocation2 + $0x70] sm:$0xff] %v1274
      %1311 = vst [vmem:[#allocation2 + $0x78] sm:$0xff] %v1275
      %1312 = vst [vmem:[#allocation2 + $0x80] sm:$0xff] %v1276
      %1313 = vst [vmem:[#allocation2 + $0x88] sm:$0xff] %v1277
      %1314 = vst [vmem:[#allocation2 + $0x90] sm:$0xff] %v1278
      %1315 = vst [vmem:[#allocation2 + $0x98] sm:$0xff] %v1279
      %1316 = vst [vmem:[#allocation2 + $0xa0] sm:$0xff] %v1280
      %1317 = vst [vmem:[#allocation2 + $0xa8] sm:$0xff] %v1281
      %1318 = vst [vmem:[#allocation2 + $0xb0] sm:$0xff] %v1282
      %1319 = vst [vmem:[#allocation2 + $0xb8] sm:$0xff] %v1283
      %1320 = vst [vmem:[#allocation2 + $0xc0] sm:$0xff] %v1284
      %1321 = vst [vmem:[#allocation2 + $0xc8] sm:$0xff] %v1285
      %1322 = vst [vmem:[#allocation2 + $0xd0] sm:$0xff] %v1286
      %1323 = vst [vmem:[#allocation2 + $0xd8] sm:$0xff] %v1287
      %1324 = vst [vmem:[#allocation2 + $0xe0] sm:$0xff] %v1288
      %1325 = vst [vmem:[#allocation2 + $0xe8] sm:$0xff] %v1289
      %1326 = vst [vmem:[#allocation2 + $0xf0] sm:$0xff] %v1290
      %1327 = vst [vmem:[#allocation2 + $0xf8] sm:$0xff] %v1291
      %1328 = vst [vmem:[#allocation2 + $0x100] sm:$0xff] %v1292
      %1329 = vst [vmem:[#allocation2 + $0x108] sm:$0xff] %v1293
      %1330 = vst [vmem:[#allocation2 + $0x110] sm:$0xff] %v1294
      %1331 = vst [vmem:[#allocation2 + $0x118] sm:$0xff] %v1295
      %v1332 = vld [vmem:[%s244] sm:$0xe]
      %v1333 = vld [vmem:[%s244 + $0x4] sm:$0xf]
      %v1334 = vld [vmem:[%s244 + $0x8] sm:$0xf]
      %v1335 = vld [vmem:[%s244 + $0xc] sm:$0xf]
      %v1336 = vld [vmem:[%s244 + $0x10] sm:$0xf]
      %v1337 = vld [vmem:[%s244 + $0x14] sm:$0xf]
      %v1338 = vld [vmem:[%s244 + $0x18] sm:$0xf]
      %v1339 = vld [vmem:[%s244 + $0x1c] sm:$0xf]
      %v1340 = vld [vmem:[%s244 + $0x20] sm:$0xf]
      %v1341 = vld [vmem:[%s244 + $0x24] sm:$0xf]
      %v1342 = vld [vmem:[%s244 + $0x28] sm:$0xf]
      %v1343 = vld [vmem:[%s244 + $0x2c] sm:$0xf]
      %v1344 = vld [vmem:[%s244 + $0x30] sm:$0xf]
      %v1345 = vld [vmem:[%s244 + $0x34] sm:$0xf]
      %v1346 = vld [vmem:[%s244 + $0x38] sm:$0xf]
      %v1347 = vld [vmem:[%s244 + $0x3c] sm:$0xf]
      %v1348 = vld [vmem:[%s244 + $0x40] sm:$0xf]
      %v1349 = vld [vmem:[%s244 + $0x44] sm:$0xf]
      %v1350 = vld [vmem:[%s244 + $0x48] sm:$0xf]
      %v1351 = vld [vmem:[%s244 + $0x4c] sm:$0xf]
      %v1352 = vld [vmem:[%s244 + $0x50] sm:$0xf]
      %v1353 = vld [vmem:[%s244 + $0x54] sm:$0xf]
      %v1354 = vld [vmem:[%s244 + $0x58] sm:$0xf]
      %v1355 = vld [vmem:[%s244 + $0x5c] sm:$0xf]
      %v1356 = vld [vmem:[%s244 + $0x60] sm:$0xf]
      %v1357 = vld [vmem:[%s244 + $0x64] sm:$0xf]
      %v1358 = vld [vmem:[%s244 + $0x68] sm:$0xf]
      %v1359 = vld [vmem:[%s244 + $0x6c] sm:$0xf]
      %v1360 = vld [vmem:[%s244 + $0x70] sm:$0xf]
      %v1361 = vld [vmem:[%s244 + $0x74] sm:$0xf]
      %v1362 = vld [vmem:[%s244 + $0x78] sm:$0xf]
      %v1363 = vld [vmem:[%s244 + $0x7c] sm:$0xf]
      %v1364 = vld [vmem:[%s244 + $0x80] sm:$0xf]
      %v1365 = vld [vmem:[%s244 + $0x84] sm:$0xf]
      %v1366 = vld [vmem:[%s244 + $0x88] sm:$0xf]
      %v1367 = vld [vmem:[%s244 + $0x8c] sm:$0xf]
      %v1368 = vld [vmem:[%s244 + $0x90] sm:$0x1]
      %s1369 = scalar_lea.vmem %s248, 128
      %v1370 = vld [vmem:[%s1369] sm:$0xf]
      %v1371 = vld [vmem:[%s1369 + $0x4] sm:$0xf]
      %v1372 = vld [vmem:[%s1369 + $0x8] sm:$0xf]
      %v1373 = vld [vmem:[%s1369 + $0xc] sm:$0xf]
      %v1374 = vld [vmem:[%s1369 + $0x10] sm:$0xf]
      %v1375 = vld [vmem:[%s1369 + $0x14] sm:$0xf]
      %v1376 = vld [vmem:[%s1369 + $0x18] sm:$0xf]
      %v1377 = vld [vmem:[%s1369 + $0x1c] sm:$0xf]
      %v1378 = vld [vmem:[%s1369 + $0x20] sm:$0xf]
      %v1379 = vld [vmem:[%s1369 + $0x24] sm:$0xf]
      %v1380 = vld [vmem:[%s1369 + $0x28] sm:$0xf]
      %v1381 = vld [vmem:[%s1369 + $0x2c] sm:$0xf]
      %v1382 = vld [vmem:[%s1369 + $0x30] sm:$0xf]
      %v1383 = vld [vmem:[%s1369 + $0x34] sm:$0xf]
      %v1384 = vld [vmem:[%s1369 + $0x38] sm:$0xf]
      %v1385 = vld [vmem:[%s1369 + $0x3c] sm:$0xf]
      %v1423 = vunpack.c.l.b16 %v1332
      %v1424 = vunpack.c.l.b16 %v1333
      %v1425 = vunpack.c.l.b16 %v1334
      %v1426 = vunpack.c.l.b16 %v1335
      %v1427 = vunpack.c.l.b16 %v1336
      %v1428 = vunpack.c.l.b16 %v1337
      %v1429 = vunpack.c.l.b16 %v1338
      %v1430 = vunpack.c.l.b16 %v1339
      %v1431 = vunpack.c.l.b16 %v1340
      %v1432 = vunpack.c.l.b16 %v1341
      %v1433 = vunpack.c.l.b16 %v1342
      %v1434 = vunpack.c.l.b16 %v1343
      %v1435 = vunpack.c.l.b16 %v1344
      %v1436 = vunpack.c.l.b16 %v1345
      %v1437 = vunpack.c.l.b16 %v1346
      %v1438 = vunpack.c.l.b16 %v1347
      %v1439 = vunpack.c.l.b16 %v1348
      %v1440 = vunpack.c.l.b16 %v1349
      %v1441 = vunpack.c.l.b16 %v1350
      %v1442 = vunpack.c.l.b16 %v1351
      %v1443 = vunpack.c.l.b16 %v1352
      %v1444 = vunpack.c.l.b16 %v1353
      %v1445 = vunpack.c.l.b16 %v1354
      %v1446 = vunpack.c.l.b16 %v1355
      %v1447 = vunpack.c.l.b16 %v1356
      %v1448 = vunpack.c.l.b16 %v1357
      %v1449 = vunpack.c.l.b16 %v1358
      %v1450 = vunpack.c.l.b16 %v1359
      %v1451 = vunpack.c.l.b16 %v1360
      %v1452 = vunpack.c.l.b16 %v1361
      %v1453 = vunpack.c.l.b16 %v1362
      %v1454 = vunpack.c.l.b16 %v1363
      %v1455 = vunpack.c.l.b16 %v1364
      %v1456 = vunpack.c.l.b16 %v1365
      %v1457 = vunpack.c.l.b16 %v1366
      %v1458 = vunpack.c.l.b16 %v1367
      %v1459 = vunpack.c.l.b16 %v1368
      %v1460 = vpack.c.b16 %v1424, %v1423
      %v1461 = vpack.c.b16 %v1426, %v1425
      %v1462 = vpack.c.b16 %v1428, %v1427
      %v1463 = vpack.c.b16 %v1430, %v1429
      %v1464 = vpack.c.b16 %v1432, %v1431
      %v1465 = vpack.c.b16 %v1434, %v1433
      %v1466 = vpack.c.b16 %v1436, %v1435
      %v1467 = vpack.c.b16 %v1438, %v1437
      %v1468 = vpack.c.b16 %v1440, %v1439
      %v1469 = vpack.c.b16 %v1442, %v1441
      %v1470 = vpack.c.b16 %v1444, %v1443
      %v1471 = vpack.c.b16 %v1446, %v1445
      %v1472 = vpack.c.b16 %v1448, %v1447
      %v1473 = vpack.c.b16 %v1450, %v1449
      %v1474 = vpack.c.b16 %v1452, %v1451
      %v1475 = vpack.c.b16 %v1454, %v1453
      %v1476 = vpack.c.b16 %v1456, %v1455
      %v1477 = vpack.c.b16 %v1458, %v1457
      %v1478 = vpack.c.b16 %v1459, %v1459
      %vm1479 = vcmask 1046528
      %v1480 = vrot.slane %v1460, 1
      %v1481 = vrot.slane %v1461, 1
      %v1482 = vsel %vm1479, %v1480, %v1481
      %v1483 = vrot.slane %v1462, 1
      %v1484 = vsel %vm1479, %v1481, %v1483
      %v1485 = vrot.slane %v1463, 1
      %v1486 = vsel %vm1479, %v1483, %v1485
      %v1487 = vrot.slane %v1464, 1
      %v1488 = vsel %vm1479, %v1485, %v1487
      %v1489 = vrot.slane %v1465, 1
      %v1490 = vsel %vm1479, %v1487, %v1489
      %v1491 = vrot.slane %v1466, 1
      %v1492 = vsel %vm1479, %v1489, %v1491
      %v1493 = vrot.slane %v1467, 1
      %v1494 = vsel %vm1479, %v1491, %v1493
      %v1495 = vrot.slane %v1468, 1
      %v1496 = vsel %vm1479, %v1493, %v1495
      %v1497 = vrot.slane %v1469, 1
      %v1498 = vsel %vm1479, %v1495, %v1497
      %v1499 = vrot.slane %v1470, 1
      %v1500 = vsel %vm1479, %v1497, %v1499
      %v1501 = vrot.slane %v1471, 1
      %v1502 = vsel %vm1479, %v1499, %v1501
      %v1503 = vrot.slane %v1472, 1
      %v1504 = vsel %vm1479, %v1501, %v1503
      %v1505 = vrot.slane %v1473, 1
      %v1506 = vsel %vm1479, %v1503, %v1505
      %v1507 = vrot.slane %v1474, 1
      %v1508 = vsel %vm1479, %v1505, %v1507
      %v1509 = vrot.slane %v1475, 1
      %v1510 = vsel %vm1479, %v1507, %v1509
      %v1511 = vrot.slane %v1476, 1
      %v1512 = vsel %vm1479, %v1509, %v1511
      %v1513 = vrot.slane %v1477, 1
      %v1514 = vsel %vm1479, %v1511, %v1513
      %v1515 = vrot.slane %v1478, 1
      %v1516 = vsel %vm1479, %v1513, %v1515
      %v1551 = vunpack.c.l.b16 %v1370
      %v1552 = vunpack.c.l.b16 %v1371
      %v1553 = vunpack.c.l.b16 %v1372
      %v1554 = vunpack.c.l.b16 %v1373
      %v1555 = vunpack.c.l.b16 %v1374
      %v1556 = vunpack.c.l.b16 %v1375
      %v1557 = vunpack.c.l.b16 %v1376
      %v1558 = vunpack.c.l.b16 %v1377
      %v1559 = vunpack.c.l.b16 %v1378
      %v1560 = vunpack.c.l.b16 %v1379
      %v1561 = vunpack.c.l.b16 %v1380
      %v1562 = vunpack.c.l.b16 %v1381
      %v1563 = vunpack.c.l.b16 %v1382
      %v1564 = vunpack.c.l.b16 %v1383
      %v1565 = vunpack.c.l.b16 %v1384
      %v1566 = vunpack.c.l.b16 %v1385
      %v1567 = vpack.c.b16 %v1552, %v1551
      %v1568 = vpack.c.b16 %v1554, %v1553
      %v1569 = vpack.c.b16 %v1556, %v1555
      %v1570 = vpack.c.b16 %v1558, %v1557
      %v1571 = vpack.c.b16 %v1560, %v1559
      %v1572 = vpack.c.b16 %v1562, %v1561
      %v1573 = vpack.c.b16 %v1564, %v1563
      %v1574 = vpack.c.b16 %v1566, %v1565
      %1583 = vmatprep.subr.bf16.mxu0 0
      %1584 = vmatpush1.bf16.msra.mxu0 %v1574
      %1585 = vmatprep.subr.bf16.mxu0 0
      %1586 = vmatpush1.bf16.msra.mxu0 %v1573
      %1587 = vmatprep.subr.bf16.mxu0 0
      %1588 = vmatpush1.bf16.msra.mxu0 %v1572
      %1589 = vmatprep.subr.bf16.mxu0 0
      %1590 = vmatpush1.bf16.msra.mxu0 %v1571
      %1591 = vmatprep.subr.bf16.mxu0 0
      %1592 = vmatpush1.bf16.msra.mxu0 %v1570
      %1593 = vmatprep.subr.bf16.mxu0 0
      %1594 = vmatpush1.bf16.msra.mxu0 %v1569
      %1595 = vmatprep.subr.bf16.mxu0 0
      %1596 = vmatpush1.bf16.msra.mxu0 %v1568
      %1597 = vmatprep.subr.bf16.mxu0 0
      %1598 = vmatpush1.bf16.msra.mxu0 %v1567
      %1599 = vmatprep.subr.bf16.mxu0 0
      %1600 = vmatpush2.bf16.msra.mxu0 0
      %1601 = vmatprep.subr.bf16.mxu0 0
      %1602 = vmatpush2.bf16.msra.mxu0 0
      %1603 = vmatprep.subr.bf16.mxu0 0
      %1604 = vmatpush2.bf16.msra.mxu0 0
      %1605 = vmatprep.subr.bf16.mxu0 0
      %1606 = vmatpush2.bf16.msra.mxu0 0
      %1607 = vmatprep.subr.bf16.mxu0 0
      %1608 = vmatpush2.bf16.msra.mxu0 0
      %1609 = vmatprep.subr.bf16.mxu0 0
      %1610 = vmatpush2.bf16.msra.mxu0 0
      %1611 = vmatprep.subr.bf16.mxu0 0
      %1612 = vmatpush2.bf16.msra.mxu0 0
      %1613 = vmatprep.subr.bf16.mxu0 0
      %1614 = vmatpush2.bf16.msra.mxu0 0
      %1615 = vmatprep.mubr.bf16.mxu0 0
      %1616 = vmatmul.mubr.bf16.gmra.mxu0 %v1482
      %v1617 = vpop.f32.mrf.mxu0
      %v1618 = vadd.f32 0.0, %v1617
      %v1619 = vpop.f32.mrf.mxu0
      %v1620 = vpop.f32.mrf.mxu0
      %v1621 = vadd.f32 0.0, %v1620
      %v1622 = vpop.f32.mrf.mxu0
      %1623 = vmatprep.mubr.bf16.mxu0 0
      %1624 = vmatmul.mubr.bf16.gmra.mxu0 %v1484
      %v1625 = vpop.f32.mrf.mxu0
      %v1626 = vadd.f32 0.0, %v1625
      %v1627 = vpop.f32.mrf.mxu0
      %v1628 = vpop.f32.mrf.mxu0
      %v1629 = vadd.f32 0.0, %v1628
      %v1630 = vpop.f32.mrf.mxu0
      %1631 = vmatprep.mubr.bf16.mxu0 0
      %1632 = vmatmul.mubr.bf16.gmra.mxu0 %v1486
      %v1633 = vpop.f32.mrf.mxu0
      %v1634 = vadd.f32 0.0, %v1633
      %v1635 = vpop.f32.mrf.mxu0
      %v1636 = vpop.f32.mrf.mxu0
      %v1637 = vadd.f32 0.0, %v1636
      %v1638 = vpop.f32.mrf.mxu0
      %1639 = vmatprep.mubr.bf16.mxu0 0
      %1640 = vmatmul.mubr.bf16.gmra.mxu0 %v1488
      %v1641 = vpop.f32.mrf.mxu0
      %v1642 = vadd.f32 0.0, %v1641
      %v1643 = vpop.f32.mrf.mxu0
      %v1644 = vpop.f32.mrf.mxu0
      %v1645 = vadd.f32 0.0, %v1644
      %v1646 = vpop.f32.mrf.mxu0
      %1647 = vmatprep.mubr.bf16.mxu0 0
      %1648 = vmatmul.mubr.bf16.gmra.mxu0 %v1490
      %v1649 = vpop.f32.mrf.mxu0
      %v1650 = vadd.f32 0.0, %v1649
      %v1651 = vpop.f32.mrf.mxu0
      %v1652 = vpop.f32.mrf.mxu0
      %v1653 = vadd.f32 0.0, %v1652
      %v1654 = vpop.f32.mrf.mxu0
      %1655 = vmatprep.mubr.bf16.mxu0 0
      %1656 = vmatmul.mubr.bf16.gmra.mxu0 %v1492
      %v1657 = vpop.f32.mrf.mxu0
      %v1658 = vadd.f32 0.0, %v1657
      %v1659 = vpop.f32.mrf.mxu0
      %v1660 = vpop.f32.mrf.mxu0
      %v1661 = vadd.f32 0.0, %v1660
      %v1662 = vpop.f32.mrf.mxu0
      %1663 = vmatprep.mubr.bf16.mxu0 0
      %1664 = vmatmul.mubr.bf16.gmra.mxu0 %v1494
      %v1665 = vpop.f32.mrf.mxu0
      %v1666 = vadd.f32 0.0, %v1665
      %v1667 = vpop.f32.mrf.mxu0
      %v1668 = vpop.f32.mrf.mxu0
      %v1669 = vadd.f32 0.0, %v1668
      %v1670 = vpop.f32.mrf.mxu0
      %1671 = vmatprep.mubr.bf16.mxu0 0
      %1672 = vmatmul.mubr.bf16.gmra.mxu0 %v1496
      %v1673 = vpop.f32.mrf.mxu0
      %v1674 = vadd.f32 0.0, %v1673
      %v1675 = vpop.f32.mrf.mxu0
      %v1676 = vpop.f32.mrf.mxu0
      %v1677 = vadd.f32 0.0, %v1676
      %v1678 = vpop.f32.mrf.mxu0
      %1679 = vmatprep.mubr.bf16.mxu0 0
      %1680 = vmatmul.mubr.bf16.gmra.mxu0 %v1498
      %v1681 = vpop.f32.mrf.mxu0
      %v1682 = vadd.f32 0.0, %v1681
      %v1683 = vpop.f32.mrf.mxu0
      %v1684 = vpop.f32.mrf.mxu0
      %v1685 = vadd.f32 0.0, %v1684
      %v1686 = vpop.f32.mrf.mxu0
      %1687 = vmatprep.mubr.bf16.mxu0 0
      %1688 = vmatmul.mubr.bf16.gmra.mxu0 %v1500
      %v1689 = vpop.f32.mrf.mxu0
      %v1690 = vadd.f32 0.0, %v1689
      %v1691 = vpop.f32.mrf.mxu0
      %v1692 = vpop.f32.mrf.mxu0
      %v1693 = vadd.f32 0.0, %v1692
      %v1694 = vpop.f32.mrf.mxu0
      %1695 = vmatprep.mubr.bf16.mxu0 0
      %1696 = vmatmul.mubr.bf16.gmra.mxu0 %v1502
      %v1697 = vpop.f32.mrf.mxu0
      %v1698 = vadd.f32 0.0, %v1697
      %v1699 = vpop.f32.mrf.mxu0
      %v1700 = vpop.f32.mrf.mxu0
      %v1701 = vadd.f32 0.0, %v1700
      %v1702 = vpop.f32.mrf.mxu0
      %1703 = vmatprep.mubr.bf16.mxu0 0
      %1704 = vmatmul.mubr.bf16.gmra.mxu0 %v1504
      %v1705 = vpop.f32.mrf.mxu0
      %v1706 = vadd.f32 0.0, %v1705
      %v1707 = vpop.f32.mrf.mxu0
      %v1708 = vpop.f32.mrf.mxu0
      %v1709 = vadd.f32 0.0, %v1708
      %v1710 = vpop.f32.mrf.mxu0
      %1711 = vmatprep.mubr.bf16.mxu0 0
      %1712 = vmatmul.mubr.bf16.gmra.mxu0 %v1506
      %v1713 = vpop.f32.mrf.mxu0
      %v1714 = vadd.f32 0.0, %v1713
      %v1715 = vpop.f32.mrf.mxu0
      %v1716 = vpop.f32.mrf.mxu0
      %v1717 = vadd.f32 0.0, %v1716
      %v1718 = vpop.f32.mrf.mxu0
      %1719 = vmatprep.mubr.bf16.mxu0 0
      %1720 = vmatmul.mubr.bf16.gmra.mxu0 %v1508
      %v1721 = vpop.f32.mrf.mxu0
      %v1722 = vadd.f32 0.0, %v1721
      %v1723 = vpop.f32.mrf.mxu0
      %v1724 = vpop.f32.mrf.mxu0
      %v1725 = vadd.f32 0.0, %v1724
      %v1726 = vpop.f32.mrf.mxu0
      %1727 = vmatprep.mubr.bf16.mxu0 0
      %1728 = vmatmul.mubr.bf16.gmra.mxu0 %v1510
      %v1729 = vpop.f32.mrf.mxu0
      %v1730 = vadd.f32 0.0, %v1729
      %v1731 = vpop.f32.mrf.mxu0
      %v1732 = vpop.f32.mrf.mxu0
      %v1733 = vadd.f32 0.0, %v1732
      %v1734 = vpop.f32.mrf.mxu0
      %1735 = vmatprep.mubr.bf16.mxu0 0
      %1736 = vmatmul.mubr.bf16.gmra.mxu0 %v1512
      %v1737 = vpop.f32.mrf.mxu0
      %v1738 = vadd.f32 0.0, %v1737
      %v1739 = vpop.f32.mrf.mxu0
      %v1740 = vpop.f32.mrf.mxu0
      %v1741 = vadd.f32 0.0, %v1740
      %v1742 = vpop.f32.mrf.mxu0
      %1743 = vmatprep.mubr.bf16.mxu0 0
      %1744 = vmatmul.mubr.bf16.gmra.mxu0 %v1514
      %v1745 = vpop.f32.mrf.mxu0
      %v1746 = vadd.f32 0.0, %v1745
      %v1747 = vpop.f32.mrf.mxu0
      %v1748 = vpop.f32.mrf.mxu0
      %v1749 = vadd.f32 0.0, %v1748
      %v1750 = vpop.f32.mrf.mxu0
      %1751 = vmatprep.mubr.bf16.mxu0 0
      %1752 = vmatmul.mubr.bf16.gmra.mxu0 %v1516
      %v1753 = vpop.f32.mrf.mxu0
      %v1754 = vadd.f32 0.0, %v1753
      %v1755 = vpop.f32.mrf.mxu0
      %v1756 = vpop.f32.mrf.mxu0
      %v1757 = vadd.f32 0.0, %v1756
      %v1758 = vpop.f32.mrf.mxu0
      %1759 = vdwg.mxu0
      %v1760 = vld [vmem:[#allocation2] sm:$0xff]
      %v1761 = vld [vmem:[#allocation2 + $0x8] sm:$0xff]
      %v1762 = vld [vmem:[#allocation2 + $0x10] sm:$0xff]
      %v1763 = vld [vmem:[#allocation2 + $0x18] sm:$0xff]
      %v1764 = vld [vmem:[#allocation2 + $0x20] sm:$0xff]
      %v1765 = vld [vmem:[#allocation2 + $0x28] sm:$0xff]
      %v1766 = vld [vmem:[#allocation2 + $0x30] sm:$0xff]
      %v1767 = vld [vmem:[#allocation2 + $0x38] sm:$0xff]
      %v1768 = vld [vmem:[#allocation2 + $0x40] sm:$0xff]
      %v1769 = vld [vmem:[#allocation2 + $0x48] sm:$0xff]
      %v1770 = vld [vmem:[#allocation2 + $0x50] sm:$0xff]
      %v1771 = vld [vmem:[#allocation2 + $0x58] sm:$0xff]
      %v1772 = vld [vmem:[#allocation2 + $0x60] sm:$0xff]
      %v1773 = vld [vmem:[#allocation2 + $0x68] sm:$0xff]
      %v1774 = vld [vmem:[#allocation2 + $0x70] sm:$0xff]
      %v1775 = vld [vmem:[#allocation2 + $0x78] sm:$0xff]
      %v1776 = vld [vmem:[#allocation2 + $0x80] sm:$0xff]
      %v1777 = vld [vmem:[#allocation2 + $0x88] sm:$0xff]
      %v1778 = vld [vmem:[#allocation2 + $0x90] sm:$0xff]
      %v1779 = vld [vmem:[#allocation2 + $0x98] sm:$0xff]
      %v1780 = vld [vmem:[#allocation2 + $0xa0] sm:$0xff]
      %v1781 = vld [vmem:[#allocation2 + $0xa8] sm:$0xff]
      %v1782 = vld [vmem:[#allocation2 + $0xb0] sm:$0xff]
      %v1783 = vld [vmem:[#allocation2 + $0xb8] sm:$0xff]
      %v1784 = vld [vmem:[#allocation2 + $0xc0] sm:$0xff]
      %v1785 = vld [vmem:[#allocation2 + $0xc8] sm:$0xff]
      %v1786 = vld [vmem:[#allocation2 + $0xd0] sm:$0xff]
      %v1787 = vld [vmem:[#allocation2 + $0xd8] sm:$0xff]
      %v1788 = vld [vmem:[#allocation2 + $0xe0] sm:$0xff]
      %v1789 = vld [vmem:[#allocation2 + $0xe8] sm:$0xff]
      %v1790 = vld [vmem:[#allocation2 + $0xf0] sm:$0xff]
      %v1791 = vld [vmem:[#allocation2 + $0xf8] sm:$0xff]
      %v1792 = vld [vmem:[#allocation2 + $0x100] sm:$0xff]
      %v1793 = vld [vmem:[#allocation2 + $0x108] sm:$0xff]
      %v1794 = vld [vmem:[#allocation2 + $0x110] sm:$0xff]
      %v1795 = vld [vmem:[#allocation2 + $0x118] sm:$0xff]
      %v1796 = vadd.f32 %v1760, %v1618
      %v1797 = vadd.f32 %v1761, %v1621
      %v1798 = vadd.f32 %v1762, %v1626
      %v1799 = vadd.f32 %v1763, %v1629
      %v1800 = vadd.f32 %v1764, %v1634
      %v1801 = vadd.f32 %v1765, %v1637
      %v1802 = vadd.f32 %v1766, %v1642
      %v1803 = vadd.f32 %v1767, %v1645
      %v1804 = vadd.f32 %v1768, %v1650
      %v1805 = vadd.f32 %v1769, %v1653
      %v1806 = vadd.f32 %v1770, %v1658
      %v1807 = vadd.f32 %v1771, %v1661
      %v1808 = vadd.f32 %v1772, %v1666
      %v1809 = vadd.f32 %v1773, %v1669
      %v1810 = vadd.f32 %v1774, %v1674
      %v1811 = vadd.f32 %v1775, %v1677
      %v1812 = vadd.f32 %v1776, %v1682
      %v1813 = vadd.f32 %v1777, %v1685
      %v1814 = vadd.f32 %v1778, %v1690
      %v1815 = vadd.f32 %v1779, %v1693
      %v1816 = vadd.f32 %v1780, %v1698
      %v1817 = vadd.f32 %v1781, %v1701
      %v1818 = vadd.f32 %v1782, %v1706
      %v1819 = vadd.f32 %v1783, %v1709
      %v1820 = vadd.f32 %v1784, %v1714
      %v1821 = vadd.f32 %v1785, %v1717
      %v1822 = vadd.f32 %v1786, %v1722
      %v1823 = vadd.f32 %v1787, %v1725
      %v1824 = vadd.f32 %v1788, %v1730
      %v1825 = vadd.f32 %v1789, %v1733
      %v1826 = vadd.f32 %v1790, %v1738
      %v1827 = vadd.f32 %v1791, %v1741
      %v1828 = vadd.f32 %v1792, %v1746
      %v1829 = vadd.f32 %v1793, %v1749
      %v1830 = vadd.f32 %v1794, %v1754
      %v1831 = vadd.f32 %v1795, %v1757
      %1832 = vst [vmem:[#allocation2] sm:$0xff] %v1796
      %1833 = vst [vmem:[#allocation2 + $0x8] sm:$0xff] %v1797
      %1834 = vst [vmem:[#allocation2 + $0x10] sm:$0xff] %v1798
      %1835 = vst [vmem:[#allocation2 + $0x18] sm:$0xff] %v1799
      %1836 = vst [vmem:[#allocation2 + $0x20] sm:$0xff] %v1800
      %1837 = vst [vmem:[#allocation2 + $0x28] sm:$0xff] %v1801
      %1838 = vst [vmem:[#allocation2 + $0x30] sm:$0xff] %v1802
      %1839 = vst [vmem:[#allocation2 + $0x38] sm:$0xff] %v1803
      %1840 = vst [vmem:[#allocation2 + $0x40] sm:$0xff] %v1804
      %1841 = vst [vmem:[#allocation2 + $0x48] sm:$0xff] %v1805
      %1842 = vst [vmem:[#allocation2 + $0x50] sm:$0xff] %v1806
      %1843 = vst [vmem:[#allocation2 + $0x58] sm:$0xff] %v1807
      %1844 = vst [vmem:[#allocation2 + $0x60] sm:$0xff] %v1808
      %1845 = vst [vmem:[#allocation2 + $0x68] sm:$0xff] %v1809
      %1846 = vst [vmem:[#allocation2 + $0x70] sm:$0xff] %v1810
      %1847 = vst [vmem:[#allocation2 + $0x78] sm:$0xff] %v1811
      %1848 = vst [vmem:[#allocation2 + $0x80] sm:$0xff] %v1812
      %1849 = vst [vmem:[#allocation2 + $0x88] sm:$0xff] %v1813
      %1850 = vst [vmem:[#allocation2 + $0x90] sm:$0xff] %v1814
      %1851 = vst [vmem:[#allocation2 + $0x98] sm:$0xff] %v1815
      %1852 = vst [vmem:[#allocation2 + $0xa0] sm:$0xff] %v1816
      %1853 = vst [vmem:[#allocation2 + $0xa8] sm:$0xff] %v1817
      %1854 = vst [vmem:[#allocation2 + $0xb0] sm:$0xff] %v1818
      %1855 = vst [vmem:[#allocation2 + $0xb8] sm:$0xff] %v1819
      %1856 = vst [vmem:[#allocation2 + $0xc0] sm:$0xff] %v1820
      %1857 = vst [vmem:[#allocation2 + $0xc8] sm:$0xff] %v1821
      %1858 = vst [vmem:[#allocation2 + $0xd0] sm:$0xff] %v1822
      %1859 = vst [vmem:[#allocation2 + $0xd8] sm:$0xff] %v1823
      %1860 = vst [vmem:[#allocation2 + $0xe0] sm:$0xff] %v1824
      %1861 = vst [vmem:[#allocation2 + $0xe8] sm:$0xff] %v1825
      %1862 = vst [vmem:[#allocation2 + $0xf0] sm:$0xff] %v1826
      %1863 = vst [vmem:[#allocation2 + $0xf8] sm:$0xff] %v1827
      %1864 = vst [vmem:[#allocation2 + $0x100] sm:$0xff] %v1828
      %1865 = vst [vmem:[#allocation2 + $0x108] sm:$0xff] %v1829
      %1866 = vst [vmem:[#allocation2 + $0x110] sm:$0xff] %v1830
      %1867 = vst [vmem:[#allocation2 + $0x118] sm:$0xff] %v1831
      %v1868 = vld [vmem:[%s244 + $0x8] sm:$0xe]
      %v1869 = vld [vmem:[%s244 + $0xc] sm:$0xf]
      %v1870 = vld [vmem:[%s244 + $0x10] sm:$0xf]
      %v1871 = vld [vmem:[%s244 + $0x14] sm:$0xf]
      %v1872 = vld [vmem:[%s244 + $0x18] sm:$0xf]
      %v1873 = vld [vmem:[%s244 + $0x1c] sm:$0xf]
      %v1874 = vld [vmem:[%s244 + $0x20] sm:$0xf]
      %v1875 = vld [vmem:[%s244 + $0x24] sm:$0xf]
      %v1876 = vld [vmem:[%s244 + $0x28] sm:$0xf]
      %v1877 = vld [vmem:[%s244 + $0x2c] sm:$0xf]
      %v1878 = vld [vmem:[%s244 + $0x30] sm:$0xf]
      %v1879 = vld [vmem:[%s244 + $0x34] sm:$0xf]
      %v1880 = vld [vmem:[%s244 + $0x38] sm:$0xf]
      %v1881 = vld [vmem:[%s244 + $0x3c] sm:$0xf]
      %v1882 = vld [vmem:[%s244 + $0x40] sm:$0xf]
      %v1883 = vld [vmem:[%s244 + $0x44] sm:$0xf]
      %v1884 = vld [vmem:[%s244 + $0x48] sm:$0xf]
      %v1885 = vld [vmem:[%s244 + $0x4c] sm:$0xf]
      %v1886 = vld [vmem:[%s244 + $0x50] sm:$0xf]
      %v1887 = vld [vmem:[%s244 + $0x54] sm:$0xf]
      %v1888 = vld [vmem:[%s244 + $0x58] sm:$0xf]
      %v1889 = vld [vmem:[%s244 + $0x5c] sm:$0xf]
      %v1890 = vld [vmem:[%s244 + $0x60] sm:$0xf]
      %v1891 = vld [vmem:[%s244 + $0x64] sm:$0xf]
      %v1892 = vld [vmem:[%s244 + $0x68] sm:$0xf]
      %v1893 = vld [vmem:[%s244 + $0x6c] sm:$0xf]
      %v1894 = vld [vmem:[%s244 + $0x70] sm:$0xf]
      %v1895 = vld [vmem:[%s244 + $0x74] sm:$0xf]
      %v1896 = vld [vmem:[%s244 + $0x78] sm:$0xf]
      %v1897 = vld [vmem:[%s244 + $0x7c] sm:$0xf]
      %v1898 = vld [vmem:[%s244 + $0x80] sm:$0xf]
      %v1899 = vld [vmem:[%s244 + $0x84] sm:$0xf]
      %v1900 = vld [vmem:[%s244 + $0x88] sm:$0xf]
      %v1901 = vld [vmem:[%s244 + $0x8c] sm:$0xf]
      %v1902 = vld [vmem:[%s244 + $0x90] sm:$0xf]
      %v1903 = vld [vmem:[%s244 + $0x94] sm:$0xf]
      %v1904 = vld [vmem:[%s244 + $0x98] sm:$0x1]
      %s1905 = scalar_lea.vmem %s248, 192
      %v1906 = vld [vmem:[%s1905] sm:$0xf]
      %v1907 = vld [vmem:[%s1905 + $0x4] sm:$0xf]
      %v1908 = vld [vmem:[%s1905 + $0x8] sm:$0xf]
      %v1909 = vld [vmem:[%s1905 + $0xc] sm:$0xf]
      %v1910 = vld [vmem:[%s1905 + $0x10] sm:$0xf]
      %v1911 = vld [vmem:[%s1905 + $0x14] sm:$0xf]
      %v1912 = vld [vmem:[%s1905 + $0x18] sm:$0xf]
      %v1913 = vld [vmem:[%s1905 + $0x1c] sm:$0xf]
      %v1914 = vld [vmem:[%s1905 + $0x20] sm:$0xf]
      %v1915 = vld [vmem:[%s1905 + $0x24] sm:$0xf]
      %v1916 = vld [vmem:[%s1905 + $0x28] sm:$0xf]
      %v1917 = vld [vmem:[%s1905 + $0x2c] sm:$0xf]
      %v1918 = vld [vmem:[%s1905 + $0x30] sm:$0xf]
      %v1919 = vld [vmem:[%s1905 + $0x34] sm:$0xf]
      %v1920 = vld [vmem:[%s1905 + $0x38] sm:$0xf]
      %v1921 = vld [vmem:[%s1905 + $0x3c] sm:$0xf]
      %v1959 = vunpack.c.l.b16 %v1868
      %v1960 = vunpack.c.l.b16 %v1869
      %v1961 = vunpack.c.l.b16 %v1870
      %v1962 = vunpack.c.l.b16 %v1871
      %v1963 = vunpack.c.l.b16 %v1872
      %v1964 = vunpack.c.l.b16 %v1873
      %v1965 = vunpack.c.l.b16 %v1874
      %v1966 = vunpack.c.l.b16 %v1875
      %v1967 = vunpack.c.l.b16 %v1876
      %v1968 = vunpack.c.l.b16 %v1877
      %v1969 = vunpack.c.l.b16 %v1878
      %v1970 = vunpack.c.l.b16 %v1879
      %v1971 = vunpack.c.l.b16 %v1880
      %v1972 = vunpack.c.l.b16 %v1881
      %v1973 = vunpack.c.l.b16 %v1882
      %v1974 = vunpack.c.l.b16 %v1883
      %v1975 = vunpack.c.l.b16 %v1884
      %v1976 = vunpack.c.l.b16 %v1885
      %v1977 = vunpack.c.l.b16 %v1886
      %v1978 = vunpack.c.l.b16 %v1887
      %v1979 = vunpack.c.l.b16 %v1888
      %v1980 = vunpack.c.l.b16 %v1889
      %v1981 = vunpack.c.l.b16 %v1890
      %v1982 = vunpack.c.l.b16 %v1891
      %v1983 = vunpack.c.l.b16 %v1892
      %v1984 = vunpack.c.l.b16 %v1893
      %v1985 = vunpack.c.l.b16 %v1894
      %v1986 = vunpack.c.l.b16 %v1895
      %v1987 = vunpack.c.l.b16 %v1896
      %v1988 = vunpack.c.l.b16 %v1897
      %v1989 = vunpack.c.l.b16 %v1898
      %v1990 = vunpack.c.l.b16 %v1899
      %v1991 = vunpack.c.l.b16 %v1900
      %v1992 = vunpack.c.l.b16 %v1901
      %v1993 = vunpack.c.l.b16 %v1902
      %v1994 = vunpack.c.l.b16 %v1903
      %v1995 = vunpack.c.l.b16 %v1904
      %v1996 = vpack.c.b16 %v1960, %v1959
      %v1997 = vpack.c.b16 %v1962, %v1961
      %v1998 = vpack.c.b16 %v1964, %v1963
      %v1999 = vpack.c.b16 %v1966, %v1965
      %v2000 = vpack.c.b16 %v1968, %v1967
      %v2001 = vpack.c.b16 %v1970, %v1969
      %v2002 = vpack.c.b16 %v1972, %v1971
      %v2003 = vpack.c.b16 %v1974, %v1973
      %v2004 = vpack.c.b16 %v1976, %v1975
      %v2005 = vpack.c.b16 %v1978, %v1977
      %v2006 = vpack.c.b16 %v1980, %v1979
      %v2007 = vpack.c.b16 %v1982, %v1981
      %v2008 = vpack.c.b16 %v1984, %v1983
      %v2009 = vpack.c.b16 %v1986, %v1985
      %v2010 = vpack.c.b16 %v1988, %v1987
      %v2011 = vpack.c.b16 %v1990, %v1989
      %v2012 = vpack.c.b16 %v1992, %v1991
      %v2013 = vpack.c.b16 %v1994, %v1993
      %v2014 = vpack.c.b16 %v1995, %v1995
      %v2015 = vrot.slane %v1996, 1
      %v2016 = vrot.slane %v1997, 1
      %v2017 = vsel %vm1479, %v2015, %v2016
      %v2018 = vrot.slane %v1998, 1
      %v2019 = vsel %vm1479, %v2016, %v2018
      %v2020 = vrot.slane %v1999, 1
      %v2021 = vsel %vm1479, %v2018, %v2020
      %v2022 = vrot.slane %v2000, 1
      %v2023 = vsel %vm1479, %v2020, %v2022
      %v2024 = vrot.slane %v2001, 1
      %v2025 = vsel %vm1479, %v2022, %v2024
      %v2026 = vrot.slane %v2002, 1
      %v2027 = vsel %vm1479, %v2024, %v2026
      %v2028 = vrot.slane %v2003, 1
      %v2029 = vsel %vm1479, %v2026, %v2028
      %v2030 = vrot.slane %v2004, 1
      %v2031 = vsel %vm1479, %v2028, %v2030
      %v2032 = vrot.slane %v2005, 1
      %v2033 = vsel %vm1479, %v2030, %v2032
      %v2034 = vrot.slane %v2006, 1
      %v2035 = vsel %vm1479, %v2032, %v2034
      %v2036 = vrot.slane %v2007, 1
      %v2037 = vsel %vm1479, %v2034, %v2036
      %v2038 = vrot.slane %v2008, 1
      %v2039 = vsel %vm1479, %v2036, %v2038
      %v2040 = vrot.slane %v2009, 1
      %v2041 = vsel %vm1479, %v2038, %v2040
      %v2042 = vrot.slane %v2010, 1
      %v2043 = vsel %vm1479, %v2040, %v2042
      %v2044 = vrot.slane %v2011, 1
      %v2045 = vsel %vm1479, %v2042, %v2044
      %v2046 = vrot.slane %v2012, 1
      %v2047 = vsel %vm1479, %v2044, %v2046
      %v2048 = vrot.slane %v2013, 1
      %v2049 = vsel %vm1479, %v2046, %v2048
      %v2050 = vrot.slane %v2014, 1
      %v2051 = vsel %vm1479, %v2048, %v2050
      %v2086 = vunpack.c.l.b16 %v1906
      %v2087 = vunpack.c.l.b16 %v1907
      %v2088 = vunpack.c.l.b16 %v1908
      %v2089 = vunpack.c.l.b16 %v1909
      %v2090 = vunpack.c.l.b16 %v1910
      %v2091 = vunpack.c.l.b16 %v1911
      %v2092 = vunpack.c.l.b16 %v1912
      %v2093 = vunpack.c.l.b16 %v1913
      %v2094 = vunpack.c.l.b16 %v1914
      %v2095 = vunpack.c.l.b16 %v1915
      %v2096 = vunpack.c.l.b16 %v1916
      %v2097 = vunpack.c.l.b16 %v1917
      %v2098 = vunpack.c.l.b16 %v1918
      %v2099 = vunpack.c.l.b16 %v1919
      %v2100 = vunpack.c.l.b16 %v1920
      %v2101 = vunpack.c.l.b16 %v1921
      %v2102 = vpack.c.b16 %v2087, %v2086
      %v2103 = vpack.c.b16 %v2089, %v2088
      %v2104 = vpack.c.b16 %v2091, %v2090
      %v2105 = vpack.c.b16 %v2093, %v2092
      %v2106 = vpack.c.b16 %v2095, %v2094
      %v2107 = vpack.c.b16 %v2097, %v2096
      %v2108 = vpack.c.b16 %v2099, %v2098
      %v2109 = vpack.c.b16 %v2101, %v2100
      %2118 = vmatprep.subr.bf16.mxu0 0
      %2119 = vmatpush1.bf16.msra.mxu0 %v2109
      %2120 = vmatprep.subr.bf16.mxu0 0
      %2121 = vmatpush1.bf16.msra.mxu0 %v2108
      %2122 = vmatprep.subr.bf16.mxu0 0
      %2123 = vmatpush1.bf16.msra.mxu0 %v2107
      %2124 = vmatprep.subr.bf16.mxu0 0
      %2125 = vmatpush1.bf16.msra.mxu0 %v2106
      %2126 = vmatprep.subr.bf16.mxu0 0
      %2127 = vmatpush1.bf16.msra.mxu0 %v2105
      %2128 = vmatprep.subr.bf16.mxu0 0
      %2129 = vmatpush1.bf16.msra.mxu0 %v2104
      %2130 = vmatprep.subr.bf16.mxu0 0
      %2131 = vmatpush1.bf16.msra.mxu0 %v2103
      %2132 = vmatprep.subr.bf16.mxu0 0
      %2133 = vmatpush1.bf16.msra.mxu0 %v2102
      %2134 = vmatprep.subr.bf16.mxu0 0
      %2135 = vmatpush2.bf16.msra.mxu0 0
      %2136 = vmatprep.subr.bf16.mxu0 0
      %2137 = vmatpush2.bf16.msra.mxu0 0
      %2138 = vmatprep.subr.bf16.mxu0 0
      %2139 = vmatpush2.bf16.msra.mxu0 0
      %2140 = vmatprep.subr.bf16.mxu0 0
      %2141 = vmatpush2.bf16.msra.mxu0 0
      %2142 = vmatprep.subr.bf16.mxu0 0
      %2143 = vmatpush2.bf16.msra.mxu0 0
      %2144 = vmatprep.subr.bf16.mxu0 0
      %2145 = vmatpush2.bf16.msra.mxu0 0
      %2146 = vmatprep.subr.bf16.mxu0 0
      %2147 = vmatpush2.bf16.msra.mxu0 0
      %2148 = vmatprep.subr.bf16.mxu0 0
      %2149 = vmatpush2.bf16.msra.mxu0 0
      %2150 = vmatprep.mubr.bf16.mxu0 0
      %2151 = vmatmul.mubr.bf16.gmra.mxu0 %v2017
      %v2152 = vpop.f32.mrf.mxu0
      %v2153 = vadd.f32 0.0, %v2152
      %v2154 = vpop.f32.mrf.mxu0
      %v2155 = vpop.f32.mrf.mxu0
      %v2156 = vadd.f32 0.0, %v2155
      %v2157 = vpop.f32.mrf.mxu0
      %2158 = vmatprep.mubr.bf16.mxu0 0
      %2159 = vmatmul.mubr.bf16.gmra.mxu0 %v2019
      %v2160 = vpop.f32.mrf.mxu0
      %v2161 = vadd.f32 0.0, %v2160
      %v2162 = vpop.f32.mrf.mxu0
      %v2163 = vpop.f32.mrf.mxu0
      %v2164 = vadd.f32 0.0, %v2163
      %v2165 = vpop.f32.mrf.mxu0
      %2166 = vmatprep.mubr.bf16.mxu0 0
      %2167 = vmatmul.mubr.bf16.gmra.mxu0 %v2021
      %v2168 = vpop.f32.mrf.mxu0
      %v2169 = vadd.f32 0.0, %v2168
      %v2170 = vpop.f32.mrf.mxu0
      %v2171 = vpop.f32.mrf.mxu0
      %v2172 = vadd.f32 0.0, %v2171
      %v2173 = vpop.f32.mrf.mxu0
      %2174 = vmatprep.mubr.bf16.mxu0 0
      %2175 = vmatmul.mubr.bf16.gmra.mxu0 %v2023
      %v2176 = vpop.f32.mrf.mxu0
      %v2177 = vadd.f32 0.0, %v2176
      %v2178 = vpop.f32.mrf.mxu0
      %v2179 = vpop.f32.mrf.mxu0
      %v2180 = vadd.f32 0.0, %v2179
      %v2181 = vpop.f32.mrf.mxu0
      %2182 = vmatprep.mubr.bf16.mxu0 0
      %2183 = vmatmul.mubr.bf16.gmra.mxu0 %v2025
      %v2184 = vpop.f32.mrf.mxu0
      %v2185 = vadd.f32 0.0, %v2184
      %v2186 = vpop.f32.mrf.mxu0
      %v2187 = vpop.f32.mrf.mxu0
      %v2188 = vadd.f32 0.0, %v2187
      %v2189 = vpop.f32.mrf.mxu0
      %2190 = vmatprep.mubr.bf16.mxu0 0
      %2191 = vmatmul.mubr.bf16.gmra.mxu0 %v2027
      %v2192 = vpop.f32.mrf.mxu0
      %v2193 = vadd.f32 0.0, %v2192
      %v2194 = vpop.f32.mrf.mxu0
      %v2195 = vpop.f32.mrf.mxu0
      %v2196 = vadd.f32 0.0, %v2195
      %v2197 = vpop.f32.mrf.mxu0
      %2198 = vmatprep.mubr.bf16.mxu0 0
      %2199 = vmatmul.mubr.bf16.gmra.mxu0 %v2029
      %v2200 = vpop.f32.mrf.mxu0
      %v2201 = vadd.f32 0.0, %v2200
      %v2202 = vpop.f32.mrf.mxu0
      %v2203 = vpop.f32.mrf.mxu0
      %v2204 = vadd.f32 0.0, %v2203
      %v2205 = vpop.f32.mrf.mxu0
      %2206 = vmatprep.mubr.bf16.mxu0 0
      %2207 = vmatmul.mubr.bf16.gmra.mxu0 %v2031
      %v2208 = vpop.f32.mrf.mxu0
      %v2209 = vadd.f32 0.0, %v2208
      %v2210 = vpop.f32.mrf.mxu0
      %v2211 = vpop.f32.mrf.mxu0
      %v2212 = vadd.f32 0.0, %v2211
      %v2213 = vpop.f32.mrf.mxu0
      %2214 = vmatprep.mubr.bf16.mxu0 0
      %2215 = vmatmul.mubr.bf16.gmra.mxu0 %v2033
      %v2216 = vpop.f32.mrf.mxu0
      %v2217 = vadd.f32 0.0, %v2216
      %v2218 = vpop.f32.mrf.mxu0
      %v2219 = vpop.f32.mrf.mxu0
      %v2220 = vadd.f32 0.0, %v2219
      %v2221 = vpop.f32.mrf.mxu0
      %2222 = vmatprep.mubr.bf16.mxu0 0
      %2223 = vmatmul.mubr.bf16.gmra.mxu0 %v2035
      %v2224 = vpop.f32.mrf.mxu0
      %v2225 = vadd.f32 0.0, %v2224
      %v2226 = vpop.f32.mrf.mxu0
      %v2227 = vpop.f32.mrf.mxu0
      %v2228 = vadd.f32 0.0, %v2227
      %v2229 = vpop.f32.mrf.mxu0
      %2230 = vmatprep.mubr.bf16.mxu0 0
      %2231 = vmatmul.mubr.bf16.gmra.mxu0 %v2037
      %v2232 = vpop.f32.mrf.mxu0
      %v2233 = vadd.f32 0.0, %v2232
      %v2234 = vpop.f32.mrf.mxu0
      %v2235 = vpop.f32.mrf.mxu0
      %v2236 = vadd.f32 0.0, %v2235
      %v2237 = vpop.f32.mrf.mxu0
      %2238 = vmatprep.mubr.bf16.mxu0 0
      %2239 = vmatmul.mubr.bf16.gmra.mxu0 %v2039
      %v2240 = vpop.f32.mrf.mxu0
      %v2241 = vadd.f32 0.0, %v2240
      %v2242 = vpop.f32.mrf.mxu0
      %v2243 = vpop.f32.mrf.mxu0
      %v2244 = vadd.f32 0.0, %v2243
      %v2245 = vpop.f32.mrf.mxu0
      %2246 = vmatprep.mubr.bf16.mxu0 0
      %2247 = vmatmul.mubr.bf16.gmra.mxu0 %v2041
      %v2248 = vpop.f32.mrf.mxu0
      %v2249 = vadd.f32 0.0, %v2248
      %v2250 = vpop.f32.mrf.mxu0
      %v2251 = vpop.f32.mrf.mxu0
      %v2252 = vadd.f32 0.0, %v2251
      %v2253 = vpop.f32.mrf.mxu0
      %2254 = vmatprep.mubr.bf16.mxu0 0
      %2255 = vmatmul.mubr.bf16.gmra.mxu0 %v2043
      %v2256 = vpop.f32.mrf.mxu0
      %v2257 = vadd.f32 0.0, %v2256
      %v2258 = vpop.f32.mrf.mxu0
      %v2259 = vpop.f32.mrf.mxu0
      %v2260 = vadd.f32 0.0, %v2259
      %v2261 = vpop.f32.mrf.mxu0
      %2262 = vmatprep.mubr.bf16.mxu0 0
      %2263 = vmatmul.mubr.bf16.gmra.mxu0 %v2045
      %v2264 = vpop.f32.mrf.mxu0
      %v2265 = vadd.f32 0.0, %v2264
      %v2266 = vpop.f32.mrf.mxu0
      %v2267 = vpop.f32.mrf.mxu0
      %v2268 = vadd.f32 0.0, %v2267
      %v2269 = vpop.f32.mrf.mxu0
      %2270 = vmatprep.mubr.bf16.mxu0 0
      %2271 = vmatmul.mubr.bf16.gmra.mxu0 %v2047
      %v2272 = vpop.f32.mrf.mxu0
      %v2273 = vadd.f32 0.0, %v2272
      %v2274 = vpop.f32.mrf.mxu0
      %v2275 = vpop.f32.mrf.mxu0
      %v2276 = vadd.f32 0.0, %v2275
      %v2277 = vpop.f32.mrf.mxu0
      %2278 = vmatprep.mubr.bf16.mxu0 0
      %2279 = vmatmul.mubr.bf16.gmra.mxu0 %v2049
      %v2280 = vpop.f32.mrf.mxu0
      %v2281 = vadd.f32 0.0, %v2280
      %v2282 = vpop.f32.mrf.mxu0
      %v2283 = vpop.f32.mrf.mxu0
      %v2284 = vadd.f32 0.0, %v2283
      %v2285 = vpop.f32.mrf.mxu0
      %2286 = vmatprep.mubr.bf16.mxu0 0
      %2287 = vmatmul.mubr.bf16.gmra.mxu0 %v2051
      %v2288 = vpop.f32.mrf.mxu0
      %v2289 = vadd.f32 0.0, %v2288
      %v2290 = vpop.f32.mrf.mxu0
      %v2291 = vpop.f32.mrf.mxu0
      %v2292 = vadd.f32 0.0, %v2291
      %v2293 = vpop.f32.mrf.mxu0
      %2294 = vdwg.mxu0
      %v2295 = vld [vmem:[#allocation2] sm:$0xff]
      %v2296 = vld [vmem:[#allocation2 + $0x8] sm:$0xff]
      %v2297 = vld [vmem:[#allocation2 + $0x10] sm:$0xff]
      %v2298 = vld [vmem:[#allocation2 + $0x18] sm:$0xff]
      %v2299 = vld [vmem:[#allocation2 + $0x20] sm:$0xff]
      %v2300 = vld [vmem:[#allocation2 + $0x28] sm:$0xff]
      %v2301 = vld [vmem:[#allocation2 + $0x30] sm:$0xff]
      %v2302 = vld [vmem:[#allocation2 + $0x38] sm:$0xff]
      %v2303 = vld [vmem:[#allocation2 + $0x40] sm:$0xff]
      %v2304 = vld [vmem:[#allocation2 + $0x48] sm:$0xff]
      %v2305 = vld [vmem:[#allocation2 + $0x50] sm:$0xff]
      %v2306 = vld [vmem:[#allocation2 + $0x58] sm:$0xff]
      %v2307 = vld [vmem:[#allocation2 + $0x60] sm:$0xff]
      %v2308 = vld [vmem:[#allocation2 + $0x68] sm:$0xff]
      %v2309 = vld [vmem:[#allocation2 + $0x70] sm:$0xff]
      %v2310 = vld [vmem:[#allocation2 + $0x78] sm:$0xff]
      %v2311 = vld [vmem:[#allocation2 + $0x80] sm:$0xff]
      %v2312 = vld [vmem:[#allocation2 + $0x88] sm:$0xff]
      %v2313 = vld [vmem:[#allocation2 + $0x90] sm:$0xff]
      %v2314 = vld [vmem:[#allocation2 + $0x98] sm:$0xff]
      %v2315 = vld [vmem:[#allocation2 + $0xa0] sm:$0xff]
      %v2316 = vld [vmem:[#allocation2 + $0xa8] sm:$0xff]
      %v2317 = vld [vmem:[#allocation2 + $0xb0] sm:$0xff]
      %v2318 = vld [vmem:[#allocation2 + $0xb8] sm:$0xff]
      %v2319 = vld [vmem:[#allocation2 + $0xc0] sm:$0xff]
      %v2320 = vld [vmem:[#allocation2 + $0xc8] sm:$0xff]
      %v2321 = vld [vmem:[#allocation2 + $0xd0] sm:$0xff]
      %v2322 = vld [vmem:[#allocation2 + $0xd8] sm:$0xff]
      %v2323 = vld [vmem:[#allocation2 + $0xe0] sm:$0xff]
      %v2324 = vld [vmem:[#allocation2 + $0xe8] sm:$0xff]
      %v2325 = vld [vmem:[#allocation2 + $0xf0] sm:$0xff]
      %v2326 = vld [vmem:[#allocation2 + $0xf8] sm:$0xff]
      %v2327 = vld [vmem:[#allocation2 + $0x100] sm:$0xff]
      %v2328 = vld [vmem:[#allocation2 + $0x108] sm:$0xff]
      %v2329 = vld [vmem:[#allocation2 + $0x110] sm:$0xff]
      %v2330 = vld [vmem:[#allocation2 + $0x118] sm:$0xff]
      %v2331 = vadd.f32 %v2295, %v2153
      %v2332 = vadd.f32 %v2296, %v2156
      %v2333 = vadd.f32 %v2297, %v2161
      %v2334 = vadd.f32 %v2298, %v2164
      %v2335 = vadd.f32 %v2299, %v2169
      %v2336 = vadd.f32 %v2300, %v2172
      %v2337 = vadd.f32 %v2301, %v2177
      %v2338 = vadd.f32 %v2302, %v2180
      %v2339 = vadd.f32 %v2303, %v2185
      %v2340 = vadd.f32 %v2304, %v2188
      %v2341 = vadd.f32 %v2305, %v2193
      %v2342 = vadd.f32 %v2306, %v2196
      %v2343 = vadd.f32 %v2307, %v2201
      %v2344 = vadd.f32 %v2308, %v2204
      %v2345 = vadd.f32 %v2309, %v2209
      %v2346 = vadd.f32 %v2310, %v2212
      %v2347 = vadd.f32 %v2311, %v2217
      %v2348 = vadd.f32 %v2312, %v2220
      %v2349 = vadd.f32 %v2313, %v2225
      %v2350 = vadd.f32 %v2314, %v2228
      %v2351 = vadd.f32 %v2315, %v2233
      %v2352 = vadd.f32 %v2316, %v2236
      %v2353 = vadd.f32 %v2317, %v2241
      %v2354 = vadd.f32 %v2318, %v2244
      %v2355 = vadd.f32 %v2319, %v2249
      %v2356 = vadd.f32 %v2320, %v2252
      %v2357 = vadd.f32 %v2321, %v2257
      %v2358 = vadd.f32 %v2322, %v2260
      %v2359 = vadd.f32 %v2323, %v2265
      %v2360 = vadd.f32 %v2324, %v2268
      %v2361 = vadd.f32 %v2325, %v2273
      %v2362 = vadd.f32 %v2326, %v2276
      %v2363 = vadd.f32 %v2327, %v2281
      %v2364 = vadd.f32 %v2328, %v2284
      %v2365 = vadd.f32 %v2329, %v2289
      %v2366 = vadd.f32 %v2330, %v2292
      %2367 = vst [vmem:[#allocation2] sm:$0xff] %v2331
      %2368 = vst [vmem:[#allocation2 + $0x8] sm:$0xff] %v2332
      %2369 = vst [vmem:[#allocation2 + $0x10] sm:$0xff] %v2333
      %2370 = vst [vmem:[#allocation2 + $0x18] sm:$0xff] %v2334
      %2371 = vst [vmem:[#allocation2 + $0x20] sm:$0xff] %v2335
      %2372 = vst [vmem:[#allocation2 + $0x28] sm:$0xff] %v2336
      %2373 = vst [vmem:[#allocation2 + $0x30] sm:$0xff] %v2337
      %2374 = vst [vmem:[#allocation2 + $0x38] sm:$0xff] %v2338
      %2375 = vst [vmem:[#allocation2 + $0x40] sm:$0xff] %v2339
      %2376 = vst [vmem:[#allocation2 + $0x48] sm:$0xff] %v2340
      %2377 = vst [vmem:[#allocation2 + $0x50] sm:$0xff] %v2341
      %2378 = vst [vmem:[#allocation2 + $0x58] sm:$0xff] %v2342
      %2379 = vst [vmem:[#allocation2 + $0x60] sm:$0xff] %v2343
      %2380 = vst [vmem:[#allocation2 + $0x68] sm:$0xff] %v2344
      %2381 = vst [vmem:[#allocation2 + $0x70] sm:$0xff] %v2345
      %2382 = vst [vmem:[#allocation2 + $0x78] sm:$0xff] %v2346
      %2383 = vst [vmem:[#allocation2 + $0x80] sm:$0xff] %v2347
      %2384 = vst [vmem:[#allocation2 + $0x88] sm:$0xff] %v2348
      %2385 = vst [vmem:[#allocation2 + $0x90] sm:$0xff] %v2349
      %2386 = vst [vmem:[#allocation2 + $0x98] sm:$0xff] %v2350
      %2387 = vst [vmem:[#allocation2 + $0xa0] sm:$0xff] %v2351
      %2388 = vst [vmem:[#allocation2 + $0xa8] sm:$0xff] %v2352
      %2389 = vst [vmem:[#allocation2 + $0xb0] sm:$0xff] %v2353
      %2390 = vst [vmem:[#allocation2 + $0xb8] sm:$0xff] %v2354
      %2391 = vst [vmem:[#allocation2 + $0xc0] sm:$0xff] %v2355
      %2392 = vst [vmem:[#allocation2 + $0xc8] sm:$0xff] %v2356
      %2393 = vst [vmem:[#allocation2 + $0xd0] sm:$0xff] %v2357
      %2394 = vst [vmem:[#allocation2 + $0xd8] sm:$0xff] %v2358
      %2395 = vst [vmem:[#allocation2 + $0xe0] sm:$0xff] %v2359
      %2396 = vst [vmem:[#allocation2 + $0xe8] sm:$0xff] %v2360
      %2397 = vst [vmem:[#allocation2 + $0xf0] sm:$0xff] %v2361
      %2398 = vst [vmem:[#allocation2 + $0xf8] sm:$0xff] %v2362
      %2399 = vst [vmem:[#allocation2 + $0x100] sm:$0xff] %v2363
      %2400 = vst [vmem:[#allocation2 + $0x108] sm:$0xff] %v2364
      %2401 = vst [vmem:[#allocation2 + $0x110] sm:$0xff] %v2365
      %2402 = vst [vmem:[#allocation2 + $0x118] sm:$0xff] %v2366
      %v2403 = vld [vmem:[%s244 + $0x8] sm:$0xe]
      %v2404 = vld [vmem:[%s244 + $0xc] sm:$0xf]
      %v2405 = vld [vmem:[%s244 + $0x10] sm:$0xf]
      %v2406 = vld [vmem:[%s244 + $0x14] sm:$0xf]
      %v2407 = vld [vmem:[%s244 + $0x18] sm:$0xf]
      %v2408 = vld [vmem:[%s244 + $0x1c] sm:$0xf]
      %v2409 = vld [vmem:[%s244 + $0x20] sm:$0xf]
      %v2410 = vld [vmem:[%s244 + $0x24] sm:$0xf]
      %v2411 = vld [vmem:[%s244 + $0x28] sm:$0xf]
      %v2412 = vld [vmem:[%s244 + $0x2c] sm:$0xf]
      %v2413 = vld [vmem:[%s244 + $0x30] sm:$0xf]
      %v2414 = vld [vmem:[%s244 + $0x34] sm:$0xf]
      %v2415 = vld [vmem:[%s244 + $0x38] sm:$0xf]
      %v2416 = vld [vmem:[%s244 + $0x3c] sm:$0xf]
      %v2417 = vld [vmem:[%s244 + $0x40] sm:$0xf]
      %v2418 = vld [vmem:[%s244 + $0x44] sm:$0xf]
      %v2419 = vld [vmem:[%s244 + $0x48] sm:$0xf]
      %v2420 = vld [vmem:[%s244 + $0x4c] sm:$0xf]
      %v2421 = vld [vmem:[%s244 + $0x50] sm:$0xf]
      %v2422 = vld [vmem:[%s244 + $0x54] sm:$0xf]
      %v2423 = vld [vmem:[%s244 + $0x58] sm:$0xf]
      %v2424 = vld [vmem:[%s244 + $0x5c] sm:$0xf]
      %v2425 = vld [vmem:[%s244 + $0x60] sm:$0xf]
      %v2426 = vld [vmem:[%s244 + $0x64] sm:$0xf]
      %v2427 = vld [vmem:[%s244 + $0x68] sm:$0xf]
      %v2428 = vld [vmem:[%s244 + $0x6c] sm:$0xf]
      %v2429 = vld [vmem:[%s244 + $0x70] sm:$0xf]
      %v2430 = vld [vmem:[%s244 + $0x74] sm:$0xf]
      %v2431 = vld [vmem:[%s244 + $0x78] sm:$0xf]
      %v2432 = vld [vmem:[%s244 + $0x7c] sm:$0xf]
      %v2433 = vld [vmem:[%s244 + $0x80] sm:$0xf]
      %v2434 = vld [vmem:[%s244 + $0x84] sm:$0xf]
      %v2435 = vld [vmem:[%s244 + $0x88] sm:$0xf]
      %v2436 = vld [vmem:[%s244 + $0x8c] sm:$0xf]
      %v2437 = vld [vmem:[%s244 + $0x90] sm:$0xf]
      %v2438 = vld [vmem:[%s244 + $0x94] sm:$0xf]
      %v2439 = vld [vmem:[%s244 + $0x98] sm:$0x3]
      %s2440 = scalar_lea.vmem %s248, 256
      %v2441 = vld [vmem:[%s2440] sm:$0xf]
      %v2442 = vld [vmem:[%s2440 + $0x4] sm:$0xf]
      %v2443 = vld [vmem:[%s2440 + $0x8] sm:$0xf]
      %v2444 = vld [vmem:[%s2440 + $0xc] sm:$0xf]
      %v2445 = vld [vmem:[%s2440 + $0x10] sm:$0xf]
      %v2446 = vld [vmem:[%s2440 + $0x14] sm:$0xf]
      %v2447 = vld [vmem:[%s2440 + $0x18] sm:$0xf]
      %v2448 = vld [vmem:[%s2440 + $0x1c] sm:$0xf]
      %v2449 = vld [vmem:[%s2440 + $0x20] sm:$0xf]
      %v2450 = vld [vmem:[%s2440 + $0x24] sm:$0xf]
      %v2451 = vld [vmem:[%s2440 + $0x28] sm:$0xf]
      %v2452 = vld [vmem:[%s2440 + $0x2c] sm:$0xf]
      %v2453 = vld [vmem:[%s2440 + $0x30] sm:$0xf]
      %v2454 = vld [vmem:[%s2440 + $0x34] sm:$0xf]
      %v2455 = vld [vmem:[%s2440 + $0x38] sm:$0xf]
      %v2456 = vld [vmem:[%s2440 + $0x3c] sm:$0xf]
      %v2494 = vunpack.c.l.b16 %v2403
      %v2495 = vunpack.c.l.b16 %v2404
      %v2496 = vunpack.c.l.b16 %v2405
      %v2497 = vunpack.c.l.b16 %v2406
      %v2498 = vunpack.c.l.b16 %v2407
      %v2499 = vunpack.c.l.b16 %v2408
      %v2500 = vunpack.c.l.b16 %v2409
      %v2501 = vunpack.c.l.b16 %v2410
      %v2502 = vunpack.c.l.b16 %v2411
      %v2503 = vunpack.c.l.b16 %v2412
      %v2504 = vunpack.c.l.b16 %v2413
      %v2505 = vunpack.c.l.b16 %v2414
      %v2506 = vunpack.c.l.b16 %v2415
      %v2507 = vunpack.c.l.b16 %v2416
      %v2508 = vunpack.c.l.b16 %v2417
      %v2509 = vunpack.c.l.b16 %v2418
      %v2510 = vunpack.c.l.b16 %v2419
      %v2511 = vunpack.c.l.b16 %v2420
      %v2512 = vunpack.c.l.b16 %v2421
      %v2513 = vunpack.c.l.b16 %v2422
      %v2514 = vunpack.c.l.b16 %v2423
      %v2515 = vunpack.c.l.b16 %v2424
      %v2516 = vunpack.c.l.b16 %v2425
      %v2517 = vunpack.c.l.b16 %v2426
      %v2518 = vunpack.c.l.b16 %v2427
      %v2519 = vunpack.c.l.b16 %v2428
      %v2520 = vunpack.c.l.b16 %v2429
      %v2521 = vunpack.c.l.b16 %v2430
      %v2522 = vunpack.c.l.b16 %v2431
      %v2523 = vunpack.c.l.b16 %v2432
      %v2524 = vunpack.c.l.b16 %v2433
      %v2525 = vunpack.c.l.b16 %v2434
      %v2526 = vunpack.c.l.b16 %v2435
      %v2527 = vunpack.c.l.b16 %v2436
      %v2528 = vunpack.c.l.b16 %v2437
      %v2529 = vunpack.c.l.b16 %v2438
      %v2530 = vunpack.c.l.b16 %v2439
      %v2531 = vpack.c.b16 %v2495, %v2494
      %v2532 = vpack.c.b16 %v2497, %v2496
      %v2533 = vpack.c.b16 %v2499, %v2498
      %v2534 = vpack.c.b16 %v2501, %v2500
      %v2535 = vpack.c.b16 %v2503, %v2502
      %v2536 = vpack.c.b16 %v2505, %v2504
      %v2537 = vpack.c.b16 %v2507, %v2506
      %v2538 = vpack.c.b16 %v2509, %v2508
      %v2539 = vpack.c.b16 %v2511, %v2510
      %v2540 = vpack.c.b16 %v2513, %v2512
      %v2541 = vpack.c.b16 %v2515, %v2514
      %v2542 = vpack.c.b16 %v2517, %v2516
      %v2543 = vpack.c.b16 %v2519, %v2518
      %v2544 = vpack.c.b16 %v2521, %v2520
      %v2545 = vpack.c.b16 %v2523, %v2522
      %v2546 = vpack.c.b16 %v2525, %v2524
      %v2547 = vpack.c.b16 %v2527, %v2526
      %v2548 = vpack.c.b16 %v2529, %v2528
      %v2549 = vpack.c.b16 %v2530, %v2530
      %vm2550 = vsmask.f32 6400
      %v2552 = vshrl.u32 %v2531, 16
      %v2554 = vrot.slane %v2552, 1
      %v2555 = vshll.u32 %v2531, 16
      %v2557 = vrot.slane %v2555, 2
      %v2558 = vor.u32 %v2554, %v2557
      %v2560 = vshrl.u32 %v2532, 16
      %v2562 = vrot.slane %v2560, 1
      %v2563 = vshll.u32 %v2532, 16
      %v2565 = vrot.slane %v2563, 2
      %v2566 = vor.u32 %v2562, %v2565
      %v2567 = vsel %vm2550, %v2558, %v2566
      %v2569 = vshrl.u32 %v2533, 16
      %v2571 = vrot.slane %v2569, 1
      %v2572 = vshll.u32 %v2533, 16
      %v2574 = vrot.slane %v2572, 2
      %v2575 = vor.u32 %v2571, %v2574
      %v2576 = vsel %vm2550, %v2566, %v2575
      %v2578 = vshrl.u32 %v2534, 16
      %v2580 = vrot.slane %v2578, 1
      %v2581 = vshll.u32 %v2534, 16
      %v2583 = vrot.slane %v2581, 2
      %v2584 = vor.u32 %v2580, %v2583
      %v2585 = vsel %vm2550, %v2575, %v2584
      %v2587 = vshrl.u32 %v2535, 16
      %v2589 = vrot.slane %v2587, 1
      %v2590 = vshll.u32 %v2535, 16
      %v2592 = vrot.slane %v2590, 2
      %v2593 = vor.u32 %v2589, %v2592
      %v2594 = vsel %vm2550, %v2584, %v2593
      %v2596 = vshrl.u32 %v2536, 16
      %v2598 = vrot.slane %v2596, 1
      %v2599 = vshll.u32 %v2536, 16
      %v2601 = vrot.slane %v2599, 2
      %v2602 = vor.u32 %v2598, %v2601
      %v2603 = vsel %vm2550, %v2593, %v2602
      %v2605 = vshrl.u32 %v2537, 16
      %v2607 = vrot.slane %v2605, 1
      %v2608 = vshll.u32 %v2537, 16
      %v2610 = vrot.slane %v2608, 2
      %v2611 = vor.u32 %v2607, %v2610
      %v2612 = vsel %vm2550, %v2602, %v2611
      %v2614 = vshrl.u32 %v2538, 16
      %v2616 = vrot.slane %v2614, 1
      %v2617 = vshll.u32 %v2538, 16
      %v2619 = vrot.slane %v2617, 2
      %v2620 = vor.u32 %v2616, %v2619
      %v2621 = vsel %vm2550, %v2611, %v2620
      %v2623 = vshrl.u32 %v2539, 16
      %v2625 = vrot.slane %v2623, 1
      %v2626 = vshll.u32 %v2539, 16
      %v2628 = vrot.slane %v2626, 2
      %v2629 = vor.u32 %v2625, %v2628
      %v2630 = vsel %vm2550, %v2620, %v2629
      %v2632 = vshrl.u32 %v2540, 16
      %v2634 = vrot.slane %v2632, 1
      %v2635 = vshll.u32 %v2540, 16
      %v2637 = vrot.slane %v2635, 2
      %v2638 = vor.u32 %v2634, %v2637
      %v2639 = vsel %vm2550, %v2629, %v2638
      %v2641 = vshrl.u32 %v2541, 16
      %v2643 = vrot.slane %v2641, 1
      %v2644 = vshll.u32 %v2541, 16
      %v2646 = vrot.slane %v2644, 2
      %v2647 = vor.u32 %v2643, %v2646
      %v2648 = vsel %vm2550, %v2638, %v2647
      %v2650 = vshrl.u32 %v2542, 16
      %v2652 = vrot.slane %v2650, 1
      %v2653 = vshll.u32 %v2542, 16
      %v2655 = vrot.slane %v2653, 2
      %v2656 = vor.u32 %v2652, %v2655
      %v2657 = vsel %vm2550, %v2647, %v2656
      %v2659 = vshrl.u32 %v2543, 16
      %v2661 = vrot.slane %v2659, 1
      %v2662 = vshll.u32 %v2543, 16
      %v2664 = vrot.slane %v2662, 2
      %v2665 = vor.u32 %v2661, %v2664
      %v2666 = vsel %vm2550, %v2656, %v2665
      %v2668 = vshrl.u32 %v2544, 16
      %v2670 = vrot.slane %v2668, 1
      %v2671 = vshll.u32 %v2544, 16
      %v2673 = vrot.slane %v2671, 2
      %v2674 = vor.u32 %v2670, %v2673
      %v2675 = vsel %vm2550, %v2665, %v2674
      %v2677 = vshrl.u32 %v2545, 16
      %v2679 = vrot.slane %v2677, 1
      %v2680 = vshll.u32 %v2545, 16
      %v2682 = vrot.slane %v2680, 2
      %v2683 = vor.u32 %v2679, %v2682
      %v2684 = vsel %vm2550, %v2674, %v2683
      %v2686 = vshrl.u32 %v2546, 16
      %v2688 = vrot.slane %v2686, 1
      %v2689 = vshll.u32 %v2546, 16
      %v2691 = vrot.slane %v2689, 2
      %v2692 = vor.u32 %v2688, %v2691
      %v2693 = vsel %vm2550, %v2683, %v2692
      %v2695 = vshrl.u32 %v2547, 16
      %v2697 = vrot.slane %v2695, 1
      %v2698 = vshll.u32 %v2547, 16
      %v2700 = vrot.slane %v2698, 2
      %v2701 = vor.u32 %v2697, %v2700
      %v2702 = vsel %vm2550, %v2692, %v2701
      %v2704 = vshrl.u32 %v2548, 16
      %v2706 = vrot.slane %v2704, 1
      %v2707 = vshll.u32 %v2548, 16
      %v2709 = vrot.slane %v2707, 2
      %v2710 = vor.u32 %v2706, %v2709
      %v2711 = vsel %vm2550, %v2701, %v2710
      %v2713 = vshrl.u32 %v2549, 16
      %v2715 = vrot.slane %v2713, 1
      %v2716 = vshll.u32 %v2549, 16
      %v2718 = vrot.slane %v2716, 2
      %v2719 = vor.u32 %v2715, %v2718
      %v2720 = vsel %vm2550, %v2710, %v2719
      %v2755 = vunpack.c.l.b16 %v2441
      %v2756 = vunpack.c.l.b16 %v2442
      %v2757 = vunpack.c.l.b16 %v2443
      %v2758 = vunpack.c.l.b16 %v2444
      %v2759 = vunpack.c.l.b16 %v2445
      %v2760 = vunpack.c.l.b16 %v2446
      %v2761 = vunpack.c.l.b16 %v2447
      %v2762 = vunpack.c.l.b16 %v2448
      %v2763 = vunpack.c.l.b16 %v2449
      %v2764 = vunpack.c.l.b16 %v2450
      %v2765 = vunpack.c.l.b16 %v2451
      %v2766 = vunpack.c.l.b16 %v2452
      %v2767 = vunpack.c.l.b16 %v2453
      %v2768 = vunpack.c.l.b16 %v2454
      %v2769 = vunpack.c.l.b16 %v2455
      %v2770 = vunpack.c.l.b16 %v2456
      %v2771 = vpack.c.b16 %v2756, %v2755
      %v2772 = vpack.c.b16 %v2758, %v2757
      %v2773 = vpack.c.b16 %v2760, %v2759
      %v2774 = vpack.c.b16 %v2762, %v2761
      %v2775 = vpack.c.b16 %v2764, %v2763
      %v2776 = vpack.c.b16 %v2766, %v2765
      %v2777 = vpack.c.b16 %v2768, %v2767
      %v2778 = vpack.c.b16 %v2770, %v2769
      %2787 = vmatprep.subr.bf16.mxu0 0
      %2788 = vmatpush1.bf16.msra.mxu0 %v2778
      %2789 = vmatprep.subr.bf16.mxu0 0
      %2790 = vmatpush1.bf16.msra.mxu0 %v2777
      %2791 = vmatprep.subr.bf16.mxu0 0
      %2792 = vmatpush1.bf16.msra.mxu0 %v2776
      %2793 = vmatprep.subr.bf16.mxu0 0
      %2794 = vmatpush1.bf16.msra.mxu0 %v2775
      %2795 = vmatprep.subr.bf16.mxu0 0
      %2796 = vmatpush1.bf16.msra.mxu0 %v2774
      %2797 = vmatprep.subr.bf16.mxu0 0
      %2798 = vmatpush1.bf16.msra.mxu0 %v2773
      %2799 = vmatprep.subr.bf16.mxu0 0
      %2800 = vmatpush1.bf16.msra.mxu0 %v2772
      %2801 = vmatprep.subr.bf16.mxu0 0
      %2802 = vmatpush1.bf16.msra.mxu0 %v2771
      %2803 = vmatprep.subr.bf16.mxu0 0
      %2804 = vmatpush2.bf16.msra.mxu0 0
      %2805 = vmatprep.subr.bf16.mxu0 0
      %2806 = vmatpush2.bf16.msra.mxu0 0
      %2807 = vmatprep.subr.bf16.mxu0 0
      %2808 = vmatpush2.bf16.msra.mxu0 0
      %2809 = vmatprep.subr.bf16.mxu0 0
      %2810 = vmatpush2.bf16.msra.mxu0 0
      %2811 = vmatprep.subr.bf16.mxu0 0
      %2812 = vmatpush2.bf16.msra.mxu0 0
      %2813 = vmatprep.subr.bf16.mxu0 0
      %2814 = vmatpush2.bf16.msra.mxu0 0
      %2815 = vmatprep.subr.bf16.mxu0 0
      %2816 = vmatpush2.bf16.msra.mxu0 0
      %2817 = vmatprep.subr.bf16.mxu0 0
      %2818 = vmatpush2.bf16.msra.mxu0 0
      %2819 = vmatprep.mubr.bf16.mxu0 0
      %2820 = vmatmul.mubr.bf16.gmra.mxu0 %v2567
      %v2821 = vpop.f32.mrf.mxu0
      %v2822 = vadd.f32 0.0, %v2821
      %v2823 = vpop.f32.mrf.mxu0
      %v2824 = vpop.f32.mrf.mxu0
      %v2825 = vadd.f32 0.0, %v2824
      %v2826 = vpop.f32.mrf.mxu0
      %2827 = vmatprep.mubr.bf16.mxu0 0
      %2828 = vmatmul.mubr.bf16.gmra.mxu0 %v2576
      %v2829 = vpop.f32.mrf.mxu0
      %v2830 = vadd.f32 0.0, %v2829
      %v2831 = vpop.f32.mrf.mxu0
      %v2832 = vpop.f32.mrf.mxu0
      %v2833 = vadd.f32 0.0, %v2832
      %v2834 = vpop.f32.mrf.mxu0
      %2835 = vmatprep.mubr.bf16.mxu0 0
      %2836 = vmatmul.mubr.bf16.gmra.mxu0 %v2585
      %v2837 = vpop.f32.mrf.mxu0
      %v2838 = vadd.f32 0.0, %v2837
      %v2839 = vpop.f32.mrf.mxu0
      %v2840 = vpop.f32.mrf.mxu0
      %v2841 = vadd.f32 0.0, %v2840
      %v2842 = vpop.f32.mrf.mxu0
      %2843 = vmatprep.mubr.bf16.mxu0 0
      %2844 = vmatmul.mubr.bf16.gmra.mxu0 %v2594
      %v2845 = vpop.f32.mrf.mxu0
      %v2846 = vadd.f32 0.0, %v2845
      %v2847 = vpop.f32.mrf.mxu0
      %v2848 = vpop.f32.mrf.mxu0
      %v2849 = vadd.f32 0.0, %v2848
      %v2850 = vpop.f32.mrf.mxu0
      %2851 = vmatprep.mubr.bf16.mxu0 0
      %2852 = vmatmul.mubr.bf16.gmra.mxu0 %v2603
      %v2853 = vpop.f32.mrf.mxu0
      %v2854 = vadd.f32 0.0, %v2853
      %v2855 = vpop.f32.mrf.mxu0
      %v2856 = vpop.f32.mrf.mxu0
      %v2857 = vadd.f32 0.0, %v2856
      %v2858 = vpop.f32.mrf.mxu0
      %2859 = vmatprep.mubr.bf16.mxu0 0
      %2860 = vmatmul.mubr.bf16.gmra.mxu0 %v2612
      %v2861 = vpop.f32.mrf.mxu0
      %v2862 = vadd.f32 0.0, %v2861
      %v2863 = vpop.f32.mrf.mxu0
      %v2864 = vpop.f32.mrf.mxu0
      %v2865 = vadd.f32 0.0, %v2864
      %v2866 = vpop.f32.mrf.mxu0
      %2867 = vmatprep.mubr.bf16.mxu0 0
      %2868 = vmatmul.mubr.bf16.gmra.mxu0 %v2621
      %v2869 = vpop.f32.mrf.mxu0
      %v2870 = vadd.f32 0.0, %v2869
      %v2871 = vpop.f32.mrf.mxu0
      %v2872 = vpop.f32.mrf.mxu0
      %v2873 = vadd.f32 0.0, %v2872
      %v2874 = vpop.f32.mrf.mxu0
      %2875 = vmatprep.mubr.bf16.mxu0 0
      %2876 = vmatmul.mubr.bf16.gmra.mxu0 %v2630
      %v2877 = vpop.f32.mrf.mxu0
      %v2878 = vadd.f32 0.0, %v2877
      %v2879 = vpop.f32.mrf.mxu0
      %v2880 = vpop.f32.mrf.mxu0
      %v2881 = vadd.f32 0.0, %v2880
      %v2882 = vpop.f32.mrf.mxu0
      %2883 = vmatprep.mubr.bf16.mxu0 0
      %2884 = vmatmul.mubr.bf16.gmra.mxu0 %v2639
      %v2885 = vpop.f32.mrf.mxu0
      %v2886 = vadd.f32 0.0, %v2885
      %v2887 = vpop.f32.mrf.mxu0
      %v2888 = vpop.f32.mrf.mxu0
      %v2889 = vadd.f32 0.0, %v2888
      %v2890 = vpop.f32.mrf.mxu0
      %2891 = vmatprep.mubr.bf16.mxu0 0
      %2892 = vmatmul.mubr.bf16.gmra.mxu0 %v2648
      %v2893 = vpop.f32.mrf.mxu0
      %v2894 = vadd.f32 0.0, %v2893
      %v2895 = vpop.f32.mrf.mxu0
      %v2896 = vpop.f32.mrf.mxu0
      %v2897 = vadd.f32 0.0, %v2896
      %v2898 = vpop.f32.mrf.mxu0
      %2899 = vmatprep.mubr.bf16.mxu0 0
      %2900 = vmatmul.mubr.bf16.gmra.mxu0 %v2657
      %v2901 = vpop.f32.mrf.mxu0
      %v2902 = vadd.f32 0.0, %v2901
      %v2903 = vpop.f32.mrf.mxu0
      %v2904 = vpop.f32.mrf.mxu0
      %v2905 = vadd.f32 0.0, %v2904
      %v2906 = vpop.f32.mrf.mxu0
      %2907 = vmatprep.mubr.bf16.mxu0 0
      %2908 = vmatmul.mubr.bf16.gmra.mxu0 %v2666
      %v2909 = vpop.f32.mrf.mxu0
      %v2910 = vadd.f32 0.0, %v2909
      %v2911 = vpop.f32.mrf.mxu0
      %v2912 = vpop.f32.mrf.mxu0
      %v2913 = vadd.f32 0.0, %v2912
      %v2914 = vpop.f32.mrf.mxu0
      %2915 = vmatprep.mubr.bf16.mxu0 0
      %2916 = vmatmul.mubr.bf16.gmra.mxu0 %v2675
      %v2917 = vpop.f32.mrf.mxu0
      %v2918 = vadd.f32 0.0, %v2917
      %v2919 = vpop.f32.mrf.mxu0
      %v2920 = vpop.f32.mrf.mxu0
      %v2921 = vadd.f32 0.0, %v2920
      %v2922 = vpop.f32.mrf.mxu0
      %2923 = vmatprep.mubr.bf16.mxu0 0
      %2924 = vmatmul.mubr.bf16.gmra.mxu0 %v2684
      %v2925 = vpop.f32.mrf.mxu0
      %v2926 = vadd.f32 0.0, %v2925
      %v2927 = vpop.f32.mrf.mxu0
      %v2928 = vpop.f32.mrf.mxu0
      %v2929 = vadd.f32 0.0, %v2928
      %v2930 = vpop.f32.mrf.mxu0
      %2931 = vmatprep.mubr.bf16.mxu0 0
      %2932 = vmatmul.mubr.bf16.gmra.mxu0 %v2693
      %v2933 = vpop.f32.mrf.mxu0
      %v2934 = vadd.f32 0.0, %v2933
      %v2935 = vpop.f32.mrf.mxu0
      %v2936 = vpop.f32.mrf.mxu0
      %v2937 = vadd.f32 0.0, %v2936
      %v2938 = vpop.f32.mrf.mxu0
      %2939 = vmatprep.mubr.bf16.mxu0 0
      %2940 = vmatmul.mubr.bf16.gmra.mxu0 %v2702
      %v2941 = vpop.f32.mrf.mxu0
      %v2942 = vadd.f32 0.0, %v2941
      %v2943 = vpop.f32.mrf.mxu0
      %v2944 = vpop.f32.mrf.mxu0
      %v2945 = vadd.f32 0.0, %v2944
      %v2946 = vpop.f32.mrf.mxu0
      %2947 = vmatprep.mubr.bf16.mxu0 0
      %2948 = vmatmul.mubr.bf16.gmra.mxu0 %v2711
      %v2949 = vpop.f32.mrf.mxu0
      %v2950 = vadd.f32 0.0, %v2949
      %v2951 = vpop.f32.mrf.mxu0
      %v2952 = vpop.f32.mrf.mxu0
      %v2953 = vadd.f32 0.0, %v2952
      %v2954 = vpop.f32.mrf.mxu0
      %2955 = vmatprep.mubr.bf16.mxu0 0
      %2956 = vmatmul.mubr.bf16.gmra.mxu0 %v2720
      %v2957 = vpop.f32.mrf.mxu0
      %v2958 = vadd.f32 0.0, %v2957
      %v2959 = vpop.f32.mrf.mxu0
      %v2960 = vpop.f32.mrf.mxu0
      %v2961 = vadd.f32 0.0, %v2960
      %v2962 = vpop.f32.mrf.mxu0
      %2963 = vdwg.mxu0
      %v2964 = vld [vmem:[#allocation2] sm:$0xff]
      %v2965 = vld [vmem:[#allocation2 + $0x8] sm:$0xff]
      %v2966 = vld [vmem:[#allocation2 + $0x10] sm:$0xff]
      %v2967 = vld [vmem:[#allocation2 + $0x18] sm:$0xff]
      %v2968 = vld [vmem:[#allocation2 + $0x20] sm:$0xff]
      %v2969 = vld [vmem:[#allocation2 + $0x28] sm:$0xff]
      %v2970 = vld [vmem:[#allocation2 + $0x30] sm:$0xff]
      %v2971 = vld [vmem:[#allocation2 + $0x38] sm:$0xff]
      %v2972 = vld [vmem:[#allocation2 + $0x40] sm:$0xff]
      %v2973 = vld [vmem:[#allocation2 + $0x48] sm:$0xff]
      %v2974 = vld [vmem:[#allocation2 + $0x50] sm:$0xff]
      %v2975 = vld [vmem:[#allocation2 + $0x58] sm:$0xff]
      %v2976 = vld [vmem:[#allocation2 + $0x60] sm:$0xff]
      %v2977 = vld [vmem:[#allocation2 + $0x68] sm:$0xff]
      %v2978 = vld [vmem:[#allocation2 + $0x70] sm:$0xff]
      %v2979 = vld [vmem:[#allocation2 + $0x78] sm:$0xff]
      %v2980 = vld [vmem:[#allocation2 + $0x80] sm:$0xff]
      %v2981 = vld [vmem:[#allocation2 + $0x88] sm:$0xff]
      %v2982 = vld [vmem:[#allocation2 + $0x90] sm:$0xff]
      %v2983 = vld [vmem:[#allocation2 + $0x98] sm:$0xff]
      %v2984 = vld [vmem:[#allocation2 + $0xa0] sm:$0xff]
      %v2985 = vld [vmem:[#allocation2 + $0xa8] sm:$0xff]
      %v2986 = vld [vmem:[#allocation2 + $0xb0] sm:$0xff]
      %v2987 = vld [vmem:[#allocation2 + $0xb8] sm:$0xff]
      %v2988 = vld [vmem:[#allocation2 + $0xc0] sm:$0xff]
      %v2989 = vld [vmem:[#allocation2 + $0xc8] sm:$0xff]
      %v2990 = vld [vmem:[#allocation2 + $0xd0] sm:$0xff]
      %v2991 = vld [vmem:[#allocation2 + $0xd8] sm:$0xff]
      %v2992 = vld [vmem:[#allocation2 + $0xe0] sm:$0xff]
      %v2993 = vld [vmem:[#allocation2 + $0xe8] sm:$0xff]
      %v2994 = vld [vmem:[#allocation2 + $0xf0] sm:$0xff]
      %v2995 = vld [vmem:[#allocation2 + $0xf8] sm:$0xff]
      %v2996 = vld [vmem:[#allocation2 + $0x100] sm:$0xff]
      %v2997 = vld [vmem:[#allocation2 + $0x108] sm:$0xff]
      %v2998 = vld [vmem:[#allocation2 + $0x110] sm:$0xff]
      %v2999 = vld [vmem:[#allocation2 + $0x118] sm:$0xff]
      %v3000 = vadd.f32 %v2964, %v2822
      %v3001 = vadd.f32 %v2965, %v2825
      %v3002 = vadd.f32 %v2966, %v2830
      %v3003 = vadd.f32 %v2967, %v2833
      %v3004 = vadd.f32 %v2968, %v2838
      %v3005 = vadd.f32 %v2969, %v2841
      %v3006 = vadd.f32 %v2970, %v2846
      %v3007 = vadd.f32 %v2971, %v2849
      %v3008 = vadd.f32 %v2972, %v2854
      %v3009 = vadd.f32 %v2973, %v2857
      %v3010 = vadd.f32 %v2974, %v2862
      %v3011 = vadd.f32 %v2975, %v2865
      %v3012 = vadd.f32 %v2976, %v2870
      %v3013 = vadd.f32 %v2977, %v2873
      %v3014 = vadd.f32 %v2978, %v2878
      %v3015 = vadd.f32 %v2979, %v2881
      %v3016 = vadd.f32 %v2980, %v2886
      %v3017 = vadd.f32 %v2981, %v2889
      %v3018 = vadd.f32 %v2982, %v2894
      %v3019 = vadd.f32 %v2983, %v2897
      %v3020 = vadd.f32 %v2984, %v2902
      %v3021 = vadd.f32 %v2985, %v2905
      %v3022 = vadd.f32 %v2986, %v2910
      %v3023 = vadd.f32 %v2987, %v2913
      %v3024 = vadd.f32 %v2988, %v2918
      %v3025 = vadd.f32 %v2989, %v2921
      %v3026 = vadd.f32 %v2990, %v2926
      %v3027 = vadd.f32 %v2991, %v2929
      %v3028 = vadd.f32 %v2992, %v2934
      %v3029 = vadd.f32 %v2993, %v2937
      %v3030 = vadd.f32 %v2994, %v2942
      %v3031 = vadd.f32 %v2995, %v2945
      %v3032 = vadd.f32 %v2996, %v2950
      %v3033 = vadd.f32 %v2997, %v2953
      %v3034 = vadd.f32 %v2998, %v2958
      %v3035 = vadd.f32 %v2999, %v2961
      %3036 = vst [vmem:[#allocation2] sm:$0xff] %v3000
      %3037 = vst [vmem:[#allocation2 + $0x8] sm:$0xff] %v3001
      %3038 = vst [vmem:[#allocation2 + $0x10] sm:$0xff] %v3002
      %3039 = vst [vmem:[#allocation2 + $0x18] sm:$0xff] %v3003
      %3040 = vst [vmem:[#allocation2 + $0x20] sm:$0xff] %v3004
      %3041 = vst [vmem:[#allocation2 + $0x28] sm:$0xff] %v3005
      %3042 = vst [vmem:[#allocation2 + $0x30] sm:$0xff] %v3006
      %3043 = vst [vmem:[#allocation2 + $0x38] sm:$0xff] %v3007
      %3044 = vst [vmem:[#allocation2 + $0x40] sm:$0xff] %v3008
      %3045 = vst [vmem:[#allocation2 + $0x48] sm:$0xff] %v3009
      %3046 = vst [vmem:[#allocation2 + $0x50] sm:$0xff] %v3010
      %3047 = vst [vmem:[#allocation2 + $0x58] sm:$0xff] %v3011
      %3048 = vst [vmem:[#allocation2 + $0x60] sm:$0xff] %v3012
      %3049 = vst [vmem:[#allocation2 + $0x68] sm:$0xff] %v3013
      %3050 = vst [vmem:[#allocation2 + $0x70] sm:$0xff] %v3014
      %3051 = vst [vmem:[#allocation2 + $0x78] sm:$0xff] %v3015
      %3052 = vst [vmem:[#allocation2 + $0x80] sm:$0xff] %v3016
      %3053 = vst [vmem:[#allocation2 + $0x88] sm:$0xff] %v3017
      %3054 = vst [vmem:[#allocation2 + $0x90] sm:$0xff] %v3018
      %3055 = vst [vmem:[#allocation2 + $0x98] sm:$0xff] %v3019
      %3056 = vst [vmem:[#allocation2 + $0xa0] sm:$0xff] %v3020
      %3057 = vst [vmem:[#allocation2 + $0xa8] sm:$0xff] %v3021
      %3058 = vst [vmem:[#allocation2 + $0xb0] sm:$0xff] %v3022
      %3059 = vst [vmem:[#allocation2 + $0xb8] sm:$0xff] %v3023
      %3060 = vst [vmem:[#allocation2 + $0xc0] sm:$0xff] %v3024
      %3061 = vst [vmem:[#allocation2 + $0xc8] sm:$0xff] %v3025
      %3062 = vst [vmem:[#allocation2 + $0xd0] sm:$0xff] %v3026
      %3063 = vst [vmem:[#allocation2 + $0xd8] sm:$0xff] %v3027
      %3064 = vst [vmem:[#allocation2 + $0xe0] sm:$0xff] %v3028
      %3065 = vst [vmem:[#allocation2 + $0xe8] sm:$0xff] %v3029
      %3066 = vst [vmem:[#allocation2 + $0xf0] sm:$0xff] %v3030
      %3067 = vst [vmem:[#allocation2 + $0xf8] sm:$0xff] %v3031
      %3068 = vst [vmem:[#allocation2 + $0x100] sm:$0xff] %v3032
      %3069 = vst [vmem:[#allocation2 + $0x108] sm:$0xff] %v3033
      %3070 = vst [vmem:[#allocation2 + $0x110] sm:$0xff] %v3034
      %3071 = vst [vmem:[#allocation2 + $0x118] sm:$0xff] %v3035
      %v3072 = vld [vmem:[%s244 + $0x8] sm:$0xc]
      %v3073 = vld [vmem:[%s244 + $0xc] sm:$0xf]
      %v3074 = vld [vmem:[%s244 + $0x10] sm:$0xf]
      %v3075 = vld [vmem:[%s244 + $0x14] sm:$0xf]
      %v3076 = vld [vmem:[%s244 + $0x18] sm:$0xf]
      %v3077 = vld [vmem:[%s244 + $0x1c] sm:$0xf]
      %v3078 = vld [vmem:[%s244 + $0x20] sm:$0xf]
      %v3079 = vld [vmem:[%s244 + $0x24] sm:$0xf]
      %v3080 = vld [vmem:[%s244 + $0x28] sm:$0xf]
      %v3081 = vld [vmem:[%s244 + $0x2c] sm:$0xf]
      %v3082 = vld [vmem:[%s244 + $0x30] sm:$0xf]
      %v3083 = vld [vmem:[%s244 + $0x34] sm:$0xf]
      %v3084 = vld [vmem:[%s244 + $0x38] sm:$0xf]
      %v3085 = vld [vmem:[%s244 + $0x3c] sm:$0xf]
      %v3086 = vld [vmem:[%s244 + $0x40] sm:$0xf]
      %v3087 = vld [vmem:[%s244 + $0x44] sm:$0xf]
      %v3088 = vld [vmem:[%s244 + $0x48] sm:$0xf]
      %v3089 = vld [vmem:[%s244 + $0x4c] sm:$0xf]
      %v3090 = vld [vmem:[%s244 + $0x50] sm:$0xf]
      %v3091 = vld [vmem:[%s244 + $0x54] sm:$0xf]
      %v3092 = vld [vmem:[%s244 + $0x58] sm:$0xf]
      %v3093 = vld [vmem:[%s244 + $0x5c] sm:$0xf]
      %v3094 = vld [vmem:[%s244 + $0x60] sm:$0xf]
      %v3095 = vld [vmem:[%s244 + $0x64] sm:$0xf]
      %v3096 = vld [vmem:[%s244 + $0x68] sm:$0xf]
      %v3097 = vld [vmem:[%s244 + $0x6c] sm:$0xf]
      %v3098 = vld [vmem:[%s244 + $0x70] sm:$0xf]
      %v3099 = vld [vmem:[%s244 + $0x74] sm:$0xf]
      %v3100 = vld [vmem:[%s244 + $0x78] sm:$0xf]
      %v3101 = vld [vmem:[%s244 + $0x7c] sm:$0xf]
      %v3102 = vld [vmem:[%s244 + $0x80] sm:$0xf]
      %v3103 = vld [vmem:[%s244 + $0x84] sm:$0xf]
      %v3104 = vld [vmem:[%s244 + $0x88] sm:$0xf]
      %v3105 = vld [vmem:[%s244 + $0x8c] sm:$0xf]
      %v3106 = vld [vmem:[%s244 + $0x90] sm:$0xf]
      %v3107 = vld [vmem:[%s244 + $0x94] sm:$0xf]
      %v3108 = vld [vmem:[%s244 + $0x98] sm:$0x3]
      %s3109 = scalar_lea.vmem %s248, 320
      %v3110 = vld [vmem:[%s3109] sm:$0xf]
      %v3111 = vld [vmem:[%s3109 + $0x4] sm:$0xf]
      %v3112 = vld [vmem:[%s3109 + $0x8] sm:$0xf]
      %v3113 = vld [vmem:[%s3109 + $0xc] sm:$0xf]
      %v3114 = vld [vmem:[%s3109 + $0x10] sm:$0xf]
      %v3115 = vld [vmem:[%s3109 + $0x14] sm:$0xf]
      %v3116 = vld [vmem:[%s3109 + $0x18] sm:$0xf]
      %v3117 = vld [vmem:[%s3109 + $0x1c] sm:$0xf]
      %v3118 = vld [vmem:[%s3109 + $0x20] sm:$0xf]
      %v3119 = vld [vmem:[%s3109 + $0x24] sm:$0xf]
      %v3120 = vld [vmem:[%s3109 + $0x28] sm:$0xf]
      %v3121 = vld [vmem:[%s3109 + $0x2c] sm:$0xf]
      %v3122 = vld [vmem:[%s3109 + $0x30] sm:$0xf]
      %v3123 = vld [vmem:[%s3109 + $0x34] sm:$0xf]
      %v3124 = vld [vmem:[%s3109 + $0x38] sm:$0xf]
      %v3125 = vld [vmem:[%s3109 + $0x3c] sm:$0xf]
      %v3163 = vunpack.c.l.b16 %v3072
      %v3164 = vunpack.c.l.b16 %v3073
      %v3165 = vunpack.c.l.b16 %v3074
      %v3166 = vunpack.c.l.b16 %v3075
      %v3167 = vunpack.c.l.b16 %v3076
      %v3168 = vunpack.c.l.b16 %v3077
      %v3169 = vunpack.c.l.b16 %v3078
      %v3170 = vunpack.c.l.b16 %v3079
      %v3171 = vunpack.c.l.b16 %v3080
      %v3172 = vunpack.c.l.b16 %v3081
      %v3173 = vunpack.c.l.b16 %v3082
      %v3174 = vunpack.c.l.b16 %v3083
      %v3175 = vunpack.c.l.b16 %v3084
      %v3176 = vunpack.c.l.b16 %v3085
      %v3177 = vunpack.c.l.b16 %v3086
      %v3178 = vunpack.c.l.b16 %v3087
      %v3179 = vunpack.c.l.b16 %v3088
      %v3180 = vunpack.c.l.b16 %v3089
      %v3181 = vunpack.c.l.b16 %v3090
      %v3182 = vunpack.c.l.b16 %v3091
      %v3183 = vunpack.c.l.b16 %v3092
      %v3184 = vunpack.c.l.b16 %v3093
      %v3185 = vunpack.c.l.b16 %v3094
      %v3186 = vunpack.c.l.b16 %v3095
      %v3187 = vunpack.c.l.b16 %v3096
      %v3188 = vunpack.c.l.b16 %v3097
      %v3189 = vunpack.c.l.b16 %v3098
      %v3190 = vunpack.c.l.b16 %v3099
      %v3191 = vunpack.c.l.b16 %v3100
      %v3192 = vunpack.c.l.b16 %v3101
      %v3193 = vunpack.c.l.b16 %v3102
      %v3194 = vunpack.c.l.b16 %v3103
      %v3195 = vunpack.c.l.b16 %v3104
      %v3196 = vunpack.c.l.b16 %v3105
      %v3197 = vunpack.c.l.b16 %v3106
      %v3198 = vunpack.c.l.b16 %v3107
      %v3199 = vunpack.c.l.b16 %v3108
      %v3200 = vpack.c.b16 %v3164, %v3163
      %v3201 = vpack.c.b16 %v3166, %v3165
      %v3202 = vpack.c.b16 %v3168, %v3167
      %v3203 = vpack.c.b16 %v3170, %v3169
      %v3204 = vpack.c.b16 %v3172, %v3171
      %v3205 = vpack.c.b16 %v3174, %v3173
      %v3206 = vpack.c.b16 %v3176, %v3175
      %v3207 = vpack.c.b16 %v3178, %v3177
      %v3208 = vpack.c.b16 %v3180, %v3179
      %v3209 = vpack.c.b16 %v3182, %v3181
      %v3210 = vpack.c.b16 %v3184, %v3183
      %v3211 = vpack.c.b16 %v3186, %v3185
      %v3212 = vpack.c.b16 %v3188, %v3187
      %v3213 = vpack.c.b16 %v3190, %v3189
      %v3214 = vpack.c.b16 %v3192, %v3191
      %v3215 = vpack.c.b16 %v3194, %v3193
      %v3216 = vpack.c.b16 %v3196, %v3195
      %v3217 = vpack.c.b16 %v3198, %v3197
      %v3218 = vpack.c.b16 %v3199, %v3199
      %vm3219 = vcmask 1045504
      %v3220 = vrot.slane %v3200, 2
      %v3221 = vrot.slane %v3201, 2
      %v3222 = vsel %vm3219, %v3220, %v3221
      %v3223 = vrot.slane %v3202, 2
      %v3224 = vsel %vm3219, %v3221, %v3223
      %v3225 = vrot.slane %v3203, 2
      %v3226 = vsel %vm3219, %v3223, %v3225
      %v3227 = vrot.slane %v3204, 2
      %v3228 = vsel %vm3219, %v3225, %v3227
      %v3229 = vrot.slane %v3205, 2
      %v3230 = vsel %vm3219, %v3227, %v3229
      %v3231 = vrot.slane %v3206, 2
      %v3232 = vsel %vm3219, %v3229, %v3231
      %v3233 = vrot.slane %v3207, 2
      %v3234 = vsel %vm3219, %v3231, %v3233
      %v3235 = vrot.slane %v3208, 2
      %v3236 = vsel %vm3219, %v3233, %v3235
      %v3237 = vrot.slane %v3209, 2
      %v3238 = vsel %vm3219, %v3235, %v3237
      %v3239 = vrot.slane %v3210, 2
      %v3240 = vsel %vm3219, %v3237, %v3239
      %v3241 = vrot.slane %v3211, 2
      %v3242 = vsel %vm3219, %v3239, %v3241
      %v3243 = vrot.slane %v3212, 2
      %v3244 = vsel %vm3219, %v3241, %v3243
      %v3245 = vrot.slane %v3213, 2
      %v3246 = vsel %vm3219, %v3243, %v3245
      %v3247 = vrot.slane %v3214, 2
      %v3248 = vsel %vm3219, %v3245, %v3247
      %v3249 = vrot.slane %v3215, 2
      %v3250 = vsel %vm3219, %v3247, %v3249
      %v3251 = vrot.slane %v3216, 2
      %v3252 = vsel %vm3219, %v3249, %v3251
      %v3253 = vrot.slane %v3217, 2
      %v3254 = vsel %vm3219, %v3251, %v3253
      %v3255 = vrot.slane %v3218, 2
      %v3256 = vsel %vm3219, %v3253, %v3255
      %v3291 = vunpack.c.l.b16 %v3110
      %v3292 = vunpack.c.l.b16 %v3111
      %v3293 = vunpack.c.l.b16 %v3112
      %v3294 = vunpack.c.l.b16 %v3113
      %v3295 = vunpack.c.l.b16 %v3114
      %v3296 = vunpack.c.l.b16 %v3115
      %v3297 = vunpack.c.l.b16 %v3116
      %v3298 = vunpack.c.l.b16 %v3117
      %v3299 = vunpack.c.l.b16 %v3118
      %v3300 = vunpack.c.l.b16 %v3119
      %v3301 = vunpack.c.l.b16 %v3120
      %v3302 = vunpack.c.l.b16 %v3121
      %v3303 = vunpack.c.l.b16 %v3122
      %v3304 = vunpack.c.l.b16 %v3123
      %v3305 = vunpack.c.l.b16 %v3124
      %v3306 = vunpack.c.l.b16 %v3125
      %v3307 = vpack.c.b16 %v3292, %v3291
      %v3308 = vpack.c.b16 %v3294, %v3293
      %v3309 = vpack.c.b16 %v3296, %v3295
      %v3310 = vpack.c.b16 %v3298, %v3297
      %v3311 = vpack.c.b16 %v3300, %v3299
      %v3312 = vpack.c.b16 %v3302, %v3301
      %v3313 = vpack.c.b16 %v3304, %v3303
      %v3314 = vpack.c.b16 %v3306, %v3305
      %3323 = vmatprep.subr.bf16.mxu0 0
      %3324 = vmatpush1.bf16.msra.mxu0 %v3314
      %3325 = vmatprep.subr.bf16.mxu0 0
      %3326 = vmatpush1.bf16.msra.mxu0 %v3313
      %3327 = vmatprep.subr.bf16.mxu0 0
      %3328 = vmatpush1.bf16.msra.mxu0 %v3312
      %3329 = vmatprep.subr.bf16.mxu0 0
      %3330 = vmatpush1.bf16.msra.mxu0 %v3311
      %3331 = vmatprep.subr.bf16.mxu0 0
      %3332 = vmatpush1.bf16.msra.mxu0 %v3310
      %3333 = vmatprep.subr.bf16.mxu0 0
      %3334 = vmatpush1.bf16.msra.mxu0 %v3309
      %3335 = vmatprep.subr.bf16.mxu0 0
      %3336 = vmatpush1.bf16.msra.mxu0 %v3308
      %3337 = vmatprep.subr.bf16.mxu0 0
      %3338 = vmatpush1.bf16.msra.mxu0 %v3307
      %3339 = vmatprep.subr.bf16.mxu0 0
      %3340 = vmatpush2.bf16.msra.mxu0 0
      %3341 = vmatprep.subr.bf16.mxu0 0
      %3342 = vmatpush2.bf16.msra.mxu0 0
      %3343 = vmatprep.subr.bf16.mxu0 0
      %3344 = vmatpush2.bf16.msra.mxu0 0
      %3345 = vmatprep.subr.bf16.mxu0 0
      %3346 = vmatpush2.bf16.msra.mxu0 0
      %3347 = vmatprep.subr.bf16.mxu0 0
      %3348 = vmatpush2.bf16.msra.mxu0 0
      %3349 = vmatprep.subr.bf16.mxu0 0
      %3350 = vmatpush2.bf16.msra.mxu0 0
      %3351 = vmatprep.subr.bf16.mxu0 0
      %3352 = vmatpush2.bf16.msra.mxu0 0
      %3353 = vmatprep.subr.bf16.mxu0 0
      %3354 = vmatpush2.bf16.msra.mxu0 0
      %3355 = vmatprep.mubr.bf16.mxu0 0
      %3356 = vmatmul.mubr.bf16.gmra.mxu0 %v3222
      %v3357 = vpop.f32.mrf.mxu0
      %v3358 = vadd.f32 0.0, %v3357
      %v3359 = vpop.f32.mrf.mxu0
      %v3360 = vpop.f32.mrf.mxu0
      %v3361 = vadd.f32 0.0, %v3360
      %v3362 = vpop.f32.mrf.mxu0
      %3363 = vmatprep.mubr.bf16.mxu0 0
      %3364 = vmatmul.mubr.bf16.gmra.mxu0 %v3224
      %v3365 = vpop.f32.mrf.mxu0
      %v3366 = vadd.f32 0.0, %v3365
      %v3367 = vpop.f32.mrf.mxu0
      %v3368 = vpop.f32.mrf.mxu0
      %v3369 = vadd.f32 0.0, %v3368
      %v3370 = vpop.f32.mrf.mxu0
      %3371 = vmatprep.mubr.bf16.mxu0 0
      %3372 = vmatmul.mubr.bf16.gmra.mxu0 %v3226
      %v3373 = vpop.f32.mrf.mxu0
      %v3374 = vadd.f32 0.0, %v3373
      %v3375 = vpop.f32.mrf.mxu0
      %v3376 = vpop.f32.mrf.mxu0
      %v3377 = vadd.f32 0.0, %v3376
      %v3378 = vpop.f32.mrf.mxu0
      %3379 = vmatprep.mubr.bf16.mxu0 0
      %3380 = vmatmul.mubr.bf16.gmra.mxu0 %v3228
      %v3381 = vpop.f32.mrf.mxu0
      %v3382 = vadd.f32 0.0, %v3381
      %v3383 = vpop.f32.mrf.mxu0
      %v3384 = vpop.f32.mrf.mxu0
      %v3385 = vadd.f32 0.0, %v3384
      %v3386 = vpop.f32.mrf.mxu0
      %3387 = vmatprep.mubr.bf16.mxu0 0
      %3388 = vmatmul.mubr.bf16.gmra.mxu0 %v3230
      %v3389 = vpop.f32.mrf.mxu0
      %v3390 = vadd.f32 0.0, %v3389
      %v3391 = vpop.f32.mrf.mxu0
      %v3392 = vpop.f32.mrf.mxu0
      %v3393 = vadd.f32 0.0, %v3392
      %v3394 = vpop.f32.mrf.mxu0
      %3395 = vmatprep.mubr.bf16.mxu0 0
      %3396 = vmatmul.mubr.bf16.gmra.mxu0 %v3232
      %v3397 = vpop.f32.mrf.mxu0
      %v3398 = vadd.f32 0.0, %v3397
      %v3399 = vpop.f32.mrf.mxu0
      %v3400 = vpop.f32.mrf.mxu0
      %v3401 = vadd.f32 0.0, %v3400
      %v3402 = vpop.f32.mrf.mxu0
      %3403 = vmatprep.mubr.bf16.mxu0 0
      %3404 = vmatmul.mubr.bf16.gmra.mxu0 %v3234
      %v3405 = vpop.f32.mrf.mxu0
      %v3406 = vadd.f32 0.0, %v3405
      %v3407 = vpop.f32.mrf.mxu0
      %v3408 = vpop.f32.mrf.mxu0
      %v3409 = vadd.f32 0.0, %v3408
      %v3410 = vpop.f32.mrf.mxu0
      %3411 = vmatprep.mubr.bf16.mxu0 0
      %3412 = vmatmul.mubr.bf16.gmra.mxu0 %v3236
      %v3413 = vpop.f32.mrf.mxu0
      %v3414 = vadd.f32 0.0, %v3413
      %v3415 = vpop.f32.mrf.mxu0
      %v3416 = vpop.f32.mrf.mxu0
      %v3417 = vadd.f32 0.0, %v3416
      %v3418 = vpop.f32.mrf.mxu0
      %3419 = vmatprep.mubr.bf16.mxu0 0
      %3420 = vmatmul.mubr.bf16.gmra.mxu0 %v3238
      %v3421 = vpop.f32.mrf.mxu0
      %v3422 = vadd.f32 0.0, %v3421
      %v3423 = vpop.f32.mrf.mxu0
      %v3424 = vpop.f32.mrf.mxu0
      %v3425 = vadd.f32 0.0, %v3424
      %v3426 = vpop.f32.mrf.mxu0
      %3427 = vmatprep.mubr.bf16.mxu0 0
      %3428 = vmatmul.mubr.bf16.gmra.mxu0 %v3240
      %v3429 = vpop.f32.mrf.mxu0
      %v3430 = vadd.f32 0.0, %v3429
      %v3431 = vpop.f32.mrf.mxu0
      %v3432 = vpop.f32.mrf.mxu0
      %v3433 = vadd.f32 0.0, %v3432
      %v3434 = vpop.f32.mrf.mxu0
      %3435 = vmatprep.mubr.bf16.mxu0 0
      %3436 = vmatmul.mubr.bf16.gmra.mxu0 %v3242
      %v3437 = vpop.f32.mrf.mxu0
      %v3438 = vadd.f32 0.0, %v3437
      %v3439 = vpop.f32.mrf.mxu0
      %v3440 = vpop.f32.mrf.mxu0
      %v3441 = vadd.f32 0.0, %v3440
      %v3442 = vpop.f32.mrf.mxu0
      %3443 = vmatprep.mubr.bf16.mxu0 0
      %3444 = vmatmul.mubr.bf16.gmra.mxu0 %v3244
      %v3445 = vpop.f32.mrf.mxu0
      %v3446 = vadd.f32 0.0, %v3445
      %v3447 = vpop.f32.mrf.mxu0
      %v3448 = vpop.f32.mrf.mxu0
      %v3449 = vadd.f32 0.0, %v3448
      %v3450 = vpop.f32.mrf.mxu0
      %3451 = vmatprep.mubr.bf16.mxu0 0
      %3452 = vmatmul.mubr.bf16.gmra.mxu0 %v3246
      %v3453 = vpop.f32.mrf.mxu0
      %v3454 = vadd.f32 0.0, %v3453
      %v3455 = vpop.f32.mrf.mxu0
      %v3456 = vpop.f32.mrf.mxu0
      %v3457 = vadd.f32 0.0, %v3456
      %v3458 = vpop.f32.mrf.mxu0
      %3459 = vmatprep.mubr.bf16.mxu0 0
      %3460 = vmatmul.mubr.bf16.gmra.mxu0 %v3248
      %v3461 = vpop.f32.mrf.mxu0
      %v3462 = vadd.f32 0.0, %v3461
      %v3463 = vpop.f32.mrf.mxu0
      %v3464 = vpop.f32.mrf.mxu0
      %v3465 = vadd.f32 0.0, %v3464
      %v3466 = vpop.f32.mrf.mxu0
      %3467 = vmatprep.mubr.bf16.mxu0 0
      %3468 = vmatmul.mubr.bf16.gmra.mxu0 %v3250
      %v3469 = vpop.f32.mrf.mxu0
      %v3470 = vadd.f32 0.0, %v3469
      %v3471 = vpop.f32.mrf.mxu0
      %v3472 = vpop.f32.mrf.mxu0
      %v3473 = vadd.f32 0.0, %v3472
      %v3474 = vpop.f32.mrf.mxu0
      %3475 = vmatprep.mubr.bf16.mxu0 0
      %3476 = vmatmul.mubr.bf16.gmra.mxu0 %v3252
      %v3477 = vpop.f32.mrf.mxu0
      %v3478 = vadd.f32 0.0, %v3477
      %v3479 = vpop.f32.mrf.mxu0
      %v3480 = vpop.f32.mrf.mxu0
      %v3481 = vadd.f32 0.0, %v3480
      %v3482 = vpop.f32.mrf.mxu0
      %3483 = vmatprep.mubr.bf16.mxu0 0
      %3484 = vmatmul.mubr.bf16.gmra.mxu0 %v3254
      %v3485 = vpop.f32.mrf.mxu0
      %v3486 = vadd.f32 0.0, %v3485
      %v3487 = vpop.f32.mrf.mxu0
      %v3488 = vpop.f32.mrf.mxu0
      %v3489 = vadd.f32 0.0, %v3488
      %v3490 = vpop.f32.mrf.mxu0
      %3491 = vmatprep.mubr.bf16.mxu0 0
      %3492 = vmatmul.mubr.bf16.gmra.mxu0 %v3256
      %v3493 = vpop.f32.mrf.mxu0
      %v3494 = vadd.f32 0.0, %v3493
      %v3495 = vpop.f32.mrf.mxu0
      %v3496 = vpop.f32.mrf.mxu0
      %v3497 = vadd.f32 0.0, %v3496
      %v3498 = vpop.f32.mrf.mxu0
      %3499 = vdwg.mxu0
      %v3500 = vld [vmem:[#allocation2] sm:$0xff]
      %v3501 = vld [vmem:[#allocation2 + $0x8] sm:$0xff]
      %v3502 = vld [vmem:[#allocation2 + $0x10] sm:$0xff]
      %v3503 = vld [vmem:[#allocation2 + $0x18] sm:$0xff]
      %v3504 = vld [vmem:[#allocation2 + $0x20] sm:$0xff]
      %v3505 = vld [vmem:[#allocation2 + $0x28] sm:$0xff]
      %v3506 = vld [vmem:[#allocation2 + $0x30] sm:$0xff]
      %v3507 = vld [vmem:[#allocation2 + $0x38] sm:$0xff]
      %v3508 = vld [vmem:[#allocation2 + $0x40] sm:$0xff]
      %v3509 = vld [vmem:[#allocation2 + $0x48] sm:$0xff]
      %v3510 = vld [vmem:[#allocation2 + $0x50] sm:$0xff]
      %v3511 = vld [vmem:[#allocation2 + $0x58] sm:$0xff]
      %v3512 = vld [vmem:[#allocation2 + $0x60] sm:$0xff]
      %v3513 = vld [vmem:[#allocation2 + $0x68] sm:$0xff]
      %v3514 = vld [vmem:[#allocation2 + $0x70] sm:$0xff]
      %v3515 = vld [vmem:[#allocation2 + $0x78] sm:$0xff]
      %v3516 = vld [vmem:[#allocation2 + $0x80] sm:$0xff]
      %v3517 = vld [vmem:[#allocation2 + $0x88] sm:$0xff]
      %v3518 = vld [vmem:[#allocation2 + $0x90] sm:$0xff]
      %v3519 = vld [vmem:[#allocation2 + $0x98] sm:$0xff]
      %v3520 = vld [vmem:[#allocation2 + $0xa0] sm:$0xff]
      %v3521 = vld [vmem:[#allocation2 + $0xa8] sm:$0xff]
      %v3522 = vld [vmem:[#allocation2 + $0xb0] sm:$0xff]
      %v3523 = vld [vmem:[#allocation2 + $0xb8] sm:$0xff]
      %v3524 = vld [vmem:[#allocation2 + $0xc0] sm:$0xff]
      %v3525 = vld [vmem:[#allocation2 + $0xc8] sm:$0xff]
      %v3526 = vld [vmem:[#allocation2 + $0xd0] sm:$0xff]
      %v3527 = vld [vmem:[#allocation2 + $0xd8] sm:$0xff]
      %v3528 = vld [vmem:[#allocation2 + $0xe0] sm:$0xff]
      %v3529 = vld [vmem:[#allocation2 + $0xe8] sm:$0xff]
      %v3530 = vld [vmem:[#allocation2 + $0xf0] sm:$0xff]
      %v3531 = vld [vmem:[#allocation2 + $0xf8] sm:$0xff]
      %v3532 = vld [vmem:[#allocation2 + $0x100] sm:$0xff]
      %v3533 = vld [vmem:[#allocation2 + $0x108] sm:$0xff]
      %v3534 = vld [vmem:[#allocation2 + $0x110] sm:$0xff]
      %v3535 = vld [vmem:[#allocation2 + $0x118] sm:$0xff]
      %v3536 = vadd.f32 %v3500, %v3358
      %v3537 = vadd.f32 %v3501, %v3361
      %v3538 = vadd.f32 %v3502, %v3366
      %v3539 = vadd.f32 %v3503, %v3369
      %v3540 = vadd.f32 %v3504, %v3374
      %v3541 = vadd.f32 %v3505, %v3377
      %v3542 = vadd.f32 %v3506, %v3382
      %v3543 = vadd.f32 %v3507, %v3385
      %v3544 = vadd.f32 %v3508, %v3390
      %v3545 = vadd.f32 %v3509, %v3393
      %v3546 = vadd.f32 %v3510, %v3398
      %v3547 = vadd.f32 %v3511, %v3401
      %v3548 = vadd.f32 %v3512, %v3406
      %v3549 = vadd.f32 %v3513, %v3409
      %v3550 = vadd.f32 %v3514, %v3414
      %v3551 = vadd.f32 %v3515, %v3417
      %v3552 = vadd.f32 %v3516, %v3422
      %v3553 = vadd.f32 %v3517, %v3425
      %v3554 = vadd.f32 %v3518, %v3430
      %v3555 = vadd.f32 %v3519, %v3433
      %v3556 = vadd.f32 %v3520, %v3438
      %v3557 = vadd.f32 %v3521, %v3441
      %v3558 = vadd.f32 %v3522, %v3446
      %v3559 = vadd.f32 %v3523, %v3449
      %v3560 = vadd.f32 %v3524, %v3454
      %v3561 = vadd.f32 %v3525, %v3457
      %v3562 = vadd.f32 %v3526, %v3462
      %v3563 = vadd.f32 %v3527, %v3465
      %v3564 = vadd.f32 %v3528, %v3470
      %v3565 = vadd.f32 %v3529, %v3473
      %v3566 = vadd.f32 %v3530, %v3478
      %v3567 = vadd.f32 %v3531, %v3481
      %v3568 = vadd.f32 %v3532, %v3486
      %v3569 = vadd.f32 %v3533, %v3489
      %v3570 = vadd.f32 %v3534, %v3494
      %v3571 = vadd.f32 %v3535, %v3497
      %3572 = vst [vmem:[#allocation2] sm:$0xff] %v3536
      %3573 = vst [vmem:[#allocation2 + $0x8] sm:$0xff] %v3537
      %3574 = vst [vmem:[#allocation2 + $0x10] sm:$0xff] %v3538
      %3575 = vst [vmem:[#allocation2 + $0x18] sm:$0xff] %v3539
      %3576 = vst [vmem:[#allocation2 + $0x20] sm:$0xff] %v3540
      %3577 = vst [vmem:[#allocation2 + $0x28] sm:$0xff] %v3541
      %3578 = vst [vmem:[#allocation2 + $0x30] sm:$0xff] %v3542
      %3579 = vst [vmem:[#allocation2 + $0x38] sm:$0xff] %v3543
      %3580 = vst [vmem:[#allocation2 + $0x40] sm:$0xff] %v3544
      %3581 = vst [vmem:[#allocation2 + $0x48] sm:$0xff] %v3545
      %3582 = vst [vmem:[#allocation2 + $0x50] sm:$0xff] %v3546
      %3583 = vst [vmem:[#allocation2 + $0x58] sm:$0xff] %v3547
      %3584 = vst [vmem:[#allocation2 + $0x60] sm:$0xff] %v3548
      %3585 = vst [vmem:[#allocation2 + $0x68] sm:$0xff] %v3549
      %3586 = vst [vmem:[#allocation2 + $0x70] sm:$0xff] %v3550
      %3587 = vst [vmem:[#allocation2 + $0x78] sm:$0xff] %v3551
      %3588 = vst [vmem:[#allocation2 + $0x80] sm:$0xff] %v3552
      %3589 = vst [vmem:[#allocation2 + $0x88] sm:$0xff] %v3553
      %3590 = vst [vmem:[#allocation2 + $0x90] sm:$0xff] %v3554
      %3591 = vst [vmem:[#allocation2 + $0x98] sm:$0xff] %v3555
      %3592 = vst [vmem:[#allocation2 + $0xa0] sm:$0xff] %v3556
      %3593 = vst [vmem:[#allocation2 + $0xa8] sm:$0xff] %v3557
      %3594 = vst [vmem:[#allocation2 + $0xb0] sm:$0xff] %v3558
      %3595 = vst [vmem:[#allocation2 + $0xb8] sm:$0xff] %v3559
      %3596 = vst [vmem:[#allocation2 + $0xc0] sm:$0xff] %v3560
      %3597 = vst [vmem:[#allocation2 + $0xc8] sm:$0xff] %v3561
      %3598 = vst [vmem:[#allocation2 + $0xd0] sm:$0xff] %v3562
      %3599 = vst [vmem:[#allocation2 + $0xd8] sm:$0xff] %v3563
      %3600 = vst [vmem:[#allocation2 + $0xe0] sm:$0xff] %v3564
      %3601 = vst [vmem:[#allocation2 + $0xe8] sm:$0xff] %v3565
      %3602 = vst [vmem:[#allocation2 + $0xf0] sm:$0xff] %v3566
      %3603 = vst [vmem:[#allocation2 + $0xf8] sm:$0xff] %v3567
      %3604 = vst [vmem:[#allocation2 + $0x100] sm:$0xff] %v3568
      %3605 = vst [vmem:[#allocation2 + $0x108] sm:$0xff] %v3569
      %3606 = vst [vmem:[#allocation2 + $0x110] sm:$0xff] %v3570
      %3607 = vst [vmem:[#allocation2 + $0x118] sm:$0xff] %v3571
      %v3608 = vld [vmem:[%s244 + $0x10] sm:$0xc]
      %v3609 = vld [vmem:[%s244 + $0x14] sm:$0xf]
      %v3610 = vld [vmem:[%s244 + $0x18] sm:$0xf]
      %v3611 = vld [vmem:[%s244 + $0x1c] sm:$0xf]
      %v3612 = vld [vmem:[%s244 + $0x20] sm:$0xf]
      %v3613 = vld [vmem:[%s244 + $0x24] sm:$0xf]
      %v3614 = vld [vmem:[%s244 + $0x28] sm:$0xf]
      %v3615 = vld [vmem:[%s244 + $0x2c] sm:$0xf]
      %v3616 = vld [vmem:[%s244 + $0x30] sm:$0xf]
      %v3617 = vld [vmem:[%s244 + $0x34] sm:$0xf]
      %v3618 = vld [vmem:[%s244 + $0x38] sm:$0xf]
      %v3619 = vld [vmem:[%s244 + $0x3c] sm:$0xf]
      %v3620 = vld [vmem:[%s244 + $0x40] sm:$0xf]
      %v3621 = vld [vmem:[%s244 + $0x44] sm:$0xf]
      %v3622 = vld [vmem:[%s244 + $0x48] sm:$0xf]
      %v3623 = vld [vmem:[%s244 + $0x4c] sm:$0xf]
      %v3624 = vld [vmem:[%s244 + $0x50] sm:$0xf]
      %v3625 = vld [vmem:[%s244 + $0x54] sm:$0xf]
      %v3626 = vld [vmem:[%s244 + $0x58] sm:$0xf]
      %v3627 = vld [vmem:[%s244 + $0x5c] sm:$0xf]
      %v3628 = vld [vmem:[%s244 + $0x60] sm:$0xf]
      %v3629 = vld [vmem:[%s244 + $0x64] sm:$0xf]
      %v3630 = vld [vmem:[%s244 + $0x68] sm:$0xf]
      %v3631 = vld [vmem:[%s244 + $0x6c] sm:$0xf]
      %v3632 = vld [vmem:[%s244 + $0x70] sm:$0xf]
      %v3633 = vld [vmem:[%s244 + $0x74] sm:$0xf]
      %v3634 = vld [vmem:[%s244 + $0x78] sm:$0xf]
      %v3635 = vld [vmem:[%s244 + $0x7c] sm:$0xf]
      %v3636 = vld [vmem:[%s244 + $0x80] sm:$0xf]
      %v3637 = vld [vmem:[%s244 + $0x84] sm:$0xf]
      %v3638 = vld [vmem:[%s244 + $0x88] sm:$0xf]
      %v3639 = vld [vmem:[%s244 + $0x8c] sm:$0xf]
      %v3640 = vld [vmem:[%s244 + $0x90] sm:$0xf]
      %v3641 = vld [vmem:[%s244 + $0x94] sm:$0xf]
      %v3642 = vld [vmem:[%s244 + $0x98] sm:$0xf]
      %v3643 = vld [vmem:[%s244 + $0x9c] sm:$0xf]
      %v3644 = vld [vmem:[%s244 + $0xa0] sm:$0x3]
      %s3645 = scalar_lea.vmem %s248, 384
      %v3646 = vld [vmem:[%s3645] sm:$0xf]
      %v3647 = vld [vmem:[%s3645 + $0x4] sm:$0xf]
      %v3648 = vld [vmem:[%s3645 + $0x8] sm:$0xf]
      %v3649 = vld [vmem:[%s3645 + $0xc] sm:$0xf]
      %v3650 = vld [vmem:[%s3645 + $0x10] sm:$0xf]
      %v3651 = vld [vmem:[%s3645 + $0x14] sm:$0xf]
      %v3652 = vld [vmem:[%s3645 + $0x18] sm:$0xf]
      %v3653 = vld [vmem:[%s3645 + $0x1c] sm:$0xf]
      %v3654 = vld [vmem:[%s3645 + $0x20] sm:$0xf]
      %v3655 = vld [vmem:[%s3645 + $0x24] sm:$0xf]
      %v3656 = vld [vmem:[%s3645 + $0x28] sm:$0xf]
      %v3657 = vld [vmem:[%s3645 + $0x2c] sm:$0xf]
      %v3658 = vld [vmem:[%s3645 + $0x30] sm:$0xf]
      %v3659 = vld [vmem:[%s3645 + $0x34] sm:$0xf]
      %v3660 = vld [vmem:[%s3645 + $0x38] sm:$0xf]
      %v3661 = vld [vmem:[%s3645 + $0x3c] sm:$0xf]
      %v3699 = vunpack.c.l.b16 %v3608
      %v3700 = vunpack.c.l.b16 %v3609
      %v3701 = vunpack.c.l.b16 %v3610
      %v3702 = vunpack.c.l.b16 %v3611
      %v3703 = vunpack.c.l.b16 %v3612
      %v3704 = vunpack.c.l.b16 %v3613
      %v3705 = vunpack.c.l.b16 %v3614
      %v3706 = vunpack.c.l.b16 %v3615
      %v3707 = vunpack.c.l.b16 %v3616
      %v3708 = vunpack.c.l.b16 %v3617
      %v3709 = vunpack.c.l.b16 %v3618
      %v3710 = vunpack.c.l.b16 %v3619
      %v3711 = vunpack.c.l.b16 %v3620
      %v3712 = vunpack.c.l.b16 %v3621
      %v3713 = vunpack.c.l.b16 %v3622
      %v3714 = vunpack.c.l.b16 %v3623
      %v3715 = vunpack.c.l.b16 %v3624
      %v3716 = vunpack.c.l.b16 %v3625
      %v3717 = vunpack.c.l.b16 %v3626
      %v3718 = vunpack.c.l.b16 %v3627
      %v3719 = vunpack.c.l.b16 %v3628
      %v3720 = vunpack.c.l.b16 %v3629
      %v3721 = vunpack.c.l.b16 %v3630
      %v3722 = vunpack.c.l.b16 %v3631
      %v3723 = vunpack.c.l.b16 %v3632
      %v3724 = vunpack.c.l.b16 %v3633
      %v3725 = vunpack.c.l.b16 %v3634
      %v3726 = vunpack.c.l.b16 %v3635
      %v3727 = vunpack.c.l.b16 %v3636
      %v3728 = vunpack.c.l.b16 %v3637
      %v3729 = vunpack.c.l.b16 %v3638
      %v3730 = vunpack.c.l.b16 %v3639
      %v3731 = vunpack.c.l.b16 %v3640
      %v3732 = vunpack.c.l.b16 %v3641
      %v3733 = vunpack.c.l.b16 %v3642
      %v3734 = vunpack.c.l.b16 %v3643
      %v3735 = vunpack.c.l.b16 %v3644
      %v3736 = vpack.c.b16 %v3700, %v3699
      %v3737 = vpack.c.b16 %v3702, %v3701
      %v3738 = vpack.c.b16 %v3704, %v3703
      %v3739 = vpack.c.b16 %v3706, %v3705
      %v3740 = vpack.c.b16 %v3708, %v3707
      %v3741 = vpack.c.b16 %v3710, %v3709
      %v3742 = vpack.c.b16 %v3712, %v3711
      %v3743 = vpack.c.b16 %v3714, %v3713
      %v3744 = vpack.c.b16 %v3716, %v3715
      %v3745 = vpack.c.b16 %v3718, %v3717
      %v3746 = vpack.c.b16 %v3720, %v3719
      %v3747 = vpack.c.b16 %v3722, %v3721
      %v3748 = vpack.c.b16 %v3724, %v3723
      %v3749 = vpack.c.b16 %v3726, %v3725
      %v3750 = vpack.c.b16 %v3728, %v3727
      %v3751 = vpack.c.b16 %v3730, %v3729
      %v3752 = vpack.c.b16 %v3732, %v3731
      %v3753 = vpack.c.b16 %v3734, %v3733
      %v3754 = vpack.c.b16 %v3735, %v3735
      %v3755 = vrot.slane %v3736, 2
      %v3756 = vrot.slane %v3737, 2
      %v3757 = vsel %vm3219, %v3755, %v3756
      %v3758 = vrot.slane %v3738, 2
      %v3759 = vsel %vm3219, %v3756, %v3758
      %v3760 = vrot.slane %v3739, 2
      %v3761 = vsel %vm3219, %v3758, %v3760
      %v3762 = vrot.slane %v3740, 2
      %v3763 = vsel %vm3219, %v3760, %v3762
      %v3764 = vrot.slane %v3741, 2
      %v3765 = vsel %vm3219, %v3762, %v3764
      %v3766 = vrot.slane %v3742, 2
      %v3767 = vsel %vm3219, %v3764, %v3766
      %v3768 = vrot.slane %v3743, 2
      %v3769 = vsel %vm3219, %v3766, %v3768
      %v3770 = vrot.slane %v3744, 2
      %v3771 = vsel %vm3219, %v3768, %v3770
      %v3772 = vrot.slane %v3745, 2
      %v3773 = vsel %vm3219, %v3770, %v3772
      %v3774 = vrot.slane %v3746, 2
      %v3775 = vsel %vm3219, %v3772, %v3774
      %v3776 = vrot.slane %v3747, 2
      %v3777 = vsel %vm3219, %v3774, %v3776
      %v3778 = vrot.slane %v3748, 2
      %v3779 = vsel %vm3219, %v3776, %v3778
      %v3780 = vrot.slane %v3749, 2
      %v3781 = vsel %vm3219, %v3778, %v3780
      %v3782 = vrot.slane %v3750, 2
      %v3783 = vsel %vm3219, %v3780, %v3782
      %v3784 = vrot.slane %v3751, 2
      %v3785 = vsel %vm3219, %v3782, %v3784
      %v3786 = vrot.slane %v3752, 2
      %v3787 = vsel %vm3219, %v3784, %v3786
      %v3788 = vrot.slane %v3753, 2
      %v3789 = vsel %vm3219, %v3786, %v3788
      %v3790 = vrot.slane %v3754, 2
      %v3791 = vsel %vm3219, %v3788, %v3790
      %v3826 = vunpack.c.l.b16 %v3646
      %v3827 = vunpack.c.l.b16 %v3647
      %v3828 = vunpack.c.l.b16 %v3648
      %v3829 = vunpack.c.l.b16 %v3649
      %v3830 = vunpack.c.l.b16 %v3650
      %v3831 = vunpack.c.l.b16 %v3651
      %v3832 = vunpack.c.l.b16 %v3652
      %v3833 = vunpack.c.l.b16 %v3653
      %v3834 = vunpack.c.l.b16 %v3654
      %v3835 = vunpack.c.l.b16 %v3655
      %v3836 = vunpack.c.l.b16 %v3656
      %v3837 = vunpack.c.l.b16 %v3657
      %v3838 = vunpack.c.l.b16 %v3658
      %v3839 = vunpack.c.l.b16 %v3659
      %v3840 = vunpack.c.l.b16 %v3660
      %v3841 = vunpack.c.l.b16 %v3661
      %v3842 = vpack.c.b16 %v3827, %v3826
      %v3843 = vpack.c.b16 %v3829, %v3828
      %v3844 = vpack.c.b16 %v3831, %v3830
      %v3845 = vpack.c.b16 %v3833, %v3832
      %v3846 = vpack.c.b16 %v3835, %v3834
      %v3847 = vpack.c.b16 %v3837, %v3836
      %v3848 = vpack.c.b16 %v3839, %v3838
      %v3849 = vpack.c.b16 %v3841, %v3840
      %3858 = vmatprep.subr.bf16.mxu0 0
      %3859 = vmatpush1.bf16.msra.mxu0 %v3849
      %3860 = vmatprep.subr.bf16.mxu0 0
      %3861 = vmatpush1.bf16.msra.mxu0 %v3848
      %3862 = vmatprep.subr.bf16.mxu0 0
      %3863 = vmatpush1.bf16.msra.mxu0 %v3847
      %3864 = vmatprep.subr.bf16.mxu0 0
      %3865 = vmatpush1.bf16.msra.mxu0 %v3846
      %3866 = vmatprep.subr.bf16.mxu0 0
      %3867 = vmatpush1.bf16.msra.mxu0 %v3845
      %3868 = vmatprep.subr.bf16.mxu0 0
      %3869 = vmatpush1.bf16.msra.mxu0 %v3844
      %3870 = vmatprep.subr.bf16.mxu0 0
      %3871 = vmatpush1.bf16.msra.mxu0 %v3843
      %3872 = vmatprep.subr.bf16.mxu0 0
      %3873 = vmatpush1.bf16.msra.mxu0 %v3842
      %3874 = vmatprep.subr.bf16.mxu0 0
      %3875 = vmatpush2.bf16.msra.mxu0 0
      %3876 = vmatprep.subr.bf16.mxu0 0
      %3877 = vmatpush2.bf16.msra.mxu0 0
      %3878 = vmatprep.subr.bf16.mxu0 0
      %3879 = vmatpush2.bf16.msra.mxu0 0
      %3880 = vmatprep.subr.bf16.mxu0 0
      %3881 = vmatpush2.bf16.msra.mxu0 0
      %3882 = vmatprep.subr.bf16.mxu0 0
      %3883 = vmatpush2.bf16.msra.mxu0 0
      %3884 = vmatprep.subr.bf16.mxu0 0
      %3885 = vmatpush2.bf16.msra.mxu0 0
      %3886 = vmatprep.subr.bf16.mxu0 0
      %3887 = vmatpush2.bf16.msra.mxu0 0
      %3888 = vmatprep.subr.bf16.mxu0 0
      %3889 = vmatpush2.bf16.msra.mxu0 0
      %3890 = vmatprep.mubr.bf16.mxu0 0
      %3891 = vmatmul.mubr.bf16.gmra.mxu0 %v3757
      %v3892 = vpop.f32.mrf.mxu0
      %v3893 = vadd.f32 0.0, %v3892
      %v3894 = vpop.f32.mrf.mxu0
      %v3895 = vpop.f32.mrf.mxu0
      %v3896 = vadd.f32 0.0, %v3895
      %v3897 = vpop.f32.mrf.mxu0
      %3898 = vmatprep.mubr.bf16.mxu0 0
      %3899 = vmatmul.mubr.bf16.gmra.mxu0 %v3759
      %v3900 = vpop.f32.mrf.mxu0
      %v3901 = vadd.f32 0.0, %v3900
      %v3902 = vpop.f32.mrf.mxu0
      %v3903 = vpop.f32.mrf.mxu0
      %v3904 = vadd.f32 0.0, %v3903
      %v3905 = vpop.f32.mrf.mxu0
      %3906 = vmatprep.mubr.bf16.mxu0 0
      %3907 = vmatmul.mubr.bf16.gmra.mxu0 %v3761
      %v3908 = vpop.f32.mrf.mxu0
      %v3909 = vadd.f32 0.0, %v3908
      %v3910 = vpop.f32.mrf.mxu0
      %v3911 = vpop.f32.mrf.mxu0
      %v3912 = vadd.f32 0.0, %v3911
      %v3913 = vpop.f32.mrf.mxu0
      %3914 = vmatprep.mubr.bf16.mxu0 0
      %3915 = vmatmul.mubr.bf16.gmra.mxu0 %v3763
      %v3916 = vpop.f32.mrf.mxu0
      %v3917 = vadd.f32 0.0, %v3916
      %v3918 = vpop.f32.mrf.mxu0
      %v3919 = vpop.f32.mrf.mxu0
      %v3920 = vadd.f32 0.0, %v3919
      %v3921 = vpop.f32.mrf.mxu0
      %3922 = vmatprep.mubr.bf16.mxu0 0
      %3923 = vmatmul.mubr.bf16.gmra.mxu0 %v3765
      %v3924 = vpop.f32.mrf.mxu0
      %v3925 = vadd.f32 0.0, %v3924
      %v3926 = vpop.f32.mrf.mxu0
      %v3927 = vpop.f32.mrf.mxu0
      %v3928 = vadd.f32 0.0, %v3927
      %v3929 = vpop.f32.mrf.mxu0
      %3930 = vmatprep.mubr.bf16.mxu0 0
      %3931 = vmatmul.mubr.bf16.gmra.mxu0 %v3767
      %v3932 = vpop.f32.mrf.mxu0
      %v3933 = vadd.f32 0.0, %v3932
      %v3934 = vpop.f32.mrf.mxu0
      %v3935 = vpop.f32.mrf.mxu0
      %v3936 = vadd.f32 0.0, %v3935
      %v3937 = vpop.f32.mrf.mxu0
      %3938 = vmatprep.mubr.bf16.mxu0 0
      %3939 = vmatmul.mubr.bf16.gmra.mxu0 %v3769
      %v3940 = vpop.f32.mrf.mxu0
      %v3941 = vadd.f32 0.0, %v3940
      %v3942 = vpop.f32.mrf.mxu0
      %v3943 = vpop.f32.mrf.mxu0
      %v3944 = vadd.f32 0.0, %v3943
      %v3945 = vpop.f32.mrf.mxu0
      %3946 = vmatprep.mubr.bf16.mxu0 0
      %3947 = vmatmul.mubr.bf16.gmra.mxu0 %v3771
      %v3948 = vpop.f32.mrf.mxu0
      %v3949 = vadd.f32 0.0, %v3948
      %v3950 = vpop.f32.mrf.mxu0
      %v3951 = vpop.f32.mrf.mxu0
      %v3952 = vadd.f32 0.0, %v3951
      %v3953 = vpop.f32.mrf.mxu0
      %3954 = vmatprep.mubr.bf16.mxu0 0
      %3955 = vmatmul.mubr.bf16.gmra.mxu0 %v3773
      %v3956 = vpop.f32.mrf.mxu0
      %v3957 = vadd.f32 0.0, %v3956
      %v3958 = vpop.f32.mrf.mxu0
      %v3959 = vpop.f32.mrf.mxu0
      %v3960 = vadd.f32 0.0, %v3959
      %v3961 = vpop.f32.mrf.mxu0
      %3962 = vmatprep.mubr.bf16.mxu0 0
      %3963 = vmatmul.mubr.bf16.gmra.mxu0 %v3775
      %v3964 = vpop.f32.mrf.mxu0
      %v3965 = vadd.f32 0.0, %v3964
      %v3966 = vpop.f32.mrf.mxu0
      %v3967 = vpop.f32.mrf.mxu0
      %v3968 = vadd.f32 0.0, %v3967
      %v3969 = vpop.f32.mrf.mxu0
      %3970 = vmatprep.mubr.bf16.mxu0 0
      %3971 = vmatmul.mubr.bf16.gmra.mxu0 %v3777
      %v3972 = vpop.f32.mrf.mxu0
      %v3973 = vadd.f32 0.0, %v3972
      %v3974 = vpop.f32.mrf.mxu0
      %v3975 = vpop.f32.mrf.mxu0
      %v3976 = vadd.f32 0.0, %v3975
      %v3977 = vpop.f32.mrf.mxu0
      %3978 = vmatprep.mubr.bf16.mxu0 0
      %3979 = vmatmul.mubr.bf16.gmra.mxu0 %v3779
      %v3980 = vpop.f32.mrf.mxu0
      %v3981 = vadd.f32 0.0, %v3980
      %v3982 = vpop.f32.mrf.mxu0
      %v3983 = vpop.f32.mrf.mxu0
      %v3984 = vadd.f32 0.0, %v3983
      %v3985 = vpop.f32.mrf.mxu0
      %3986 = vmatprep.mubr.bf16.mxu0 0
      %3987 = vmatmul.mubr.bf16.gmra.mxu0 %v3781
      %v3988 = vpop.f32.mrf.mxu0
      %v3989 = vadd.f32 0.0, %v3988
      %v3990 = vpop.f32.mrf.mxu0
      %v3991 = vpop.f32.mrf.mxu0
      %v3992 = vadd.f32 0.0, %v3991
      %v3993 = vpop.f32.mrf.mxu0
      %3994 = vmatprep.mubr.bf16.mxu0 0
      %3995 = vmatmul.mubr.bf16.gmra.mxu0 %v3783
      %v3996 = vpop.f32.mrf.mxu0
      %v3997 = vadd.f32 0.0, %v3996
      %v3998 = vpop.f32.mrf.mxu0
      %v3999 = vpop.f32.mrf.mxu0
      %v4000 = vadd.f32 0.0, %v3999
      %v4001 = vpop.f32.mrf.mxu0
      %4002 = vmatprep.mubr.bf16.mxu0 0
      %4003 = vmatmul.mubr.bf16.gmra.mxu0 %v3785
      %v4004 = vpop.f32.mrf.mxu0
      %v4005 = vadd.f32 0.0, %v4004
      %v4006 = vpop.f32.mrf.mxu0
      %v4007 = vpop.f32.mrf.mxu0
      %v4008 = vadd.f32 0.0, %v4007
      %v4009 = vpop.f32.mrf.mxu0
      %4010 = vmatprep.mubr.bf16.mxu0 0
      %4011 = vmatmul.mubr.bf16.gmra.mxu0 %v3787
      %v4012 = vpop.f32.mrf.mxu0
      %v4013 = vadd.f32 0.0, %v4012
      %v4014 = vpop.f32.mrf.mxu0
      %v4015 = vpop.f32.mrf.mxu0
      %v4016 = vadd.f32 0.0, %v4015
      %v4017 = vpop.f32.mrf.mxu0
      %4018 = vmatprep.mubr.bf16.mxu0 0
      %4019 = vmatmul.mubr.bf16.gmra.mxu0 %v3789
      %v4020 = vpop.f32.mrf.mxu0
      %v4021 = vadd.f32 0.0, %v4020
      %v4022 = vpop.f32.mrf.mxu0
      %v4023 = vpop.f32.mrf.mxu0
      %v4024 = vadd.f32 0.0, %v4023
      %v4025 = vpop.f32.mrf.mxu0
      %4026 = vmatprep.mubr.bf16.mxu0 0
      %4027 = vmatmul.mubr.bf16.gmra.mxu0 %v3791
      %v4028 = vpop.f32.mrf.mxu0
      %v4029 = vadd.f32 0.0, %v4028
      %v4030 = vpop.f32.mrf.mxu0
      %v4031 = vpop.f32.mrf.mxu0
      %v4032 = vadd.f32 0.0, %v4031
      %v4033 = vpop.f32.mrf.mxu0
      %4034 = vdwg.mxu0
      %v4035 = vld [vmem:[#allocation2] sm:$0xff]
      %v4036 = vld [vmem:[#allocation2 + $0x8] sm:$0xff]
      %v4037 = vld [vmem:[#allocation2 + $0x10] sm:$0xff]
      %v4038 = vld [vmem:[#allocation2 + $0x18] sm:$0xff]
      %v4039 = vld [vmem:[#allocation2 + $0x20] sm:$0xff]
      %v4040 = vld [vmem:[#allocation2 + $0x28] sm:$0xff]
      %v4041 = vld [vmem:[#allocation2 + $0x30] sm:$0xff]
      %v4042 = vld [vmem:[#allocation2 + $0x38] sm:$0xff]
      %v4043 = vld [vmem:[#allocation2 + $0x40] sm:$0xff]
      %v4044 = vld [vmem:[#allocation2 + $0x48] sm:$0xff]
      %v4045 = vld [vmem:[#allocation2 + $0x50] sm:$0xff]
      %v4046 = vld [vmem:[#allocation2 + $0x58] sm:$0xff]
      %v4047 = vld [vmem:[#allocation2 + $0x60] sm:$0xff]
      %v4048 = vld [vmem:[#allocation2 + $0x68] sm:$0xff]
      %v4049 = vld [vmem:[#allocation2 + $0x70] sm:$0xff]
      %v4050 = vld [vmem:[#allocation2 + $0x78] sm:$0xff]
      %v4051 = vld [vmem:[#allocation2 + $0x80] sm:$0xff]
      %v4052 = vld [vmem:[#allocation2 + $0x88] sm:$0xff]
      %v4053 = vld [vmem:[#allocation2 + $0x90] sm:$0xff]
      %v4054 = vld [vmem:[#allocation2 + $0x98] sm:$0xff]
      %v4055 = vld [vmem:[#allocation2 + $0xa0] sm:$0xff]
      %v4056 = vld [vmem:[#allocation2 + $0xa8] sm:$0xff]
      %v4057 = vld [vmem:[#allocation2 + $0xb0] sm:$0xff]
      %v4058 = vld [vmem:[#allocation2 + $0xb8] sm:$0xff]
      %v4059 = vld [vmem:[#allocation2 + $0xc0] sm:$0xff]
      %v4060 = vld [vmem:[#allocation2 + $0xc8] sm:$0xff]
      %v4061 = vld [vmem:[#allocation2 + $0xd0] sm:$0xff]
      %v4062 = vld [vmem:[#allocation2 + $0xd8] sm:$0xff]
      %v4063 = vld [vmem:[#allocation2 + $0xe0] sm:$0xff]
      %v4064 = vld [vmem:[#allocation2 + $0xe8] sm:$0xff]
      %v4065 = vld [vmem:[#allocation2 + $0xf0] sm:$0xff]
      %v4066 = vld [vmem:[#allocation2 + $0xf8] sm:$0xff]
      %v4067 = vld [vmem:[#allocation2 + $0x100] sm:$0xff]
      %v4068 = vld [vmem:[#allocation2 + $0x108] sm:$0xff]
      %v4069 = vld [vmem:[#allocation2 + $0x110] sm:$0xff]
      %v4070 = vld [vmem:[#allocation2 + $0x118] sm:$0xff]
      %v4071 = vadd.f32 %v4035, %v3893
      %v4072 = vadd.f32 %v4036, %v3896
      %v4073 = vadd.f32 %v4037, %v3901
      %v4074 = vadd.f32 %v4038, %v3904
      %v4075 = vadd.f32 %v4039, %v3909
      %v4076 = vadd.f32 %v4040, %v3912
      %v4077 = vadd.f32 %v4041, %v3917
      %v4078 = vadd.f32 %v4042, %v3920
      %v4079 = vadd.f32 %v4043, %v3925
      %v4080 = vadd.f32 %v4044, %v3928
      %v4081 = vadd.f32 %v4045, %v3933
      %v4082 = vadd.f32 %v4046, %v3936
      %v4083 = vadd.f32 %v4047, %v3941
      %v4084 = vadd.f32 %v4048, %v3944
      %v4085 = vadd.f32 %v4049, %v3949
      %v4086 = vadd.f32 %v4050, %v3952
      %v4087 = vadd.f32 %v4051, %v3957
      %v4088 = vadd.f32 %v4052, %v3960
      %v4089 = vadd.f32 %v4053, %v3965
      %v4090 = vadd.f32 %v4054, %v3968
      %v4091 = vadd.f32 %v4055, %v3973
      %v4092 = vadd.f32 %v4056, %v3976
      %v4093 = vadd.f32 %v4057, %v3981
      %v4094 = vadd.f32 %v4058, %v3984
      %v4095 = vadd.f32 %v4059, %v3989
      %v4096 = vadd.f32 %v4060, %v3992
      %v4097 = vadd.f32 %v4061, %v3997
      %v4098 = vadd.f32 %v4062, %v4000
      %v4099 = vadd.f32 %v4063, %v4005
      %v4100 = vadd.f32 %v4064, %v4008
      %v4101 = vadd.f32 %v4065, %v4013
      %v4102 = vadd.f32 %v4066, %v4016
      %v4103 = vadd.f32 %v4067, %v4021
      %v4104 = vadd.f32 %v4068, %v4024
      %v4105 = vadd.f32 %v4069, %v4029
      %v4106 = vadd.f32 %v4070, %v4032
      %4107 = vst [vmem:[#allocation2] sm:$0xff] %v4071
      %4108 = vst [vmem:[#allocation2 + $0x8] sm:$0xff] %v4072
      %4109 = vst [vmem:[#allocation2 + $0x10] sm:$0xff] %v4073
      %4110 = vst [vmem:[#allocation2 + $0x18] sm:$0xff] %v4074
      %4111 = vst [vmem:[#allocation2 + $0x20] sm:$0xff] %v4075
      %4112 = vst [vmem:[#allocation2 + $0x28] sm:$0xff] %v4076
      %4113 = vst [vmem:[#allocation2 + $0x30] sm:$0xff] %v4077
      %4114 = vst [vmem:[#allocation2 + $0x38] sm:$0xff] %v4078
      %4115 = vst [vmem:[#allocation2 + $0x40] sm:$0xff] %v4079
      %4116 = vst [vmem:[#allocation2 + $0x48] sm:$0xff] %v4080
      %4117 = vst [vmem:[#allocation2 + $0x50] sm:$0xff] %v4081
      %4118 = vst [vmem:[#allocation2 + $0x58] sm:$0xff] %v4082
      %4119 = vst [vmem:[#allocation2 + $0x60] sm:$0xff] %v4083
      %4120 = vst [vmem:[#allocation2 + $0x68] sm:$0xff] %v4084
      %4121 = vst [vmem:[#allocation2 + $0x70] sm:$0xff] %v4085
      %4122 = vst [vmem:[#allocation2 + $0x78] sm:$0xff] %v4086
      %4123 = vst [vmem:[#allocation2 + $0x80] sm:$0xff] %v4087
      %4124 = vst [vmem:[#allocation2 + $0x88] sm:$0xff] %v4088
      %4125 = vst [vmem:[#allocation2 + $0x90] sm:$0xff] %v4089
      %4126 = vst [vmem:[#allocation2 + $0x98] sm:$0xff] %v4090
      %4127 = vst [vmem:[#allocation2 + $0xa0] sm:$0xff] %v4091
      %4128 = vst [vmem:[#allocation2 + $0xa8] sm:$0xff] %v4092
      %4129 = vst [vmem:[#allocation2 + $0xb0] sm:$0xff] %v4093
      %4130 = vst [vmem:[#allocation2 + $0xb8] sm:$0xff] %v4094
      %4131 = vst [vmem:[#allocation2 + $0xc0] sm:$0xff] %v4095
      %4132 = vst [vmem:[#allocation2 + $0xc8] sm:$0xff] %v4096
      %4133 = vst [vmem:[#allocation2 + $0xd0] sm:$0xff] %v4097
      %4134 = vst [vmem:[#allocation2 + $0xd8] sm:$0xff] %v4098
      %4135 = vst [vmem:[#allocation2 + $0xe0] sm:$0xff] %v4099
      %4136 = vst [vmem:[#allocation2 + $0xe8] sm:$0xff] %v4100
      %4137 = vst [vmem:[#allocation2 + $0xf0] sm:$0xff] %v4101
      %4138 = vst [vmem:[#allocation2 + $0xf8] sm:$0xff] %v4102
      %4139 = vst [vmem:[#allocation2 + $0x100] sm:$0xff] %v4103
      %4140 = vst [vmem:[#allocation2 + $0x108] sm:$0xff] %v4104
      %4141 = vst [vmem:[#allocation2 + $0x110] sm:$0xff] %v4105
      %4142 = vst [vmem:[#allocation2 + $0x118] sm:$0xff] %v4106
      %v4143 = vld [vmem:[%s244 + $0x10] sm:$0xc]
      %v4144 = vld [vmem:[%s244 + $0x14] sm:$0xf]
      %v4145 = vld [vmem:[%s244 + $0x18] sm:$0xf]
      %v4146 = vld [vmem:[%s244 + $0x1c] sm:$0xf]
      %v4147 = vld [vmem:[%s244 + $0x20] sm:$0xf]
      %v4148 = vld [vmem:[%s244 + $0x24] sm:$0xf]
      %v4149 = vld [vmem:[%s244 + $0x28] sm:$0xf]
      %v4150 = vld [vmem:[%s244 + $0x2c] sm:$0xf]
      %v4151 = vld [vmem:[%s244 + $0x30] sm:$0xf]
      %v4152 = vld [vmem:[%s244 + $0x34] sm:$0xf]
      %v4153 = vld [vmem:[%s244 + $0x38] sm:$0xf]
      %v4154 = vld [vmem:[%s244 + $0x3c] sm:$0xf]
      %v4155 = vld [vmem:[%s244 + $0x40] sm:$0xf]
      %v4156 = vld [vmem:[%s244 + $0x44] sm:$0xf]
      %v4157 = vld [vmem:[%s244 + $0x48] sm:$0xf]
      %v4158 = vld [vmem:[%s244 + $0x4c] sm:$0xf]
      %v4159 = vld [vmem:[%s244 + $0x50] sm:$0xf]
      %v4160 = vld [vmem:[%s244 + $0x54] sm:$0xf]
      %v4161 = vld [vmem:[%s244 + $0x58] sm:$0xf]
      %v4162 = vld [vmem:[%s244 + $0x5c] sm:$0xf]
      %v4163 = vld [vmem:[%s244 + $0x60] sm:$0xf]
      %v4164 = vld [vmem:[%s244 + $0x64] sm:$0xf]
      %v4165 = vld [vmem:[%s244 + $0x68] sm:$0xf]
      %v4166 = vld [vmem:[%s244 + $0x6c] sm:$0xf]
      %v4167 = vld [vmem:[%s244 + $0x70] sm:$0xf]
      %v4168 = vld [vmem:[%s244 + $0x74] sm:$0xf]
      %v4169 = vld [vmem:[%s244 + $0x78] sm:$0xf]
      %v4170 = vld [vmem:[%s244 + $0x7c] sm:$0xf]
      %v4171 = vld [vmem:[%s244 + $0x80] sm:$0xf]
      %v4172 = vld [vmem:[%s244 + $0x84] sm:$0xf]
      %v4173 = vld [vmem:[%s244 + $0x88] sm:$0xf]
      %v4174 = vld [vmem:[%s244 + $0x8c] sm:$0xf]
      %v4175 = vld [vmem:[%s244 + $0x90] sm:$0xf]
      %v4176 = vld [vmem:[%s244 + $0x94] sm:$0xf]
      %v4177 = vld [vmem:[%s244 + $0x98] sm:$0xf]
      %v4178 = vld [vmem:[%s244 + $0x9c] sm:$0xf]
      %v4179 = vld [vmem:[%s244 + $0xa0] sm:$0x7]
      %s4180 = scalar_lea.vmem %s248, 448
      %v4181 = vld [vmem:[%s4180] sm:$0xf]
      %v4182 = vld [vmem:[%s4180 + $0x4] sm:$0xf]
      %v4183 = vld [vmem:[%s4180 + $0x8] sm:$0xf]
      %v4184 = vld [vmem:[%s4180 + $0xc] sm:$0xf]
      %v4185 = vld [vmem:[%s4180 + $0x10] sm:$0xf]
      %v4186 = vld [vmem:[%s4180 + $0x14] sm:$0xf]
      %v4187 = vld [vmem:[%s4180 + $0x18] sm:$0xf]
      %v4188 = vld [vmem:[%s4180 + $0x1c] sm:$0xf]
      %v4189 = vld [vmem:[%s4180 + $0x20] sm:$0xf]
      %v4190 = vld [vmem:[%s4180 + $0x24] sm:$0xf]
      %v4191 = vld [vmem:[%s4180 + $0x28] sm:$0xf]
      %v4192 = vld [vmem:[%s4180 + $0x2c] sm:$0xf]
      %v4193 = vld [vmem:[%s4180 + $0x30] sm:$0xf]
      %v4194 = vld [vmem:[%s4180 + $0x34] sm:$0xf]
      %v4195 = vld [vmem:[%s4180 + $0x38] sm:$0xf]
      %v4196 = vld [vmem:[%s4180 + $0x3c] sm:$0xf]
      %v4234 = vunpack.c.l.b16 %v4143
      %v4235 = vunpack.c.l.b16 %v4144
      %v4236 = vunpack.c.l.b16 %v4145
      %v4237 = vunpack.c.l.b16 %v4146
      %v4238 = vunpack.c.l.b16 %v4147
      %v4239 = vunpack.c.l.b16 %v4148
      %v4240 = vunpack.c.l.b16 %v4149
      %v4241 = vunpack.c.l.b16 %v4150
      %v4242 = vunpack.c.l.b16 %v4151
      %v4243 = vunpack.c.l.b16 %v4152
      %v4244 = vunpack.c.l.b16 %v4153
      %v4245 = vunpack.c.l.b16 %v4154
      %v4246 = vunpack.c.l.b16 %v4155
      %v4247 = vunpack.c.l.b16 %v4156
      %v4248 = vunpack.c.l.b16 %v4157
      %v4249 = vunpack.c.l.b16 %v4158
      %v4250 = vunpack.c.l.b16 %v4159
      %v4251 = vunpack.c.l.b16 %v4160
      %v4252 = vunpack.c.l.b16 %v4161
      %v4253 = vunpack.c.l.b16 %v4162
      %v4254 = vunpack.c.l.b16 %v4163
      %v4255 = vunpack.c.l.b16 %v4164
      %v4256 = vunpack.c.l.b16 %v4165
      %v4257 = vunpack.c.l.b16 %v4166
      %v4258 = vunpack.c.l.b16 %v4167
      %v4259 = vunpack.c.l.b16 %v4168
      %v4260 = vunpack.c.l.b16 %v4169
      %v4261 = vunpack.c.l.b16 %v4170
      %v4262 = vunpack.c.l.b16 %v4171
      %v4263 = vunpack.c.l.b16 %v4172
      %v4264 = vunpack.c.l.b16 %v4173
      %v4265 = vunpack.c.l.b16 %v4174
      %v4266 = vunpack.c.l.b16 %v4175
      %v4267 = vunpack.c.l.b16 %v4176
      %v4268 = vunpack.c.l.b16 %v4177
      %v4269 = vunpack.c.l.b16 %v4178
      %v4270 = vunpack.c.l.b16 %v4179
      %v4271 = vpack.c.b16 %v4235, %v4234
      %v4272 = vpack.c.b16 %v4237, %v4236
      %v4273 = vpack.c.b16 %v4239, %v4238
      %v4274 = vpack.c.b16 %v4241, %v4240
      %v4275 = vpack.c.b16 %v4243, %v4242
      %v4276 = vpack.c.b16 %v4245, %v4244
      %v4277 = vpack.c.b16 %v4247, %v4246
      %v4278 = vpack.c.b16 %v4249, %v4248
      %v4279 = vpack.c.b16 %v4251, %v4250
      %v4280 = vpack.c.b16 %v4253, %v4252
      %v4281 = vpack.c.b16 %v4255, %v4254
      %v4282 = vpack.c.b16 %v4257, %v4256
      %v4283 = vpack.c.b16 %v4259, %v4258
      %v4284 = vpack.c.b16 %v4261, %v4260
      %v4285 = vpack.c.b16 %v4263, %v4262
      %v4286 = vpack.c.b16 %v4265, %v4264
      %v4287 = vpack.c.b16 %v4267, %v4266
      %v4288 = vpack.c.b16 %v4269, %v4268
      %v4289 = vpack.c.b16 %v4270, %v4270
      %vm4290 = vsmask.f32 5376
      %v4292 = vshrl.u32 %v4271, 16
      %v4294 = vrot.slane %v4292, 2
      %v4295 = vshll.u32 %v4271, 16
      %v4297 = vrot.slane %v4295, 3
      %v4298 = vor.u32 %v4294, %v4297
      %v4300 = vshrl.u32 %v4272, 16
      %v4302 = vrot.slane %v4300, 2
      %v4303 = vshll.u32 %v4272, 16
      %v4305 = vrot.slane %v4303, 3
      %v4306 = vor.u32 %v4302, %v4305
      %v4307 = vsel %vm4290, %v4298, %v4306
      %v4309 = vshrl.u32 %v4273, 16
      %v4311 = vrot.slane %v4309, 2
      %v4312 = vshll.u32 %v4273, 16
      %v4314 = vrot.slane %v4312, 3
      %v4315 = vor.u32 %v4311, %v4314
      %v4316 = vsel %vm4290, %v4306, %v4315
      %v4318 = vshrl.u32 %v4274, 16
      %v4320 = vrot.slane %v4318, 2
      %v4321 = vshll.u32 %v4274, 16
      %v4323 = vrot.slane %v4321, 3
      %v4324 = vor.u32 %v4320, %v4323
      %v4325 = vsel %vm4290, %v4315, %v4324
      %v4327 = vshrl.u32 %v4275, 16
      %v4329 = vrot.slane %v4327, 2
      %v4330 = vshll.u32 %v4275, 16
      %v4332 = vrot.slane %v4330, 3
      %v4333 = vor.u32 %v4329, %v4332
      %v4334 = vsel %vm4290, %v4324, %v4333
      %v4336 = vshrl.u32 %v4276, 16
      %v4338 = vrot.slane %v4336, 2
      %v4339 = vshll.u32 %v4276, 16
      %v4341 = vrot.slane %v4339, 3
      %v4342 = vor.u32 %v4338, %v4341
      %v4343 = vsel %vm4290, %v4333, %v4342
      %v4345 = vshrl.u32 %v4277, 16
      %v4347 = vrot.slane %v4345, 2
      %v4348 = vshll.u32 %v4277, 16
      %v4350 = vrot.slane %v4348, 3
      %v4351 = vor.u32 %v4347, %v4350
      %v4352 = vsel %vm4290, %v4342, %v4351
      %v4354 = vshrl.u32 %v4278, 16
      %v4356 = vrot.slane %v4354, 2
      %v4357 = vshll.u32 %v4278, 16
      %v4359 = vrot.slane %v4357, 3
      %v4360 = vor.u32 %v4356, %v4359
      %v4361 = vsel %vm4290, %v4351, %v4360
      %v4363 = vshrl.u32 %v4279, 16
      %v4365 = vrot.slane %v4363, 2
      %v4366 = vshll.u32 %v4279, 16
      %v4368 = vrot.slane %v4366, 3
      %v4369 = vor.u32 %v4365, %v4368
      %v4370 = vsel %vm4290, %v4360, %v4369
      %v4372 = vshrl.u32 %v4280, 16
      %v4374 = vrot.slane %v4372, 2
      %v4375 = vshll.u32 %v4280, 16
      %v4377 = vrot.slane %v4375, 3
      %v4378 = vor.u32 %v4374, %v4377
      %v4379 = vsel %vm4290, %v4369, %v4378
      %v4381 = vshrl.u32 %v4281, 16
      %v4383 = vrot.slane %v4381, 2
      %v4384 = vshll.u32 %v4281, 16
      %v4386 = vrot.slane %v4384, 3
      %v4387 = vor.u32 %v4383, %v4386
      %v4388 = vsel %vm4290, %v4378, %v4387
      %v4390 = vshrl.u32 %v4282, 16
      %v4392 = vrot.slane %v4390, 2
      %v4393 = vshll.u32 %v4282, 16
      %v4395 = vrot.slane %v4393, 3
      %v4396 = vor.u32 %v4392, %v4395
      %v4397 = vsel %vm4290, %v4387, %v4396
      %v4399 = vshrl.u32 %v4283, 16
      %v4401 = vrot.slane %v4399, 2
      %v4402 = vshll.u32 %v4283, 16
      %v4404 = vrot.slane %v4402, 3
      %v4405 = vor.u32 %v4401, %v4404
      %v4406 = vsel %vm4290, %v4396, %v4405
      %v4408 = vshrl.u32 %v4284, 16
      %v4410 = vrot.slane %v4408, 2
      %v4411 = vshll.u32 %v4284, 16
      %v4413 = vrot.slane %v4411, 3
      %v4414 = vor.u32 %v4410, %v4413
      %v4415 = vsel %vm4290, %v4405, %v4414
      %v4417 = vshrl.u32 %v4285, 16
      %v4419 = vrot.slane %v4417, 2
      %v4420 = vshll.u32 %v4285, 16
      %v4422 = vrot.slane %v4420, 3
      %v4423 = vor.u32 %v4419, %v4422
      %v4424 = vsel %vm4290, %v4414, %v4423
      %v4426 = vshrl.u32 %v4286, 16
      %v4428 = vrot.slane %v4426, 2
      %v4429 = vshll.u32 %v4286, 16
      %v4431 = vrot.slane %v4429, 3
      %v4432 = vor.u32 %v4428, %v4431
      %v4433 = vsel %vm4290, %v4423, %v4432
      %v4435 = vshrl.u32 %v4287, 16
      %v4437 = vrot.slane %v4435, 2
      %v4438 = vshll.u32 %v4287, 16
      %v4440 = vrot.slane %v4438, 3
      %v4441 = vor.u32 %v4437, %v4440
      %v4442 = vsel %vm4290, %v4432, %v4441
      %v4444 = vshrl.u32 %v4288, 16
      %v4446 = vrot.slane %v4444, 2
      %v4447 = vshll.u32 %v4288, 16
      %v4449 = vrot.slane %v4447, 3
      %v4450 = vor.u32 %v4446, %v4449
      %v4451 = vsel %vm4290, %v4441, %v4450
      %v4453 = vshrl.u32 %v4289, 16
      %v4455 = vrot.slane %v4453, 2
      %v4456 = vshll.u32 %v4289, 16
      %v4458 = vrot.slane %v4456, 3
      %v4459 = vor.u32 %v4455, %v4458
      %v4460 = vsel %vm4290, %v4450, %v4459
      %v4495 = vunpack.c.l.b16 %v4181
      %v4496 = vunpack.c.l.b16 %v4182
      %v4497 = vunpack.c.l.b16 %v4183
      %v4498 = vunpack.c.l.b16 %v4184
      %v4499 = vunpack.c.l.b16 %v4185
      %v4500 = vunpack.c.l.b16 %v4186
      %v4501 = vunpack.c.l.b16 %v4187
      %v4502 = vunpack.c.l.b16 %v4188
      %v4503 = vunpack.c.l.b16 %v4189
      %v4504 = vunpack.c.l.b16 %v4190
      %v4505 = vunpack.c.l.b16 %v4191
      %v4506 = vunpack.c.l.b16 %v4192
      %v4507 = vunpack.c.l.b16 %v4193
      %v4508 = vunpack.c.l.b16 %v4194
      %v4509 = vunpack.c.l.b16 %v4195
      %v4510 = vunpack.c.l.b16 %v4196
      %v4511 = vpack.c.b16 %v4496, %v4495
      %v4512 = vpack.c.b16 %v4498, %v4497
      %v4513 = vpack.c.b16 %v4500, %v4499
      %v4514 = vpack.c.b16 %v4502, %v4501
      %v4515 = vpack.c.b16 %v4504, %v4503
      %v4516 = vpack.c.b16 %v4506, %v4505
      %v4517 = vpack.c.b16 %v4508, %v4507
      %v4518 = vpack.c.b16 %v4510, %v4509
      %4527 = vmatprep.subr.bf16.mxu0 0
      %4528 = vmatpush1.bf16.msra.mxu0 %v4518
      %4529 = vmatprep.subr.bf16.mxu0 0
      %4530 = vmatpush1.bf16.msra.mxu0 %v4517
      %4531 = vmatprep.subr.bf16.mxu0 0
      %4532 = vmatpush1.bf16.msra.mxu0 %v4516
      %4533 = vmatprep.subr.bf16.mxu0 0
      %4534 = vmatpush1.bf16.msra.mxu0 %v4515
      %4535 = vmatprep.subr.bf16.mxu0 0
      %4536 = vmatpush1.bf16.msra.mxu0 %v4514
      %4537 = vmatprep.subr.bf16.mxu0 0
      %4538 = vmatpush1.bf16.msra.mxu0 %v4513
      %4539 = vmatprep.subr.bf16.mxu0 0
      %4540 = vmatpush1.bf16.msra.mxu0 %v4512
      %4541 = vmatprep.subr.bf16.mxu0 0
      %4542 = vmatpush1.bf16.msra.mxu0 %v4511
      %4543 = vmatprep.subr.bf16.mxu0 0
      %4544 = vmatpush2.bf16.msra.mxu0 0
      %4545 = vmatprep.subr.bf16.mxu0 0
      %4546 = vmatpush2.bf16.msra.mxu0 0
      %4547 = vmatprep.subr.bf16.mxu0 0
      %4548 = vmatpush2.bf16.msra.mxu0 0
      %4549 = vmatprep.subr.bf16.mxu0 0
      %4550 = vmatpush2.bf16.msra.mxu0 0
      %4551 = vmatprep.subr.bf16.mxu0 0
      %4552 = vmatpush2.bf16.msra.mxu0 0
      %4553 = vmatprep.subr.bf16.mxu0 0
      %4554 = vmatpush2.bf16.msra.mxu0 0
      %4555 = vmatprep.subr.bf16.mxu0 0
      %4556 = vmatpush2.bf16.msra.mxu0 0
      %4557 = vmatprep.subr.bf16.mxu0 0
      %4558 = vmatpush2.bf16.msra.mxu0 0
      %4559 = vmatprep.mubr.bf16.mxu0 0
      %4560 = vmatmul.mubr.bf16.gmra.mxu0 %v4307
      %v4561 = vpop.f32.mrf.mxu0
      %v4562 = vadd.f32 0.0, %v4561
      %v4563 = vpop.f32.mrf.mxu0
      %v4564 = vpop.f32.mrf.mxu0
      %v4565 = vadd.f32 0.0, %v4564
      %v4566 = vpop.f32.mrf.mxu0
      %4567 = vmatprep.mubr.bf16.mxu0 0
      %4568 = vmatmul.mubr.bf16.gmra.mxu0 %v4316
      %v4569 = vpop.f32.mrf.mxu0
      %v4570 = vadd.f32 0.0, %v4569
      %v4571 = vpop.f32.mrf.mxu0
      %v4572 = vpop.f32.mrf.mxu0
      %v4573 = vadd.f32 0.0, %v4572
      %v4574 = vpop.f32.mrf.mxu0
      %4575 = vmatprep.mubr.bf16.mxu0 0
      %4576 = vmatmul.mubr.bf16.gmra.mxu0 %v4325
      %v4577 = vpop.f32.mrf.mxu0
      %v4578 = vadd.f32 0.0, %v4577
      %v4579 = vpop.f32.mrf.mxu0
      %v4580 = vpop.f32.mrf.mxu0
      %v4581 = vadd.f32 0.0, %v4580
      %v4582 = vpop.f32.mrf.mxu0
      %4583 = vmatprep.mubr.bf16.mxu0 0
      %4584 = vmatmul.mubr.bf16.gmra.mxu0 %v4334
      %v4585 = vpop.f32.mrf.mxu0
      %v4586 = vadd.f32 0.0, %v4585
      %v4587 = vpop.f32.mrf.mxu0
      %v4588 = vpop.f32.mrf.mxu0
      %v4589 = vadd.f32 0.0, %v4588
      %v4590 = vpop.f32.mrf.mxu0
      %4591 = vmatprep.mubr.bf16.mxu0 0
      %4592 = vmatmul.mubr.bf16.gmra.mxu0 %v4343
      %v4593 = vpop.f32.mrf.mxu0
      %v4594 = vadd.f32 0.0, %v4593
      %v4595 = vpop.f32.mrf.mxu0
      %v4596 = vpop.f32.mrf.mxu0
      %v4597 = vadd.f32 0.0, %v4596
      %v4598 = vpop.f32.mrf.mxu0
      %4599 = vmatprep.mubr.bf16.mxu0 0
      %4600 = vmatmul.mubr.bf16.gmra.mxu0 %v4352
      %v4601 = vpop.f32.mrf.mxu0
      %v4602 = vadd.f32 0.0, %v4601
      %v4603 = vpop.f32.mrf.mxu0
      %v4604 = vpop.f32.mrf.mxu0
      %v4605 = vadd.f32 0.0, %v4604
      %v4606 = vpop.f32.mrf.mxu0
      %4607 = vmatprep.mubr.bf16.mxu0 0
      %4608 = vmatmul.mubr.bf16.gmra.mxu0 %v4361
      %v4609 = vpop.f32.mrf.mxu0
      %v4610 = vadd.f32 0.0, %v4609
      %v4611 = vpop.f32.mrf.mxu0
      %v4612 = vpop.f32.mrf.mxu0
      %v4613 = vadd.f32 0.0, %v4612
      %v4614 = vpop.f32.mrf.mxu0
      %4615 = vmatprep.mubr.bf16.mxu0 0
      %4616 = vmatmul.mubr.bf16.gmra.mxu0 %v4370
      %v4617 = vpop.f32.mrf.mxu0
      %v4618 = vadd.f32 0.0, %v4617
      %v4619 = vpop.f32.mrf.mxu0
      %v4620 = vpop.f32.mrf.mxu0
      %v4621 = vadd.f32 0.0, %v4620
      %v4622 = vpop.f32.mrf.mxu0
      %4623 = vmatprep.mubr.bf16.mxu0 0
      %4624 = vmatmul.mubr.bf16.gmra.mxu0 %v4379
      %v4625 = vpop.f32.mrf.mxu0
      %v4626 = vadd.f32 0.0, %v4625
      %v4627 = vpop.f32.mrf.mxu0
      %v4628 = vpop.f32.mrf.mxu0
      %v4629 = vadd.f32 0.0, %v4628
      %v4630 = vpop.f32.mrf.mxu0
      %4631 = vmatprep.mubr.bf16.mxu0 0
      %4632 = vmatmul.mubr.bf16.gmra.mxu0 %v4388
      %v4633 = vpop.f32.mrf.mxu0
      %v4634 = vadd.f32 0.0, %v4633
      %v4635 = vpop.f32.mrf.mxu0
      %v4636 = vpop.f32.mrf.mxu0
      %v4637 = vadd.f32 0.0, %v4636
      %v4638 = vpop.f32.mrf.mxu0
      %4639 = vmatprep.mubr.bf16.mxu0 0
      %4640 = vmatmul.mubr.bf16.gmra.mxu0 %v4397
      %v4641 = vpop.f32.mrf.mxu0
      %v4642 = vadd.f32 0.0, %v4641
      %v4643 = vpop.f32.mrf.mxu0
      %v4644 = vpop.f32.mrf.mxu0
      %v4645 = vadd.f32 0.0, %v4644
      %v4646 = vpop.f32.mrf.mxu0
      %4647 = vmatprep.mubr.bf16.mxu0 0
      %4648 = vmatmul.mubr.bf16.gmra.mxu0 %v4406
      %v4649 = vpop.f32.mrf.mxu0
      %v4650 = vadd.f32 0.0, %v4649
      %v4651 = vpop.f32.mrf.mxu0
      %v4652 = vpop.f32.mrf.mxu0
      %v4653 = vadd.f32 0.0, %v4652
      %v4654 = vpop.f32.mrf.mxu0
      %4655 = vmatprep.mubr.bf16.mxu0 0
      %4656 = vmatmul.mubr.bf16.gmra.mxu0 %v4415
      %v4657 = vpop.f32.mrf.mxu0
      %v4658 = vadd.f32 0.0, %v4657
      %v4659 = vpop.f32.mrf.mxu0
      %v4660 = vpop.f32.mrf.mxu0
      %v4661 = vadd.f32 0.0, %v4660
      %v4662 = vpop.f32.mrf.mxu0
      %4663 = vmatprep.mubr.bf16.mxu0 0
      %4664 = vmatmul.mubr.bf16.gmra.mxu0 %v4424
      %v4665 = vpop.f32.mrf.mxu0
      %v4666 = vadd.f32 0.0, %v4665
      %v4667 = vpop.f32.mrf.mxu0
      %v4668 = vpop.f32.mrf.mxu0
      %v4669 = vadd.f32 0.0, %v4668
      %v4670 = vpop.f32.mrf.mxu0
      %4671 = vmatprep.mubr.bf16.mxu0 0
      %4672 = vmatmul.mubr.bf16.gmra.mxu0 %v4433
      %v4673 = vpop.f32.mrf.mxu0
      %v4674 = vadd.f32 0.0, %v4673
      %v4675 = vpop.f32.mrf.mxu0
      %v4676 = vpop.f32.mrf.mxu0
      %v4677 = vadd.f32 0.0, %v4676
      %v4678 = vpop.f32.mrf.mxu0
      %4679 = vmatprep.mubr.bf16.mxu0 0
      %4680 = vmatmul.mubr.bf16.gmra.mxu0 %v4442
      %v4681 = vpop.f32.mrf.mxu0
      %v4682 = vadd.f32 0.0, %v4681
      %v4683 = vpop.f32.mrf.mxu0
      %v4684 = vpop.f32.mrf.mxu0
      %v4685 = vadd.f32 0.0, %v4684
      %v4686 = vpop.f32.mrf.mxu0
      %4687 = vmatprep.mubr.bf16.mxu0 0
      %4688 = vmatmul.mubr.bf16.gmra.mxu0 %v4451
      %v4689 = vpop.f32.mrf.mxu0
      %v4690 = vadd.f32 0.0, %v4689
      %v4691 = vpop.f32.mrf.mxu0
      %v4692 = vpop.f32.mrf.mxu0
      %v4693 = vadd.f32 0.0, %v4692
      %v4694 = vpop.f32.mrf.mxu0
      %4695 = vmatprep.mubr.bf16.mxu0 0
      %4696 = vmatmul.mubr.bf16.gmra.mxu0 %v4460
      %v4697 = vpop.f32.mrf.mxu0
      %v4698 = vadd.f32 0.0, %v4697
      %v4699 = vpop.f32.mrf.mxu0
      %v4700 = vpop.f32.mrf.mxu0
      %v4701 = vadd.f32 0.0, %v4700
      %v4702 = vpop.f32.mrf.mxu0
      %4703 = vdwg.mxu0
      %v4704 = vld [vmem:[#allocation2] sm:$0xff]
      %v4705 = vld [vmem:[#allocation2 + $0x8] sm:$0xff]
      %v4706 = vld [vmem:[#allocation2 + $0x10] sm:$0xff]
      %v4707 = vld [vmem:[#allocation2 + $0x18] sm:$0xff]
      %v4708 = vld [vmem:[#allocation2 + $0x20] sm:$0xff]
      %v4709 = vld [vmem:[#allocation2 + $0x28] sm:$0xff]
      %v4710 = vld [vmem:[#allocation2 + $0x30] sm:$0xff]
      %v4711 = vld [vmem:[#allocation2 + $0x38] sm:$0xff]
      %v4712 = vld [vmem:[#allocation2 + $0x40] sm:$0xff]
      %v4713 = vld [vmem:[#allocation2 + $0x48] sm:$0xff]
      %v4714 = vld [vmem:[#allocation2 + $0x50] sm:$0xff]
      %v4715 = vld [vmem:[#allocation2 + $0x58] sm:$0xff]
      %v4716 = vld [vmem:[#allocation2 + $0x60] sm:$0xff]
      %v4717 = vld [vmem:[#allocation2 + $0x68] sm:$0xff]
      %v4718 = vld [vmem:[#allocation2 + $0x70] sm:$0xff]
      %v4719 = vld [vmem:[#allocation2 + $0x78] sm:$0xff]
      %v4720 = vld [vmem:[#allocation2 + $0x80] sm:$0xff]
      %v4721 = vld [vmem:[#allocation2 + $0x88] sm:$0xff]
      %v4722 = vld [vmem:[#allocation2 + $0x90] sm:$0xff]
      %v4723 = vld [vmem:[#allocation2 + $0x98] sm:$0xff]
      %v4724 = vld [vmem:[#allocation2 + $0xa0] sm:$0xff]
      %v4725 = vld [vmem:[#allocation2 + $0xa8] sm:$0xff]
      %v4726 = vld [vmem:[#allocation2 + $0xb0] sm:$0xff]
      %v4727 = vld [vmem:[#allocation2 + $0xb8] sm:$0xff]
      %v4728 = vld [vmem:[#allocation2 + $0xc0] sm:$0xff]
      %v4729 = vld [vmem:[#allocation2 + $0xc8] sm:$0xff]
      %v4730 = vld [vmem:[#allocation2 + $0xd0] sm:$0xff]
      %v4731 = vld [vmem:[#allocation2 + $0xd8] sm:$0xff]
      %v4732 = vld [vmem:[#allocation2 + $0xe0] sm:$0xff]
      %v4733 = vld [vmem:[#allocation2 + $0xe8] sm:$0xff]
      %v4734 = vld [vmem:[#allocation2 + $0xf0] sm:$0xff]
      %v4735 = vld [vmem:[#allocation2 + $0xf8] sm:$0xff]
      %v4736 = vld [vmem:[#allocation2 + $0x100] sm:$0xff]
      %v4737 = vld [vmem:[#allocation2 + $0x108] sm:$0xff]
      %v4738 = vld [vmem:[#allocation2 + $0x110] sm:$0xff]
      %v4739 = vld [vmem:[#allocation2 + $0x118] sm:$0xff]
      %v4740 = vadd.f32 %v4704, %v4562
      %v4741 = vadd.f32 %v4705, %v4565
      %v4742 = vadd.f32 %v4706, %v4570
      %v4743 = vadd.f32 %v4707, %v4573
      %v4744 = vadd.f32 %v4708, %v4578
      %v4745 = vadd.f32 %v4709, %v4581
      %v4746 = vadd.f32 %v4710, %v4586
      %v4747 = vadd.f32 %v4711, %v4589
      %v4748 = vadd.f32 %v4712, %v4594
      %v4749 = vadd.f32 %v4713, %v4597
      %v4750 = vadd.f32 %v4714, %v4602
      %v4751 = vadd.f32 %v4715, %v4605
      %v4752 = vadd.f32 %v4716, %v4610
      %v4753 = vadd.f32 %v4717, %v4613
      %v4754 = vadd.f32 %v4718, %v4618
      %v4755 = vadd.f32 %v4719, %v4621
      %v4756 = vadd.f32 %v4720, %v4626
      %v4757 = vadd.f32 %v4721, %v4629
      %v4758 = vadd.f32 %v4722, %v4634
      %v4759 = vadd.f32 %v4723, %v4637
      %v4760 = vadd.f32 %v4724, %v4642
      %v4761 = vadd.f32 %v4725, %v4645
      %v4762 = vadd.f32 %v4726, %v4650
      %v4763 = vadd.f32 %v4727, %v4653
      %v4764 = vadd.f32 %v4728, %v4658
      %v4765 = vadd.f32 %v4729, %v4661
      %v4766 = vadd.f32 %v4730, %v4666
      %v4767 = vadd.f32 %v4731, %v4669
      %v4768 = vadd.f32 %v4732, %v4674
      %v4769 = vadd.f32 %v4733, %v4677
      %v4770 = vadd.f32 %v4734, %v4682
      %v4771 = vadd.f32 %v4735, %v4685
      %v4772 = vadd.f32 %v4736, %v4690
      %v4773 = vadd.f32 %v4737, %v4693
      %v4774 = vadd.f32 %v4738, %v4698
      %v4775 = vadd.f32 %v4739, %v4701
      %4776 = vst [vmem:[#allocation2] sm:$0xff] %v4740
      %4777 = vst [vmem:[#allocation2 + $0x8] sm:$0xff] %v4741
      %4778 = vst [vmem:[#allocation2 + $0x10] sm:$0xff] %v4742
      %4779 = vst [vmem:[#allocation2 + $0x18] sm:$0xff] %v4743
      %4780 = vst [vmem:[#allocation2 + $0x20] sm:$0xff] %v4744
      %4781 = vst [vmem:[#allocation2 + $0x28] sm:$0xff] %v4745
      %4782 = vst [vmem:[#allocation2 + $0x30] sm:$0xff] %v4746
      %4783 = vst [vmem:[#allocation2 + $0x38] sm:$0xff] %v4747
      %4784 = vst [vmem:[#allocation2 + $0x40] sm:$0xff] %v4748
      %4785 = vst [vmem:[#allocation2 + $0x48] sm:$0xff] %v4749
      %4786 = vst [vmem:[#allocation2 + $0x50] sm:$0xff] %v4750
      %4787 = vst [vmem:[#allocation2 + $0x58] sm:$0xff] %v4751
      %4788 = vst [vmem:[#allocation2 + $0x60] sm:$0xff] %v4752
      %4789 = vst [vmem:[#allocation2 + $0x68] sm:$0xff] %v4753
      %4790 = vst [vmem:[#allocation2 + $0x70] sm:$0xff] %v4754
      %4791 = vst [vmem:[#allocation2 + $0x78] sm:$0xff] %v4755
      %4792 = vst [vmem:[#allocation2 + $0x80] sm:$0xff] %v4756
      %4793 = vst [vmem:[#allocation2 + $0x88] sm:$0xff] %v4757
      %4794 = vst [vmem:[#allocation2 + $0x90] sm:$0xff] %v4758
      %4795 = vst [vmem:[#allocation2 + $0x98] sm:$0xff] %v4759
      %4796 = vst [vmem:[#allocation2 + $0xa0] sm:$0xff] %v4760
      %4797 = vst [vmem:[#allocation2 + $0xa8] sm:$0xff] %v4761
      %4798 = vst [vmem:[#allocation2 + $0xb0] sm:$0xff] %v4762
      %4799 = vst [vmem:[#allocation2 + $0xb8] sm:$0xff] %v4763
      %4800 = vst [vmem:[#allocation2 + $0xc0] sm:$0xff] %v4764
      %4801 = vst [vmem:[#allocation2 + $0xc8] sm:$0xff] %v4765
      %4802 = vst [vmem:[#allocation2 + $0xd0] sm:$0xff] %v4766
      %4803 = vst [vmem:[#allocation2 + $0xd8] sm:$0xff] %v4767
      %4804 = vst [vmem:[#allocation2 + $0xe0] sm:$0xff] %v4768
      %4805 = vst [vmem:[#allocation2 + $0xe8] sm:$0xff] %v4769
      %4806 = vst [vmem:[#allocation2 + $0xf0] sm:$0xff] %v4770
      %4807 = vst [vmem:[#allocation2 + $0xf8] sm:$0xff] %v4771
      %4808 = vst [vmem:[#allocation2 + $0x100] sm:$0xff] %v4772
      %4809 = vst [vmem:[#allocation2 + $0x108] sm:$0xff] %v4773
      %4810 = vst [vmem:[#allocation2 + $0x110] sm:$0xff] %v4774
      %4811 = vst [vmem:[#allocation2 + $0x118] sm:$0xff] %v4775
      %v4812 = vld [vmem:[%s244 + $0x10] sm:$0x8]
      %v4813 = vld [vmem:[%s244 + $0x14] sm:$0xf]
      %v4814 = vld [vmem:[%s244 + $0x18] sm:$0xf]
      %v4815 = vld [vmem:[%s244 + $0x1c] sm:$0xf]
      %v4816 = vld [vmem:[%s244 + $0x20] sm:$0xf]
      %v4817 = vld [vmem:[%s244 + $0x24] sm:$0xf]
      %v4818 = vld [vmem:[%s244 + $0x28] sm:$0xf]
      %v4819 = vld [vmem:[%s244 + $0x2c] sm:$0xf]
      %v4820 = vld [vmem:[%s244 + $0x30] sm:$0xf]
      %v4821 = vld [vmem:[%s244 + $0x34] sm:$0xf]
      %v4822 = vld [vmem:[%s244 + $0x38] sm:$0xf]
      %v4823 = vld [vmem:[%s244 + $0x3c] sm:$0xf]
      %v4824 = vld [vmem:[%s244 + $0x40] sm:$0xf]
      %v4825 = vld [vmem:[%s244 + $0x44] sm:$0xf]
      %v4826 = vld [vmem:[%s244 + $0x48] sm:$0xf]
      %v4827 = vld [vmem:[%s244 + $0x4c] sm:$0xf]
      %v4828 = vld [vmem:[%s244 + $0x50] sm:$0xf]
      %v4829 = vld [vmem:[%s244 + $0x54] sm:$0xf]
      %v4830 = vld [vmem:[%s244 + $0x58] sm:$0xf]
      %v4831 = vld [vmem:[%s244 + $0x5c] sm:$0xf]
      %v4832 = vld [vmem:[%s244 + $0x60] sm:$0xf]
      %v4833 = vld [vmem:[%s244 + $0x64] sm:$0xf]
      %v4834 = vld [vmem:[%s244 + $0x68] sm:$0xf]
      %v4835 = vld [vmem:[%s244 + $0x6c] sm:$0xf]
      %v4836 = vld [vmem:[%s244 + $0x70] sm:$0xf]
      %v4837 = vld [vmem:[%s244 + $0x74] sm:$0xf]
      %v4838 = vld [vmem:[%s244 + $0x78] sm:$0xf]
      %v4839 = vld [vmem:[%s244 + $0x7c] sm:$0xf]
      %v4840 = vld [vmem:[%s244 + $0x80] sm:$0xf]
      %v4841 = vld [vmem:[%s244 + $0x84] sm:$0xf]
      %v4842 = vld [vmem:[%s244 + $0x88] sm:$0xf]
      %v4843 = vld [vmem:[%s244 + $0x8c] sm:$0xf]
      %v4844 = vld [vmem:[%s244 + $0x90] sm:$0xf]
      %v4845 = vld [vmem:[%s244 + $0x94] sm:$0xf]
      %v4846 = vld [vmem:[%s244 + $0x98] sm:$0xf]
      %v4847 = vld [vmem:[%s244 + $0x9c] sm:$0xf]
      %v4848 = vld [vmem:[%s244 + $0xa0] sm:$0x7]
      %s4849 = scalar_lea.vmem %s248, 512
      %v4850 = vld [vmem:[%s4849] sm:$0xf]
      %v4851 = vld [vmem:[%s4849 + $0x4] sm:$0xf]
      %v4852 = vld [vmem:[%s4849 + $0x8] sm:$0xf]
      %v4853 = vld [vmem:[%s4849 + $0xc] sm:$0xf]
      %v4854 = vld [vmem:[%s4849 + $0x10] sm:$0xf]
      %v4855 = vld [vmem:[%s4849 + $0x14] sm:$0xf]
      %v4856 = vld [vmem:[%s4849 + $0x18] sm:$0xf]
      %v4857 = vld [vmem:[%s4849 + $0x1c] sm:$0xf]
      %v4858 = vld [vmem:[%s4849 + $0x20] sm:$0xf]
      %v4859 = vld [vmem:[%s4849 + $0x24] sm:$0xf]
      %v4860 = vld [vmem:[%s4849 + $0x28] sm:$0xf]
      %v4861 = vld [vmem:[%s4849 + $0x2c] sm:$0xf]
      %v4862 = vld [vmem:[%s4849 + $0x30] sm:$0xf]
      %v4863 = vld [vmem:[%s4849 + $0x34] sm:$0xf]
      %v4864 = vld [vmem:[%s4849 + $0x38] sm:$0xf]
      %v4865 = vld [vmem:[%s4849 + $0x3c] sm:$0xf]
      %v4903 = vunpack.c.l.b16 %v4812
      %v4904 = vunpack.c.l.b16 %v4813
      %v4905 = vunpack.c.l.b16 %v4814
      %v4906 = vunpack.c.l.b16 %v4815
      %v4907 = vunpack.c.l.b16 %v4816
      %v4908 = vunpack.c.l.b16 %v4817
      %v4909 = vunpack.c.l.b16 %v4818
      %v4910 = vunpack.c.l.b16 %v4819
      %v4911 = vunpack.c.l.b16 %v4820
      %v4912 = vunpack.c.l.b16 %v4821
      %v4913 = vunpack.c.l.b16 %v4822
      %v4914 = vunpack.c.l.b16 %v4823
      %v4915 = vunpack.c.l.b16 %v4824
      %v4916 = vunpack.c.l.b16 %v4825
      %v4917 = vunpack.c.l.b16 %v4826
      %v4918 = vunpack.c.l.b16 %v4827
      %v4919 = vunpack.c.l.b16 %v4828
      %v4920 = vunpack.c.l.b16 %v4829
      %v4921 = vunpack.c.l.b16 %v4830
      %v4922 = vunpack.c.l.b16 %v4831
      %v4923 = vunpack.c.l.b16 %v4832
      %v4924 = vunpack.c.l.b16 %v4833
      %v4925 = vunpack.c.l.b16 %v4834
      %v4926 = vunpack.c.l.b16 %v4835
      %v4927 = vunpack.c.l.b16 %v4836
      %v4928 = vunpack.c.l.b16 %v4837
      %v4929 = vunpack.c.l.b16 %v4838
      %v4930 = vunpack.c.l.b16 %v4839
      %v4931 = vunpack.c.l.b16 %v4840
      %v4932 = vunpack.c.l.b16 %v4841
      %v4933 = vunpack.c.l.b16 %v4842
      %v4934 = vunpack.c.l.b16 %v4843
      %v4935 = vunpack.c.l.b16 %v4844
      %v4936 = vunpack.c.l.b16 %v4845
      %v4937 = vunpack.c.l.b16 %v4846
      %v4938 = vunpack.c.l.b16 %v4847
      %v4939 = vunpack.c.l.b16 %v4848
      %v4940 = vpack.c.b16 %v4904, %v4903
      %v4941 = vpack.c.b16 %v4906, %v4905
      %v4942 = vpack.c.b16 %v4908, %v4907
      %v4943 = vpack.c.b16 %v4910, %v4909
      %v4944 = vpack.c.b16 %v4912, %v4911
      %v4945 = vpack.c.b16 %v4914, %v4913
      %v4946 = vpack.c.b16 %v4916, %v4915
      %v4947 = vpack.c.b16 %v4918, %v4917
      %v4948 = vpack.c.b16 %v4920, %v4919
      %v4949 = vpack.c.b16 %v4922, %v4921
      %v4950 = vpack.c.b16 %v4924, %v4923
      %v4951 = vpack.c.b16 %v4926, %v4925
      %v4952 = vpack.c.b16 %v4928, %v4927
      %v4953 = vpack.c.b16 %v4930, %v4929
      %v4954 = vpack.c.b16 %v4932, %v4931
      %v4955 = vpack.c.b16 %v4934, %v4933
      %v4956 = vpack.c.b16 %v4936, %v4935
      %v4957 = vpack.c.b16 %v4938, %v4937
      %v4958 = vpack.c.b16 %v4939, %v4939
      %vm4959 = vcmask 1044480
      %v4960 = vrot.slane %v4940, 3
      %v4961 = vrot.slane %v4941, 3
      %v4962 = vsel %vm4959, %v4960, %v4961
      %v4963 = vrot.slane %v4942, 3
      %v4964 = vsel %vm4959, %v4961, %v4963
      %v4965 = vrot.slane %v4943, 3
      %v4966 = vsel %vm4959, %v4963, %v4965
      %v4967 = vrot.slane %v4944, 3
      %v4968 = vsel %vm4959, %v4965, %v4967
      %v4969 = vrot.slane %v4945, 3
      %v4970 = vsel %vm4959, %v4967, %v4969
      %v4971 = vrot.slane %v4946, 3
      %v4972 = vsel %vm4959, %v4969, %v4971
      %v4973 = vrot.slane %v4947, 3
      %v4974 = vsel %vm4959, %v4971, %v4973
      %v4975 = vrot.slane %v4948, 3
      %v4976 = vsel %vm4959, %v4973, %v4975
      %v4977 = vrot.slane %v4949, 3
      %v4978 = vsel %vm4959, %v4975, %v4977
      %v4979 = vrot.slane %v4950, 3
      %v4980 = vsel %vm4959, %v4977, %v4979
      %v4981 = vrot.slane %v4951, 3
      %v4982 = vsel %vm4959, %v4979, %v4981
      %v4983 = vrot.slane %v4952, 3
      %v4984 = vsel %vm4959, %v4981, %v4983
      %v4985 = vrot.slane %v4953, 3
      %v4986 = vsel %vm4959, %v4983, %v4985
      %v4987 = vrot.slane %v4954, 3
      %v4988 = vsel %vm4959, %v4985, %v4987
      %v4989 = vrot.slane %v4955, 3
      %v4990 = vsel %vm4959, %v4987, %v4989
      %v4991 = vrot.slane %v4956, 3
      %v4992 = vsel %vm4959, %v4989, %v4991
      %v4993 = vrot.slane %v4957, 3
      %v4994 = vsel %vm4959, %v4991, %v4993
      %v4995 = vrot.slane %v4958, 3
      %v4996 = vsel %vm4959, %v4993, %v4995
      %v5031 = vunpack.c.l.b16 %v4850
      %v5032 = vunpack.c.l.b16 %v4851
      %v5033 = vunpack.c.l.b16 %v4852
      %v5034 = vunpack.c.l.b16 %v4853
      %v5035 = vunpack.c.l.b16 %v4854
      %v5036 = vunpack.c.l.b16 %v4855
      %v5037 = vunpack.c.l.b16 %v4856
      %v5038 = vunpack.c.l.b16 %v4857
      %v5039 = vunpack.c.l.b16 %v4858
      %v5040 = vunpack.c.l.b16 %v4859
      %v5041 = vunpack.c.l.b16 %v4860
      %v5042 = vunpack.c.l.b16 %v4861
      %v5043 = vunpack.c.l.b16 %v4862
      %v5044 = vunpack.c.l.b16 %v4863
      %v5045 = vunpack.c.l.b16 %v4864
      %v5046 = vunpack.c.l.b16 %v4865
      %v5047 = vpack.c.b16 %v5032, %v5031
      %v5048 = vpack.c.b16 %v5034, %v5033
      %v5049 = vpack.c.b16 %v5036, %v5035
      %v5050 = vpack.c.b16 %v5038, %v5037
      %v5051 = vpack.c.b16 %v5040, %v5039
      %v5052 = vpack.c.b16 %v5042, %v5041
      %v5053 = vpack.c.b16 %v5044, %v5043
      %v5054 = vpack.c.b16 %v5046, %v5045
      %5063 = vmatprep.subr.bf16.mxu0 0
      %5064 = vmatpush1.bf16.msra.mxu0 %v5054
      %5065 = vmatprep.subr.bf16.mxu0 0
      %5066 = vmatpush1.bf16.msra.mxu0 %v5053
      %5067 = vmatprep.subr.bf16.mxu0 0
      %5068 = vmatpush1.bf16.msra.mxu0 %v5052
      %5069 = vmatprep.subr.bf16.mxu0 0
      %5070 = vmatpush1.bf16.msra.mxu0 %v5051
      %5071 = vmatprep.subr.bf16.mxu0 0
      %5072 = vmatpush1.bf16.msra.mxu0 %v5050
      %5073 = vmatprep.subr.bf16.mxu0 0
      %5074 = vmatpush1.bf16.msra.mxu0 %v5049
      %5075 = vmatprep.subr.bf16.mxu0 0
      %5076 = vmatpush1.bf16.msra.mxu0 %v5048
      %5077 = vmatprep.subr.bf16.mxu0 0
      %5078 = vmatpush1.bf16.msra.mxu0 %v5047
      %5079 = vmatprep.subr.bf16.mxu0 0
      %5080 = vmatpush2.bf16.msra.mxu0 0
      %5081 = vmatprep.subr.bf16.mxu0 0
      %5082 = vmatpush2.bf16.msra.mxu0 0
      %5083 = vmatprep.subr.bf16.mxu0 0
      %5084 = vmatpush2.bf16.msra.mxu0 0
      %5085 = vmatprep.subr.bf16.mxu0 0
      %5086 = vmatpush2.bf16.msra.mxu0 0
      %5087 = vmatprep.subr.bf16.mxu0 0
      %5088 = vmatpush2.bf16.msra.mxu0 0
      %5089 = vmatprep.subr.bf16.mxu0 0
      %5090 = vmatpush2.bf16.msra.mxu0 0
      %5091 = vmatprep.subr.bf16.mxu0 0
      %5092 = vmatpush2.bf16.msra.mxu0 0
      %5093 = vmatprep.subr.bf16.mxu0 0
      %5094 = vmatpush2.bf16.msra.mxu0 0
      %5095 = vmatprep.mubr.bf16.mxu0 0
      %5096 = vmatmul.mubr.bf16.gmra.mxu0 %v4962
      %v5097 = vpop.f32.mrf.mxu0
      %v5098 = vadd.f32 0.0, %v5097
      %v5099 = vpop.f32.mrf.mxu0
      %v5100 = vpop.f32.mrf.mxu0
      %v5101 = vadd.f32 0.0, %v5100
      %v5102 = vpop.f32.mrf.mxu0
      %5103 = vmatprep.mubr.bf16.mxu0 0
      %5104 = vmatmul.mubr.bf16.gmra.mxu0 %v4964
      %v5105 = vpop.f32.mrf.mxu0
      %v5106 = vadd.f32 0.0, %v5105
      %v5107 = vpop.f32.mrf.mxu0
      %v5108 = vpop.f32.mrf.mxu0
      %v5109 = vadd.f32 0.0, %v5108
      %v5110 = vpop.f32.mrf.mxu0
      %5111 = vmatprep.mubr.bf16.mxu0 0
      %5112 = vmatmul.mubr.bf16.gmra.mxu0 %v4966
      %v5113 = vpop.f32.mrf.mxu0
      %v5114 = vadd.f32 0.0, %v5113
      %v5115 = vpop.f32.mrf.mxu0
      %v5116 = vpop.f32.mrf.mxu0
      %v5117 = vadd.f32 0.0, %v5116
      %v5118 = vpop.f32.mrf.mxu0
      %5119 = vmatprep.mubr.bf16.mxu0 0
      %5120 = vmatmul.mubr.bf16.gmra.mxu0 %v4968
      %v5121 = vpop.f32.mrf.mxu0
      %v5122 = vadd.f32 0.0, %v5121
      %v5123 = vpop.f32.mrf.mxu0
      %v5124 = vpop.f32.mrf.mxu0
      %v5125 = vadd.f32 0.0, %v5124
      %v5126 = vpop.f32.mrf.mxu0
      %5127 = vmatprep.mubr.bf16.mxu0 0
      %5128 = vmatmul.mubr.bf16.gmra.mxu0 %v4970
      %v5129 = vpop.f32.mrf.mxu0
      %v5130 = vadd.f32 0.0, %v5129
      %v5131 = vpop.f32.mrf.mxu0
      %v5132 = vpop.f32.mrf.mxu0
      %v5133 = vadd.f32 0.0, %v5132
      %v5134 = vpop.f32.mrf.mxu0
      %5135 = vmatprep.mubr.bf16.mxu0 0
      %5136 = vmatmul.mubr.bf16.gmra.mxu0 %v4972
      %v5137 = vpop.f32.mrf.mxu0
      %v5138 = vadd.f32 0.0, %v5137
      %v5139 = vpop.f32.mrf.mxu0
      %v5140 = vpop.f32.mrf.mxu0
      %v5141 = vadd.f32 0.0, %v5140
      %v5142 = vpop.f32.mrf.mxu0
      %5143 = vmatprep.mubr.bf16.mxu0 0
      %5144 = vmatmul.mubr.bf16.gmra.mxu0 %v4974
      %v5145 = vpop.f32.mrf.mxu0
      %v5146 = vadd.f32 0.0, %v5145
      %v5147 = vpop.f32.mrf.mxu0
      %v5148 = vpop.f32.mrf.mxu0
      %v5149 = vadd.f32 0.0, %v5148
      %v5150 = vpop.f32.mrf.mxu0
      %5151 = vmatprep.mubr.bf16.mxu0 0
      %5152 = vmatmul.mubr.bf16.gmra.mxu0 %v4976
      %v5153 = vpop.f32.mrf.mxu0
      %v5154 = vadd.f32 0.0, %v5153
      %v5155 = vpop.f32.mrf.mxu0
      %v5156 = vpop.f32.mrf.mxu0
      %v5157 = vadd.f32 0.0, %v5156
      %v5158 = vpop.f32.mrf.mxu0
      %5159 = vmatprep.mubr.bf16.mxu0 0
      %5160 = vmatmul.mubr.bf16.gmra.mxu0 %v4978
      %v5161 = vpop.f32.mrf.mxu0
      %v5162 = vadd.f32 0.0, %v5161
      %v5163 = vpop.f32.mrf.mxu0
      %v5164 = vpop.f32.mrf.mxu0
      %v5165 = vadd.f32 0.0, %v5164
      %v5166 = vpop.f32.mrf.mxu0
      %5167 = vmatprep.mubr.bf16.mxu0 0
      %5168 = vmatmul.mubr.bf16.gmra.mxu0 %v4980
      %v5169 = vpop.f32.mrf.mxu0
      %v5170 = vadd.f32 0.0, %v5169
      %v5171 = vpop.f32.mrf.mxu0
      %v5172 = vpop.f32.mrf.mxu0
      %v5173 = vadd.f32 0.0, %v5172
      %v5174 = vpop.f32.mrf.mxu0
      %5175 = vmatprep.mubr.bf16.mxu0 0
      %5176 = vmatmul.mubr.bf16.gmra.mxu0 %v4982
      %v5177 = vpop.f32.mrf.mxu0
      %v5178 = vadd.f32 0.0, %v5177
      %v5179 = vpop.f32.mrf.mxu0
      %v5180 = vpop.f32.mrf.mxu0
      %v5181 = vadd.f32 0.0, %v5180
      %v5182 = vpop.f32.mrf.mxu0
      %5183 = vmatprep.mubr.bf16.mxu0 0
      %5184 = vmatmul.mubr.bf16.gmra.mxu0 %v4984
      %v5185 = vpop.f32.mrf.mxu0
      %v5186 = vadd.f32 0.0, %v5185
      %v5187 = vpop.f32.mrf.mxu0
      %v5188 = vpop.f32.mrf.mxu0
      %v5189 = vadd.f32 0.0, %v5188
      %v5190 = vpop.f32.mrf.mxu0
      %5191 = vmatprep.mubr.bf16.mxu0 0
      %5192 = vmatmul.mubr.bf16.gmra.mxu0 %v4986
      %v5193 = vpop.f32.mrf.mxu0
      %v5194 = vadd.f32 0.0, %v5193
      %v5195 = vpop.f32.mrf.mxu0
      %v5196 = vpop.f32.mrf.mxu0
      %v5197 = vadd.f32 0.0, %v5196
      %v5198 = vpop.f32.mrf.mxu0
      %5199 = vmatprep.mubr.bf16.mxu0 0
      %5200 = vmatmul.mubr.bf16.gmra.mxu0 %v4988
      %v5201 = vpop.f32.mrf.mxu0
      %v5202 = vadd.f32 0.0, %v5201
      %v5203 = vpop.f32.mrf.mxu0
      %v5204 = vpop.f32.mrf.mxu0
      %v5205 = vadd.f32 0.0, %v5204
      %v5206 = vpop.f32.mrf.mxu0
      %5207 = vmatprep.mubr.bf16.mxu0 0
      %5208 = vmatmul.mubr.bf16.gmra.mxu0 %v4990
      %v5209 = vpop.f32.mrf.mxu0
      %v5210 = vadd.f32 0.0, %v5209
      %v5211 = vpop.f32.mrf.mxu0
      %v5212 = vpop.f32.mrf.mxu0
      %v5213 = vadd.f32 0.0, %v5212
      %v5214 = vpop.f32.mrf.mxu0
      %5215 = vmatprep.mubr.bf16.mxu0 0
      %5216 = vmatmul.mubr.bf16.gmra.mxu0 %v4992
      %v5217 = vpop.f32.mrf.mxu0
      %v5218 = vadd.f32 0.0, %v5217
      %v5219 = vpop.f32.mrf.mxu0
      %v5220 = vpop.f32.mrf.mxu0
      %v5221 = vadd.f32 0.0, %v5220
      %v5222 = vpop.f32.mrf.mxu0
      %5223 = vmatprep.mubr.bf16.mxu0 0
      %5224 = vmatmul.mubr.bf16.gmra.mxu0 %v4994
      %v5225 = vpop.f32.mrf.mxu0
      %v5226 = vadd.f32 0.0, %v5225
      %v5227 = vpop.f32.mrf.mxu0
      %v5228 = vpop.f32.mrf.mxu0
      %v5229 = vadd.f32 0.0, %v5228
      %v5230 = vpop.f32.mrf.mxu0
      %5231 = vmatprep.mubr.bf16.mxu0 0
      %5232 = vmatmul.mubr.bf16.gmra.mxu0 %v4996
      %v5233 = vpop.f32.mrf.mxu0
      %v5234 = vadd.f32 0.0, %v5233
      %v5235 = vpop.f32.mrf.mxu0
      %v5236 = vpop.f32.mrf.mxu0
      %v5237 = vadd.f32 0.0, %v5236
      %v5238 = vpop.f32.mrf.mxu0
      %5239 = vdwg.mxu0
      %v5240 = vld [vmem:[#allocation2] sm:$0xff]
      %v5241 = vld [vmem:[#allocation2 + $0x8] sm:$0xff]
      %v5242 = vld [vmem:[#allocation2 + $0x10] sm:$0xff]
      %v5243 = vld [vmem:[#allocation2 + $0x18] sm:$0xff]
      %v5244 = vld [vmem:[#allocation2 + $0x20] sm:$0xff]
      %v5245 = vld [vmem:[#allocation2 + $0x28] sm:$0xff]
      %v5246 = vld [vmem:[#allocation2 + $0x30] sm:$0xff]
      %v5247 = vld [vmem:[#allocation2 + $0x38] sm:$0xff]
      %v5248 = vld [vmem:[#allocation2 + $0x40] sm:$0xff]
      %v5249 = vld [vmem:[#allocation2 + $0x48] sm:$0xff]
      %v5250 = vld [vmem:[#allocation2 + $0x50] sm:$0xff]
      %v5251 = vld [vmem:[#allocation2 + $0x58] sm:$0xff]
      %v5252 = vld [vmem:[#allocation2 + $0x60] sm:$0xff]
      %v5253 = vld [vmem:[#allocation2 + $0x68] sm:$0xff]
      %v5254 = vld [vmem:[#allocation2 + $0x70] sm:$0xff]
      %v5255 = vld [vmem:[#allocation2 + $0x78] sm:$0xff]
      %v5256 = vld [vmem:[#allocation2 + $0x80] sm:$0xff]
      %v5257 = vld [vmem:[#allocation2 + $0x88] sm:$0xff]
      %v5258 = vld [vmem:[#allocation2 + $0x90] sm:$0xff]
      %v5259 = vld [vmem:[#allocation2 + $0x98] sm:$0xff]
      %v5260 = vld [vmem:[#allocation2 + $0xa0] sm:$0xff]
      %v5261 = vld [vmem:[#allocation2 + $0xa8] sm:$0xff]
      %v5262 = vld [vmem:[#allocation2 + $0xb0] sm:$0xff]
      %v5263 = vld [vmem:[#allocation2 + $0xb8] sm:$0xff]
      %v5264 = vld [vmem:[#allocation2 + $0xc0] sm:$0xff]
      %v5265 = vld [vmem:[#allocation2 + $0xc8] sm:$0xff]
      %v5266 = vld [vmem:[#allocation2 + $0xd0] sm:$0xff]
      %v5267 = vld [vmem:[#allocation2 + $0xd8] sm:$0xff]
      %v5268 = vld [vmem:[#allocation2 + $0xe0] sm:$0xff]
      %v5269 = vld [vmem:[#allocation2 + $0xe8] sm:$0xff]
      %v5270 = vld [vmem:[#allocation2 + $0xf0] sm:$0xff]
      %v5271 = vld [vmem:[#allocation2 + $0xf8] sm:$0xff]
      %v5272 = vld [vmem:[#allocation2 + $0x100] sm:$0xff]
      %v5273 = vld [vmem:[#allocation2 + $0x108] sm:$0xff]
      %v5274 = vld [vmem:[#allocation2 + $0x110] sm:$0xff]
      %v5275 = vld [vmem:[#allocation2 + $0x118] sm:$0xff]
      %v5276 = vadd.f32 %v5240, %v5098
      %v5277 = vadd.f32 %v5241, %v5101
      %v5278 = vadd.f32 %v5242, %v5106
      %v5279 = vadd.f32 %v5243, %v5109
      %v5280 = vadd.f32 %v5244, %v5114
      %v5281 = vadd.f32 %v5245, %v5117
      %v5282 = vadd.f32 %v5246, %v5122
      %v5283 = vadd.f32 %v5247, %v5125
      %v5284 = vadd.f32 %v5248, %v5130
      %v5285 = vadd.f32 %v5249, %v5133
      %v5286 = vadd.f32 %v5250, %v5138
      %v5287 = vadd.f32 %v5251, %v5141
      %v5288 = vadd.f32 %v5252, %v5146
      %v5289 = vadd.f32 %v5253, %v5149
      %v5290 = vadd.f32 %v5254, %v5154
      %v5291 = vadd.f32 %v5255, %v5157
      %v5292 = vadd.f32 %v5256, %v5162
      %v5293 = vadd.f32 %v5257, %v5165
      %v5294 = vadd.f32 %v5258, %v5170
      %v5295 = vadd.f32 %v5259, %v5173
      %v5296 = vadd.f32 %v5260, %v5178
      %v5297 = vadd.f32 %v5261, %v5181
      %v5298 = vadd.f32 %v5262, %v5186
      %v5299 = vadd.f32 %v5263, %v5189
      %v5300 = vadd.f32 %v5264, %v5194
      %v5301 = vadd.f32 %v5265, %v5197
      %v5302 = vadd.f32 %v5266, %v5202
      %v5303 = vadd.f32 %v5267, %v5205
      %v5304 = vadd.f32 %v5268, %v5210
      %v5305 = vadd.f32 %v5269, %v5213
      %v5306 = vadd.f32 %v5270, %v5218
      %v5307 = vadd.f32 %v5271, %v5221
      %v5308 = vadd.f32 %v5272, %v5226
      %v5309 = vadd.f32 %v5273, %v5229
      %v5310 = vadd.f32 %v5274, %v5234
      %v5311 = vadd.f32 %v5275, %v5237
      %5312 = vst [vmem:[#allocation2] sm:$0xff] %v5276
      %5313 = vst [vmem:[#allocation2 + $0x8] sm:$0xff] %v5277
      %5314 = vst [vmem:[#allocation2 + $0x10] sm:$0xff] %v5278
      %5315 = vst [vmem:[#allocation2 + $0x18] sm:$0xff] %v5279
      %5316 = vst [vmem:[#allocation2 + $0x20] sm:$0xff] %v5280
      %5317 = vst [vmem:[#allocation2 + $0x28] sm:$0xff] %v5281
      %5318 = vst [vmem:[#allocation2 + $0x30] sm:$0xff] %v5282
      %5319 = vst [vmem:[#allocation2 + $0x38] sm:$0xff] %v5283
      %5320 = vst [vmem:[#allocation2 + $0x40] sm:$0xff] %v5284
      %5321 = vst [vmem:[#allocation2 + $0x48] sm:$0xff] %v5285
      %5322 = vst [vmem:[#allocation2 + $0x50] sm:$0xff] %v5286
      %5323 = vst [vmem:[#allocation2 + $0x58] sm:$0xff] %v5287
      %5324 = vst [vmem:[#allocation2 + $0x60] sm:$0xff] %v5288
      %5325 = vst [vmem:[#allocation2 + $0x68] sm:$0xff] %v5289
      %5326 = vst [vmem:[#allocation2 + $0x70] sm:$0xff] %v5290
      %5327 = vst [vmem:[#allocation2 + $0x78] sm:$0xff] %v5291
      %5328 = vst [vmem:[#allocation2 + $0x80] sm:$0xff] %v5292
      %5329 = vst [vmem:[#allocation2 + $0x88] sm:$0xff] %v5293
      %5330 = vst [vmem:[#allocation2 + $0x90] sm:$0xff] %v5294
      %5331 = vst [vmem:[#allocation2 + $0x98] sm:$0xff] %v5295
      %5332 = vst [vmem:[#allocation2 + $0xa0] sm:$0xff] %v5296
      %5333 = vst [vmem:[#allocation2 + $0xa8] sm:$0xff] %v5297
      %5334 = vst [vmem:[#allocation2 + $0xb0] sm:$0xff] %v5298
      %5335 = vst [vmem:[#allocation2 + $0xb8] sm:$0xff] %v5299
      %5336 = vst [vmem:[#allocation2 + $0xc0] sm:$0xff] %v5300
      %5337 = vst [vmem:[#allocation2 + $0xc8] sm:$0xff] %v5301
      %5338 = vst [vmem:[#allocation2 + $0xd0] sm:$0xff] %v5302
      %5339 = vst [vmem:[#allocation2 + $0xd8] sm:$0xff] %v5303
      %5340 = vst [vmem:[#allocation2 + $0xe0] sm:$0xff] %v5304
      %5341 = vst [vmem:[#allocation2 + $0xe8] sm:$0xff] %v5305
      %5342 = vst [vmem:[#allocation2 + $0xf0] sm:$0xff] %v5306
      %5343 = vst [vmem:[#allocation2 + $0xf8] sm:$0xff] %v5307
      %5344 = vst [vmem:[#allocation2 + $0x100] sm:$0xff] %v5308
      %5345 = vst [vmem:[#allocation2 + $0x108] sm:$0xff] %v5309
      %5346 = vst [vmem:[#allocation2 + $0x110] sm:$0xff] %v5310
      %5347 = vst [vmem:[#allocation2 + $0x118] sm:$0xff] %v5311
      %v5348 = vld [vmem:[#allocation2] sm:$0xff]
      %v5349 = vld [vmem:[#allocation2 + $0x8] sm:$0xff]
      %v5350 = vld [vmem:[#allocation2 + $0x10] sm:$0xff]
      %v5351 = vld [vmem:[#allocation2 + $0x18] sm:$0xff]
      %v5352 = vld [vmem:[#allocation2 + $0x20] sm:$0xff]
      %v5353 = vld [vmem:[#allocation2 + $0x28] sm:$0xff]
      %v5354 = vld [vmem:[#allocation2 + $0x30] sm:$0xff]
      %v5355 = vld [vmem:[#allocation2 + $0x38] sm:$0xff]
      %v5356 = vld [vmem:[#allocation2 + $0x40] sm:$0xff]
      %v5357 = vld [vmem:[#allocation2 + $0x48] sm:$0xff]
      %v5358 = vld [vmem:[#allocation2 + $0x50] sm:$0xff]
      %v5359 = vld [vmem:[#allocation2 + $0x58] sm:$0xff]
      %v5360 = vld [vmem:[#allocation2 + $0x60] sm:$0xff]
      %v5361 = vld [vmem:[#allocation2 + $0x68] sm:$0xff]
      %v5362 = vld [vmem:[#allocation2 + $0x70] sm:$0xff]
      %v5363 = vld [vmem:[#allocation2 + $0x78] sm:$0xff]
      %v5364 = vld [vmem:[#allocation2 + $0x80] sm:$0xff]
      %v5365 = vld [vmem:[#allocation2 + $0x88] sm:$0xff]
      %v5366 = vld [vmem:[#allocation2 + $0x90] sm:$0xff]
      %v5367 = vld [vmem:[#allocation2 + $0x98] sm:$0xff]
      %v5368 = vld [vmem:[#allocation2 + $0xa0] sm:$0xff]
      %v5369 = vld [vmem:[#allocation2 + $0xa8] sm:$0xff]
      %v5370 = vld [vmem:[#allocation2 + $0xb0] sm:$0xff]
      %v5371 = vld [vmem:[#allocation2 + $0xb8] sm:$0xff]
      %v5372 = vld [vmem:[#allocation2 + $0xc0] sm:$0xff]
      %v5373 = vld [vmem:[#allocation2 + $0xc8] sm:$0xff]
      %v5374 = vld [vmem:[#allocation2 + $0xd0] sm:$0xff]
      %v5375 = vld [vmem:[#allocation2 + $0xd8] sm:$0xff]
      %v5376 = vld [vmem:[#allocation2 + $0xe0] sm:$0xff]
      %v5377 = vld [vmem:[#allocation2 + $0xe8] sm:$0xff]
      %v5378 = vld [vmem:[#allocation2 + $0xf0] sm:$0xff]
      %v5379 = vld [vmem:[#allocation2 + $0xf8] sm:$0xff]
      %v5380 = vld [vmem:[#allocation2 + $0x100] sm:$0xff]
      %v5381 = vld [vmem:[#allocation2 + $0x108] sm:$0xff]
      %v5382 = vld [vmem:[#allocation2 + $0x110] sm:$0xff]
      %v5383 = vld [vmem:[#allocation2 + $0x118] sm:$0xff]
      %v5384 = vld [vmem:[%s251] sm:$0x1]
      %v5386 = vlaneseq
      %v5387 = vshrl.u32 %v5386, 7
      %v5388 = vsub.s32 0, %v5387
      %v5389 = vrot.slane %v5384, %v5388
      %v5391 = vmul.f32 %v5348, %v5389
      %v5392 = vmul.f32 %v5349, %v5389
      %v5393 = vmul.f32 %v5350, %v5389
      %v5394 = vmul.f32 %v5351, %v5389
      %v5395 = vmul.f32 %v5352, %v5389
      %v5396 = vmul.f32 %v5353, %v5389
      %v5397 = vmul.f32 %v5354, %v5389
      %v5398 = vmul.f32 %v5355, %v5389
      %v5399 = vmul.f32 %v5356, %v5389
      %v5400 = vmul.f32 %v5357, %v5389
      %v5401 = vmul.f32 %v5358, %v5389
      %v5402 = vmul.f32 %v5359, %v5389
      %v5403 = vmul.f32 %v5360, %v5389
      %v5404 = vmul.f32 %v5361, %v5389
      %v5405 = vmul.f32 %v5362, %v5389
      %v5406 = vmul.f32 %v5363, %v5389
      %v5407 = vmul.f32 %v5364, %v5389
      %v5408 = vmul.f32 %v5365, %v5389
      %v5409 = vmul.f32 %v5366, %v5389
      %v5410 = vmul.f32 %v5367, %v5389
      %v5411 = vmul.f32 %v5368, %v5389
      %v5412 = vmul.f32 %v5369, %v5389
      %v5413 = vmul.f32 %v5370, %v5389
      %v5414 = vmul.f32 %v5371, %v5389
      %v5415 = vmul.f32 %v5372, %v5389
      %v5416 = vmul.f32 %v5373, %v5389
      %v5417 = vmul.f32 %v5374, %v5389
      %v5418 = vmul.f32 %v5375, %v5389
      %v5419 = vmul.f32 %v5376, %v5389
      %v5420 = vmul.f32 %v5377, %v5389
      %v5421 = vmul.f32 %v5378, %v5389
      %v5422 = vmul.f32 %v5379, %v5389
      %v5423 = vmul.f32 %v5380, %v5389
      %v5424 = vmul.f32 %v5381, %v5389
      %v5425 = vmul.f32 %v5382, %v5389
      %v5426 = vmul.f32 %v5383, %v5389
      %v5427 = vld [vmem:[%s254] sm:$0x1]
      %v5429 = vlaneseq
      %v5430 = vshrl.u32 %v5429, 7
      %v5431 = vsub.s32 0, %v5430
      %v5432 = vrot.slane %v5427, %v5431
      %v5434 = vadd.f32 %v5391, %v5432
      %v5435 = vadd.f32 %v5392, %v5432
      %v5436 = vadd.f32 %v5393, %v5432
      %v5437 = vadd.f32 %v5394, %v5432
      %v5438 = vadd.f32 %v5395, %v5432
      %v5439 = vadd.f32 %v5396, %v5432
      %v5440 = vadd.f32 %v5397, %v5432
      %v5441 = vadd.f32 %v5398, %v5432
      %v5442 = vadd.f32 %v5399, %v5432
      %v5443 = vadd.f32 %v5400, %v5432
      %v5444 = vadd.f32 %v5401, %v5432
      %v5445 = vadd.f32 %v5402, %v5432
      %v5446 = vadd.f32 %v5403, %v5432
      %v5447 = vadd.f32 %v5404, %v5432
      %v5448 = vadd.f32 %v5405, %v5432
      %v5449 = vadd.f32 %v5406, %v5432
      %v5450 = vadd.f32 %v5407, %v5432
      %v5451 = vadd.f32 %v5408, %v5432
      %v5452 = vadd.f32 %v5409, %v5432
      %v5453 = vadd.f32 %v5410, %v5432
      %v5454 = vadd.f32 %v5411, %v5432
      %v5455 = vadd.f32 %v5412, %v5432
      %v5456 = vadd.f32 %v5413, %v5432
      %v5457 = vadd.f32 %v5414, %v5432
      %v5458 = vadd.f32 %v5415, %v5432
      %v5459 = vadd.f32 %v5416, %v5432
      %v5460 = vadd.f32 %v5417, %v5432
      %v5461 = vadd.f32 %v5418, %v5432
      %v5462 = vadd.f32 %v5419, %v5432
      %v5463 = vadd.f32 %v5420, %v5432
      %v5464 = vadd.f32 %v5421, %v5432
      %v5465 = vadd.f32 %v5422, %v5432
      %v5466 = vadd.f32 %v5423, %v5432
      %v5467 = vadd.f32 %v5424, %v5432
      %v5468 = vadd.f32 %v5425, %v5432
      %v5469 = vadd.f32 %v5426, %v5432
      %v5470 = vmax.f32 %v5434, 0.0
      %v5471 = vmax.f32 %v5435, 0.0
      %v5472 = vmax.f32 %v5436, 0.0
      %v5473 = vmax.f32 %v5437, 0.0
      %v5474 = vmax.f32 %v5438, 0.0
      %v5475 = vmax.f32 %v5439, 0.0
      %v5476 = vmax.f32 %v5440, 0.0
      %v5477 = vmax.f32 %v5441, 0.0
      %v5478 = vmax.f32 %v5442, 0.0
      %v5479 = vmax.f32 %v5443, 0.0
      %v5480 = vmax.f32 %v5444, 0.0
      %v5481 = vmax.f32 %v5445, 0.0
      %v5482 = vmax.f32 %v5446, 0.0
      %v5483 = vmax.f32 %v5447, 0.0
      %v5484 = vmax.f32 %v5448, 0.0
      %v5485 = vmax.f32 %v5449, 0.0
      %v5486 = vmax.f32 %v5450, 0.0
      %v5487 = vmax.f32 %v5451, 0.0
      %v5488 = vmax.f32 %v5452, 0.0
      %v5489 = vmax.f32 %v5453, 0.0
      %v5490 = vmax.f32 %v5454, 0.0
      %v5491 = vmax.f32 %v5455, 0.0
      %v5492 = vmax.f32 %v5456, 0.0
      %v5493 = vmax.f32 %v5457, 0.0
      %v5494 = vmax.f32 %v5458, 0.0
      %v5495 = vmax.f32 %v5459, 0.0
      %v5496 = vmax.f32 %v5460, 0.0
      %v5497 = vmax.f32 %v5461, 0.0
      %v5498 = vmax.f32 %v5462, 0.0
      %v5499 = vmax.f32 %v5463, 0.0
      %v5500 = vmax.f32 %v5464, 0.0
      %v5501 = vmax.f32 %v5465, 0.0
      %v5502 = vmax.f32 %v5466, 0.0
      %v5503 = vmax.f32 %v5467, 0.0
      %v5504 = vmax.f32 %v5468, 0.0
      %v5505 = vmax.f32 %v5469, 0.0
      %v5506 = vpack.c.bf16 %v5471, %v5470
      %v5507 = vpack.c.bf16 %v5473, %v5472
      %v5508 = vpack.c.bf16 %v5475, %v5474
      %v5509 = vpack.c.bf16 %v5477, %v5476
      %v5510 = vpack.c.bf16 %v5479, %v5478
      %v5511 = vpack.c.bf16 %v5481, %v5480
      %v5512 = vpack.c.bf16 %v5483, %v5482
      %v5513 = vpack.c.bf16 %v5485, %v5484
      %v5514 = vpack.c.bf16 %v5487, %v5486
      %v5515 = vpack.c.bf16 %v5489, %v5488
      %v5516 = vpack.c.bf16 %v5491, %v5490
      %v5517 = vpack.c.bf16 %v5493, %v5492
      %v5518 = vpack.c.bf16 %v5495, %v5494
      %v5519 = vpack.c.bf16 %v5497, %v5496
      %v5520 = vpack.c.bf16 %v5499, %v5498
      %v5521 = vpack.c.bf16 %v5501, %v5500
      %v5522 = vpack.c.bf16 %v5503, %v5502
      %v5523 = vpack.c.bf16 %v5505, %v5504
      %v5542 = vunpack.c.l.b16 %v5506
      %v5543 = vunpack.c.h.b16 %v5506
      %v5544 = vunpack.c.l.b16 %v5507
      %v5545 = vunpack.c.h.b16 %v5507
      %v5546 = vunpack.c.l.b16 %v5508
      %v5547 = vunpack.c.h.b16 %v5508
      %v5548 = vunpack.c.l.b16 %v5509
      %v5549 = vunpack.c.h.b16 %v5509
      %v5550 = vunpack.c.l.b16 %v5510
      %v5551 = vunpack.c.h.b16 %v5510
      %v5552 = vunpack.c.l.b16 %v5511
      %v5553 = vunpack.c.h.b16 %v5511
      %v5554 = vunpack.c.l.b16 %v5512
      %v5555 = vunpack.c.h.b16 %v5512
      %v5556 = vunpack.c.l.b16 %v5513
      %v5557 = vunpack.c.h.b16 %v5513
      %v5558 = vunpack.c.l.b16 %v5514
      %v5559 = vunpack.c.h.b16 %v5514
      %v5560 = vunpack.c.l.b16 %v5515
      %v5561 = vunpack.c.h.b16 %v5515
      %v5562 = vunpack.c.l.b16 %v5516
      %v5563 = vunpack.c.h.b16 %v5516
      %v5564 = vunpack.c.l.b16 %v5517
      %v5565 = vunpack.c.h.b16 %v5517
      %v5566 = vunpack.c.l.b16 %v5518
      %v5567 = vunpack.c.h.b16 %v5518
      %v5568 = vunpack.c.l.b16 %v5519
      %v5569 = vunpack.c.h.b16 %v5519
      %v5570 = vunpack.c.l.b16 %v5520
      %v5571 = vunpack.c.h.b16 %v5520
      %v5572 = vunpack.c.l.b16 %v5521
      %v5573 = vunpack.c.h.b16 %v5521
      %v5574 = vunpack.c.l.b16 %v5522
      %v5575 = vunpack.c.h.b16 %v5522
      %v5576 = vunpack.c.l.b16 %v5523
      %v5577 = vunpack.c.h.b16 %v5523
      %v5578 = vpack.c.b16 %v5542, %v5542
      %v5579 = vpack.c.b16 %v5543, %v5543
      %v5580 = vpack.c.b16 %v5544, %v5544
      %v5581 = vpack.c.b16 %v5545, %v5545
      %v5582 = vpack.c.b16 %v5546, %v5546
      %v5583 = vpack.c.b16 %v5547, %v5547
      %v5584 = vpack.c.b16 %v5548, %v5548
      %v5585 = vpack.c.b16 %v5549, %v5549
      %v5586 = vpack.c.b16 %v5550, %v5550
      %v5587 = vpack.c.b16 %v5551, %v5551
      %v5588 = vpack.c.b16 %v5552, %v5552
      %v5589 = vpack.c.b16 %v5553, %v5553
      %v5590 = vpack.c.b16 %v5554, %v5554
      %v5591 = vpack.c.b16 %v5555, %v5555
      %v5592 = vpack.c.b16 %v5556, %v5556
      %v5593 = vpack.c.b16 %v5557, %v5557
      %v5594 = vpack.c.b16 %v5558, %v5558
      %v5595 = vpack.c.b16 %v5559, %v5559
      %v5596 = vpack.c.b16 %v5560, %v5560
      %v5597 = vpack.c.b16 %v5561, %v5561
      %v5598 = vpack.c.b16 %v5562, %v5562
      %v5599 = vpack.c.b16 %v5563, %v5563
      %v5600 = vpack.c.b16 %v5564, %v5564
      %v5601 = vpack.c.b16 %v5565, %v5565
      %v5602 = vpack.c.b16 %v5566, %v5566
      %v5603 = vpack.c.b16 %v5567, %v5567
      %v5604 = vpack.c.b16 %v5568, %v5568
      %v5605 = vpack.c.b16 %v5569, %v5569
      %v5606 = vpack.c.b16 %v5570, %v5570
      %v5607 = vpack.c.b16 %v5571, %v5571
      %v5608 = vpack.c.b16 %v5572, %v5572
      %v5609 = vpack.c.b16 %v5573, %v5573
      %v5610 = vpack.c.b16 %v5574, %v5574
      %v5611 = vpack.c.b16 %v5575, %v5575
      %v5612 = vpack.c.b16 %v5576, %v5576
      %v5613 = vpack.c.b16 %v5577, %v5577
      %5650 = vst [vmem:[%s262] sm:$0xf] %v5578
      %5651 = vst [vmem:[%s262 + $0x4] sm:$0xf] %v5579
      %5652 = vst [vmem:[%s262 + $0x8] sm:$0xf] %v5580
      %5653 = vst [vmem:[%s262 + $0xc] sm:$0xf] %v5581
      %5654 = vst [vmem:[%s262 + $0x10] sm:$0xf] %v5582
      %5655 = vst [vmem:[%s262 + $0x14] sm:$0xf] %v5583
      %5656 = vst [vmem:[%s262 + $0x18] sm:$0xf] %v5584
      %5657 = vst [vmem:[%s262 + $0x1c] sm:$0xf] %v5585
      %5658 = vst [vmem:[%s262 + $0x20] sm:$0xf] %v5586
      %5659 = vst [vmem:[%s262 + $0x24] sm:$0xf] %v5587
      %5660 = vst [vmem:[%s262 + $0x28] sm:$0xf] %v5588
      %5661 = vst [vmem:[%s262 + $0x2c] sm:$0xf] %v5589
      %5662 = vst [vmem:[%s262 + $0x30] sm:$0xf] %v5590
      %5663 = vst [vmem:[%s262 + $0x34] sm:$0xf] %v5591
      %5664 = vst [vmem:[%s262 + $0x38] sm:$0xf] %v5592
      %5665 = vst [vmem:[%s262 + $0x3c] sm:$0xf] %v5593
      %5666 = vst [vmem:[%s262 + $0x40] sm:$0xf] %v5594
      %5667 = vst [vmem:[%s262 + $0x44] sm:$0xf] %v5595
      %5668 = vst [vmem:[%s262 + $0x48] sm:$0xf] %v5596
      %5669 = vst [vmem:[%s262 + $0x4c] sm:$0xf] %v5597
      %5670 = vst [vmem:[%s262 + $0x50] sm:$0xf] %v5598
      %5671 = vst [vmem:[%s262 + $0x54] sm:$0xf] %v5599
      %5672 = vst [vmem:[%s262 + $0x58] sm:$0xf] %v5600
      %5673 = vst [vmem:[%s262 + $0x5c] sm:$0xf] %v5601
      %5674 = vst [vmem:[%s262 + $0x60] sm:$0xf] %v5602
      %5675 = vst [vmem:[%s262 + $0x64] sm:$0xf] %v5603
      %5676 = vst [vmem:[%s262 + $0x68] sm:$0xf] %v5604
      %5677 = vst [vmem:[%s262 + $0x6c] sm:$0xf] %v5605
      %5678 = vst [vmem:[%s262 + $0x70] sm:$0xf] %v5606
      %5679 = vst [vmem:[%s262 + $0x74] sm:$0xf] %v5607
      %5680 = vst [vmem:[%s262 + $0x78] sm:$0xf] %v5608
      %5681 = vst [vmem:[%s262 + $0x7c] sm:$0xf] %v5609
      %5682 = vst [vmem:[%s262 + $0x80] sm:$0xf] %v5610
      %5683 = vst [vmem:[%s262 + $0x84] sm:$0xf] %v5611
      %5684 = vst [vmem:[%s262 + $0x88] sm:$0xf] %v5612
      %5685 = vst [vmem:[%s262 + $0x8c] sm:$0xf] %v5613
      %p5686 = scmp.lt.s32.totalorder %s19, 1
      %s5687 = scalar_select %p5686, %s19, 1
      %p5688 = scmp.lt.s32.totalorder %s20, 0
      %s5689 = scalar_select %p5688, %s20, 0
      %s5690 = smul.addr %s5687, 36
      %s5691 = sadd.s32 %s5689, %s5690
      %s5692 = smul.addr %s5691, 4
      %s5693 = scalar_lea.vmem %s4, %s5692
      // Predicated region
      $region37: #{residual_block_forward.2} parent=35 // pred_check
        %p5694 = pneg %p151
      $region38: #{residual_block_forward.2} parent=35 // pred_check_branch
        %5696 = sbr.rel (%p5694) target = $region40
      $region39: #{residual_block_forward.2} parent=35 // pred_region
        _
      $region40: #{residual_block_forward.2} parent=35 // pred_fallthru
        _
    $region36: #{residual_block_forward.2} parent=5 // pred_fallthru
      _
    %p5697 = scmp.le.s32.totalorder 2, %s10
    // Predicated region
    $region41: #{residual_block_forward.2} parent=5 // pred_check
      %p5698 = pneg %p5697
    $region42: #{residual_block_forward.2} parent=5 // pred_check_branch
      %5700 = sbr.rel (%p5698) target = $region44
    $region43: #{residual_block_forward.2} parent=5 // pred_region
      %s5701 = ssub.s32 %s10, 2
      // Predicated region
      $region45: #{residual_block_forward.2} parent=43 // pred_check
        %p5702 = pneg %p157
      $region46: #{residual_block_forward.2} parent=43 // pred_check_branch
        %5704 = sbr.rel (%p5702) target = $region48
      $region47: #{residual_block_forward.2} parent=43 // pred_region
        %p5705 = scmp.lt.s32.totalorder %s21, 1
        %s5706 = scalar_select %p5705, %s21, 1
        %p5707 = scmp.lt.s32.totalorder %s22, 0
        %s5708 = scalar_select %p5707, %s22, 0
        %s5709 = smul.addr %s5706, 36
        %s5710 = sadd.s32 %s5708, %s5709
        %s5711 = smul.addr %s5710, 4
        %s5712 = scalar_lea.vmem %s4, %s5711
      $region48: #{residual_block_forward.2} parent=43 // pred_fallthru
        _
    $region44: #{residual_block_forward.2} parent=5 // pred_fallthru
      _
  $region6: #{residual_block_forward.2} parent=0 // loop_footer
    %s14 = sadd.s32 1, %s10
  $region7: #{residual_block_forward.2} parent=0 // loop_footer_branch
    %9 = sbr.rel target = $region3
  $region8: #{residual_block_forward.2} parent=0 // loop_exit
    _

// kernel: residual_block_forward.3
$region0: #{residual_block_forward.3}
  #allocation0 [shape = 'u32[]', space=smem, size = 0x4, offset = 0x4, fixed_abs, tag = 'smem constant byte address 0x4 - core index']
  #allocation1 [shape = 'u32[144,128]{1,0:T(1,128)}', space=vmem, size = 0x12000, scoped, tag = 'internal scratch']
  #allocation2 [shape = 'f32[288,128]{1,0:T(8,128)}', space=vmem, size = 0x24000, scoped, tag = 'scratch operand']
  %s0 = inlined_call_operand.vmem [shape: bf16[2,1,336,128], index: 0, kind: input, shape index: {}]
  %s1 = inlined_call_operand.vmem [shape: bf16[9,128,128], index: 1, kind: input, shape index: {}]
  %s2 = inlined_call_operand.vmem [shape: f32[1,128], index: 2, kind: input, shape index: {}]
  %s3 = inlined_call_operand.vmem [shape: f32[1,128], index: 3, kind: input, shape index: {}]
  %s4 = inlined_call_operand.vmem [shape: f32[2,288,128], index: 4, kind: input, shape index: {}]
  %s5 = inlined_call_operand.vmem [shape: f32[2,288,128], index: 5, kind: output, shape index: {}]
  %s6 = sld [smem:[#allocation0]]
  $region53: #{residual_block_forward.3} parent=0
    _
  %s8 = ssub.s32 1, %s6
  %s9 = scalar_select 0, %s8, %s6
  loop: start=0, step=1, limit=4
  $region2: #{residual_block_forward.3} parent=0 // loop_pre_header
    _
  $region3: #{residual_block_forward.3} parent=0 // loop_header
    %s11 = sphi 0, %s15
    %p12 = scmp.ge.s32.totalorder %s11, 4
    %s18 = sphi 0, %s30
    %s19 = sphi 0, %s26
    %s20 = sphi 0, %s18
    %s21 = sphi 0, %s19
    %s22 = sphi 0, %s20
    %s23 = sphi 0, %s21
    %s33 = sphi 0, %s35
    %s36 = sphi 0, %s33
    %s37 = sphi 0, %s36
    %s53 = sphi 0, %s37
    %s59 = sphi 0, %s61
    %s62 = sphi 0, %s59
    %s63 = sphi 0, %s62
    %s79 = sphi 0, %s63
    %s85 = sphi 0, %s87
    %s88 = sphi 0, %s85
    %s89 = sphi 0, %s88
    %s105 = sphi 0, %s89
    %s111 = sphi 0, %s113
    %s114 = sphi 0, %s111
    %s115 = sphi 0, %s114
    %s131 = sphi 0, %s115
    %s139 = sphi 0, %s141
    %s142 = sphi 0, %s139
    %s143 = sphi 0, %s142
    %s159 = sphi 0, %s143
    %s167 = sphi 0, %s169
    %s170 = sphi 0, %s167
    %s171 = sphi 0, %s170
    %s187 = sphi 0, %s171
  $region4: #{residual_block_forward.3} parent=0 // loop_header_branch
    %14 = sbr.rel (%p12) target = $region8
  $region5: #{residual_block_forward.3} parent=0 // loop_body
    %s16 = ssub.s32 %s11, 1
    %s17 = ssub.s32 %s11, 2
    %s24 = sadd.s32 1, %s19
    %p25 = scmp.ge.s32.totalorder %s24, 1
    %s26 = scalar_select %p25, 0, %s24
    %s27 = sadd.s32 1, %s18
    %s28 = scalar_select %p25, %s27, %s18
    %p29 = scmp.ge.s32.totalorder %s28, 2
    %s30 = scalar_select %p29, 0, %s28
    %s31 = ssub.s32 %s18, %s30
    %p32 = scmp.eq.s32.totalorder %s31, 0
    %s34 = sadd.s32 %s33, 1
    %s35 = scalar_select %p32, %s33, %s34
    %p38 = pneg %p32
    %p39 = scmp.eq.s32.totalorder %s11, 1
    %p40 = por %p38, %p39
    %p41 = scmp.ne.s32.totalorder %s33, %s36
    %p42 = scmp.eq.s32.totalorder %s11, 0
    %p43 = por %p41, %p42
    %p44 = scmp.ne.s32.totalorder %s33, %s36
    %p45 = scmp.eq.s32.totalorder %s16, 1
    %p46 = por %p44, %p45
    %p47 = scmp.ne.s32.totalorder %s36, %s37
    %p48 = scmp.eq.s32.totalorder %s16, 0
    %p49 = por %p47, %p48
    %p50 = scmp.ne.s32.totalorder %s36, %s37
    %p51 = scmp.eq.s32.totalorder %s17, 1
    %p52 = por %p50, %p51
    %p54 = scmp.ne.s32.totalorder %s37, %s53
    %p55 = scmp.eq.s32.totalorder %s17, 0
    %p56 = por %p54, %p55
    %s57 = ssub.s32 %s19, %s26
    %p58 = scmp.eq.s32.totalorder %s57, 0
    %s60 = sadd.s32 %s59, 1
    %s61 = scalar_select %p58, %s59, %s60
    %p64 = pneg %p58
    %p65 = scmp.eq.s32.totalorder %s11, 1
    %p66 = por %p64, %p65
    %p67 = scmp.ne.s32.totalorder %s59, %s62
    %p68 = scmp.eq.s32.totalorder %s11, 0
    %p69 = por %p67, %p68
    %p70 = scmp.ne.s32.totalorder %s59, %s62
    %p71 = scmp.eq.s32.totalorder %s16, 1
    %p72 = por %p70, %p71
    %p73 = scmp.ne.s32.totalorder %s62, %s63
    %p74 = scmp.eq.s32.totalorder %s16, 0
    %p75 = por %p73, %p74
    %p76 = scmp.ne.s32.totalorder %s62, %s63
    %p77 = scmp.eq.s32.totalorder %s17, 1
    %p78 = por %p76, %p77
    %p80 = scmp.ne.s32.totalorder %s63, %s79
    %p81 = scmp.eq.s32.totalorder %s17, 0
    %p82 = por %p80, %p81
    %s83 = ssub.s32 %s19, %s26
    %p84 = scmp.eq.s32.totalorder %s83, 0
    %s86 = sadd.s32 %s85, 1
    %s87 = scalar_select %p84, %s85, %s86
    %p90 = pneg %p84
    %p91 = scmp.eq.s32.totalorder %s11, 1
    %p92 = por %p90, %p91
    %p93 = scmp.ne.s32.totalorder %s85, %s88
    %p94 = scmp.eq.s32.totalorder %s11, 0
    %p95 = por %p93, %p94
    %p96 = scmp.ne.s32.totalorder %s85, %s88
    %p97 = scmp.eq.s32.totalorder %s16, 1
    %p98 = por %p96, %p97
    %p99 = scmp.ne.s32.totalorder %s88, %s89
    %p100 = scmp.eq.s32.totalorder %s16, 0
    %p101 = por %p99, %p100
    %p102 = scmp.ne.s32.totalorder %s88, %s89
    %p103 = scmp.eq.s32.totalorder %s17, 1
    %p104 = por %p102, %p103
    %p106 = scmp.ne.s32.totalorder %s89, %s105
    %p107 = scmp.eq.s32.totalorder %s17, 0
    %p108 = por %p106, %p107
    %s109 = ssub.s32 %s19, %s26
    %p110 = scmp.eq.s32.totalorder %s109, 0
    %s112 = sadd.s32 %s111, 1
    %s113 = scalar_select %p110, %s111, %s112
    %p116 = pneg %p110
    %p117 = scmp.eq.s32.totalorder %s11, 1
    %p118 = por %p116, %p117
    %p119 = scmp.ne.s32.totalorder %s111, %s114
    %p120 = scmp.eq.s32.totalorder %s11, 0
    %p121 = por %p119, %p120
    %p122 = scmp.ne.s32.totalorder %s111, %s114
    %p123 = scmp.eq.s32.totalorder %s16, 1
    %p124 = por %p122, %p123
    %p125 = scmp.ne.s32.totalorder %s114, %s115
    %p126 = scmp.eq.s32.totalorder %s16, 0
    %p127 = por %p125, %p126
    %p128 = scmp.ne.s32.totalorder %s114, %s115
    %p129 = scmp.eq.s32.totalorder %s17, 1
    %p130 = por %p128, %p129
    %p132 = scmp.ne.s32.totalorder %s115, %s131
    %p133 = scmp.eq.s32.totalorder %s17, 0
    %p134 = por %p132, %p133
    %s135 = ssub.s32 %s18, %s30
    %s136 = ssub.s32 %s19, %s26
    %s137 = sor.u32 %s135, %s136
    %p138 = scmp.eq.s32.totalorder %s137, 0
    %s140 = sadd.s32 %s139, 1
    %s141 = scalar_select %p138, %s139, %s140
    %p144 = pneg %p138
    %p145 = scmp.eq.s32.totalorder %s11, 1
    %p146 = por %p144, %p145
    %p147 = scmp.ne.s32.totalorder %s139, %s142
    %p148 = scmp.eq.s32.totalorder %s11, 0
    %p149 = por %p147, %p148
    %p150 = scmp.ne.s32.totalorder %s139, %s142
    %p151 = scmp.eq.s32.totalorder %s16, 1
    %p152 = por %p150, %p151
    %p153 = scmp.ne.s32.totalorder %s142, %s143
    %p154 = scmp.eq.s32.totalorder %s16, 0
    %p155 = por %p153, %p154
    %p156 = scmp.ne.s32.totalorder %s142, %s143
    %p157 = scmp.eq.s32.totalorder %s17, 1
    %p158 = por %p156, %p157
    %p160 = scmp.ne.s32.totalorder %s143, %s159
    %p161 = scmp.eq.s32.totalorder %s17, 0
    %p162 = por %p160, %p161
    %s163 = ssub.s32 %s18, %s30
    %s164 = ssub.s32 %s19, %s26
    %s165 = sor.u32 %s163, %s164
    %p166 = scmp.eq.s32.totalorder %s165, 0
    %s168 = sadd.s32 %s167, 1
    %s169 = scalar_select %p166, %s167, %s168
    %p172 = pneg %p166
    %p173 = scmp.eq.s32.totalorder %s11, 1
    %p174 = por %p172, %p173
    %p175 = scmp.ne.s32.totalorder %s167, %s170
    %p176 = scmp.eq.s32.totalorder %s11, 0
    %p177 = por %p175, %p176
    %p178 = scmp.ne.s32.totalorder %s167, %s170
    %p179 = scmp.eq.s32.totalorder %s16, 1
    %p180 = por %p178, %p179
    %p181 = scmp.ne.s32.totalorder %s170, %s171
    %p182 = scmp.eq.s32.totalorder %s16, 0
    %p183 = por %p181, %p182
    %p184 = scmp.ne.s32.totalorder %s170, %s171
    %p185 = scmp.eq.s32.totalorder %s17, 1
    %p186 = por %p184, %p185
    %p188 = scmp.ne.s32.totalorder %s171, %s187
    %p189 = scmp.eq.s32.totalorder %s17, 0
    %p190 = por %p188, %p189
    %p191 = scmp.le.s32.totalorder 1, %s11
    %p192 = scmp.lt.s32.totalorder %s11, 3
    %p193 = pnand %p191, %p192
    %p194 = pneg %p193
    // Predicated region
    $region9: #{residual_block_forward.3} parent=5 // pred_check
      _
    $region10: #{residual_block_forward.3} parent=5 // pred_check_branch
      %196 = sbr.rel (%p193) target = $region12
    $region11: #{residual_block_forward.3} parent=5 // pred_region
      %s197 = ssub.s32 %s11, 1
      // Predicated region
      $region13: #{residual_block_forward.3} parent=11 // pred_check
        %p198 = pneg %p75
      $region14: #{residual_block_forward.3} parent=11 // pred_check_branch
        %200 = sbr.rel (%p198) target = $region16
      $region15: #{residual_block_forward.3} parent=11 // pred_region
        %p201 = scmp.lt.s32.totalorder %s21, 0
        %s202 = scalar_select %p201, %s21, 0
        %s203 = smul.addr %s202, 4
        %s204 = scalar_lea.vmem %s1, %s203
      $region16: #{residual_block_forward.3} parent=11 // pred_fallthru
        _
      // Predicated region
      $region17: #{residual_block_forward.3} parent=11 // pred_check
        %p205 = pneg %p101
      $region18: #{residual_block_forward.3} parent=11 // pred_check_branch
        %207 = sbr.rel (%p205) target = $region20
      $region19: #{residual_block_forward.3} parent=11 // pred_region
        %p208 = scmp.lt.s32.totalorder %s21, 0
        %s209 = scalar_select %p208, %s21, 0
        %s210 = scalar_lea.vmem %s2, %s209
      $region20: #{residual_block_forward.3} parent=11 // pred_fallthru
        _
      // Predicated region
      $region21: #{residual_block_forward.3} parent=11 // pred_check
        %p211 = pneg %p127
      $region22: #{residual_block_forward.3} parent=11 // pred_check_branch
        %213 = sbr.rel (%p211) target = $region24
      $region23: #{residual_block_forward.3} parent=11 // pred_region
        %p214 = scmp.lt.s32.totalorder %s21, 0
        %s215 = scalar_select %p214, %s21, 0
        %s216 = scalar_lea.vmem %s3, %s215
      $region24: #{residual_block_forward.3} parent=11 // pred_fallthru
        _
    $region12: #{residual_block_forward.3} parent=5 // pred_fallthru
      _
    %p217 = scmp.lt.s32.totalorder %s11, 2
    // Predicated region
    $region25: #{residual_block_forward.3} parent=5 // pred_check
      %p218 = pneg %p217
    $region26: #{residual_block_forward.3} parent=5 // pred_check_branch
      %220 = sbr.rel (%p218) target = $region28
    $region27: #{residual_block_forward.3} parent=5 // pred_region
      // Predicated region
      $region29: #{residual_block_forward.3} parent=27 // pred_check
        %p221 = pneg %p43
      $region30: #{residual_block_forward.3} parent=27 // pred_check_branch
        %223 = sbr.rel (%p221) target = $region32
      $region31: #{residual_block_forward.3} parent=27 // pred_region
        %p224 = scmp.lt.s32.totalorder %s18, 1
        %s225 = scalar_select %p224, %s18, 1
        %s226 = smul.addr %s225, 42
        %s227 = smul.addr %s226, 4
        %s228 = scalar_lea.vmem %s0, %s227
      $region32: #{residual_block_forward.3} parent=27 // pred_fallthru
        _
      // Predicated region
      $region33: #{residual_block_forward.3} parent=27 // pred_check
        %p229 = pneg %p149
      $region34: #{residual_block_forward.3} parent=27 // pred_check_branch
        %231 = sbr.rel (%p229) target = $region36
      $region35: #{residual_block_forward.3} parent=27 // pred_region
        %p232 = scmp.lt.s32.totalorder %s18, 1
        %s233 = scalar_select %p232, %s18, 1
        %p234 = scmp.lt.s32.totalorder %s19, 0
        %s235 = scalar_select %p234, %s19, 0
        %s236 = smul.addr %s233, 36
        %s237 = sadd.s32 %s235, %s236
        %s238 = smul.addr %s237, 8
        %s239 = scalar_lea.vmem %s4, %s238
      $region36: #{residual_block_forward.3} parent=27 // pred_fallthru
        _
    $region28: #{residual_block_forward.3} parent=5 // pred_fallthru
      _
    %p240 = scmp.le.s32.totalorder 1, %s11
    %p241 = scmp.lt.s32.totalorder %s11, 3
    %p242 = pnand %p240, %p241
    %p243 = pneg %p242
    // Predicated region
    $region37: #{residual_block_forward.3} parent=5 // pred_check
      _
    $region38: #{residual_block_forward.3} parent=5 // pred_check_branch
      %245 = sbr.rel (%p242) target = $region40
    $region39: #{residual_block_forward.3} parent=5 // pred_region
      %s246 = ssub.s32 %s11, 1
      %p247 = scmp.lt.s32.totalorder %s20, 1
      %s248 = scalar_select %p247, %s20, 1
      %s249 = smul.addr %s248, 42
      %s250 = smul.addr %s249, 4
      %s251 = scalar_lea.vmem %s0, %s250
      %p252 = pneg %p49
      %p253 = pneg %p46
      %p254 = scmp.lt.s32.totalorder %s21, 0
      %s255 = scalar_select %p254, %s21, 0
      %s256 = smul.addr %s255, 4
      %s257 = scalar_lea.vmem %s1, %s256
      %p258 = pneg %p75
      %p259 = pneg %p72
      %p260 = scmp.lt.s32.totalorder %s21, 0
      %s261 = scalar_select %p260, %s21, 0
      %s262 = scalar_lea.vmem %s2, %s261
      %p263 = pneg %p101
      %p264 = pneg %p98
      %p265 = scmp.lt.s32.totalorder %s21, 0
      %s266 = scalar_select %p265, %s21, 0
      %s267 = scalar_lea.vmem %s3, %s266
      %p268 = pneg %p127
      %p269 = pneg %p124
      %p270 = scmp.lt.s32.totalorder %s20, 1
      %s271 = scalar_select %p270, %s20, 1
      %p272 = scmp.lt.s32.totalorder %s21, 0
      %s273 = scalar_select %p272, %s21, 0
      %s274 = smul.addr %s271, 36
      %s275 = sadd.s32 %s273, %s274
      %s276 = smul.addr %s275, 8
      %s277 = scalar_lea.vmem %s4, %s276
      %p278 = pneg %p155
      %p279 = pneg %p152
      %p280 = pneg %p183
      %p281 = pneg %p180
      %p282 = scmp.lt.s32.totalorder %s20, 1
      %s283 = scalar_select %p282, %s20, 1
      %p284 = scmp.lt.s32.totalorder %s21, 0
      %s285 = scalar_select %p284, %s21, 0
      %s286 = smul.addr %s283, 36
      %s287 = sadd.s32 %s285, %s286
      %s288 = smul.addr %s287, 8
      %s289 = scalar_lea.vmem %s5, %s288
      %p290 = scmp.lt.s32.totalorder %s20, 1
      %s291 = scalar_select %p290, %s20, 1
      %s292 = smul.addr %s291, 42
      %s293 = smul.addr %s292, 4
      %s294 = scalar_lea.vmem %s0, %s293
      %p295 = scmp.lt.s32.totalorder %s21, 0
      %s296 = scalar_select %p295, %s21, 0
      %s297 = smul.addr %s296, 4
      %s298 = scalar_lea.vmem %s1, %s297
      %p299 = scmp.lt.s32.totalorder %s21, 0
      %s300 = scalar_select %p299, %s21, 0
      %s301 = scalar_lea.vmem %s2, %s300
      %p302 = scmp.lt.s32.totalorder %s21, 0
      %s303 = scalar_select %p302, %s21, 0
      %s304 = scalar_lea.vmem %s3, %s303
      %p305 = scmp.lt.s32.totalorder %s20, 1
      %s306 = scalar_select %p305, %s20, 1
      %p307 = scmp.lt.s32.totalorder %s21, 0
      %s308 = scalar_select %p307, %s21, 0
      %s309 = smul.addr %s306, 36
      %s310 = sadd.s32 %s308, %s309
      %s311 = smul.addr %s310, 8
      %s312 = scalar_lea.vmem %s4, %s311
      %p313 = scmp.lt.s32.totalorder %s20, 1
      %s314 = scalar_select %p313, %s20, 1
      %p315 = scmp.lt.s32.totalorder %s21, 0
      %s316 = scalar_select %p315, %s21, 0
      %s317 = smul.addr %s314, 36
      %s318 = sadd.s32 %s316, %s317
      %s319 = smul.addr %s318, 8
      %s320 = scalar_lea.vmem %s5, %s319
      %v322 = vld [vmem:[%s294] sm:$0xf]
      %v323 = vld [vmem:[%s294 + $0x4] sm:$0xf]
      %v324 = vld [vmem:[%s294 + $0x8] sm:$0xf]
      %v325 = vld [vmem:[%s294 + $0xc] sm:$0xf]
      %v326 = vld [vmem:[%s294 + $0x10] sm:$0xf]
      %v327 = vld [vmem:[%s294 + $0x14] sm:$0xf]
      %v328 = vld [vmem:[%s294 + $0x18] sm:$0xf]
      %v329 = vld [vmem:[%s294 + $0x1c] sm:$0xf]
      %v330 = vld [vmem:[%s294 + $0x20] sm:$0xf]
      %v331 = vld [vmem:[%s294 + $0x24] sm:$0xf]
      %v332 = vld [vmem:[%s294 + $0x28] sm:$0xf]
      %v333 = vld [vmem:[%s294 + $0x2c] sm:$0xf]
      %v334 = vld [vmem:[%s294 + $0x30] sm:$0xf]
      %v335 = vld [vmem:[%s294 + $0x34] sm:$0xf]
      %v336 = vld [vmem:[%s294 + $0x38] sm:$0xf]
      %v337 = vld [vmem:[%s294 + $0x3c] sm:$0xf]
      %v338 = vld [vmem:[%s294 + $0x40] sm:$0xf]
      %v339 = vld [vmem:[%s294 + $0x44] sm:$0xf]
      %v340 = vld [vmem:[%s294 + $0x48] sm:$0xf]
      %v341 = vld [vmem:[%s294 + $0x4c] sm:$0xf]
      %v342 = vld [vmem:[%s294 + $0x50] sm:$0xf]
      %v343 = vld [vmem:[%s294 + $0x54] sm:$0xf]
      %v344 = vld [vmem:[%s294 + $0x58] sm:$0xf]
      %v345 = vld [vmem:[%s294 + $0x5c] sm:$0xf]
      %v346 = vld [vmem:[%s294 + $0x60] sm:$0xf]
      %v347 = vld [vmem:[%s294 + $0x64] sm:$0xf]
      %v348 = vld [vmem:[%s294 + $0x68] sm:$0xf]
      %v349 = vld [vmem:[%s294 + $0x6c] sm:$0xf]
      %v350 = vld [vmem:[%s294 + $0x70] sm:$0xf]
      %v351 = vld [vmem:[%s294 + $0x74] sm:$0xf]
      %v352 = vld [vmem:[%s294 + $0x78] sm:$0xf]
      %v353 = vld [vmem:[%s294 + $0x7c] sm:$0xf]
      %v354 = vld [vmem:[%s294 + $0x80] sm:$0xf]
      %v355 = vld [vmem:[%s294 + $0x84] sm:$0xf]
      %v356 = vld [vmem:[%s294 + $0x88] sm:$0xf]
      %v357 = vld [vmem:[%s294 + $0x8c] sm:$0xf]
      %v358 = vld [vmem:[%s298] sm:$0xf]
      %v359 = vld [vmem:[%s298 + $0x4] sm:$0xf]
      %v360 = vld [vmem:[%s298 + $0x8] sm:$0xf]
      %v361 = vld [vmem:[%s298 + $0xc] sm:$0xf]
      %v362 = vld [vmem:[%s298 + $0x10] sm:$0xf]
      %v363 = vld [vmem:[%s298 + $0x14] sm:$0xf]
      %v364 = vld [vmem:[%s298 + $0x18] sm:$0xf]
      %v365 = vld [vmem:[%s298 + $0x1c] sm:$0xf]
      %v366 = vld [vmem:[%s298 + $0x20] sm:$0xf]
      %v367 = vld [vmem:[%s298 + $0x24] sm:$0xf]
      %v368 = vld [vmem:[%s298 + $0x28] sm:$0xf]
      %v369 = vld [vmem:[%s298 + $0x2c] sm:$0xf]
      %v370 = vld [vmem:[%s298 + $0x30] sm:$0xf]
      %v371 = vld [vmem:[%s298 + $0x34] sm:$0xf]
      %v372 = vld [vmem:[%s298 + $0x38] sm:$0xf]
      %v373 = vld [vmem:[%s298 + $0x3c] sm:$0xf]
      %v410 = vunpack.c.l.b16 %v322
      %v411 = vunpack.c.l.b16 %v323
      %v412 = vunpack.c.l.b16 %v324
      %v413 = vunpack.c.l.b16 %v325
      %v414 = vunpack.c.l.b16 %v326
      %v415 = vunpack.c.l.b16 %v327
      %v416 = vunpack.c.l.b16 %v328
      %v417 = vunpack.c.l.b16 %v329
      %v418 = vunpack.c.l.b16 %v330
      %v419 = vunpack.c.l.b16 %v331
      %v420 = vunpack.c.l.b16 %v332
      %v421 = vunpack.c.l.b16 %v333
      %v422 = vunpack.c.l.b16 %v334
      %v423 = vunpack.c.l.b16 %v335
      %v424 = vunpack.c.l.b16 %v336
      %v425 = vunpack.c.l.b16 %v337
      %v426 = vunpack.c.l.b16 %v338
      %v427 = vunpack.c.l.b16 %v339
      %v428 = vunpack.c.l.b16 %v340
      %v429 = vunpack.c.l.b16 %v341
      %v430 = vunpack.c.l.b16 %v342
      %v431 = vunpack.c.l.b16 %v343
      %v432 = vunpack.c.l.b16 %v344
      %v433 = vunpack.c.l.b16 %v345
      %v434 = vunpack.c.l.b16 %v346
      %v435 = vunpack.c.l.b16 %v347
      %v436 = vunpack.c.l.b16 %v348
      %v437 = vunpack.c.l.b16 %v349
      %v438 = vunpack.c.l.b16 %v350
      %v439 = vunpack.c.l.b16 %v351
      %v440 = vunpack.c.l.b16 %v352
      %v441 = vunpack.c.l.b16 %v353
      %v442 = vunpack.c.l.b16 %v354
      %v443 = vunpack.c.l.b16 %v355
      %v444 = vunpack.c.l.b16 %v356
      %v445 = vunpack.c.l.b16 %v357
      %v446 = vpack.c.b16 %v411, %v410
      %v447 = vpack.c.b16 %v413, %v412
      %v448 = vpack.c.b16 %v415, %v414
      %v449 = vpack.c.b16 %v417, %v416
      %v450 = vpack.c.b16 %v419, %v418
      %v451 = vpack.c.b16 %v421, %v420
      %v452 = vpack.c.b16 %v423, %v422
      %v453 = vpack.c.b16 %v425, %v424
      %v454 = vpack.c.b16 %v427, %v426
      %v455 = vpack.c.b16 %v429, %v428
      %v456 = vpack.c.b16 %v431, %v430
      %v457 = vpack.c.b16 %v433, %v432
      %v458 = vpack.c.b16 %v435, %v434
      %v459 = vpack.c.b16 %v437, %v436
      %v460 = vpack.c.b16 %v439, %v438
      %v461 = vpack.c.b16 %v441, %v440
      %v462 = vpack.c.b16 %v443, %v442
      %v463 = vpack.c.b16 %v445, %v444
      %v498 = vunpack.c.l.b16 %v358
      %v499 = vunpack.c.l.b16 %v359
      %v500 = vunpack.c.l.b16 %v360
      %v501 = vunpack.c.l.b16 %v361
      %v502 = vunpack.c.l.b16 %v362
      %v503 = vunpack.c.l.b16 %v363
      %v504 = vunpack.c.l.b16 %v364
      %v505 = vunpack.c.l.b16 %v365
      %v506 = vunpack.c.l.b16 %v366
      %v507 = vunpack.c.l.b16 %v367
      %v508 = vunpack.c.l.b16 %v368
      %v509 = vunpack.c.l.b16 %v369
      %v510 = vunpack.c.l.b16 %v370
      %v511 = vunpack.c.l.b16 %v371
      %v512 = vunpack.c.l.b16 %v372
      %v513 = vunpack.c.l.b16 %v373
      %v514 = vpack.c.b16 %v499, %v498
      %v515 = vpack.c.b16 %v501, %v500
      %v516 = vpack.c.b16 %v503, %v502
      %v517 = vpack.c.b16 %v505, %v504
      %v518 = vpack.c.b16 %v507, %v506
      %v519 = vpack.c.b16 %v509, %v508
      %v520 = vpack.c.b16 %v511, %v510
      %v521 = vpack.c.b16 %v513, %v512
      %530 = vmatprep.subr.bf16.mxu0 0
      %531 = vmatpush1.bf16.msra.mxu0 %v521
      %532 = vmatprep.subr.bf16.mxu0 0
      %533 = vmatpush1.bf16.msra.mxu0 %v520
      %534 = vmatprep.subr.bf16.mxu0 0
      %535 = vmatpush1.bf16.msra.mxu0 %v519
      %536 = vmatprep.subr.bf16.mxu0 0
      %537 = vmatpush1.bf16.msra.mxu0 %v518
      %538 = vmatprep.subr.bf16.mxu0 0
      %539 = vmatpush1.bf16.msra.mxu0 %v517
      %540 = vmatprep.subr.bf16.mxu0 0
      %541 = vmatpush1.bf16.msra.mxu0 %v516
      %542 = vmatprep.subr.bf16.mxu0 0
      %543 = vmatpush1.bf16.msra.mxu0 %v515
      %544 = vmatprep.subr.bf16.mxu0 0
      %545 = vmatpush1.bf16.msra.mxu0 %v514
      %546 = vmatprep.subr.bf16.mxu0 0
      %547 = vmatpush2.bf16.msra.mxu0 0
      %548 = vmatprep.subr.bf16.mxu0 0
      %549 = vmatpush2.bf16.msra.mxu0 0
      %550 = vmatprep.subr.bf16.mxu0 0
      %551 = vmatpush2.bf16.msra.mxu0 0
      %552 = vmatprep.subr.bf16.mxu0 0
      %553 = vmatpush2.bf16.msra.mxu0 0
      %554 = vmatprep.subr.bf16.mxu0 0
      %555 = vmatpush2.bf16.msra.mxu0 0
      %556 = vmatprep.subr.bf16.mxu0 0
      %557 = vmatpush2.bf16.msra.mxu0 0
      %558 = vmatprep.subr.bf16.mxu0 0
      %559 = vmatpush2.bf16.msra.mxu0 0
      %560 = vmatprep.subr.bf16.mxu0 0
      %561 = vmatpush2.bf16.msra.mxu0 0
      %562 = vmatprep.mubr.bf16.mxu0 0
      %563 = vmatmul.mubr.bf16.gmra.mxu0 %v446
      %v564 = vpop.f32.mrf.mxu0
      %v565 = vadd.f32 0.0, %v564
      %v566 = vpop.f32.mrf.mxu0
      %v567 = vpop.f32.mrf.mxu0
      %v568 = vadd.f32 0.0, %v567
      %v569 = vpop.f32.mrf.mxu0
      %570 = vmatprep.mubr.bf16.mxu0 0
      %571 = vmatmul.mubr.bf16.gmra.mxu0 %v447
      %v572 = vpop.f32.mrf.mxu0
      %v573 = vadd.f32 0.0, %v572
      %v574 = vpop.f32.mrf.mxu0
      %v575 = vpop.f32.mrf.mxu0
      %v576 = vadd.f32 0.0, %v575
      %v577 = vpop.f32.mrf.mxu0
      %578 = vmatprep.mubr.bf16.mxu0 0
      %579 = vmatmul.mubr.bf16.gmra.mxu0 %v448
      %v580 = vpop.f32.mrf.mxu0
      %v581 = vadd.f32 0.0, %v580
      %v582 = vpop.f32.mrf.mxu0
      %v583 = vpop.f32.mrf.mxu0
      %v584 = vadd.f32 0.0, %v583
      %v585 = vpop.f32.mrf.mxu0
      %586 = vmatprep.mubr.bf16.mxu0 0
      %587 = vmatmul.mubr.bf16.gmra.mxu0 %v449
      %v588 = vpop.f32.mrf.mxu0
      %v589 = vadd.f32 0.0, %v588
      %v590 = vpop.f32.mrf.mxu0
      %v591 = vpop.f32.mrf.mxu0
      %v592 = vadd.f32 0.0, %v591
      %v593 = vpop.f32.mrf.mxu0
      %594 = vmatprep.mubr.bf16.mxu0 0
      %595 = vmatmul.mubr.bf16.gmra.mxu0 %v450
      %v596 = vpop.f32.mrf.mxu0
      %v597 = vadd.f32 0.0, %v596
      %v598 = vpop.f32.mrf.mxu0
      %v599 = vpop.f32.mrf.mxu0
      %v600 = vadd.f32 0.0, %v599
      %v601 = vpop.f32.mrf.mxu0
      %602 = vmatprep.mubr.bf16.mxu0 0
      %603 = vmatmul.mubr.bf16.gmra.mxu0 %v451
      %v604 = vpop.f32.mrf.mxu0
      %v605 = vadd.f32 0.0, %v604
      %v606 = vpop.f32.mrf.mxu0
      %v607 = vpop.f32.mrf.mxu0
      %v608 = vadd.f32 0.0, %v607
      %v609 = vpop.f32.mrf.mxu0
      %610 = vmatprep.mubr.bf16.mxu0 0
      %611 = vmatmul.mubr.bf16.gmra.mxu0 %v452
      %v612 = vpop.f32.mrf.mxu0
      %v613 = vadd.f32 0.0, %v612
      %v614 = vpop.f32.mrf.mxu0
      %v615 = vpop.f32.mrf.mxu0
      %v616 = vadd.f32 0.0, %v615
      %v617 = vpop.f32.mrf.mxu0
      %618 = vmatprep.mubr.bf16.mxu0 0
      %619 = vmatmul.mubr.bf16.gmra.mxu0 %v453
      %v620 = vpop.f32.mrf.mxu0
      %v621 = vadd.f32 0.0, %v620
      %v622 = vpop.f32.mrf.mxu0
      %v623 = vpop.f32.mrf.mxu0
      %v624 = vadd.f32 0.0, %v623
      %v625 = vpop.f32.mrf.mxu0
      %626 = vmatprep.mubr.bf16.mxu0 0
      %627 = vmatmul.mubr.bf16.gmra.mxu0 %v454
      %v628 = vpop.f32.mrf.mxu0
      %v629 = vadd.f32 0.0, %v628
      %v630 = vpop.f32.mrf.mxu0
      %v631 = vpop.f32.mrf.mxu0
      %v632 = vadd.f32 0.0, %v631
      %v633 = vpop.f32.mrf.mxu0
      %634 = vmatprep.mubr.bf16.mxu0 0
      %635 = vmatmul.mubr.bf16.gmra.mxu0 %v455
      %v636 = vpop.f32.mrf.mxu0
      %v637 = vadd.f32 0.0, %v636
      %v638 = vpop.f32.mrf.mxu0
      %v639 = vpop.f32.mrf.mxu0
      %v640 = vadd.f32 0.0, %v639
      %v641 = vpop.f32.mrf.mxu0
      %642 = vmatprep.mubr.bf16.mxu0 0
      %643 = vmatmul.mubr.bf16.gmra.mxu0 %v456
      %v644 = vpop.f32.mrf.mxu0
      %v645 = vadd.f32 0.0, %v644
      %v646 = vpop.f32.mrf.mxu0
      %v647 = vpop.f32.mrf.mxu0
      %v648 = vadd.f32 0.0, %v647
      %v649 = vpop.f32.mrf.mxu0
      %650 = vmatprep.mubr.bf16.mxu0 0
      %651 = vmatmul.mubr.bf16.gmra.mxu0 %v457
      %v652 = vpop.f32.mrf.mxu0
      %v653 = vadd.f32 0.0, %v652
      %v654 = vpop.f32.mrf.mxu0
      %v655 = vpop.f32.mrf.mxu0
      %v656 = vadd.f32 0.0, %v655
      %v657 = vpop.f32.mrf.mxu0
      %658 = vmatprep.mubr.bf16.mxu0 0
      %659 = vmatmul.mubr.bf16.gmra.mxu0 %v458
      %v660 = vpop.f32.mrf.mxu0
      %v661 = vadd.f32 0.0, %v660
      %v662 = vpop.f32.mrf.mxu0
      %v663 = vpop.f32.mrf.mxu0
      %v664 = vadd.f32 0.0, %v663
      %v665 = vpop.f32.mrf.mxu0
      %666 = vmatprep.mubr.bf16.mxu0 0
      %667 = vmatmul.mubr.bf16.gmra.mxu0 %v459
      %v668 = vpop.f32.mrf.mxu0
      %v669 = vadd.f32 0.0, %v668
      %v670 = vpop.f32.mrf.mxu0
      %v671 = vpop.f32.mrf.mxu0
      %v672 = vadd.f32 0.0, %v671
      %v673 = vpop.f32.mrf.mxu0
      %674 = vmatprep.mubr.bf16.mxu0 0
      %675 = vmatmul.mubr.bf16.gmra.mxu0 %v460
      %v676 = vpop.f32.mrf.mxu0
      %v677 = vadd.f32 0.0, %v676
      %v678 = vpop.f32.mrf.mxu0
      %v679 = vpop.f32.mrf.mxu0
      %v680 = vadd.f32 0.0, %v679
      %v681 = vpop.f32.mrf.mxu0
      %682 = vmatprep.mubr.bf16.mxu0 0
      %683 = vmatmul.mubr.bf16.gmra.mxu0 %v461
      %v684 = vpop.f32.mrf.mxu0
      %v685 = vadd.f32 0.0, %v684
      %v686 = vpop.f32.mrf.mxu0
      %v687 = vpop.f32.mrf.mxu0
      %v688 = vadd.f32 0.0, %v687
      %v689 = vpop.f32.mrf.mxu0
      %690 = vmatprep.mubr.bf16.mxu0 0
      %691 = vmatmul.mubr.bf16.gmra.mxu0 %v462
      %v692 = vpop.f32.mrf.mxu0
      %v693 = vadd.f32 0.0, %v692
      %v694 = vpop.f32.mrf.mxu0
      %v695 = vpop.f32.mrf.mxu0
      %v696 = vadd.f32 0.0, %v695
      %v697 = vpop.f32.mrf.mxu0
      %698 = vmatprep.mubr.bf16.mxu0 0
      %699 = vmatmul.mubr.bf16.gmra.mxu0 %v463
      %v700 = vpop.f32.mrf.mxu0
      %v701 = vadd.f32 0.0, %v700
      %v702 = vpop.f32.mrf.mxu0
      %v703 = vpop.f32.mrf.mxu0
      %v704 = vadd.f32 0.0, %v703
      %v705 = vpop.f32.mrf.mxu0
      %706 = vdwg.mxu0
      %707 = vst [vmem:[#allocation2] sm:$0xff] %v565
      %708 = vst [vmem:[#allocation2 + $0x8] sm:$0xff] %v568
      %709 = vst [vmem:[#allocation2 + $0x10] sm:$0xff] %v573
      %710 = vst [vmem:[#allocation2 + $0x18] sm:$0xff] %v576
      %711 = vst [vmem:[#allocation2 + $0x20] sm:$0xff] %v581
      %712 = vst [vmem:[#allocation2 + $0x28] sm:$0xff] %v584
      %713 = vst [vmem:[#allocation2 + $0x30] sm:$0xff] %v589
      %714 = vst [vmem:[#allocation2 + $0x38] sm:$0xff] %v592
      %715 = vst [vmem:[#allocation2 + $0x40] sm:$0xff] %v597
      %716 = vst [vmem:[#allocation2 + $0x48] sm:$0xff] %v600
      %717 = vst [vmem:[#allocation2 + $0x50] sm:$0xff] %v605
      %718 = vst [vmem:[#allocation2 + $0x58] sm:$0xff] %v608
      %719 = vst [vmem:[#allocation2 + $0x60] sm:$0xff] %v613
      %720 = vst [vmem:[#allocation2 + $0x68] sm:$0xff] %v616
      %721 = vst [vmem:[#allocation2 + $0x70] sm:$0xff] %v621
      %722 = vst [vmem:[#allocation2 + $0x78] sm:$0xff] %v624
      %723 = vst [vmem:[#allocation2 + $0x80] sm:$0xff] %v629
      %724 = vst [vmem:[#allocation2 + $0x88] sm:$0xff] %v632
      %725 = vst [vmem:[#allocation2 + $0x90] sm:$0xff] %v637
      %726 = vst [vmem:[#allocation2 + $0x98] sm:$0xff] %v640
      %727 = vst [vmem:[#allocation2 + $0xa0] sm:$0xff] %v645
      %728 = vst [vmem:[#allocation2 + $0xa8] sm:$0xff] %v648
      %729 = vst [vmem:[#allocation2 + $0xb0] sm:$0xff] %v653
      %730 = vst [vmem:[#allocation2 + $0xb8] sm:$0xff] %v656
      %731 = vst [vmem:[#allocation2 + $0xc0] sm:$0xff] %v661
      %732 = vst [vmem:[#allocation2 + $0xc8] sm:$0xff] %v664
      %733 = vst [vmem:[#allocation2 + $0xd0] sm:$0xff] %v669
      %734 = vst [vmem:[#allocation2 + $0xd8] sm:$0xff] %v672
      %735 = vst [vmem:[#allocation2 + $0xe0] sm:$0xff] %v677
      %736 = vst [vmem:[#allocation2 + $0xe8] sm:$0xff] %v680
      %737 = vst [vmem:[#allocation2 + $0xf0] sm:$0xff] %v685
      %738 = vst [vmem:[#allocation2 + $0xf8] sm:$0xff] %v688
      %739 = vst [vmem:[#allocation2 + $0x100] sm:$0xff] %v693
      %740 = vst [vmem:[#allocation2 + $0x108] sm:$0xff] %v696
      %741 = vst [vmem:[#allocation2 + $0x110] sm:$0xff] %v701
      %742 = vst [vmem:[#allocation2 + $0x118] sm:$0xff] %v704
      %v743 = vld [vmem:[%s294] sm:$0xf]
      %v744 = vld [vmem:[%s294 + $0x4] sm:$0xf]
      %v745 = vld [vmem:[%s294 + $0x8] sm:$0xf]
      %v746 = vld [vmem:[%s294 + $0xc] sm:$0xf]
      %v747 = vld [vmem:[%s294 + $0x10] sm:$0xf]
      %v748 = vld [vmem:[%s294 + $0x14] sm:$0xf]
      %v749 = vld [vmem:[%s294 + $0x18] sm:$0xf]
      %v750 = vld [vmem:[%s294 + $0x1c] sm:$0xf]
      %v751 = vld [vmem:[%s294 + $0x20] sm:$0xf]
      %v752 = vld [vmem:[%s294 + $0x24] sm:$0xf]
      %v753 = vld [vmem:[%s294 + $0x28] sm:$0xf]
      %v754 = vld [vmem:[%s294 + $0x2c] sm:$0xf]
      %v755 = vld [vmem:[%s294 + $0x30] sm:$0xf]
      %v756 = vld [vmem:[%s294 + $0x34] sm:$0xf]
      %v757 = vld [vmem:[%s294 + $0x38] sm:$0xf]
      %v758 = vld [vmem:[%s294 + $0x3c] sm:$0xf]
      %v759 = vld [vmem:[%s294 + $0x40] sm:$0xf]
      %v760 = vld [vmem:[%s294 + $0x44] sm:$0xf]
      %v761 = vld [vmem:[%s294 + $0x48] sm:$0xf]
      %v762 = vld [vmem:[%s294 + $0x4c] sm:$0xf]
      %v763 = vld [vmem:[%s294 + $0x50] sm:$0xf]
      %v764 = vld [vmem:[%s294 + $0x54] sm:$0xf]
      %v765 = vld [vmem:[%s294 + $0x58] sm:$0xf]
      %v766 = vld [vmem:[%s294 + $0x5c] sm:$0xf]
      %v767 = vld [vmem:[%s294 + $0x60] sm:$0xf]
      %v768 = vld [vmem:[%s294 + $0x64] sm:$0xf]
      %v769 = vld [vmem:[%s294 + $0x68] sm:$0xf]
      %v770 = vld [vmem:[%s294 + $0x6c] sm:$0xf]
      %v771 = vld [vmem:[%s294 + $0x70] sm:$0xf]
      %v772 = vld [vmem:[%s294 + $0x74] sm:$0xf]
      %v773 = vld [vmem:[%s294 + $0x78] sm:$0xf]
      %v774 = vld [vmem:[%s294 + $0x7c] sm:$0xf]
      %v775 = vld [vmem:[%s294 + $0x80] sm:$0xf]
      %v776 = vld [vmem:[%s294 + $0x84] sm:$0xf]
      %v777 = vld [vmem:[%s294 + $0x88] sm:$0xf]
      %v778 = vld [vmem:[%s294 + $0x8c] sm:$0xf]
      %v779 = vld [vmem:[%s294 + $0x90] sm:$0x1]
      %s780 = scalar_lea.vmem %s298, 64
      %v781 = vld [vmem:[%s780] sm:$0xf]
      %v782 = vld [vmem:[%s780 + $0x4] sm:$0xf]
      %v783 = vld [vmem:[%s780 + $0x8] sm:$0xf]
      %v784 = vld [vmem:[%s780 + $0xc] sm:$0xf]
      %v785 = vld [vmem:[%s780 + $0x10] sm:$0xf]
      %v786 = vld [vmem:[%s780 + $0x14] sm:$0xf]
      %v787 = vld [vmem:[%s780 + $0x18] sm:$0xf]
      %v788 = vld [vmem:[%s780 + $0x1c] sm:$0xf]
      %v789 = vld [vmem:[%s780 + $0x20] sm:$0xf]
      %v790 = vld [vmem:[%s780 + $0x24] sm:$0xf]
      %v791 = vld [vmem:[%s780 + $0x28] sm:$0xf]
      %v792 = vld [vmem:[%s780 + $0x2c] sm:$0xf]
      %v793 = vld [vmem:[%s780 + $0x30] sm:$0xf]
      %v794 = vld [vmem:[%s780 + $0x34] sm:$0xf]
      %v795 = vld [vmem:[%s780 + $0x38] sm:$0xf]
      %v796 = vld [vmem:[%s780 + $0x3c] sm:$0xf]
      %v834 = vunpack.c.l.b16 %v743
      %v835 = vunpack.c.l.b16 %v744
      %v836 = vunpack.c.l.b16 %v745
      %v837 = vunpack.c.l.b16 %v746
      %v838 = vunpack.c.l.b16 %v747
      %v839 = vunpack.c.l.b16 %v748
      %v840 = vunpack.c.l.b16 %v749
      %v841 = vunpack.c.l.b16 %v750
      %v842 = vunpack.c.l.b16 %v751
      %v843 = vunpack.c.l.b16 %v752
      %v844 = vunpack.c.l.b16 %v753
      %v845 = vunpack.c.l.b16 %v754
      %v846 = vunpack.c.l.b16 %v755
      %v847 = vunpack.c.l.b16 %v756
      %v848 = vunpack.c.l.b16 %v757
      %v849 = vunpack.c.l.b16 %v758
      %v850 = vunpack.c.l.b16 %v759
      %v851 = vunpack.c.l.b16 %v760
      %v852 = vunpack.c.l.b16 %v761
      %v853 = vunpack.c.l.b16 %v762
      %v854 = vunpack.c.l.b16 %v763
      %v855 = vunpack.c.l.b16 %v764
      %v856 = vunpack.c.l.b16 %v765
      %v857 = vunpack.c.l.b16 %v766
      %v858 = vunpack.c.l.b16 %v767
      %v859 = vunpack.c.l.b16 %v768
      %v860 = vunpack.c.l.b16 %v769
      %v861 = vunpack.c.l.b16 %v770
      %v862 = vunpack.c.l.b16 %v771
      %v863 = vunpack.c.l.b16 %v772
      %v864 = vunpack.c.l.b16 %v773
      %v865 = vunpack.c.l.b16 %v774
      %v866 = vunpack.c.l.b16 %v775
      %v867 = vunpack.c.l.b16 %v776
      %v868 = vunpack.c.l.b16 %v777
      %v869 = vunpack.c.l.b16 %v778
      %v870 = vunpack.c.l.b16 %v779
      %v871 = vpack.c.b16 %v835, %v834
      %v872 = vpack.c.b16 %v837, %v836
      %v873 = vpack.c.b16 %v839, %v838
      %v874 = vpack.c.b16 %v841, %v840
      %v875 = vpack.c.b16 %v843, %v842
      %v876 = vpack.c.b16 %v845, %v844
      %v877 = vpack.c.b16 %v847, %v846
      %v878 = vpack.c.b16 %v849, %v848
      %v879 = vpack.c.b16 %v851, %v850
      %v880 = vpack.c.b16 %v853, %v852
      %v881 = vpack.c.b16 %v855, %v854
      %v882 = vpack.c.b16 %v857, %v856
      %v883 = vpack.c.b16 %v859, %v858
      %v884 = vpack.c.b16 %v861, %v860
      %v885 = vpack.c.b16 %v863, %v862
      %v886 = vpack.c.b16 %v865, %v864
      %v887 = vpack.c.b16 %v867, %v866
      %v888 = vpack.c.b16 %v869, %v868
      %v889 = vpack.c.b16 %v870, %v870
      %vm890 = vsmask.f32 7424
      %v892 = vshrl.u32 %v871, 16
      %v894 = vshll.u32 %v871, 16
      %v896 = vrot.slane %v894, 1
      %v897 = vor.u32 %v892, %v896
      %v899 = vshll.u32 %v872, 16
      %v901 = vrot.slane %v899, 1
      %v902 = vsel %vm890, %v897, %v901
      %v903 = vshrl.u32 %v872, 16
      %v905 = vor.u32 %v903, %v901
      %v907 = vshll.u32 %v873, 16
      %v909 = vrot.slane %v907, 1
      %v910 = vsel %vm890, %v905, %v909
      %v911 = vshrl.u32 %v873, 16
      %v913 = vor.u32 %v911, %v909
      %v915 = vshll.u32 %v874, 16
      %v917 = vrot.slane %v915, 1
      %v918 = vsel %vm890, %v913, %v917
      %v919 = vshrl.u32 %v874, 16
      %v921 = vor.u32 %v919, %v917
      %v923 = vshll.u32 %v875, 16
      %v925 = vrot.slane %v923, 1
      %v926 = vsel %vm890, %v921, %v925
      %v927 = vshrl.u32 %v875, 16
      %v929 = vor.u32 %v927, %v925
      %v931 = vshll.u32 %v876, 16
      %v933 = vrot.slane %v931, 1
      %v934 = vsel %vm890, %v929, %v933
      %v935 = vshrl.u32 %v876, 16
      %v937 = vor.u32 %v935, %v933
      %v939 = vshll.u32 %v877, 16
      %v941 = vrot.slane %v939, 1
      %v942 = vsel %vm890, %v937, %v941
      %v943 = vshrl.u32 %v877, 16
      %v945 = vor.u32 %v943, %v941
      %v947 = vshll.u32 %v878, 16
      %v949 = vrot.slane %v947, 1
      %v950 = vsel %vm890, %v945, %v949
      %v951 = vshrl.u32 %v878, 16
      %v953 = vor.u32 %v951, %v949
      %v955 = vshll.u32 %v879, 16
      %v957 = vrot.slane %v955, 1
      %v958 = vsel %vm890, %v953, %v957
      %v959 = vshrl.u32 %v879, 16
      %v961 = vor.u32 %v959, %v957
      %v963 = vshll.u32 %v880, 16
      %v965 = vrot.slane %v963, 1
      %v966 = vsel %vm890, %v961, %v965
      %v967 = vshrl.u32 %v880, 16
      %v969 = vor.u32 %v967, %v965
      %v971 = vshll.u32 %v881, 16
      %v973 = vrot.slane %v971, 1
      %v974 = vsel %vm890, %v969, %v973
      %v975 = vshrl.u32 %v881, 16
      %v977 = vor.u32 %v975, %v973
      %v979 = vshll.u32 %v882, 16
      %v981 = vrot.slane %v979, 1
      %v982 = vsel %vm890, %v977, %v981
      %v983 = vshrl.u32 %v882, 16
      %v985 = vor.u32 %v983, %v981
      %v987 = vshll.u32 %v883, 16
      %v989 = vrot.slane %v987, 1
      %v990 = vsel %vm890, %v985, %v989
      %v991 = vshrl.u32 %v883, 16
      %v993 = vor.u32 %v991, %v989
      %v995 = vshll.u32 %v884, 16
      %v997 = vrot.slane %v995, 1
      %v998 = vsel %vm890, %v993, %v997
      %v999 = vshrl.u32 %v884, 16
      %v1001 = vor.u32 %v999, %v997
      %v1003 = vshll.u32 %v885, 16
      %v1005 = vrot.slane %v1003, 1
      %v1006 = vsel %vm890, %v1001, %v1005
      %v1007 = vshrl.u32 %v885, 16
      %v1009 = vor.u32 %v1007, %v1005
      %v1011 = vshll.u32 %v886, 16
      %v1013 = vrot.slane %v1011, 1
      %v1014 = vsel %vm890, %v1009, %v1013
      %v1015 = vshrl.u32 %v886, 16
      %v1017 = vor.u32 %v1015, %v1013
      %v1019 = vshll.u32 %v887, 16
      %v1021 = vrot.slane %v1019, 1
      %v1022 = vsel %vm890, %v1017, %v1021
      %v1023 = vshrl.u32 %v887, 16
      %v1025 = vor.u32 %v1023, %v1021
      %v1027 = vshll.u32 %v888, 16
      %v1029 = vrot.slane %v1027, 1
      %v1030 = vsel %vm890, %v1025, %v1029
      %v1031 = vshrl.u32 %v888, 16
      %v1033 = vor.u32 %v1031, %v1029
      %v1035 = vshll.u32 %v889, 16
      %v1037 = vrot.slane %v1035, 1
      %v1038 = vsel %vm890, %v1033, %v1037
      %v1073 = vunpack.c.l.b16 %v781
      %v1074 = vunpack.c.l.b16 %v782
      %v1075 = vunpack.c.l.b16 %v783
      %v1076 = vunpack.c.l.b16 %v784
      %v1077 = vunpack.c.l.b16 %v785
      %v1078 = vunpack.c.l.b16 %v786
      %v1079 = vunpack.c.l.b16 %v787
      %v1080 = vunpack.c.l.b16 %v788
      %v1081 = vunpack.c.l.b16 %v789
      %v1082 = vunpack.c.l.b16 %v790
      %v1083 = vunpack.c.l.b16 %v791
      %v1084 = vunpack.c.l.b16 %v792
      %v1085 = vunpack.c.l.b16 %v793
      %v1086 = vunpack.c.l.b16 %v794
      %v1087 = vunpack.c.l.b16 %v795
      %v1088 = vunpack.c.l.b16 %v796
      %v1089 = vpack.c.b16 %v1074, %v1073
      %v1090 = vpack.c.b16 %v1076, %v1075
      %v1091 = vpack.c.b16 %v1078, %v1077
      %v1092 = vpack.c.b16 %v1080, %v1079
      %v1093 = vpack.c.b16 %v1082, %v1081
      %v1094 = vpack.c.b16 %v1084, %v1083
      %v1095 = vpack.c.b16 %v1086, %v1085
      %v1096 = vpack.c.b16 %v1088, %v1087
      %1105 = vmatprep.subr.bf16.mxu0 0
      %1106 = vmatpush1.bf16.msra.mxu0 %v1096
      %1107 = vmatprep.subr.bf16.mxu0 0
      %1108 = vmatpush1.bf16.msra.mxu0 %v1095
      %1109 = vmatprep.subr.bf16.mxu0 0
      %1110 = vmatpush1.bf16.msra.mxu0 %v1094
      %1111 = vmatprep.subr.bf16.mxu0 0
      %1112 = vmatpush1.bf16.msra.mxu0 %v1093
      %1113 = vmatprep.subr.bf16.mxu0 0
      %1114 = vmatpush1.bf16.msra.mxu0 %v1092
      %1115 = vmatprep.subr.bf16.mxu0 0
      %1116 = vmatpush1.bf16.msra.mxu0 %v1091
      %1117 = vmatprep.subr.bf16.mxu0 0
      %1118 = vmatpush1.bf16.msra.mxu0 %v1090
      %1119 = vmatprep.subr.bf16.mxu0 0
      %1120 = vmatpush1.bf16.msra.mxu0 %v1089
      %1121 = vmatprep.subr.bf16.mxu0 0
      %1122 = vmatpush2.bf16.msra.mxu0 0
      %1123 = vmatprep.subr.bf16.mxu0 0
      %1124 = vmatpush2.bf16.msra.mxu0 0
      %1125 = vmatprep.subr.bf16.mxu0 0
      %1126 = vmatpush2.bf16.msra.mxu0 0
      %1127 = vmatprep.subr.bf16.mxu0 0
      %1128 = vmatpush2.bf16.msra.mxu0 0
      %1129 = vmatprep.subr.bf16.mxu0 0
      %1130 = vmatpush2.bf16.msra.mxu0 0
      %1131 = vmatprep.subr.bf16.mxu0 0
      %1132 = vmatpush2.bf16.msra.mxu0 0
      %1133 = vmatprep.subr.bf16.mxu0 0
      %1134 = vmatpush2.bf16.msra.mxu0 0
      %1135 = vmatprep.subr.bf16.mxu0 0
      %1136 = vmatpush2.bf16.msra.mxu0 0
      %1137 = vmatprep.mubr.bf16.mxu0 0
      %1138 = vmatmul.mubr.bf16.gmra.mxu0 %v902
      %v1139 = vpop.f32.mrf.mxu0
      %v1140 = vadd.f32 0.0, %v1139
      %v1141 = vpop.f32.mrf.mxu0
      %v1142 = vpop.f32.mrf.mxu0
      %v1143 = vadd.f32 0.0, %v1142
      %v1144 = vpop.f32.mrf.mxu0
      %1145 = vmatprep.mubr.bf16.mxu0 0
      %1146 = vmatmul.mubr.bf16.gmra.mxu0 %v910
      %v1147 = vpop.f32.mrf.mxu0
      %v1148 = vadd.f32 0.0, %v1147
      %v1149 = vpop.f32.mrf.mxu0
      %v1150 = vpop.f32.mrf.mxu0
      %v1151 = vadd.f32 0.0, %v1150
      %v1152 = vpop.f32.mrf.mxu0
      %1153 = vmatprep.mubr.bf16.mxu0 0
      %1154 = vmatmul.mubr.bf16.gmra.mxu0 %v918
      %v1155 = vpop.f32.mrf.mxu0
      %v1156 = vadd.f32 0.0, %v1155
      %v1157 = vpop.f32.mrf.mxu0
      %v1158 = vpop.f32.mrf.mxu0
      %v1159 = vadd.f32 0.0, %v1158
      %v1160 = vpop.f32.mrf.mxu0
      %1161 = vmatprep.mubr.bf16.mxu0 0
      %1162 = vmatmul.mubr.bf16.gmra.mxu0 %v926
      %v1163 = vpop.f32.mrf.mxu0
      %v1164 = vadd.f32 0.0, %v1163
      %v1165 = vpop.f32.mrf.mxu0
      %v1166 = vpop.f32.mrf.mxu0
      %v1167 = vadd.f32 0.0, %v1166
      %v1168 = vpop.f32.mrf.mxu0
      %1169 = vmatprep.mubr.bf16.mxu0 0
      %1170 = vmatmul.mubr.bf16.gmra.mxu0 %v934
      %v1171 = vpop.f32.mrf.mxu0
      %v1172 = vadd.f32 0.0, %v1171
      %v1173 = vpop.f32.mrf.mxu0
      %v1174 = vpop.f32.mrf.mxu0
      %v1175 = vadd.f32 0.0, %v1174
      %v1176 = vpop.f32.mrf.mxu0
      %1177 = vmatprep.mubr.bf16.mxu0 0
      %1178 = vmatmul.mubr.bf16.gmra.mxu0 %v942
      %v1179 = vpop.f32.mrf.mxu0
      %v1180 = vadd.f32 0.0, %v1179
      %v1181 = vpop.f32.mrf.mxu0
      %v1182 = vpop.f32.mrf.mxu0
      %v1183 = vadd.f32 0.0, %v1182
      %v1184 = vpop.f32.mrf.mxu0
      %1185 = vmatprep.mubr.bf16.mxu0 0
      %1186 = vmatmul.mubr.bf16.gmra.mxu0 %v950
      %v1187 = vpop.f32.mrf.mxu0
      %v1188 = vadd.f32 0.0, %v1187
      %v1189 = vpop.f32.mrf.mxu0
      %v1190 = vpop.f32.mrf.mxu0
      %v1191 = vadd.f32 0.0, %v1190
      %v1192 = vpop.f32.mrf.mxu0
      %1193 = vmatprep.mubr.bf16.mxu0 0
      %1194 = vmatmul.mubr.bf16.gmra.mxu0 %v958
      %v1195 = vpop.f32.mrf.mxu0
      %v1196 = vadd.f32 0.0, %v1195
      %v1197 = vpop.f32.mrf.mxu0
      %v1198 = vpop.f32.mrf.mxu0
      %v1199 = vadd.f32 0.0, %v1198
      %v1200 = vpop.f32.mrf.mxu0
      %1201 = vmatprep.mubr.bf16.mxu0 0
      %1202 = vmatmul.mubr.bf16.gmra.mxu0 %v966
      %v1203 = vpop.f32.mrf.mxu0
      %v1204 = vadd.f32 0.0, %v1203
      %v1205 = vpop.f32.mrf.mxu0
      %v1206 = vpop.f32.mrf.mxu0
      %v1207 = vadd.f32 0.0, %v1206
      %v1208 = vpop.f32.mrf.mxu0
      %1209 = vmatprep.mubr.bf16.mxu0 0
      %1210 = vmatmul.mubr.bf16.gmra.mxu0 %v974
      %v1211 = vpop.f32.mrf.mxu0
      %v1212 = vadd.f32 0.0, %v1211
      %v1213 = vpop.f32.mrf.mxu0
      %v1214 = vpop.f32.mrf.mxu0
      %v1215 = vadd.f32 0.0, %v1214
      %v1216 = vpop.f32.mrf.mxu0
      %1217 = vmatprep.mubr.bf16.mxu0 0
      %1218 = vmatmul.mubr.bf16.gmra.mxu0 %v982
      %v1219 = vpop.f32.mrf.mxu0
      %v1220 = vadd.f32 0.0, %v1219
      %v1221 = vpop.f32.mrf.mxu0
      %v1222 = vpop.f32.mrf.mxu0
      %v1223 = vadd.f32 0.0, %v1222
      %v1224 = vpop.f32.mrf.mxu0
      %1225 = vmatprep.mubr.bf16.mxu0 0
      %1226 = vmatmul.mubr.bf16.gmra.mxu0 %v990
      %v1227 = vpop.f32.mrf.mxu0
      %v1228 = vadd.f32 0.0, %v1227
      %v1229 = vpop.f32.mrf.mxu0
      %v1230 = vpop.f32.mrf.mxu0
      %v1231 = vadd.f32 0.0, %v1230
      %v1232 = vpop.f32.mrf.mxu0
      %1233 = vmatprep.mubr.bf16.mxu0 0
      %1234 = vmatmul.mubr.bf16.gmra.mxu0 %v998
      %v1235 = vpop.f32.mrf.mxu0
      %v1236 = vadd.f32 0.0, %v1235
      %v1237 = vpop.f32.mrf.mxu0
      %v1238 = vpop.f32.mrf.mxu0
      %v1239 = vadd.f32 0.0, %v1238
      %v1240 = vpop.f32.mrf.mxu0
      %1241 = vmatprep.mubr.bf16.mxu0 0
      %1242 = vmatmul.mubr.bf16.gmra.mxu0 %v1006
      %v1243 = vpop.f32.mrf.mxu0
      %v1244 = vadd.f32 0.0, %v1243
      %v1245 = vpop.f32.mrf.mxu0
      %v1246 = vpop.f32.mrf.mxu0
      %v1247 = vadd.f32 0.0, %v1246
      %v1248 = vpop.f32.mrf.mxu0
      %1249 = vmatprep.mubr.bf16.mxu0 0
      %1250 = vmatmul.mubr.bf16.gmra.mxu0 %v1014
      %v1251 = vpop.f32.mrf.mxu0
      %v1252 = vadd.f32 0.0, %v1251
      %v1253 = vpop.f32.mrf.mxu0
      %v1254 = vpop.f32.mrf.mxu0
      %v1255 = vadd.f32 0.0, %v1254
      %v1256 = vpop.f32.mrf.mxu0
      %1257 = vmatprep.mubr.bf16.mxu0 0
      %1258 = vmatmul.mubr.bf16.gmra.mxu0 %v1022
      %v1259 = vpop.f32.mrf.mxu0
      %v1260 = vadd.f32 0.0, %v1259
      %v1261 = vpop.f32.mrf.mxu0
      %v1262 = vpop.f32.mrf.mxu0
      %v1263 = vadd.f32 0.0, %v1262
      %v1264 = vpop.f32.mrf.mxu0
      %1265 = vmatprep.mubr.bf16.mxu0 0
      %1266 = vmatmul.mubr.bf16.gmra.mxu0 %v1030
      %v1267 = vpop.f32.mrf.mxu0
      %v1268 = vadd.f32 0.0, %v1267
      %v1269 = vpop.f32.mrf.mxu0
      %v1270 = vpop.f32.mrf.mxu0
      %v1271 = vadd.f32 0.0, %v1270
      %v1272 = vpop.f32.mrf.mxu0
      %1273 = vmatprep.mubr.bf16.mxu0 0
      %1274 = vmatmul.mubr.bf16.gmra.mxu0 %v1038
      %v1275 = vpop.f32.mrf.mxu0
      %v1276 = vadd.f32 0.0, %v1275
      %v1277 = vpop.f32.mrf.mxu0
      %v1278 = vpop.f32.mrf.mxu0
      %v1279 = vadd.f32 0.0, %v1278
      %v1280 = vpop.f32.mrf.mxu0
      %1281 = vdwg.mxu0
      %v1282 = vld [vmem:[#allocation2] sm:$0xff]
      %v1283 = vld [vmem:[#allocation2 + $0x8] sm:$0xff]
      %v1284 = vld [vmem:[#allocation2 + $0x10] sm:$0xff]
      %v1285 = vld [vmem:[#allocation2 + $0x18] sm:$0xff]
      %v1286 = vld [vmem:[#allocation2 + $0x20] sm:$0xff]
      %v1287 = vld [vmem:[#allocation2 + $0x28] sm:$0xff]
      %v1288 = vld [vmem:[#allocation2 + $0x30] sm:$0xff]
      %v1289 = vld [vmem:[#allocation2 + $0x38] sm:$0xff]
      %v1290 = vld [vmem:[#allocation2 + $0x40] sm:$0xff]
      %v1291 = vld [vmem:[#allocation2 + $0x48] sm:$0xff]
      %v1292 = vld [vmem:[#allocation2 + $0x50] sm:$0xff]
      %v1293 = vld [vmem:[#allocation2 + $0x58] sm:$0xff]
      %v1294 = vld [vmem:[#allocation2 + $0x60] sm:$0xff]
      %v1295 = vld [vmem:[#allocation2 + $0x68] sm:$0xff]
      %v1296 = vld [vmem:[#allocation2 + $0x70] sm:$0xff]
      %v1297 = vld [vmem:[#allocation2 + $0x78] sm:$0xff]
      %v1298 = vld [vmem:[#allocation2 + $0x80] sm:$0xff]
      %v1299 = vld [vmem:[#allocation2 + $0x88] sm:$0xff]
      %v1300 = vld [vmem:[#allocation2 + $0x90] sm:$0xff]
      %v1301 = vld [vmem:[#allocation2 + $0x98] sm:$0xff]
      %v1302 = vld [vmem:[#allocation2 + $0xa0] sm:$0xff]
      %v1303 = vld [vmem:[#allocation2 + $0xa8] sm:$0xff]
      %v1304 = vld [vmem:[#allocation2 + $0xb0] sm:$0xff]
      %v1305 = vld [vmem:[#allocation2 + $0xb8] sm:$0xff]
      %v1306 = vld [vmem:[#allocation2 + $0xc0] sm:$0xff]
      %v1307 = vld [vmem:[#allocation2 + $0xc8] sm:$0xff]
      %v1308 = vld [vmem:[#allocation2 + $0xd0] sm:$0xff]
      %v1309 = vld [vmem:[#allocation2 + $0xd8] sm:$0xff]
      %v1310 = vld [vmem:[#allocation2 + $0xe0] sm:$0xff]
      %v1311 = vld [vmem:[#allocation2 + $0xe8] sm:$0xff]
      %v1312 = vld [vmem:[#allocation2 + $0xf0] sm:$0xff]
      %v1313 = vld [vmem:[#allocation2 + $0xf8] sm:$0xff]
      %v1314 = vld [vmem:[#allocation2 + $0x100] sm:$0xff]
      %v1315 = vld [vmem:[#allocation2 + $0x108] sm:$0xff]
      %v1316 = vld [vmem:[#allocation2 + $0x110] sm:$0xff]
      %v1317 = vld [vmem:[#allocation2 + $0x118] sm:$0xff]
      %v1318 = vadd.f32 %v1282, %v1140
      %v1319 = vadd.f32 %v1283, %v1143
      %v1320 = vadd.f32 %v1284, %v1148
      %v1321 = vadd.f32 %v1285, %v1151
      %v1322 = vadd.f32 %v1286, %v1156
      %v1323 = vadd.f32 %v1287, %v1159
      %v1324 = vadd.f32 %v1288, %v1164
      %v1325 = vadd.f32 %v1289, %v1167
      %v1326 = vadd.f32 %v1290, %v1172
      %v1327 = vadd.f32 %v1291, %v1175
      %v1328 = vadd.f32 %v1292, %v1180
      %v1329 = vadd.f32 %v1293, %v1183
      %v1330 = vadd.f32 %v1294, %v1188
      %v1331 = vadd.f32 %v1295, %v1191
      %v1332 = vadd.f32 %v1296, %v1196
      %v1333 = vadd.f32 %v1297, %v1199
      %v1334 = vadd.f32 %v1298, %v1204
      %v1335 = vadd.f32 %v1299, %v1207
      %v1336 = vadd.f32 %v1300, %v1212
      %v1337 = vadd.f32 %v1301, %v1215
      %v1338 = vadd.f32 %v1302, %v1220
      %v1339 = vadd.f32 %v1303, %v1223
      %v1340 = vadd.f32 %v1304, %v1228
      %v1341 = vadd.f32 %v1305, %v1231
      %v1342 = vadd.f32 %v1306, %v1236
      %v1343 = vadd.f32 %v1307, %v1239
      %v1344 = vadd.f32 %v1308, %v1244
      %v1345 = vadd.f32 %v1309, %v1247
      %v1346 = vadd.f32 %v1310, %v1252
      %v1347 = vadd.f32 %v1311, %v1255
      %v1348 = vadd.f32 %v1312, %v1260
      %v1349 = vadd.f32 %v1313, %v1263
      %v1350 = vadd.f32 %v1314, %v1268
      %v1351 = vadd.f32 %v1315, %v1271
      %v1352 = vadd.f32 %v1316, %v1276
      %v1353 = vadd.f32 %v1317, %v1279
      %1354 = vst [vmem:[#allocation2] sm:$0xff] %v1318
      %1355 = vst [vmem:[#allocation2 + $0x8] sm:$0xff] %v1319
      %1356 = vst [vmem:[#allocation2 + $0x10] sm:$0xff] %v1320
      %1357 = vst [vmem:[#allocation2 + $0x18] sm:$0xff] %v1321
      %1358 = vst [vmem:[#allocation2 + $0x20] sm:$0xff] %v1322
      %1359 = vst [vmem:[#allocation2 + $0x28] sm:$0xff] %v1323
      %1360 = vst [vmem:[#allocation2 + $0x30] sm:$0xff] %v1324
      %1361 = vst [vmem:[#allocation2 + $0x38] sm:$0xff] %v1325
      %1362 = vst [vmem:[#allocation2 + $0x40] sm:$0xff] %v1326
      %1363 = vst [vmem:[#allocation2 + $0x48] sm:$0xff] %v1327
      %1364 = vst [vmem:[#allocation2 + $0x50] sm:$0xff] %v1328
      %1365 = vst [vmem:[#allocation2 + $0x58] sm:$0xff] %v1329
      %1366 = vst [vmem:[#allocation2 + $0x60] sm:$0xff] %v1330
      %1367 = vst [vmem:[#allocation2 + $0x68] sm:$0xff] %v1331
      %1368 = vst [vmem:[#allocation2 + $0x70] sm:$0xff] %v1332
      %1369 = vst [vmem:[#allocation2 + $0x78] sm:$0xff] %v1333
      %1370 = vst [vmem:[#allocation2 + $0x80] sm:$0xff] %v1334
      %1371 = vst [vmem:[#allocation2 + $0x88] sm:$0xff] %v1335
      %1372 = vst [vmem:[#allocation2 + $0x90] sm:$0xff] %v1336
      %1373 = vst [vmem:[#allocation2 + $0x98] sm:$0xff] %v1337
      %1374 = vst [vmem:[#allocation2 + $0xa0] sm:$0xff] %v1338
      %1375 = vst [vmem:[#allocation2 + $0xa8] sm:$0xff] %v1339
      %1376 = vst [vmem:[#allocation2 + $0xb0] sm:$0xff] %v1340
      %1377 = vst [vmem:[#allocation2 + $0xb8] sm:$0xff] %v1341
      %1378 = vst [vmem:[#allocation2 + $0xc0] sm:$0xff] %v1342
      %1379 = vst [vmem:[#allocation2 + $0xc8] sm:$0xff] %v1343
      %1380 = vst [vmem:[#allocation2 + $0xd0] sm:$0xff] %v1344
      %1381 = vst [vmem:[#allocation2 + $0xd8] sm:$0xff] %v1345
      %1382 = vst [vmem:[#allocation2 + $0xe0] sm:$0xff] %v1346
      %1383 = vst [vmem:[#allocation2 + $0xe8] sm:$0xff] %v1347
      %1384 = vst [vmem:[#allocation2 + $0xf0] sm:$0xff] %v1348
      %1385 = vst [vmem:[#allocation2 + $0xf8] sm:$0xff] %v1349
      %1386 = vst [vmem:[#allocation2 + $0x100] sm:$0xff] %v1350
      %1387 = vst [vmem:[#allocation2 + $0x108] sm:$0xff] %v1351
      %1388 = vst [vmem:[#allocation2 + $0x110] sm:$0xff] %v1352
      %1389 = vst [vmem:[#allocation2 + $0x118] sm:$0xff] %v1353
      %v1390 = vld [vmem:[%s294] sm:$0xe]
      %v1391 = vld [vmem:[%s294 + $0x4] sm:$0xf]
      %v1392 = vld [vmem:[%s294 + $0x8] sm:$0xf]
      %v1393 = vld [vmem:[%s294 + $0xc] sm:$0xf]
      %v1394 = vld [vmem:[%s294 + $0x10] sm:$0xf]
      %v1395 = vld [vmem:[%s294 + $0x14] sm:$0xf]
      %v1396 = vld [vmem:[%s294 + $0x18] sm:$0xf]
      %v1397 = vld [vmem:[%s294 + $0x1c] sm:$0xf]
      %v1398 = vld [vmem:[%s294 + $0x20] sm:$0xf]
      %v1399 = vld [vmem:[%s294 + $0x24] sm:$0xf]
      %v1400 = vld [vmem:[%s294 + $0x28] sm:$0xf]
      %v1401 = vld [vmem:[%s294 + $0x2c] sm:$0xf]
      %v1402 = vld [vmem:[%s294 + $0x30] sm:$0xf]
      %v1403 = vld [vmem:[%s294 + $0x34] sm:$0xf]
      %v1404 = vld [vmem:[%s294 + $0x38] sm:$0xf]
      %v1405 = vld [vmem:[%s294 + $0x3c] sm:$0xf]
      %v1406 = vld [vmem:[%s294 + $0x40] sm:$0xf]
      %v1407 = vld [vmem:[%s294 + $0x44] sm:$0xf]
      %v1408 = vld [vmem:[%s294 + $0x48] sm:$0xf]
      %v1409 = vld [vmem:[%s294 + $0x4c] sm:$0xf]
      %v1410 = vld [vmem:[%s294 + $0x50] sm:$0xf]
      %v1411 = vld [vmem:[%s294 + $0x54] sm:$0xf]
      %v1412 = vld [vmem:[%s294 + $0x58] sm:$0xf]
      %v1413 = vld [vmem:[%s294 + $0x5c] sm:$0xf]
      %v1414 = vld [vmem:[%s294 + $0x60] sm:$0xf]
      %v1415 = vld [vmem:[%s294 + $0x64] sm:$0xf]
      %v1416 = vld [vmem:[%s294 + $0x68] sm:$0xf]
      %v1417 = vld [vmem:[%s294 + $0x6c] sm:$0xf]
      %v1418 = vld [vmem:[%s294 + $0x70] sm:$0xf]
      %v1419 = vld [vmem:[%s294 + $0x74] sm:$0xf]
      %v1420 = vld [vmem:[%s294 + $0x78] sm:$0xf]
      %v1421 = vld [vmem:[%s294 + $0x7c] sm:$0xf]
      %v1422 = vld [vmem:[%s294 + $0x80] sm:$0xf]
      %v1423 = vld [vmem:[%s294 + $0x84] sm:$0xf]
      %v1424 = vld [vmem:[%s294 + $0x88] sm:$0xf]
      %v1425 = vld [vmem:[%s294 + $0x8c] sm:$0xf]
      %v1426 = vld [vmem:[%s294 + $0x90] sm:$0x1]
      %s1427 = scalar_lea.vmem %s298, 128
      %v1428 = vld [vmem:[%s1427] sm:$0xf]
      %v1429 = vld [vmem:[%s1427 + $0x4] sm:$0xf]
      %v1430 = vld [vmem:[%s1427 + $0x8] sm:$0xf]
      %v1431 = vld [vmem:[%s1427 + $0xc] sm:$0xf]
      %v1432 = vld [vmem:[%s1427 + $0x10] sm:$0xf]
      %v1433 = vld [vmem:[%s1427 + $0x14] sm:$0xf]
      %v1434 = vld [vmem:[%s1427 + $0x18] sm:$0xf]
      %v1435 = vld [vmem:[%s1427 + $0x1c] sm:$0xf]
      %v1436 = vld [vmem:[%s1427 + $0x20] sm:$0xf]
      %v1437 = vld [vmem:[%s1427 + $0x24] sm:$0xf]
      %v1438 = vld [vmem:[%s1427 + $0x28] sm:$0xf]
      %v1439 = vld [vmem:[%s1427 + $0x2c] sm:$0xf]
      %v1440 = vld [vmem:[%s1427 + $0x30] sm:$0xf]
      %v1441 = vld [vmem:[%s1427 + $0x34] sm:$0xf]
      %v1442 = vld [vmem:[%s1427 + $0x38] sm:$0xf]
      %v1443 = vld [vmem:[%s1427 + $0x3c] sm:$0xf]
      %v1481 = vunpack.c.l.b16 %v1390
      %v1482 = vunpack.c.l.b16 %v1391
      %v1483 = vunpack.c.l.b16 %v1392
      %v1484 = vunpack.c.l.b16 %v1393
      %v1485 = vunpack.c.l.b16 %v1394
      %v1486 = vunpack.c.l.b16 %v1395
      %v1487 = vunpack.c.l.b16 %v1396
      %v1488 = vunpack.c.l.b16 %v1397
      %v1489 = vunpack.c.l.b16 %v1398
      %v1490 = vunpack.c.l.b16 %v1399
      %v1491 = vunpack.c.l.b16 %v1400
      %v1492 = vunpack.c.l.b16 %v1401
      %v1493 = vunpack.c.l.b16 %v1402
      %v1494 = vunpack.c.l.b16 %v1403
      %v1495 = vunpack.c.l.b16 %v1404
      %v1496 = vunpack.c.l.b16 %v1405
      %v1497 = vunpack.c.l.b16 %v1406
      %v1498 = vunpack.c.l.b16 %v1407
      %v1499 = vunpack.c.l.b16 %v1408
      %v1500 = vunpack.c.l.b16 %v1409
      %v1501 = vunpack.c.l.b16 %v1410
      %v1502 = vunpack.c.l.b16 %v1411
      %v1503 = vunpack.c.l.b16 %v1412
      %v1504 = vunpack.c.l.b16 %v1413
      %v1505 = vunpack.c.l.b16 %v1414
      %v1506 = vunpack.c.l.b16 %v1415
      %v1507 = vunpack.c.l.b16 %v1416
      %v1508 = vunpack.c.l.b16 %v1417
      %v1509 = vunpack.c.l.b16 %v1418
      %v1510 = vunpack.c.l.b16 %v1419
      %v1511 = vunpack.c.l.b16 %v1420
      %v1512 = vunpack.c.l.b16 %v1421
      %v1513 = vunpack.c.l.b16 %v1422
      %v1514 = vunpack.c.l.b16 %v1423
      %v1515 = vunpack.c.l.b16 %v1424
      %v1516 = vunpack.c.l.b16 %v1425
      %v1517 = vunpack.c.l.b16 %v1426
      %v1518 = vpack.c.b16 %v1482, %v1481
      %v1519 = vpack.c.b16 %v1484, %v1483
      %v1520 = vpack.c.b16 %v1486, %v1485
      %v1521 = vpack.c.b16 %v1488, %v1487
      %v1522 = vpack.c.b16 %v1490, %v1489
      %v1523 = vpack.c.b16 %v1492, %v1491
      %v1524 = vpack.c.b16 %v1494, %v1493
      %v1525 = vpack.c.b16 %v1496, %v1495
      %v1526 = vpack.c.b16 %v1498, %v1497
      %v1527 = vpack.c.b16 %v1500, %v1499
      %v1528 = vpack.c.b16 %v1502, %v1501
      %v1529 = vpack.c.b16 %v1504, %v1503
      %v1530 = vpack.c.b16 %v1506, %v1505
      %v1531 = vpack.c.b16 %v1508, %v1507
      %v1532 = vpack.c.b16 %v1510, %v1509
      %v1533 = vpack.c.b16 %v1512, %v1511
      %v1534 = vpack.c.b16 %v1514, %v1513
      %v1535 = vpack.c.b16 %v1516, %v1515
      %v1536 = vpack.c.b16 %v1517, %v1517
      %vm1537 = vcmask 1046528
      %v1538 = vrot.slane %v1518, 1
      %v1539 = vrot.slane %v1519, 1
      %v1540 = vsel %vm1537, %v1538, %v1539
      %v1541 = vrot.slane %v1520, 1
      %v1542 = vsel %vm1537, %v1539, %v1541
      %v1543 = vrot.slane %v1521, 1
      %v1544 = vsel %vm1537, %v1541, %v1543
      %v1545 = vrot.slane %v1522, 1
      %v1546 = vsel %vm1537, %v1543, %v1545
      %v1547 = vrot.slane %v1523, 1
      %v1548 = vsel %vm1537, %v1545, %v1547
      %v1549 = vrot.slane %v1524, 1
      %v1550 = vsel %vm1537, %v1547, %v1549
      %v1551 = vrot.slane %v1525, 1
      %v1552 = vsel %vm1537, %v1549, %v1551
      %v1553 = vrot.slane %v1526, 1
      %v1554 = vsel %vm1537, %v1551, %v1553
      %v1555 = vrot.slane %v1527, 1
      %v1556 = vsel %vm1537, %v1553, %v1555
      %v1557 = vrot.slane %v1528, 1
      %v1558 = vsel %vm1537, %v1555, %v1557
      %v1559 = vrot.slane %v1529, 1
      %v1560 = vsel %vm1537, %v1557, %v1559
      %v1561 = vrot.slane %v1530, 1
      %v1562 = vsel %vm1537, %v1559, %v1561
      %v1563 = vrot.slane %v1531, 1
      %v1564 = vsel %vm1537, %v1561, %v1563
      %v1565 = vrot.slane %v1532, 1
      %v1566 = vsel %vm1537, %v1563, %v1565
      %v1567 = vrot.slane %v1533, 1
      %v1568 = vsel %vm1537, %v1565, %v1567
      %v1569 = vrot.slane %v1534, 1
      %v1570 = vsel %vm1537, %v1567, %v1569
      %v1571 = vrot.slane %v1535, 1
      %v1572 = vsel %vm1537, %v1569, %v1571
      %v1573 = vrot.slane %v1536, 1
      %v1574 = vsel %vm1537, %v1571, %v1573
      %v1609 = vunpack.c.l.b16 %v1428
      %v1610 = vunpack.c.l.b16 %v1429
      %v1611 = vunpack.c.l.b16 %v1430
      %v1612 = vunpack.c.l.b16 %v1431
      %v1613 = vunpack.c.l.b16 %v1432
      %v1614 = vunpack.c.l.b16 %v1433
      %v1615 = vunpack.c.l.b16 %v1434
      %v1616 = vunpack.c.l.b16 %v1435
      %v1617 = vunpack.c.l.b16 %v1436
      %v1618 = vunpack.c.l.b16 %v1437
      %v1619 = vunpack.c.l.b16 %v1438
      %v1620 = vunpack.c.l.b16 %v1439
      %v1621 = vunpack.c.l.b16 %v1440
      %v1622 = vunpack.c.l.b16 %v1441
      %v1623 = vunpack.c.l.b16 %v1442
      %v1624 = vunpack.c.l.b16 %v1443
      %v1625 = vpack.c.b16 %v1610, %v1609
      %v1626 = vpack.c.b16 %v1612, %v1611
      %v1627 = vpack.c.b16 %v1614, %v1613
      %v1628 = vpack.c.b16 %v1616, %v1615
      %v1629 = vpack.c.b16 %v1618, %v1617
      %v1630 = vpack.c.b16 %v1620, %v1619
      %v1631 = vpack.c.b16 %v1622, %v1621
      %v1632 = vpack.c.b16 %v1624, %v1623
      %1641 = vmatprep.subr.bf16.mxu0 0
      %1642 = vmatpush1.bf16.msra.mxu0 %v1632
      %1643 = vmatprep.subr.bf16.mxu0 0
      %1644 = vmatpush1.bf16.msra.mxu0 %v1631
      %1645 = vmatprep.subr.bf16.mxu0 0
      %1646 = vmatpush1.bf16.msra.mxu0 %v1630
      %1647 = vmatprep.subr.bf16.mxu0 0
      %1648 = vmatpush1.bf16.msra.mxu0 %v1629
      %1649 = vmatprep.subr.bf16.mxu0 0
      %1650 = vmatpush1.bf16.msra.mxu0 %v1628
      %1651 = vmatprep.subr.bf16.mxu0 0
      %1652 = vmatpush1.bf16.msra.mxu0 %v1627
      %1653 = vmatprep.subr.bf16.mxu0 0
      %1654 = vmatpush1.bf16.msra.mxu0 %v1626
      %1655 = vmatprep.subr.bf16.mxu0 0
      %1656 = vmatpush1.bf16.msra.mxu0 %v1625
      %1657 = vmatprep.subr.bf16.mxu0 0
      %1658 = vmatpush2.bf16.msra.mxu0 0
      %1659 = vmatprep.subr.bf16.mxu0 0
      %1660 = vmatpush2.bf16.msra.mxu0 0
      %1661 = vmatprep.subr.bf16.mxu0 0
      %1662 = vmatpush2.bf16.msra.mxu0 0
      %1663 = vmatprep.subr.bf16.mxu0 0
      %1664 = vmatpush2.bf16.msra.mxu0 0
      %1665 = vmatprep.subr.bf16.mxu0 0
      %1666 = vmatpush2.bf16.msra.mxu0 0
      %1667 = vmatprep.subr.bf16.mxu0 0
      %1668 = vmatpush2.bf16.msra.mxu0 0
      %1669 = vmatprep.subr.bf16.mxu0 0
      %1670 = vmatpush2.bf16.msra.mxu0 0
      %1671 = vmatprep.subr.bf16.mxu0 0
      %1672 = vmatpush2.bf16.msra.mxu0 0
      %1673 = vmatprep.mubr.bf16.mxu0 0
      %1674 = vmatmul.mubr.bf16.gmra.mxu0 %v1540
      %v1675 = vpop.f32.mrf.mxu0
      %v1676 = vadd.f32 0.0, %v1675
      %v1677 = vpop.f32.mrf.mxu0
      %v1678 = vpop.f32.mrf.mxu0
      %v1679 = vadd.f32 0.0, %v1678
      %v1680 = vpop.f32.mrf.mxu0
      %1681 = vmatprep.mubr.bf16.mxu0 0
      %1682 = vmatmul.mubr.bf16.gmra.mxu0 %v1542
      %v1683 = vpop.f32.mrf.mxu0
      %v1684 = vadd.f32 0.0, %v1683
      %v1685 = vpop.f32.mrf.mxu0
      %v1686 = vpop.f32.mrf.mxu0
      %v1687 = vadd.f32 0.0, %v1686
      %v1688 = vpop.f32.mrf.mxu0
      %1689 = vmatprep.mubr.bf16.mxu0 0
      %1690 = vmatmul.mubr.bf16.gmra.mxu0 %v1544
      %v1691 = vpop.f32.mrf.mxu0
      %v1692 = vadd.f32 0.0, %v1691
      %v1693 = vpop.f32.mrf.mxu0
      %v1694 = vpop.f32.mrf.mxu0
      %v1695 = vadd.f32 0.0, %v1694
      %v1696 = vpop.f32.mrf.mxu0
      %1697 = vmatprep.mubr.bf16.mxu0 0
      %1698 = vmatmul.mubr.bf16.gmra.mxu0 %v1546
      %v1699 = vpop.f32.mrf.mxu0
      %v1700 = vadd.f32 0.0, %v1699
      %v1701 = vpop.f32.mrf.mxu0
      %v1702 = vpop.f32.mrf.mxu0
      %v1703 = vadd.f32 0.0, %v1702
      %v1704 = vpop.f32.mrf.mxu0
      %1705 = vmatprep.mubr.bf16.mxu0 0
      %1706 = vmatmul.mubr.bf16.gmra.mxu0 %v1548
      %v1707 = vpop.f32.mrf.mxu0
      %v1708 = vadd.f32 0.0, %v1707
      %v1709 = vpop.f32.mrf.mxu0
      %v1710 = vpop.f32.mrf.mxu0
      %v1711 = vadd.f32 0.0, %v1710
      %v1712 = vpop.f32.mrf.mxu0
      %1713 = vmatprep.mubr.bf16.mxu0 0
      %1714 = vmatmul.mubr.bf16.gmra.mxu0 %v1550
      %v1715 = vpop.f32.mrf.mxu0
      %v1716 = vadd.f32 0.0, %v1715
      %v1717 = vpop.f32.mrf.mxu0
      %v1718 = vpop.f32.mrf.mxu0
      %v1719 = vadd.f32 0.0, %v1718
      %v1720 = vpop.f32.mrf.mxu0
      %1721 = vmatprep.mubr.bf16.mxu0 0
      %1722 = vmatmul.mubr.bf16.gmra.mxu0 %v1552
      %v1723 = vpop.f32.mrf.mxu0
      %v1724 = vadd.f32 0.0, %v1723
      %v1725 = vpop.f32.mrf.mxu0
      %v1726 = vpop.f32.mrf.mxu0
      %v1727 = vadd.f32 0.0, %v1726
      %v1728 = vpop.f32.mrf.mxu0
      %1729 = vmatprep.mubr.bf16.mxu0 0
      %1730 = vmatmul.mubr.bf16.gmra.mxu0 %v1554
      %v1731 = vpop.f32.mrf.mxu0
      %v1732 = vadd.f32 0.0, %v1731
      %v1733 = vpop.f32.mrf.mxu0
      %v1734 = vpop.f32.mrf.mxu0
      %v1735 = vadd.f32 0.0, %v1734
      %v1736 = vpop.f32.mrf.mxu0
      %1737 = vmatprep.mubr.bf16.mxu0 0
      %1738 = vmatmul.mubr.bf16.gmra.mxu0 %v1556
      %v1739 = vpop.f32.mrf.mxu0
      %v1740 = vadd.f32 0.0, %v1739
      %v1741 = vpop.f32.mrf.mxu0
      %v1742 = vpop.f32.mrf.mxu0
      %v1743 = vadd.f32 0.0, %v1742
      %v1744 = vpop.f32.mrf.mxu0
      %1745 = vmatprep.mubr.bf16.mxu0 0
      %1746 = vmatmul.mubr.bf16.gmra.mxu0 %v1558
      %v1747 = vpop.f32.mrf.mxu0
      %v1748 = vadd.f32 0.0, %v1747
      %v1749 = vpop.f32.mrf.mxu0
      %v1750 = vpop.f32.mrf.mxu0
      %v1751 = vadd.f32 0.0, %v1750
      %v1752 = vpop.f32.mrf.mxu0
      %1753 = vmatprep.mubr.bf16.mxu0 0
      %1754 = vmatmul.mubr.bf16.gmra.mxu0 %v1560
      %v1755 = vpop.f32.mrf.mxu0
      %v1756 = vadd.f32 0.0, %v1755
      %v1757 = vpop.f32.mrf.mxu0
      %v1758 = vpop.f32.mrf.mxu0
      %v1759 = vadd.f32 0.0, %v1758
      %v1760 = vpop.f32.mrf.mxu0
      %1761 = vmatprep.mubr.bf16.mxu0 0
      %1762 = vmatmul.mubr.bf16.gmra.mxu0 %v1562
      %v1763 = vpop.f32.mrf.mxu0
      %v1764 = vadd.f32 0.0, %v1763
      %v1765 = vpop.f32.mrf.mxu0
      %v1766 = vpop.f32.mrf.mxu0
      %v1767 = vadd.f32 0.0, %v1766
      %v1768 = vpop.f32.mrf.mxu0
      %1769 = vmatprep.mubr.bf16.mxu0 0
      %1770 = vmatmul.mubr.bf16.gmra.mxu0 %v1564
      %v1771 = vpop.f32.mrf.mxu0
      %v1772 = vadd.f32 0.0, %v1771
      %v1773 = vpop.f32.mrf.mxu0
      %v1774 = vpop.f32.mrf.mxu0
      %v1775 = vadd.f32 0.0, %v1774
      %v1776 = vpop.f32.mrf.mxu0
      %1777 = vmatprep.mubr.bf16.mxu0 0
      %1778 = vmatmul.mubr.bf16.gmra.mxu0 %v1566
      %v1779 = vpop.f32.mrf.mxu0
      %v1780 = vadd.f32 0.0, %v1779
      %v1781 = vpop.f32.mrf.mxu0
      %v1782 = vpop.f32.mrf.mxu0
      %v1783 = vadd.f32 0.0, %v1782
      %v1784 = vpop.f32.mrf.mxu0
      %1785 = vmatprep.mubr.bf16.mxu0 0
      %1786 = vmatmul.mubr.bf16.gmra.mxu0 %v1568
      %v1787 = vpop.f32.mrf.mxu0
      %v1788 = vadd.f32 0.0, %v1787
      %v1789 = vpop.f32.mrf.mxu0
      %v1790 = vpop.f32.mrf.mxu0
      %v1791 = vadd.f32 0.0, %v1790
      %v1792 = vpop.f32.mrf.mxu0
      %1793 = vmatprep.mubr.bf16.mxu0 0
      %1794 = vmatmul.mubr.bf16.gmra.mxu0 %v1570
      %v1795 = vpop.f32.mrf.mxu0
      %v1796 = vadd.f32 0.0, %v1795
      %v1797 = vpop.f32.mrf.mxu0
      %v1798 = vpop.f32.mrf.mxu0
      %v1799 = vadd.f32 0.0, %v1798
      %v1800 = vpop.f32.mrf.mxu0
      %1801 = vmatprep.mubr.bf16.mxu0 0
      %1802 = vmatmul.mubr.bf16.gmra.mxu0 %v1572
      %v1803 = vpop.f32.mrf.mxu0
      %v1804 = vadd.f32 0.0, %v1803
      %v1805 = vpop.f32.mrf.mxu0
      %v1806 = vpop.f32.mrf.mxu0
      %v1807 = vadd.f32 0.0, %v1806
      %v1808 = vpop.f32.mrf.mxu0
      %1809 = vmatprep.mubr.bf16.mxu0 0
      %1810 = vmatmul.mubr.bf16.gmra.mxu0 %v1574
      %v1811 = vpop.f32.mrf.mxu0
      %v1812 = vadd.f32 0.0, %v1811
      %v1813 = vpop.f32.mrf.mxu0
      %v1814 = vpop.f32.mrf.mxu0
      %v1815 = vadd.f32 0.0, %v1814
      %v1816 = vpop.f32.mrf.mxu0
      %1817 = vdwg.mxu0
      %v1818 = vld [vmem:[#allocation2] sm:$0xff]
      %v1819 = vld [vmem:[#allocation2 + $0x8] sm:$0xff]
      %v1820 = vld [vmem:[#allocation2 + $0x10] sm:$0xff]
      %v1821 = vld [vmem:[#allocation2 + $0x18] sm:$0xff]
      %v1822 = vld [vmem:[#allocation2 + $0x20] sm:$0xff]
      %v1823 = vld [vmem:[#allocation2 + $0x28] sm:$0xff]
      %v1824 = vld [vmem:[#allocation2 + $0x30] sm:$0xff]
      %v1825 = vld [vmem:[#allocation2 + $0x38] sm:$0xff]
      %v1826 = vld [vmem:[#allocation2 + $0x40] sm:$0xff]
      %v1827 = vld [vmem:[#allocation2 + $0x48] sm:$0xff]
      %v1828 = vld [vmem:[#allocation2 + $0x50] sm:$0xff]
      %v1829 = vld [vmem:[#allocation2 + $0x58] sm:$0xff]
      %v1830 = vld [vmem:[#allocation2 + $0x60] sm:$0xff]
      %v1831 = vld [vmem:[#allocation2 + $0x68] sm:$0xff]
      %v1832 = vld [vmem:[#allocation2 + $0x70] sm:$0xff]
      %v1833 = vld [vmem:[#allocation2 + $0x78] sm:$0xff]
      %v1834 = vld [vmem:[#allocation2 + $0x80] sm:$0xff]
      %v1835 = vld [vmem:[#allocation2 + $0x88] sm:$0xff]
      %v1836 = vld [vmem:[#allocation2 + $0x90] sm:$0xff]
      %v1837 = vld [vmem:[#allocation2 + $0x98] sm:$0xff]
      %v1838 = vld [vmem:[#allocation2 + $0xa0] sm:$0xff]
      %v1839 = vld [vmem:[#allocation2 + $0xa8] sm:$0xff]
      %v1840 = vld [vmem:[#allocation2 + $0xb0] sm:$0xff]
      %v1841 = vld [vmem:[#allocation2 + $0xb8] sm:$0xff]
      %v1842 = vld [vmem:[#allocation2 + $0xc0] sm:$0xff]
      %v1843 = vld [vmem:[#allocation2 + $0xc8] sm:$0xff]
      %v1844 = vld [vmem:[#allocation2 + $0xd0] sm:$0xff]
      %v1845 = vld [vmem:[#allocation2 + $0xd8] sm:$0xff]
      %v1846 = vld [vmem:[#allocation2 + $0xe0] sm:$0xff]
      %v1847 = vld [vmem:[#allocation2 + $0xe8] sm:$0xff]
      %v1848 = vld [vmem:[#allocation2 + $0xf0] sm:$0xff]
      %v1849 = vld [vmem:[#allocation2 + $0xf8] sm:$0xff]
      %v1850 = vld [vmem:[#allocation2 + $0x100] sm:$0xff]
      %v1851 = vld [vmem:[#allocation2 + $0x108] sm:$0xff]
      %v1852 = vld [vmem:[#allocation2 + $0x110] sm:$0xff]
      %v1853 = vld [vmem:[#allocation2 + $0x118] sm:$0xff]
      %v1854 = vadd.f32 %v1818, %v1676
      %v1855 = vadd.f32 %v1819, %v1679
      %v1856 = vadd.f32 %v1820, %v1684
      %v1857 = vadd.f32 %v1821, %v1687
      %v1858 = vadd.f32 %v1822, %v1692
      %v1859 = vadd.f32 %v1823, %v1695
      %v1860 = vadd.f32 %v1824, %v1700
      %v1861 = vadd.f32 %v1825, %v1703
      %v1862 = vadd.f32 %v1826, %v1708
      %v1863 = vadd.f32 %v1827, %v1711
      %v1864 = vadd.f32 %v1828, %v1716
      %v1865 = vadd.f32 %v1829, %v1719
      %v1866 = vadd.f32 %v1830, %v1724
      %v1867 = vadd.f32 %v1831, %v1727
      %v1868 = vadd.f32 %v1832, %v1732
      %v1869 = vadd.f32 %v1833, %v1735
      %v1870 = vadd.f32 %v1834, %v1740
      %v1871 = vadd.f32 %v1835, %v1743
      %v1872 = vadd.f32 %v1836, %v1748
      %v1873 = vadd.f32 %v1837, %v1751
      %v1874 = vadd.f32 %v1838, %v1756
      %v1875 = vadd.f32 %v1839, %v1759
      %v1876 = vadd.f32 %v1840, %v1764
      %v1877 = vadd.f32 %v1841, %v1767
      %v1878 = vadd.f32 %v1842, %v1772
      %v1879 = vadd.f32 %v1843, %v1775
      %v1880 = vadd.f32 %v1844, %v1780
      %v1881 = vadd.f32 %v1845, %v1783
      %v1882 = vadd.f32 %v1846, %v1788
      %v1883 = vadd.f32 %v1847, %v1791
      %v1884 = vadd.f32 %v1848, %v1796
      %v1885 = vadd.f32 %v1849, %v1799
      %v1886 = vadd.f32 %v1850, %v1804
      %v1887 = vadd.f32 %v1851, %v1807
      %v1888 = vadd.f32 %v1852, %v1812
      %v1889 = vadd.f32 %v1853, %v1815
      %1890 = vst [vmem:[#allocation2] sm:$0xff] %v1854
      %1891 = vst [vmem:[#allocation2 + $0x8] sm:$0xff] %v1855
      %1892 = vst [vmem:[#allocation2 + $0x10] sm:$0xff] %v1856
      %1893 = vst [vmem:[#allocation2 + $0x18] sm:$0xff] %v1857
      %1894 = vst [vmem:[#allocation2 + $0x20] sm:$0xff] %v1858
      %1895 = vst [vmem:[#allocation2 + $0x28] sm:$0xff] %v1859
      %1896 = vst [vmem:[#allocation2 + $0x30] sm:$0xff] %v1860
      %1897 = vst [vmem:[#allocation2 + $0x38] sm:$0xff] %v1861
      %1898 = vst [vmem:[#allocation2 + $0x40] sm:$0xff] %v1862
      %1899 = vst [vmem:[#allocation2 + $0x48] sm:$0xff] %v1863
      %1900 = vst [vmem:[#allocation2 + $0x50] sm:$0xff] %v1864
      %1901 = vst [vmem:[#allocation2 + $0x58] sm:$0xff] %v1865
      %1902 = vst [vmem:[#allocation2 + $0x60] sm:$0xff] %v1866
      %1903 = vst [vmem:[#allocation2 + $0x68] sm:$0xff] %v1867
      %1904 = vst [vmem:[#allocation2 + $0x70] sm:$0xff] %v1868
      %1905 = vst [vmem:[#allocation2 + $0x78] sm:$0xff] %v1869
      %1906 = vst [vmem:[#allocation2 + $0x80] sm:$0xff] %v1870
      %1907 = vst [vmem:[#allocation2 + $0x88] sm:$0xff] %v1871
      %1908 = vst [vmem:[#allocation2 + $0x90] sm:$0xff] %v1872
      %1909 = vst [vmem:[#allocation2 + $0x98] sm:$0xff] %v1873
      %1910 = vst [vmem:[#allocation2 + $0xa0] sm:$0xff] %v1874
      %1911 = vst [vmem:[#allocation2 + $0xa8] sm:$0xff] %v1875
      %1912 = vst [vmem:[#allocation2 + $0xb0] sm:$0xff] %v1876
      %1913 = vst [vmem:[#allocation2 + $0xb8] sm:$0xff] %v1877
      %1914 = vst [vmem:[#allocation2 + $0xc0] sm:$0xff] %v1878
      %1915 = vst [vmem:[#allocation2 + $0xc8] sm:$0xff] %v1879
      %1916 = vst [vmem:[#allocation2 + $0xd0] sm:$0xff] %v1880
      %1917 = vst [vmem:[#allocation2 + $0xd8] sm:$0xff] %v1881
      %1918 = vst [vmem:[#allocation2 + $0xe0] sm:$0xff] %v1882
      %1919 = vst [vmem:[#allocation2 + $0xe8] sm:$0xff] %v1883
      %1920 = vst [vmem:[#allocation2 + $0xf0] sm:$0xff] %v1884
      %1921 = vst [vmem:[#allocation2 + $0xf8] sm:$0xff] %v1885
      %1922 = vst [vmem:[#allocation2 + $0x100] sm:$0xff] %v1886
      %1923 = vst [vmem:[#allocation2 + $0x108] sm:$0xff] %v1887
      %1924 = vst [vmem:[#allocation2 + $0x110] sm:$0xff] %v1888
      %1925 = vst [vmem:[#allocation2 + $0x118] sm:$0xff] %v1889
      %v1926 = vld [vmem:[%s294 + $0x8] sm:$0xe]
      %v1927 = vld [vmem:[%s294 + $0xc] sm:$0xf]
      %v1928 = vld [vmem:[%s294 + $0x10] sm:$0xf]
      %v1929 = vld [vmem:[%s294 + $0x14] sm:$0xf]
      %v1930 = vld [vmem:[%s294 + $0x18] sm:$0xf]
      %v1931 = vld [vmem:[%s294 + $0x1c] sm:$0xf]
      %v1932 = vld [vmem:[%s294 + $0x20] sm:$0xf]
      %v1933 = vld [vmem:[%s294 + $0x24] sm:$0xf]
      %v1934 = vld [vmem:[%s294 + $0x28] sm:$0xf]
      %v1935 = vld [vmem:[%s294 + $0x2c] sm:$0xf]
      %v1936 = vld [vmem:[%s294 + $0x30] sm:$0xf]
      %v1937 = vld [vmem:[%s294 + $0x34] sm:$0xf]
      %v1938 = vld [vmem:[%s294 + $0x38] sm:$0xf]
      %v1939 = vld [vmem:[%s294 + $0x3c] sm:$0xf]
      %v1940 = vld [vmem:[%s294 + $0x40] sm:$0xf]
      %v1941 = vld [vmem:[%s294 + $0x44] sm:$0xf]
      %v1942 = vld [vmem:[%s294 + $0x48] sm:$0xf]
      %v1943 = vld [vmem:[%s294 + $0x4c] sm:$0xf]
      %v1944 = vld [vmem:[%s294 + $0x50] sm:$0xf]
      %v1945 = vld [vmem:[%s294 + $0x54] sm:$0xf]
      %v1946 = vld [vmem:[%s294 + $0x58] sm:$0xf]
      %v1947 = vld [vmem:[%s294 + $0x5c] sm:$0xf]
      %v1948 = vld [vmem:[%s294 + $0x60] sm:$0xf]
      %v1949 = vld [vmem:[%s294 + $0x64] sm:$0xf]
      %v1950 = vld [vmem:[%s294 + $0x68] sm:$0xf]
      %v1951 = vld [vmem:[%s294 + $0x6c] sm:$0xf]
      %v1952 = vld [vmem:[%s294 + $0x70] sm:$0xf]
      %v1953 = vld [vmem:[%s294 + $0x74] sm:$0xf]
      %v1954 = vld [vmem:[%s294 + $0x78] sm:$0xf]
      %v1955 = vld [vmem:[%s294 + $0x7c] sm:$0xf]
      %v1956 = vld [vmem:[%s294 + $0x80] sm:$0xf]
      %v1957 = vld [vmem:[%s294 + $0x84] sm:$0xf]
      %v1958 = vld [vmem:[%s294 + $0x88] sm:$0xf]
      %v1959 = vld [vmem:[%s294 + $0x8c] sm:$0xf]
      %v1960 = vld [vmem:[%s294 + $0x90] sm:$0xf]
      %v1961 = vld [vmem:[%s294 + $0x94] sm:$0xf]
      %v1962 = vld [vmem:[%s294 + $0x98] sm:$0x1]
      %s1963 = scalar_lea.vmem %s298, 192
      %v1964 = vld [vmem:[%s1963] sm:$0xf]
      %v1965 = vld [vmem:[%s1963 + $0x4] sm:$0xf]
      %v1966 = vld [vmem:[%s1963 + $0x8] sm:$0xf]
      %v1967 = vld [vmem:[%s1963 + $0xc] sm:$0xf]
      %v1968 = vld [vmem:[%s1963 + $0x10] sm:$0xf]
      %v1969 = vld [vmem:[%s1963 + $0x14] sm:$0xf]
      %v1970 = vld [vmem:[%s1963 + $0x18] sm:$0xf]
      %v1971 = vld [vmem:[%s1963 + $0x1c] sm:$0xf]
      %v1972 = vld [vmem:[%s1963 + $0x20] sm:$0xf]
      %v1973 = vld [vmem:[%s1963 + $0x24] sm:$0xf]
      %v1974 = vld [vmem:[%s1963 + $0x28] sm:$0xf]
      %v1975 = vld [vmem:[%s1963 + $0x2c] sm:$0xf]
      %v1976 = vld [vmem:[%s1963 + $0x30] sm:$0xf]
      %v1977 = vld [vmem:[%s1963 + $0x34] sm:$0xf]
      %v1978 = vld [vmem:[%s1963 + $0x38] sm:$0xf]
      %v1979 = vld [vmem:[%s1963 + $0x3c] sm:$0xf]
      %v2017 = vunpack.c.l.b16 %v1926
      %v2018 = vunpack.c.l.b16 %v1927
      %v2019 = vunpack.c.l.b16 %v1928
      %v2020 = vunpack.c.l.b16 %v1929
      %v2021 = vunpack.c.l.b16 %v1930
      %v2022 = vunpack.c.l.b16 %v1931
      %v2023 = vunpack.c.l.b16 %v1932
      %v2024 = vunpack.c.l.b16 %v1933
      %v2025 = vunpack.c.l.b16 %v1934
      %v2026 = vunpack.c.l.b16 %v1935
      %v2027 = vunpack.c.l.b16 %v1936
      %v2028 = vunpack.c.l.b16 %v1937
      %v2029 = vunpack.c.l.b16 %v1938
      %v2030 = vunpack.c.l.b16 %v1939
      %v2031 = vunpack.c.l.b16 %v1940
      %v2032 = vunpack.c.l.b16 %v1941
      %v2033 = vunpack.c.l.b16 %v1942
      %v2034 = vunpack.c.l.b16 %v1943
      %v2035 = vunpack.c.l.b16 %v1944
      %v2036 = vunpack.c.l.b16 %v1945
      %v2037 = vunpack.c.l.b16 %v1946
      %v2038 = vunpack.c.l.b16 %v1947
      %v2039 = vunpack.c.l.b16 %v1948
      %v2040 = vunpack.c.l.b16 %v1949
      %v2041 = vunpack.c.l.b16 %v1950
      %v2042 = vunpack.c.l.b16 %v1951
      %v2043 = vunpack.c.l.b16 %v1952
      %v2044 = vunpack.c.l.b16 %v1953
      %v2045 = vunpack.c.l.b16 %v1954
      %v2046 = vunpack.c.l.b16 %v1955
      %v2047 = vunpack.c.l.b16 %v1956
      %v2048 = vunpack.c.l.b16 %v1957
      %v2049 = vunpack.c.l.b16 %v1958
      %v2050 = vunpack.c.l.b16 %v1959
      %v2051 = vunpack.c.l.b16 %v1960
      %v2052 = vunpack.c.l.b16 %v1961
      %v2053 = vunpack.c.l.b16 %v1962
      %v2054 = vpack.c.b16 %v2018, %v2017
      %v2055 = vpack.c.b16 %v2020, %v2019
      %v2056 = vpack.c.b16 %v2022, %v2021
      %v2057 = vpack.c.b16 %v2024, %v2023
      %v2058 = vpack.c.b16 %v2026, %v2025
      %v2059 = vpack.c.b16 %v2028, %v2027
      %v2060 = vpack.c.b16 %v2030, %v2029
      %v2061 = vpack.c.b16 %v2032, %v2031
      %v2062 = vpack.c.b16 %v2034, %v2033
      %v2063 = vpack.c.b16 %v2036, %v2035
      %v2064 = vpack.c.b16 %v2038, %v2037
      %v2065 = vpack.c.b16 %v2040, %v2039
      %v2066 = vpack.c.b16 %v2042, %v2041
      %v2067 = vpack.c.b16 %v2044, %v2043
      %v2068 = vpack.c.b16 %v2046, %v2045
      %v2069 = vpack.c.b16 %v2048, %v2047
      %v2070 = vpack.c.b16 %v2050, %v2049
      %v2071 = vpack.c.b16 %v2052, %v2051
      %v2072 = vpack.c.b16 %v2053, %v2053
      %v2073 = vrot.slane %v2054, 1
      %v2074 = vrot.slane %v2055, 1
      %v2075 = vsel %vm1537, %v2073, %v2074
      %v2076 = vrot.slane %v2056, 1
      %v2077 = vsel %vm1537, %v2074, %v2076
      %v2078 = vrot.slane %v2057, 1
      %v2079 = vsel %vm1537, %v2076, %v2078
      %v2080 = vrot.slane %v2058, 1
      %v2081 = vsel %vm1537, %v2078, %v2080
      %v2082 = vrot.slane %v2059, 1
      %v2083 = vsel %vm1537, %v2080, %v2082
      %v2084 = vrot.slane %v2060, 1
      %v2085 = vsel %vm1537, %v2082, %v2084
      %v2086 = vrot.slane %v2061, 1
      %v2087 = vsel %vm1537, %v2084, %v2086
      %v2088 = vrot.slane %v2062, 1
      %v2089 = vsel %vm1537, %v2086, %v2088
      %v2090 = vrot.slane %v2063, 1
      %v2091 = vsel %vm1537, %v2088, %v2090
      %v2092 = vrot.slane %v2064, 1
      %v2093 = vsel %vm1537, %v2090, %v2092
      %v2094 = vrot.slane %v2065, 1
      %v2095 = vsel %vm1537, %v2092, %v2094
      %v2096 = vrot.slane %v2066, 1
      %v2097 = vsel %vm1537, %v2094, %v2096
      %v2098 = vrot.slane %v2067, 1
      %v2099 = vsel %vm1537, %v2096, %v2098
      %v2100 = vrot.slane %v2068, 1
      %v2101 = vsel %vm1537, %v2098, %v2100
      %v2102 = vrot.slane %v2069, 1
      %v2103 = vsel %vm1537, %v2100, %v2102
      %v2104 = vrot.slane %v2070, 1
      %v2105 = vsel %vm1537, %v2102, %v2104
      %v2106 = vrot.slane %v2071, 1
      %v2107 = vsel %vm1537, %v2104, %v2106
      %v2108 = vrot.slane %v2072, 1
      %v2109 = vsel %vm1537, %v2106, %v2108
      %v2144 = vunpack.c.l.b16 %v1964
      %v2145 = vunpack.c.l.b16 %v1965
      %v2146 = vunpack.c.l.b16 %v1966
      %v2147 = vunpack.c.l.b16 %v1967
      %v2148 = vunpack.c.l.b16 %v1968
      %v2149 = vunpack.c.l.b16 %v1969
      %v2150 = vunpack.c.l.b16 %v1970
      %v2151 = vunpack.c.l.b16 %v1971
      %v2152 = vunpack.c.l.b16 %v1972
      %v2153 = vunpack.c.l.b16 %v1973
      %v2154 = vunpack.c.l.b16 %v1974
      %v2155 = vunpack.c.l.b16 %v1975
      %v2156 = vunpack.c.l.b16 %v1976
      %v2157 = vunpack.c.l.b16 %v1977
      %v2158 = vunpack.c.l.b16 %v1978
      %v2159 = vunpack.c.l.b16 %v1979
      %v2160 = vpack.c.b16 %v2145, %v2144
      %v2161 = vpack.c.b16 %v2147, %v2146
      %v2162 = vpack.c.b16 %v2149, %v2148
      %v2163 = vpack.c.b16 %v2151, %v2150
      %v2164 = vpack.c.b16 %v2153, %v2152
      %v2165 = vpack.c.b16 %v2155, %v2154
      %v2166 = vpack.c.b16 %v2157, %v2156
      %v2167 = vpack.c.b16 %v2159, %v2158
      %2176 = vmatprep.subr.bf16.mxu0 0
      %2177 = vmatpush1.bf16.msra.mxu0 %v2167
      %2178 = vmatprep.subr.bf16.mxu0 0
      %2179 = vmatpush1.bf16.msra.mxu0 %v2166
      %2180 = vmatprep.subr.bf16.mxu0 0
      %2181 = vmatpush1.bf16.msra.mxu0 %v2165
      %2182 = vmatprep.subr.bf16.mxu0 0
      %2183 = vmatpush1.bf16.msra.mxu0 %v2164
      %2184 = vmatprep.subr.bf16.mxu0 0
      %2185 = vmatpush1.bf16.msra.mxu0 %v2163
      %2186 = vmatprep.subr.bf16.mxu0 0
      %2187 = vmatpush1.bf16.msra.mxu0 %v2162
      %2188 = vmatprep.subr.bf16.mxu0 0
      %2189 = vmatpush1.bf16.msra.mxu0 %v2161
      %2190 = vmatprep.subr.bf16.mxu0 0
      %2191 = vmatpush1.bf16.msra.mxu0 %v2160
      %2192 = vmatprep.subr.bf16.mxu0 0
      %2193 = vmatpush2.bf16.msra.mxu0 0
      %2194 = vmatprep.subr.bf16.mxu0 0
      %2195 = vmatpush2.bf16.msra.mxu0 0
      %2196 = vmatprep.subr.bf16.mxu0 0
      %2197 = vmatpush2.bf16.msra.mxu0 0
      %2198 = vmatprep.subr.bf16.mxu0 0
      %2199 = vmatpush2.bf16.msra.mxu0 0
      %2200 = vmatprep.subr.bf16.mxu0 0
      %2201 = vmatpush2.bf16.msra.mxu0 0
      %2202 = vmatprep.subr.bf16.mxu0 0
      %2203 = vmatpush2.bf16.msra.mxu0 0
      %2204 = vmatprep.subr.bf16.mxu0 0
      %2205 = vmatpush2.bf16.msra.mxu0 0
      %2206 = vmatprep.subr.bf16.mxu0 0
      %2207 = vmatpush2.bf16.msra.mxu0 0
      %2208 = vmatprep.mubr.bf16.mxu0 0
      %2209 = vmatmul.mubr.bf16.gmra.mxu0 %v2075
      %v2210 = vpop.f32.mrf.mxu0
      %v2211 = vadd.f32 0.0, %v2210
      %v2212 = vpop.f32.mrf.mxu0
      %v2213 = vpop.f32.mrf.mxu0
      %v2214 = vadd.f32 0.0, %v2213
      %v2215 = vpop.f32.mrf.mxu0
      %2216 = vmatprep.mubr.bf16.mxu0 0
      %2217 = vmatmul.mubr.bf16.gmra.mxu0 %v2077
      %v2218 = vpop.f32.mrf.mxu0
      %v2219 = vadd.f32 0.0, %v2218
      %v2220 = vpop.f32.mrf.mxu0
      %v2221 = vpop.f32.mrf.mxu0
      %v2222 = vadd.f32 0.0, %v2221
      %v2223 = vpop.f32.mrf.mxu0
      %2224 = vmatprep.mubr.bf16.mxu0 0
      %2225 = vmatmul.mubr.bf16.gmra.mxu0 %v2079
      %v2226 = vpop.f32.mrf.mxu0
      %v2227 = vadd.f32 0.0, %v2226
      %v2228 = vpop.f32.mrf.mxu0
      %v2229 = vpop.f32.mrf.mxu0
      %v2230 = vadd.f32 0.0, %v2229
      %v2231 = vpop.f32.mrf.mxu0
      %2232 = vmatprep.mubr.bf16.mxu0 0
      %2233 = vmatmul.mubr.bf16.gmra.mxu0 %v2081
      %v2234 = vpop.f32.mrf.mxu0
      %v2235 = vadd.f32 0.0, %v2234
      %v2236 = vpop.f32.mrf.mxu0
      %v2237 = vpop.f32.mrf.mxu0
      %v2238 = vadd.f32 0.0, %v2237
      %v2239 = vpop.f32.mrf.mxu0
      %2240 = vmatprep.mubr.bf16.mxu0 0
      %2241 = vmatmul.mubr.bf16.gmra.mxu0 %v2083
      %v2242 = vpop.f32.mrf.mxu0
      %v2243 = vadd.f32 0.0, %v2242
      %v2244 = vpop.f32.mrf.mxu0
      %v2245 = vpop.f32.mrf.mxu0
      %v2246 = vadd.f32 0.0, %v2245
      %v2247 = vpop.f32.mrf.mxu0
      %2248 = vmatprep.mubr.bf16.mxu0 0
      %2249 = vmatmul.mubr.bf16.gmra.mxu0 %v2085
      %v2250 = vpop.f32.mrf.mxu0
      %v2251 = vadd.f32 0.0, %v2250
      %v2252 = vpop.f32.mrf.mxu0
      %v2253 = vpop.f32.mrf.mxu0
      %v2254 = vadd.f32 0.0, %v2253
      %v2255 = vpop.f32.mrf.mxu0
      %2256 = vmatprep.mubr.bf16.mxu0 0
      %2257 = vmatmul.mubr.bf16.gmra.mxu0 %v2087
      %v2258 = vpop.f32.mrf.mxu0
      %v2259 = vadd.f32 0.0, %v2258
      %v2260 = vpop.f32.mrf.mxu0
      %v2261 = vpop.f32.mrf.mxu0
      %v2262 = vadd.f32 0.0, %v2261
      %v2263 = vpop.f32.mrf.mxu0
      %2264 = vmatprep.mubr.bf16.mxu0 0
      %2265 = vmatmul.mubr.bf16.gmra.mxu0 %v2089
      %v2266 = vpop.f32.mrf.mxu0
      %v2267 = vadd.f32 0.0, %v2266
      %v2268 = vpop.f32.mrf.mxu0
      %v2269 = vpop.f32.mrf.mxu0
      %v2270 = vadd.f32 0.0, %v2269
      %v2271 = vpop.f32.mrf.mxu0
      %2272 = vmatprep.mubr.bf16.mxu0 0
      %2273 = vmatmul.mubr.bf16.gmra.mxu0 %v2091
      %v2274 = vpop.f32.mrf.mxu0
      %v2275 = vadd.f32 0.0, %v2274
      %v2276 = vpop.f32.mrf.mxu0
      %v2277 = vpop.f32.mrf.mxu0
      %v2278 = vadd.f32 0.0, %v2277
      %v2279 = vpop.f32.mrf.mxu0
      %2280 = vmatprep.mubr.bf16.mxu0 0
      %2281 = vmatmul.mubr.bf16.gmra.mxu0 %v2093
      %v2282 = vpop.f32.mrf.mxu0
      %v2283 = vadd.f32 0.0, %v2282
      %v2284 = vpop.f32.mrf.mxu0
      %v2285 = vpop.f32.mrf.mxu0
      %v2286 = vadd.f32 0.0, %v2285
      %v2287 = vpop.f32.mrf.mxu0
      %2288 = vmatprep.mubr.bf16.mxu0 0
      %2289 = vmatmul.mubr.bf16.gmra.mxu0 %v2095
      %v2290 = vpop.f32.mrf.mxu0
      %v2291 = vadd.f32 0.0, %v2290
      %v2292 = vpop.f32.mrf.mxu0
      %v2293 = vpop.f32.mrf.mxu0
      %v2294 = vadd.f32 0.0, %v2293
      %v2295 = vpop.f32.mrf.mxu0
      %2296 = vmatprep.mubr.bf16.mxu0 0
      %2297 = vmatmul.mubr.bf16.gmra.mxu0 %v2097
      %v2298 = vpop.f32.mrf.mxu0
      %v2299 = vadd.f32 0.0, %v2298
      %v2300 = vpop.f32.mrf.mxu0
      %v2301 = vpop.f32.mrf.mxu0
      %v2302 = vadd.f32 0.0, %v2301
      %v2303 = vpop.f32.mrf.mxu0
      %2304 = vmatprep.mubr.bf16.mxu0 0
      %2305 = vmatmul.mubr.bf16.gmra.mxu0 %v2099
      %v2306 = vpop.f32.mrf.mxu0
      %v2307 = vadd.f32 0.0, %v2306
      %v2308 = vpop.f32.mrf.mxu0
      %v2309 = vpop.f32.mrf.mxu0
      %v2310 = vadd.f32 0.0, %v2309
      %v2311 = vpop.f32.mrf.mxu0
      %2312 = vmatprep.mubr.bf16.mxu0 0
      %2313 = vmatmul.mubr.bf16.gmra.mxu0 %v2101
      %v2314 = vpop.f32.mrf.mxu0
      %v2315 = vadd.f32 0.0, %v2314
      %v2316 = vpop.f32.mrf.mxu0
      %v2317 = vpop.f32.mrf.mxu0
      %v2318 = vadd.f32 0.0, %v2317
      %v2319 = vpop.f32.mrf.mxu0
      %2320 = vmatprep.mubr.bf16.mxu0 0
      %2321 = vmatmul.mubr.bf16.gmra.mxu0 %v2103
      %v2322 = vpop.f32.mrf.mxu0
      %v2323 = vadd.f32 0.0, %v2322
      %v2324 = vpop.f32.mrf.mxu0
      %v2325 = vpop.f32.mrf.mxu0
      %v2326 = vadd.f32 0.0, %v2325
      %v2327 = vpop.f32.mrf.mxu0
      %2328 = vmatprep.mubr.bf16.mxu0 0
      %2329 = vmatmul.mubr.bf16.gmra.mxu0 %v2105
      %v2330 = vpop.f32.mrf.mxu0
      %v2331 = vadd.f32 0.0, %v2330
      %v2332 = vpop.f32.mrf.mxu0
      %v2333 = vpop.f32.mrf.mxu0
      %v2334 = vadd.f32 0.0, %v2333
      %v2335 = vpop.f32.mrf.mxu0
      %2336 = vmatprep.mubr.bf16.mxu0 0
      %2337 = vmatmul.mubr.bf16.gmra.mxu0 %v2107
      %v2338 = vpop.f32.mrf.mxu0
      %v2339 = vadd.f32 0.0, %v2338
      %v2340 = vpop.f32.mrf.mxu0
      %v2341 = vpop.f32.mrf.mxu0
      %v2342 = vadd.f32 0.0, %v2341
      %v2343 = vpop.f32.mrf.mxu0
      %2344 = vmatprep.mubr.bf16.mxu0 0
      %2345 = vmatmul.mubr.bf16.gmra.mxu0 %v2109
      %v2346 = vpop.f32.mrf.mxu0
      %v2347 = vadd.f32 0.0, %v2346
      %v2348 = vpop.f32.mrf.mxu0
      %v2349 = vpop.f32.mrf.mxu0
      %v2350 = vadd.f32 0.0, %v2349
      %v2351 = vpop.f32.mrf.mxu0
      %2352 = vdwg.mxu0
      %v2353 = vld [vmem:[#allocation2] sm:$0xff]
      %v2354 = vld [vmem:[#allocation2 + $0x8] sm:$0xff]
      %v2355 = vld [vmem:[#allocation2 + $0x10] sm:$0xff]
      %v2356 = vld [vmem:[#allocation2 + $0x18] sm:$0xff]
      %v2357 = vld [vmem:[#allocation2 + $0x20] sm:$0xff]
      %v2358 = vld [vmem:[#allocation2 + $0x28] sm:$0xff]
      %v2359 = vld [vmem:[#allocation2 + $0x30] sm:$0xff]
      %v2360 = vld [vmem:[#allocation2 + $0x38] sm:$0xff]
      %v2361 = vld [vmem:[#allocation2 + $0x40] sm:$0xff]
      %v2362 = vld [vmem:[#allocation2 + $0x48] sm:$0xff]
      %v2363 = vld [vmem:[#allocation2 + $0x50] sm:$0xff]
      %v2364 = vld [vmem:[#allocation2 + $0x58] sm:$0xff]
      %v2365 = vld [vmem:[#allocation2 + $0x60] sm:$0xff]
      %v2366 = vld [vmem:[#allocation2 + $0x68] sm:$0xff]
      %v2367 = vld [vmem:[#allocation2 + $0x70] sm:$0xff]
      %v2368 = vld [vmem:[#allocation2 + $0x78] sm:$0xff]
      %v2369 = vld [vmem:[#allocation2 + $0x80] sm:$0xff]
      %v2370 = vld [vmem:[#allocation2 + $0x88] sm:$0xff]
      %v2371 = vld [vmem:[#allocation2 + $0x90] sm:$0xff]
      %v2372 = vld [vmem:[#allocation2 + $0x98] sm:$0xff]
      %v2373 = vld [vmem:[#allocation2 + $0xa0] sm:$0xff]
      %v2374 = vld [vmem:[#allocation2 + $0xa8] sm:$0xff]
      %v2375 = vld [vmem:[#allocation2 + $0xb0] sm:$0xff]
      %v2376 = vld [vmem:[#allocation2 + $0xb8] sm:$0xff]
      %v2377 = vld [vmem:[#allocation2 + $0xc0] sm:$0xff]
      %v2378 = vld [vmem:[#allocation2 + $0xc8] sm:$0xff]
      %v2379 = vld [vmem:[#allocation2 + $0xd0] sm:$0xff]
      %v2380 = vld [vmem:[#allocation2 + $0xd8] sm:$0xff]
      %v2381 = vld [vmem:[#allocation2 + $0xe0] sm:$0xff]
      %v2382 = vld [vmem:[#allocation2 + $0xe8] sm:$0xff]
      %v2383 = vld [vmem:[#allocation2 + $0xf0] sm:$0xff]
      %v2384 = vld [vmem:[#allocation2 + $0xf8] sm:$0xff]
      %v2385 = vld [vmem:[#allocation2 + $0x100] sm:$0xff]
      %v2386 = vld [vmem:[#allocation2 + $0x108] sm:$0xff]
      %v2387 = vld [vmem:[#allocation2 + $0x110] sm:$0xff]
      %v2388 = vld [vmem:[#allocation2 + $0x118] sm:$0xff]
      %v2389 = vadd.f32 %v2353, %v2211
      %v2390 = vadd.f32 %v2354, %v2214
      %v2391 = vadd.f32 %v2355, %v2219
      %v2392 = vadd.f32 %v2356, %v2222
      %v2393 = vadd.f32 %v2357, %v2227
      %v2394 = vadd.f32 %v2358, %v2230
      %v2395 = vadd.f32 %v2359, %v2235
      %v2396 = vadd.f32 %v2360, %v2238
      %v2397 = vadd.f32 %v2361, %v2243
      %v2398 = vadd.f32 %v2362, %v2246
      %v2399 = vadd.f32 %v2363, %v2251
      %v2400 = vadd.f32 %v2364, %v2254
      %v2401 = vadd.f32 %v2365, %v2259
      %v2402 = vadd.f32 %v2366, %v2262
      %v2403 = vadd.f32 %v2367, %v2267
      %v2404 = vadd.f32 %v2368, %v2270
      %v2405 = vadd.f32 %v2369, %v2275
      %v2406 = vadd.f32 %v2370, %v2278
      %v2407 = vadd.f32 %v2371, %v2283
      %v2408 = vadd.f32 %v2372, %v2286
      %v2409 = vadd.f32 %v2373, %v2291
      %v2410 = vadd.f32 %v2374, %v2294
      %v2411 = vadd.f32 %v2375, %v2299
      %v2412 = vadd.f32 %v2376, %v2302
      %v2413 = vadd.f32 %v2377, %v2307
      %v2414 = vadd.f32 %v2378, %v2310
      %v2415 = vadd.f32 %v2379, %v2315
      %v2416 = vadd.f32 %v2380, %v2318
      %v2417 = vadd.f32 %v2381, %v2323
      %v2418 = vadd.f32 %v2382, %v2326
      %v2419 = vadd.f32 %v2383, %v2331
      %v2420 = vadd.f32 %v2384, %v2334
      %v2421 = vadd.f32 %v2385, %v2339
      %v2422 = vadd.f32 %v2386, %v2342
      %v2423 = vadd.f32 %v2387, %v2347
      %v2424 = vadd.f32 %v2388, %v2350
      %2425 = vst [vmem:[#allocation2] sm:$0xff] %v2389
      %2426 = vst [vmem:[#allocation2 + $0x8] sm:$0xff] %v2390
      %2427 = vst [vmem:[#allocation2 + $0x10] sm:$0xff] %v2391
      %2428 = vst [vmem:[#allocation2 + $0x18] sm:$0xff] %v2392
      %2429 = vst [vmem:[#allocation2 + $0x20] sm:$0xff] %v2393
      %2430 = vst [vmem:[#allocation2 + $0x28] sm:$0xff] %v2394
      %2431 = vst [vmem:[#allocation2 + $0x30] sm:$0xff] %v2395
      %2432 = vst [vmem:[#allocation2 + $0x38] sm:$0xff] %v2396
      %2433 = vst [vmem:[#allocation2 + $0x40] sm:$0xff] %v2397
      %2434 = vst [vmem:[#allocation2 + $0x48] sm:$0xff] %v2398
      %2435 = vst [vmem:[#allocation2 + $0x50] sm:$0xff] %v2399
      %2436 = vst [vmem:[#allocation2 + $0x58] sm:$0xff] %v2400
      %2437 = vst [vmem:[#allocation2 + $0x60] sm:$0xff] %v2401
      %2438 = vst [vmem:[#allocation2 + $0x68] sm:$0xff] %v2402
      %2439 = vst [vmem:[#allocation2 + $0x70] sm:$0xff] %v2403
      %2440 = vst [vmem:[#allocation2 + $0x78] sm:$0xff] %v2404
      %2441 = vst [vmem:[#allocation2 + $0x80] sm:$0xff] %v2405
      %2442 = vst [vmem:[#allocation2 + $0x88] sm:$0xff] %v2406
      %2443 = vst [vmem:[#allocation2 + $0x90] sm:$0xff] %v2407
      %2444 = vst [vmem:[#allocation2 + $0x98] sm:$0xff] %v2408
      %2445 = vst [vmem:[#allocation2 + $0xa0] sm:$0xff] %v2409
      %2446 = vst [vmem:[#allocation2 + $0xa8] sm:$0xff] %v2410
      %2447 = vst [vmem:[#allocation2 + $0xb0] sm:$0xff] %v2411
      %2448 = vst [vmem:[#allocation2 + $0xb8] sm:$0xff] %v2412
      %2449 = vst [vmem:[#allocation2 + $0xc0] sm:$0xff] %v2413
      %2450 = vst [vmem:[#allocation2 + $0xc8] sm:$0xff] %v2414
      %2451 = vst [vmem:[#allocation2 + $0xd0] sm:$0xff] %v2415
      %2452 = vst [vmem:[#allocation2 + $0xd8] sm:$0xff] %v2416
      %2453 = vst [vmem:[#allocation2 + $0xe0] sm:$0xff] %v2417
      %2454 = vst [vmem:[#allocation2 + $0xe8] sm:$0xff] %v2418
      %2455 = vst [vmem:[#allocation2 + $0xf0] sm:$0xff] %v2419
      %2456 = vst [vmem:[#allocation2 + $0xf8] sm:$0xff] %v2420
      %2457 = vst [vmem:[#allocation2 + $0x100] sm:$0xff] %v2421
      %2458 = vst [vmem:[#allocation2 + $0x108] sm:$0xff] %v2422
      %2459 = vst [vmem:[#allocation2 + $0x110] sm:$0xff] %v2423
      %2460 = vst [vmem:[#allocation2 + $0x118] sm:$0xff] %v2424
      %v2461 = vld [vmem:[%s294 + $0x8] sm:$0xe]
      %v2462 = vld [vmem:[%s294 + $0xc] sm:$0xf]
      %v2463 = vld [vmem:[%s294 + $0x10] sm:$0xf]
      %v2464 = vld [vmem:[%s294 + $0x14] sm:$0xf]
      %v2465 = vld [vmem:[%s294 + $0x18] sm:$0xf]
      %v2466 = vld [vmem:[%s294 + $0x1c] sm:$0xf]
      %v2467 = vld [vmem:[%s294 + $0x20] sm:$0xf]
      %v2468 = vld [vmem:[%s294 + $0x24] sm:$0xf]
      %v2469 = vld [vmem:[%s294 + $0x28] sm:$0xf]
      %v2470 = vld [vmem:[%s294 + $0x2c] sm:$0xf]
      %v2471 = vld [vmem:[%s294 + $0x30] sm:$0xf]
      %v2472 = vld [vmem:[%s294 + $0x34] sm:$0xf]
      %v2473 = vld [vmem:[%s294 + $0x38] sm:$0xf]
      %v2474 = vld [vmem:[%s294 + $0x3c] sm:$0xf]
      %v2475 = vld [vmem:[%s294 + $0x40] sm:$0xf]
      %v2476 = vld [vmem:[%s294 + $0x44] sm:$0xf]
      %v2477 = vld [vmem:[%s294 + $0x48] sm:$0xf]
      %v2478 = vld [vmem:[%s294 + $0x4c] sm:$0xf]
      %v2479 = vld [vmem:[%s294 + $0x50] sm:$0xf]
      %v2480 = vld [vmem:[%s294 + $0x54] sm:$0xf]
      %v2481 = vld [vmem:[%s294 + $0x58] sm:$0xf]
      %v2482 = vld [vmem:[%s294 + $0x5c] sm:$0xf]
      %v2483 = vld [vmem:[%s294 + $0x60] sm:$0xf]
      %v2484 = vld [vmem:[%s294 + $0x64] sm:$0xf]
      %v2485 = vld [vmem:[%s294 + $0x68] sm:$0xf]
      %v2486 = vld [vmem:[%s294 + $0x6c] sm:$0xf]
      %v2487 = vld [vmem:[%s294 + $0x70] sm:$0xf]
      %v2488 = vld [vmem:[%s294 + $0x74] sm:$0xf]
      %v2489 = vld [vmem:[%s294 + $0x78] sm:$0xf]
      %v2490 = vld [vmem:[%s294 + $0x7c] sm:$0xf]
      %v2491 = vld [vmem:[%s294 + $0x80] sm:$0xf]
      %v2492 = vld [vmem:[%s294 + $0x84] sm:$0xf]
      %v2493 = vld [vmem:[%s294 + $0x88] sm:$0xf]
      %v2494 = vld [vmem:[%s294 + $0x8c] sm:$0xf]
      %v2495 = vld [vmem:[%s294 + $0x90] sm:$0xf]
      %v2496 = vld [vmem:[%s294 + $0x94] sm:$0xf]
      %v2497 = vld [vmem:[%s294 + $0x98] sm:$0x3]
      %s2498 = scalar_lea.vmem %s298, 256
      %v2499 = vld [vmem:[%s2498] sm:$0xf]
      %v2500 = vld [vmem:[%s2498 + $0x4] sm:$0xf]
      %v2501 = vld [vmem:[%s2498 + $0x8] sm:$0xf]
      %v2502 = vld [vmem:[%s2498 + $0xc] sm:$0xf]
      %v2503 = vld [vmem:[%s2498 + $0x10] sm:$0xf]
      %v2504 = vld [vmem:[%s2498 + $0x14] sm:$0xf]
      %v2505 = vld [vmem:[%s2498 + $0x18] sm:$0xf]
      %v2506 = vld [vmem:[%s2498 + $0x1c] sm:$0xf]
      %v2507 = vld [vmem:[%s2498 + $0x20] sm:$0xf]
      %v2508 = vld [vmem:[%s2498 + $0x24] sm:$0xf]
      %v2509 = vld [vmem:[%s2498 + $0x28] sm:$0xf]
      %v2510 = vld [vmem:[%s2498 + $0x2c] sm:$0xf]
      %v2511 = vld [vmem:[%s2498 + $0x30] sm:$0xf]
      %v2512 = vld [vmem:[%s2498 + $0x34] sm:$0xf]
      %v2513 = vld [vmem:[%s2498 + $0x38] sm:$0xf]
      %v2514 = vld [vmem:[%s2498 + $0x3c] sm:$0xf]
      %v2552 = vunpack.c.l.b16 %v2461
      %v2553 = vunpack.c.l.b16 %v2462
      %v2554 = vunpack.c.l.b16 %v2463
      %v2555 = vunpack.c.l.b16 %v2464
      %v2556 = vunpack.c.l.b16 %v2465
      %v2557 = vunpack.c.l.b16 %v2466
      %v2558 = vunpack.c.l.b16 %v2467
      %v2559 = vunpack.c.l.b16 %v2468
      %v2560 = vunpack.c.l.b16 %v2469
      %v2561 = vunpack.c.l.b16 %v2470
      %v2562 = vunpack.c.l.b16 %v2471
      %v2563 = vunpack.c.l.b16 %v2472
      %v2564 = vunpack.c.l.b16 %v2473
      %v2565 = vunpack.c.l.b16 %v2474
      %v2566 = vunpack.c.l.b16 %v2475
      %v2567 = vunpack.c.l.b16 %v2476
      %v2568 = vunpack.c.l.b16 %v2477
      %v2569 = vunpack.c.l.b16 %v2478
      %v2570 = vunpack.c.l.b16 %v2479
      %v2571 = vunpack.c.l.b16 %v2480
      %v2572 = vunpack.c.l.b16 %v2481
      %v2573 = vunpack.c.l.b16 %v2482
      %v2574 = vunpack.c.l.b16 %v2483
      %v2575 = vunpack.c.l.b16 %v2484
      %v2576 = vunpack.c.l.b16 %v2485
      %v2577 = vunpack.c.l.b16 %v2486
      %v2578 = vunpack.c.l.b16 %v2487
      %v2579 = vunpack.c.l.b16 %v2488
      %v2580 = vunpack.c.l.b16 %v2489
      %v2581 = vunpack.c.l.b16 %v2490
      %v2582 = vunpack.c.l.b16 %v2491
      %v2583 = vunpack.c.l.b16 %v2492
      %v2584 = vunpack.c.l.b16 %v2493
      %v2585 = vunpack.c.l.b16 %v2494
      %v2586 = vunpack.c.l.b16 %v2495
      %v2587 = vunpack.c.l.b16 %v2496
      %v2588 = vunpack.c.l.b16 %v2497
      %v2589 = vpack.c.b16 %v2553, %v2552
      %v2590 = vpack.c.b16 %v2555, %v2554
      %v2591 = vpack.c.b16 %v2557, %v2556
      %v2592 = vpack.c.b16 %v2559, %v2558
      %v2593 = vpack.c.b16 %v2561, %v2560
      %v2594 = vpack.c.b16 %v2563, %v2562
      %v2595 = vpack.c.b16 %v2565, %v2564
      %v2596 = vpack.c.b16 %v2567, %v2566
      %v2597 = vpack.c.b16 %v2569, %v2568
      %v2598 = vpack.c.b16 %v2571, %v2570
      %v2599 = vpack.c.b16 %v2573, %v2572
      %v2600 = vpack.c.b16 %v2575, %v2574
      %v2601 = vpack.c.b16 %v2577, %v2576
      %v2602 = vpack.c.b16 %v2579, %v2578
      %v2603 = vpack.c.b16 %v2581, %v2580
      %v2604 = vpack.c.b16 %v2583, %v2582
      %v2605 = vpack.c.b16 %v2585, %v2584
      %v2606 = vpack.c.b16 %v2587, %v2586
      %v2607 = vpack.c.b16 %v2588, %v2588
      %vm2608 = vsmask.f32 6400
      %v2610 = vshrl.u32 %v2589, 16
      %v2612 = vrot.slane %v2610, 1
      %v2613 = vshll.u32 %v2589, 16
      %v2615 = vrot.slane %v2613, 2
      %v2616 = vor.u32 %v2612, %v2615
      %v2618 = vshrl.u32 %v2590, 16
      %v2620 = vrot.slane %v2618, 1
      %v2621 = vshll.u32 %v2590, 16
      %v2623 = vrot.slane %v2621, 2
      %v2624 = vor.u32 %v2620, %v2623
      %v2625 = vsel %vm2608, %v2616, %v2624
      %v2627 = vshrl.u32 %v2591, 16
      %v2629 = vrot.slane %v2627, 1
      %v2630 = vshll.u32 %v2591, 16
      %v2632 = vrot.slane %v2630, 2
      %v2633 = vor.u32 %v2629, %v2632
      %v2634 = vsel %vm2608, %v2624, %v2633
      %v2636 = vshrl.u32 %v2592, 16
      %v2638 = vrot.slane %v2636, 1
      %v2639 = vshll.u32 %v2592, 16
      %v2641 = vrot.slane %v2639, 2
      %v2642 = vor.u32 %v2638, %v2641
      %v2643 = vsel %vm2608, %v2633, %v2642
      %v2645 = vshrl.u32 %v2593, 16
      %v2647 = vrot.slane %v2645, 1
      %v2648 = vshll.u32 %v2593, 16
      %v2650 = vrot.slane %v2648, 2
      %v2651 = vor.u32 %v2647, %v2650
      %v2652 = vsel %vm2608, %v2642, %v2651
      %v2654 = vshrl.u32 %v2594, 16
      %v2656 = vrot.slane %v2654, 1
      %v2657 = vshll.u32 %v2594, 16
      %v2659 = vrot.slane %v2657, 2
      %v2660 = vor.u32 %v2656, %v2659
      %v2661 = vsel %vm2608, %v2651, %v2660
      %v2663 = vshrl.u32 %v2595, 16
      %v2665 = vrot.slane %v2663, 1
      %v2666 = vshll.u32 %v2595, 16
      %v2668 = vrot.slane %v2666, 2
      %v2669 = vor.u32 %v2665, %v2668
      %v2670 = vsel %vm2608, %v2660, %v2669
      %v2672 = vshrl.u32 %v2596, 16
      %v2674 = vrot.slane %v2672, 1
      %v2675 = vshll.u32 %v2596, 16
      %v2677 = vrot.slane %v2675, 2
      %v2678 = vor.u32 %v2674, %v2677
      %v2679 = vsel %vm2608, %v2669, %v2678
      %v2681 = vshrl.u32 %v2597, 16
      %v2683 = vrot.slane %v2681, 1
      %v2684 = vshll.u32 %v2597, 16
      %v2686 = vrot.slane %v2684, 2
      %v2687 = vor.u32 %v2683, %v2686
      %v2688 = vsel %vm2608, %v2678, %v2687
      %v2690 = vshrl.u32 %v2598, 16
      %v2692 = vrot.slane %v2690, 1
      %v2693 = vshll.u32 %v2598, 16
      %v2695 = vrot.slane %v2693, 2
      %v2696 = vor.u32 %v2692, %v2695
      %v2697 = vsel %vm2608, %v2687, %v2696
      %v2699 = vshrl.u32 %v2599, 16
      %v2701 = vrot.slane %v2699, 1
      %v2702 = vshll.u32 %v2599, 16
      %v2704 = vrot.slane %v2702, 2
      %v2705 = vor.u32 %v2701, %v2704
      %v2706 = vsel %vm2608, %v2696, %v2705
      %v2708 = vshrl.u32 %v2600, 16
      %v2710 = vrot.slane %v2708, 1
      %v2711 = vshll.u32 %v2600, 16
      %v2713 = vrot.slane %v2711, 2
      %v2714 = vor.u32 %v2710, %v2713
      %v2715 = vsel %vm2608, %v2705, %v2714
      %v2717 = vshrl.u32 %v2601, 16
      %v2719 = vrot.slane %v2717, 1
      %v2720 = vshll.u32 %v2601, 16
      %v2722 = vrot.slane %v2720, 2
      %v2723 = vor.u32 %v2719, %v2722
      %v2724 = vsel %vm2608, %v2714, %v2723
      %v2726 = vshrl.u32 %v2602, 16
      %v2728 = vrot.slane %v2726, 1
      %v2729 = vshll.u32 %v2602, 16
      %v2731 = vrot.slane %v2729, 2
      %v2732 = vor.u32 %v2728, %v2731
      %v2733 = vsel %vm2608, %v2723, %v2732
      %v2735 = vshrl.u32 %v2603, 16
      %v2737 = vrot.slane %v2735, 1
      %v2738 = vshll.u32 %v2603, 16
      %v2740 = vrot.slane %v2738, 2
      %v2741 = vor.u32 %v2737, %v2740
      %v2742 = vsel %vm2608, %v2732, %v2741
      %v2744 = vshrl.u32 %v2604, 16
      %v2746 = vrot.slane %v2744, 1
      %v2747 = vshll.u32 %v2604, 16
      %v2749 = vrot.slane %v2747, 2
      %v2750 = vor.u32 %v2746, %v2749
      %v2751 = vsel %vm2608, %v2741, %v2750
      %v2753 = vshrl.u32 %v2605, 16
      %v2755 = vrot.slane %v2753, 1
      %v2756 = vshll.u32 %v2605, 16
      %v2758 = vrot.slane %v2756, 2
      %v2759 = vor.u32 %v2755, %v2758
      %v2760 = vsel %vm2608, %v2750, %v2759
      %v2762 = vshrl.u32 %v2606, 16
      %v2764 = vrot.slane %v2762, 1
      %v2765 = vshll.u32 %v2606, 16
      %v2767 = vrot.slane %v2765, 2
      %v2768 = vor.u32 %v2764, %v2767
      %v2769 = vsel %vm2608, %v2759, %v2768
      %v2771 = vshrl.u32 %v2607, 16
      %v2773 = vrot.slane %v2771, 1
      %v2774 = vshll.u32 %v2607, 16
      %v2776 = vrot.slane %v2774, 2
      %v2777 = vor.u32 %v2773, %v2776
      %v2778 = vsel %vm2608, %v2768, %v2777
      %v2813 = vunpack.c.l.b16 %v2499
      %v2814 = vunpack.c.l.b16 %v2500
      %v2815 = vunpack.c.l.b16 %v2501
      %v2816 = vunpack.c.l.b16 %v2502
      %v2817 = vunpack.c.l.b16 %v2503
      %v2818 = vunpack.c.l.b16 %v2504
      %v2819 = vunpack.c.l.b16 %v2505
      %v2820 = vunpack.c.l.b16 %v2506
      %v2821 = vunpack.c.l.b16 %v2507
      %v2822 = vunpack.c.l.b16 %v2508
      %v2823 = vunpack.c.l.b16 %v2509
      %v2824 = vunpack.c.l.b16 %v2510
      %v2825 = vunpack.c.l.b16 %v2511
      %v2826 = vunpack.c.l.b16 %v2512
      %v2827 = vunpack.c.l.b16 %v2513
      %v2828 = vunpack.c.l.b16 %v2514
      %v2829 = vpack.c.b16 %v2814, %v2813
      %v2830 = vpack.c.b16 %v2816, %v2815
      %v2831 = vpack.c.b16 %v2818, %v2817
      %v2832 = vpack.c.b16 %v2820, %v2819
      %v2833 = vpack.c.b16 %v2822, %v2821
      %v2834 = vpack.c.b16 %v2824, %v2823
      %v2835 = vpack.c.b16 %v2826, %v2825
      %v2836 = vpack.c.b16 %v2828, %v2827
      %2845 = vmatprep.subr.bf16.mxu0 0
      %2846 = vmatpush1.bf16.msra.mxu0 %v2836
      %2847 = vmatprep.subr.bf16.mxu0 0
      %2848 = vmatpush1.bf16.msra.mxu0 %v2835
      %2849 = vmatprep.subr.bf16.mxu0 0
      %2850 = vmatpush1.bf16.msra.mxu0 %v2834
      %2851 = vmatprep.subr.bf16.mxu0 0
      %2852 = vmatpush1.bf16.msra.mxu0 %v2833
      %2853 = vmatprep.subr.bf16.mxu0 0
      %2854 = vmatpush1.bf16.msra.mxu0 %v2832
      %2855 = vmatprep.subr.bf16.mxu0 0
      %2856 = vmatpush1.bf16.msra.mxu0 %v2831
      %2857 = vmatprep.subr.bf16.mxu0 0
      %2858 = vmatpush1.bf16.msra.mxu0 %v2830
      %2859 = vmatprep.subr.bf16.mxu0 0
      %2860 = vmatpush1.bf16.msra.mxu0 %v2829
      %2861 = vmatprep.subr.bf16.mxu0 0
      %2862 = vmatpush2.bf16.msra.mxu0 0
      %2863 = vmatprep.subr.bf16.mxu0 0
      %2864 = vmatpush2.bf16.msra.mxu0 0
      %2865 = vmatprep.subr.bf16.mxu0 0
      %2866 = vmatpush2.bf16.msra.mxu0 0
      %2867 = vmatprep.subr.bf16.mxu0 0
      %2868 = vmatpush2.bf16.msra.mxu0 0
      %2869 = vmatprep.subr.bf16.mxu0 0
      %2870 = vmatpush2.bf16.msra.mxu0 0
      %2871 = vmatprep.subr.bf16.mxu0 0
      %2872 = vmatpush2.bf16.msra.mxu0 0
      %2873 = vmatprep.subr.bf16.mxu0 0
      %2874 = vmatpush2.bf16.msra.mxu0 0
      %2875 = vmatprep.subr.bf16.mxu0 0
      %2876 = vmatpush2.bf16.msra.mxu0 0
      %2877 = vmatprep.mubr.bf16.mxu0 0
      %2878 = vmatmul.mubr.bf16.gmra.mxu0 %v2625
      %v2879 = vpop.f32.mrf.mxu0
      %v2880 = vadd.f32 0.0, %v2879
      %v2881 = vpop.f32.mrf.mxu0
      %v2882 = vpop.f32.mrf.mxu0
      %v2883 = vadd.f32 0.0, %v2882
      %v2884 = vpop.f32.mrf.mxu0
      %2885 = vmatprep.mubr.bf16.mxu0 0
      %2886 = vmatmul.mubr.bf16.gmra.mxu0 %v2634
      %v2887 = vpop.f32.mrf.mxu0
      %v2888 = vadd.f32 0.0, %v2887
      %v2889 = vpop.f32.mrf.mxu0
      %v2890 = vpop.f32.mrf.mxu0
      %v2891 = vadd.f32 0.0, %v2890
      %v2892 = vpop.f32.mrf.mxu0
      %2893 = vmatprep.mubr.bf16.mxu0 0
      %2894 = vmatmul.mubr.bf16.gmra.mxu0 %v2643
      %v2895 = vpop.f32.mrf.mxu0
      %v2896 = vadd.f32 0.0, %v2895
      %v2897 = vpop.f32.mrf.mxu0
      %v2898 = vpop.f32.mrf.mxu0
      %v2899 = vadd.f32 0.0, %v2898
      %v2900 = vpop.f32.mrf.mxu0
      %2901 = vmatprep.mubr.bf16.mxu0 0
      %2902 = vmatmul.mubr.bf16.gmra.mxu0 %v2652
      %v2903 = vpop.f32.mrf.mxu0
      %v2904 = vadd.f32 0.0, %v2903
      %v2905 = vpop.f32.mrf.mxu0
      %v2906 = vpop.f32.mrf.mxu0
      %v2907 = vadd.f32 0.0, %v2906
      %v2908 = vpop.f32.mrf.mxu0
      %2909 = vmatprep.mubr.bf16.mxu0 0
      %2910 = vmatmul.mubr.bf16.gmra.mxu0 %v2661
      %v2911 = vpop.f32.mrf.mxu0
      %v2912 = vadd.f32 0.0, %v2911
      %v2913 = vpop.f32.mrf.mxu0
      %v2914 = vpop.f32.mrf.mxu0
      %v2915 = vadd.f32 0.0, %v2914
      %v2916 = vpop.f32.mrf.mxu0
      %2917 = vmatprep.mubr.bf16.mxu0 0
      %2918 = vmatmul.mubr.bf16.gmra.mxu0 %v2670
      %v2919 = vpop.f32.mrf.mxu0
      %v2920 = vadd.f32 0.0, %v2919
      %v2921 = vpop.f32.mrf.mxu0
      %v2922 = vpop.f32.mrf.mxu0
      %v2923 = vadd.f32 0.0, %v2922
      %v2924 = vpop.f32.mrf.mxu0
      %2925 = vmatprep.mubr.bf16.mxu0 0
      %2926 = vmatmul.mubr.bf16.gmra.mxu0 %v2679
      %v2927 = vpop.f32.mrf.mxu0
      %v2928 = vadd.f32 0.0, %v2927
      %v2929 = vpop.f32.mrf.mxu0
      %v2930 = vpop.f32.mrf.mxu0
      %v2931 = vadd.f32 0.0, %v2930
      %v2932 = vpop.f32.mrf.mxu0
      %2933 = vmatprep.mubr.bf16.mxu0 0
      %2934 = vmatmul.mubr.bf16.gmra.mxu0 %v2688
      %v2935 = vpop.f32.mrf.mxu0
      %v2936 = vadd.f32 0.0, %v2935
      %v2937 = vpop.f32.mrf.mxu0
      %v2938 = vpop.f32.mrf.mxu0
      %v2939 = vadd.f32 0.0, %v2938
      %v2940 = vpop.f32.mrf.mxu0
      %2941 = vmatprep.mubr.bf16.mxu0 0
      %2942 = vmatmul.mubr.bf16.gmra.mxu0 %v2697
      %v2943 = vpop.f32.mrf.mxu0
      %v2944 = vadd.f32 0.0, %v2943
      %v2945 = vpop.f32.mrf.mxu0
      %v2946 = vpop.f32.mrf.mxu0
      %v2947 = vadd.f32 0.0, %v2946
      %v2948 = vpop.f32.mrf.mxu0
      %2949 = vmatprep.mubr.bf16.mxu0 0
      %2950 = vmatmul.mubr.bf16.gmra.mxu0 %v2706
      %v2951 = vpop.f32.mrf.mxu0
      %v2952 = vadd.f32 0.0, %v2951
      %v2953 = vpop.f32.mrf.mxu0
      %v2954 = vpop.f32.mrf.mxu0
      %v2955 = vadd.f32 0.0, %v2954
      %v2956 = vpop.f32.mrf.mxu0
      %2957 = vmatprep.mubr.bf16.mxu0 0
      %2958 = vmatmul.mubr.bf16.gmra.mxu0 %v2715
      %v2959 = vpop.f32.mrf.mxu0
      %v2960 = vadd.f32 0.0, %v2959
      %v2961 = vpop.f32.mrf.mxu0
      %v2962 = vpop.f32.mrf.mxu0
      %v2963 = vadd.f32 0.0, %v2962
      %v2964 = vpop.f32.mrf.mxu0
      %2965 = vmatprep.mubr.bf16.mxu0 0
      %2966 = vmatmul.mubr.bf16.gmra.mxu0 %v2724
      %v2967 = vpop.f32.mrf.mxu0
      %v2968 = vadd.f32 0.0, %v2967
      %v2969 = vpop.f32.mrf.mxu0
      %v2970 = vpop.f32.mrf.mxu0
      %v2971 = vadd.f32 0.0, %v2970
      %v2972 = vpop.f32.mrf.mxu0
      %2973 = vmatprep.mubr.bf16.mxu0 0
      %2974 = vmatmul.mubr.bf16.gmra.mxu0 %v2733
      %v2975 = vpop.f32.mrf.mxu0
      %v2976 = vadd.f32 0.0, %v2975
      %v2977 = vpop.f32.mrf.mxu0
      %v2978 = vpop.f32.mrf.mxu0
      %v2979 = vadd.f32 0.0, %v2978
      %v2980 = vpop.f32.mrf.mxu0
      %2981 = vmatprep.mubr.bf16.mxu0 0
      %2982 = vmatmul.mubr.bf16.gmra.mxu0 %v2742
      %v2983 = vpop.f32.mrf.mxu0
      %v2984 = vadd.f32 0.0, %v2983
      %v2985 = vpop.f32.mrf.mxu0
      %v2986 = vpop.f32.mrf.mxu0
      %v2987 = vadd.f32 0.0, %v2986
      %v2988 = vpop.f32.mrf.mxu0
      %2989 = vmatprep.mubr.bf16.mxu0 0
      %2990 = vmatmul.mubr.bf16.gmra.mxu0 %v2751
      %v2991 = vpop.f32.mrf.mxu0
      %v2992 = vadd.f32 0.0, %v2991
      %v2993 = vpop.f32.mrf.mxu0
      %v2994 = vpop.f32.mrf.mxu0
      %v2995 = vadd.f32 0.0, %v2994
      %v2996 = vpop.f32.mrf.mxu0
      %2997 = vmatprep.mubr.bf16.mxu0 0
      %2998 = vmatmul.mubr.bf16.gmra.mxu0 %v2760
      %v2999 = vpop.f32.mrf.mxu0
      %v3000 = vadd.f32 0.0, %v2999
      %v3001 = vpop.f32.mrf.mxu0
      %v3002 = vpop.f32.mrf.mxu0
      %v3003 = vadd.f32 0.0, %v3002
      %v3004 = vpop.f32.mrf.mxu0
      %3005 = vmatprep.mubr.bf16.mxu0 0
      %3006 = vmatmul.mubr.bf16.gmra.mxu0 %v2769
      %v3007 = vpop.f32.mrf.mxu0
      %v3008 = vadd.f32 0.0, %v3007
      %v3009 = vpop.f32.mrf.mxu0
      %v3010 = vpop.f32.mrf.mxu0
      %v3011 = vadd.f32 0.0, %v3010
      %v3012 = vpop.f32.mrf.mxu0
      %3013 = vmatprep.mubr.bf16.mxu0 0
      %3014 = vmatmul.mubr.bf16.gmra.mxu0 %v2778
      %v3015 = vpop.f32.mrf.mxu0
      %v3016 = vadd.f32 0.0, %v3015
      %v3017 = vpop.f32.mrf.mxu0
      %v3018 = vpop.f32.mrf.mxu0
      %v3019 = vadd.f32 0.0, %v3018
      %v3020 = vpop.f32.mrf.mxu0
      %3021 = vdwg.mxu0
      %v3022 = vld [vmem:[#allocation2] sm:$0xff]
      %v3023 = vld [vmem:[#allocation2 + $0x8] sm:$0xff]
      %v3024 = vld [vmem:[#allocation2 + $0x10] sm:$0xff]
      %v3025 = vld [vmem:[#allocation2 + $0x18] sm:$0xff]
      %v3026 = vld [vmem:[#allocation2 + $0x20] sm:$0xff]
      %v3027 = vld [vmem:[#allocation2 + $0x28] sm:$0xff]
      %v3028 = vld [vmem:[#allocation2 + $0x30] sm:$0xff]
      %v3029 = vld [vmem:[#allocation2 + $0x38] sm:$0xff]
      %v3030 = vld [vmem:[#allocation2 + $0x40] sm:$0xff]
      %v3031 = vld [vmem:[#allocation2 + $0x48] sm:$0xff]
      %v3032 = vld [vmem:[#allocation2 + $0x50] sm:$0xff]
      %v3033 = vld [vmem:[#allocation2 + $0x58] sm:$0xff]
      %v3034 = vld [vmem:[#allocation2 + $0x60] sm:$0xff]
      %v3035 = vld [vmem:[#allocation2 + $0x68] sm:$0xff]
      %v3036 = vld [vmem:[#allocation2 + $0x70] sm:$0xff]
      %v3037 = vld [vmem:[#allocation2 + $0x78] sm:$0xff]
      %v3038 = vld [vmem:[#allocation2 + $0x80] sm:$0xff]
      %v3039 = vld [vmem:[#allocation2 + $0x88] sm:$0xff]
      %v3040 = vld [vmem:[#allocation2 + $0x90] sm:$0xff]
      %v3041 = vld [vmem:[#allocation2 + $0x98] sm:$0xff]
      %v3042 = vld [vmem:[#allocation2 + $0xa0] sm:$0xff]
      %v3043 = vld [vmem:[#allocation2 + $0xa8] sm:$0xff]
      %v3044 = vld [vmem:[#allocation2 + $0xb0] sm:$0xff]
      %v3045 = vld [vmem:[#allocation2 + $0xb8] sm:$0xff]
      %v3046 = vld [vmem:[#allocation2 + $0xc0] sm:$0xff]
      %v3047 = vld [vmem:[#allocation2 + $0xc8] sm:$0xff]
      %v3048 = vld [vmem:[#allocation2 + $0xd0] sm:$0xff]
      %v3049 = vld [vmem:[#allocation2 + $0xd8] sm:$0xff]
      %v3050 = vld [vmem:[#allocation2 + $0xe0] sm:$0xff]
      %v3051 = vld [vmem:[#allocation2 + $0xe8] sm:$0xff]
      %v3052 = vld [vmem:[#allocation2 + $0xf0] sm:$0xff]
      %v3053 = vld [vmem:[#allocation2 + $0xf8] sm:$0xff]
      %v3054 = vld [vmem:[#allocation2 + $0x100] sm:$0xff]
      %v3055 = vld [vmem:[#allocation2 + $0x108] sm:$0xff]
      %v3056 = vld [vmem:[#allocation2 + $0x110] sm:$0xff]
      %v3057 = vld [vmem:[#allocation2 + $0x118] sm:$0xff]
      %v3058 = vadd.f32 %v3022, %v2880
      %v3059 = vadd.f32 %v3023, %v2883
      %v3060 = vadd.f32 %v3024, %v2888
      %v3061 = vadd.f32 %v3025, %v2891
      %v3062 = vadd.f32 %v3026, %v2896
      %v3063 = vadd.f32 %v3027, %v2899
      %v3064 = vadd.f32 %v3028, %v2904
      %v3065 = vadd.f32 %v3029, %v2907
      %v3066 = vadd.f32 %v3030, %v2912
      %v3067 = vadd.f32 %v3031, %v2915
      %v3068 = vadd.f32 %v3032, %v2920
      %v3069 = vadd.f32 %v3033, %v2923
      %v3070 = vadd.f32 %v3034, %v2928
      %v3071 = vadd.f32 %v3035, %v2931
      %v3072 = vadd.f32 %v3036, %v2936
      %v3073 = vadd.f32 %v3037, %v2939
      %v3074 = vadd.f32 %v3038, %v2944
      %v3075 = vadd.f32 %v3039, %v2947
      %v3076 = vadd.f32 %v3040, %v2952
      %v3077 = vadd.f32 %v3041, %v2955
      %v3078 = vadd.f32 %v3042, %v2960
      %v3079 = vadd.f32 %v3043, %v2963
      %v3080 = vadd.f32 %v3044, %v2968
      %v3081 = vadd.f32 %v3045, %v2971
      %v3082 = vadd.f32 %v3046, %v2976
      %v3083 = vadd.f32 %v3047, %v2979
      %v3084 = vadd.f32 %v3048, %v2984
      %v3085 = vadd.f32 %v3049, %v2987
      %v3086 = vadd.f32 %v3050, %v2992
      %v3087 = vadd.f32 %v3051, %v2995
      %v3088 = vadd.f32 %v3052, %v3000
      %v3089 = vadd.f32 %v3053, %v3003
      %v3090 = vadd.f32 %v3054, %v3008
      %v3091 = vadd.f32 %v3055, %v3011
      %v3092 = vadd.f32 %v3056, %v3016
      %v3093 = vadd.f32 %v3057, %v3019
      %3094 = vst [vmem:[#allocation2] sm:$0xff] %v3058
      %3095 = vst [vmem:[#allocation2 + $0x8] sm:$0xff] %v3059
      %3096 = vst [vmem:[#allocation2 + $0x10] sm:$0xff] %v3060
      %3097 = vst [vmem:[#allocation2 + $0x18] sm:$0xff] %v3061
      %3098 = vst [vmem:[#allocation2 + $0x20] sm:$0xff] %v3062
      %3099 = vst [vmem:[#allocation2 + $0x28] sm:$0xff] %v3063
      %3100 = vst [vmem:[#allocation2 + $0x30] sm:$0xff] %v3064
      %3101 = vst [vmem:[#allocation2 + $0x38] sm:$0xff] %v3065
      %3102 = vst [vmem:[#allocation2 + $0x40] sm:$0xff] %v3066
      %3103 = vst [vmem:[#allocation2 + $0x48] sm:$0xff] %v3067
      %3104 = vst [vmem:[#allocation2 + $0x50] sm:$0xff] %v3068
      %3105 = vst [vmem:[#allocation2 + $0x58] sm:$0xff] %v3069
      %3106 = vst [vmem:[#allocation2 + $0x60] sm:$0xff] %v3070
      %3107 = vst [vmem:[#allocation2 + $0x68] sm:$0xff] %v3071
      %3108 = vst [vmem:[#allocation2 + $0x70] sm:$0xff] %v3072
      %3109 = vst [vmem:[#allocation2 + $0x78] sm:$0xff] %v3073
      %3110 = vst [vmem:[#allocation2 + $0x80] sm:$0xff] %v3074
      %3111 = vst [vmem:[#allocation2 + $0x88] sm:$0xff] %v3075
      %3112 = vst [vmem:[#allocation2 + $0x90] sm:$0xff] %v3076
      %3113 = vst [vmem:[#allocation2 + $0x98] sm:$0xff] %v3077
      %3114 = vst [vmem:[#allocation2 + $0xa0] sm:$0xff] %v3078
      %3115 = vst [vmem:[#allocation2 + $0xa8] sm:$0xff] %v3079
      %3116 = vst [vmem:[#allocation2 + $0xb0] sm:$0xff] %v3080
      %3117 = vst [vmem:[#allocation2 + $0xb8] sm:$0xff] %v3081
      %3118 = vst [vmem:[#allocation2 + $0xc0] sm:$0xff] %v3082
      %3119 = vst [vmem:[#allocation2 + $0xc8] sm:$0xff] %v3083
      %3120 = vst [vmem:[#allocation2 + $0xd0] sm:$0xff] %v3084
      %3121 = vst [vmem:[#allocation2 + $0xd8] sm:$0xff] %v3085
      %3122 = vst [vmem:[#allocation2 + $0xe0] sm:$0xff] %v3086
      %3123 = vst [vmem:[#allocation2 + $0xe8] sm:$0xff] %v3087
      %3124 = vst [vmem:[#allocation2 + $0xf0] sm:$0xff] %v3088
      %3125 = vst [vmem:[#allocation2 + $0xf8] sm:$0xff] %v3089
      %3126 = vst [vmem:[#allocation2 + $0x100] sm:$0xff] %v3090
      %3127 = vst [vmem:[#allocation2 + $0x108] sm:$0xff] %v3091
      %3128 = vst [vmem:[#allocation2 + $0x110] sm:$0xff] %v3092
      %3129 = vst [vmem:[#allocation2 + $0x118] sm:$0xff] %v3093
      %v3130 = vld [vmem:[%s294 + $0x8] sm:$0xc]
      %v3131 = vld [vmem:[%s294 + $0xc] sm:$0xf]
      %v3132 = vld [vmem:[%s294 + $0x10] sm:$0xf]
      %v3133 = vld [vmem:[%s294 + $0x14] sm:$0xf]
      %v3134 = vld [vmem:[%s294 + $0x18] sm:$0xf]
      %v3135 = vld [vmem:[%s294 + $0x1c] sm:$0xf]
      %v3136 = vld [vmem:[%s294 + $0x20] sm:$0xf]
      %v3137 = vld [vmem:[%s294 + $0x24] sm:$0xf]
      %v3138 = vld [vmem:[%s294 + $0x28] sm:$0xf]
      %v3139 = vld [vmem:[%s294 + $0x2c] sm:$0xf]
      %v3140 = vld [vmem:[%s294 + $0x30] sm:$0xf]
      %v3141 = vld [vmem:[%s294 + $0x34] sm:$0xf]
      %v3142 = vld [vmem:[%s294 + $0x38] sm:$0xf]
      %v3143 = vld [vmem:[%s294 + $0x3c] sm:$0xf]
      %v3144 = vld [vmem:[%s294 + $0x40] sm:$0xf]
      %v3145 = vld [vmem:[%s294 + $0x44] sm:$0xf]
      %v3146 = vld [vmem:[%s294 + $0x48] sm:$0xf]
      %v3147 = vld [vmem:[%s294 + $0x4c] sm:$0xf]
      %v3148 = vld [vmem:[%s294 + $0x50] sm:$0xf]
      %v3149 = vld [vmem:[%s294 + $0x54] sm:$0xf]
      %v3150 = vld [vmem:[%s294 + $0x58] sm:$0xf]
      %v3151 = vld [vmem:[%s294 + $0x5c] sm:$0xf]
      %v3152 = vld [vmem:[%s294 + $0x60] sm:$0xf]
      %v3153 = vld [vmem:[%s294 + $0x64] sm:$0xf]
      %v3154 = vld [vmem:[%s294 + $0x68] sm:$0xf]
      %v3155 = vld [vmem:[%s294 + $0x6c] sm:$0xf]
      %v3156 = vld [vmem:[%s294 + $0x70] sm:$0xf]
      %v3157 = vld [vmem:[%s294 + $0x74] sm:$0xf]
      %v3158 = vld [vmem:[%s294 + $0x78] sm:$0xf]
      %v3159 = vld [vmem:[%s294 + $0x7c] sm:$0xf]
      %v3160 = vld [vmem:[%s294 + $0x80] sm:$0xf]
      %v3161 = vld [vmem:[%s294 + $0x84] sm:$0xf]
      %v3162 = vld [vmem:[%s294 + $0x88] sm:$0xf]
      %v3163 = vld [vmem:[%s294 + $0x8c] sm:$0xf]
      %v3164 = vld [vmem:[%s294 + $0x90] sm:$0xf]
      %v3165 = vld [vmem:[%s294 + $0x94] sm:$0xf]
      %v3166 = vld [vmem:[%s294 + $0x98] sm:$0x3]
      %s3167 = scalar_lea.vmem %s298, 320
      %v3168 = vld [vmem:[%s3167] sm:$0xf]
      %v3169 = vld [vmem:[%s3167 + $0x4] sm:$0xf]
      %v3170 = vld [vmem:[%s3167 + $0x8] sm:$0xf]
      %v3171 = vld [vmem:[%s3167 + $0xc] sm:$0xf]
      %v3172 = vld [vmem:[%s3167 + $0x10] sm:$0xf]
      %v3173 = vld [vmem:[%s3167 + $0x14] sm:$0xf]
      %v3174 = vld [vmem:[%s3167 + $0x18] sm:$0xf]
      %v3175 = vld [vmem:[%s3167 + $0x1c] sm:$0xf]
      %v3176 = vld [vmem:[%s3167 + $0x20] sm:$0xf]
      %v3177 = vld [vmem:[%s3167 + $0x24] sm:$0xf]
      %v3178 = vld [vmem:[%s3167 + $0x28] sm:$0xf]
      %v3179 = vld [vmem:[%s3167 + $0x2c] sm:$0xf]
      %v3180 = vld [vmem:[%s3167 + $0x30] sm:$0xf]
      %v3181 = vld [vmem:[%s3167 + $0x34] sm:$0xf]
      %v3182 = vld [vmem:[%s3167 + $0x38] sm:$0xf]
      %v3183 = vld [vmem:[%s3167 + $0x3c] sm:$0xf]
      %v3221 = vunpack.c.l.b16 %v3130
      %v3222 = vunpack.c.l.b16 %v3131
      %v3223 = vunpack.c.l.b16 %v3132
      %v3224 = vunpack.c.l.b16 %v3133
      %v3225 = vunpack.c.l.b16 %v3134
      %v3226 = vunpack.c.l.b16 %v3135
      %v3227 = vunpack.c.l.b16 %v3136
      %v3228 = vunpack.c.l.b16 %v3137
      %v3229 = vunpack.c.l.b16 %v3138
      %v3230 = vunpack.c.l.b16 %v3139
      %v3231 = vunpack.c.l.b16 %v3140
      %v3232 = vunpack.c.l.b16 %v3141
      %v3233 = vunpack.c.l.b16 %v3142
      %v3234 = vunpack.c.l.b16 %v3143
      %v3235 = vunpack.c.l.b16 %v3144
      %v3236 = vunpack.c.l.b16 %v3145
      %v3237 = vunpack.c.l.b16 %v3146
      %v3238 = vunpack.c.l.b16 %v3147
      %v3239 = vunpack.c.l.b16 %v3148
      %v3240 = vunpack.c.l.b16 %v3149
      %v3241 = vunpack.c.l.b16 %v3150
      %v3242 = vunpack.c.l.b16 %v3151
      %v3243 = vunpack.c.l.b16 %v3152
      %v3244 = vunpack.c.l.b16 %v3153
      %v3245 = vunpack.c.l.b16 %v3154
      %v3246 = vunpack.c.l.b16 %v3155
      %v3247 = vunpack.c.l.b16 %v3156
      %v3248 = vunpack.c.l.b16 %v3157
      %v3249 = vunpack.c.l.b16 %v3158
      %v3250 = vunpack.c.l.b16 %v3159
      %v3251 = vunpack.c.l.b16 %v3160
      %v3252 = vunpack.c.l.b16 %v3161
      %v3253 = vunpack.c.l.b16 %v3162
      %v3254 = vunpack.c.l.b16 %v3163
      %v3255 = vunpack.c.l.b16 %v3164
      %v3256 = vunpack.c.l.b16 %v3165
      %v3257 = vunpack.c.l.b16 %v3166
      %v3258 = vpack.c.b16 %v3222, %v3221
      %v3259 = vpack.c.b16 %v3224, %v3223
      %v3260 = vpack.c.b16 %v3226, %v3225
      %v3261 = vpack.c.b16 %v3228, %v3227
      %v3262 = vpack.c.b16 %v3230, %v3229
      %v3263 = vpack.c.b16 %v3232, %v3231
      %v3264 = vpack.c.b16 %v3234, %v3233
      %v3265 = vpack.c.b16 %v3236, %v3235
      %v3266 = vpack.c.b16 %v3238, %v3237
      %v3267 = vpack.c.b16 %v3240, %v3239
      %v3268 = vpack.c.b16 %v3242, %v3241
      %v3269 = vpack.c.b16 %v3244, %v3243
      %v3270 = vpack.c.b16 %v3246, %v3245
      %v3271 = vpack.c.b16 %v3248, %v3247
      %v3272 = vpack.c.b16 %v3250, %v3249
      %v3273 = vpack.c.b16 %v3252, %v3251
      %v3274 = vpack.c.b16 %v3254, %v3253
      %v3275 = vpack.c.b16 %v3256, %v3255
      %v3276 = vpack.c.b16 %v3257, %v3257
      %vm3277 = vcmask 1045504
      %v3278 = vrot.slane %v3258, 2
      %v3279 = vrot.slane %v3259, 2
      %v3280 = vsel %vm3277, %v3278, %v3279
      %v3281 = vrot.slane %v3260, 2
      %v3282 = vsel %vm3277, %v3279, %v3281
      %v3283 = vrot.slane %v3261, 2
      %v3284 = vsel %vm3277, %v3281, %v3283
      %v3285 = vrot.slane %v3262, 2
      %v3286 = vsel %vm3277, %v3283, %v3285
      %v3287 = vrot.slane %v3263, 2
      %v3288 = vsel %vm3277, %v3285, %v3287
      %v3289 = vrot.slane %v3264, 2
      %v3290 = vsel %vm3277, %v3287, %v3289
      %v3291 = vrot.slane %v3265, 2
      %v3292 = vsel %vm3277, %v3289, %v3291
      %v3293 = vrot.slane %v3266, 2
      %v3294 = vsel %vm3277, %v3291, %v3293
      %v3295 = vrot.slane %v3267, 2
      %v3296 = vsel %vm3277, %v3293, %v3295
      %v3297 = vrot.slane %v3268, 2
      %v3298 = vsel %vm3277, %v3295, %v3297
      %v3299 = vrot.slane %v3269, 2
      %v3300 = vsel %vm3277, %v3297, %v3299
      %v3301 = vrot.slane %v3270, 2
      %v3302 = vsel %vm3277, %v3299, %v3301
      %v3303 = vrot.slane %v3271, 2
      %v3304 = vsel %vm3277, %v3301, %v3303
      %v3305 = vrot.slane %v3272, 2
      %v3306 = vsel %vm3277, %v3303, %v3305
      %v3307 = vrot.slane %v3273, 2
      %v3308 = vsel %vm3277, %v3305, %v3307
      %v3309 = vrot.slane %v3274, 2
      %v3310 = vsel %vm3277, %v3307, %v3309
      %v3311 = vrot.slane %v3275, 2
      %v3312 = vsel %vm3277, %v3309, %v3311
      %v3313 = vrot.slane %v3276, 2
      %v3314 = vsel %vm3277, %v3311, %v3313
      %v3349 = vunpack.c.l.b16 %v3168
      %v3350 = vunpack.c.l.b16 %v3169
      %v3351 = vunpack.c.l.b16 %v3170
      %v3352 = vunpack.c.l.b16 %v3171
      %v3353 = vunpack.c.l.b16 %v3172
      %v3354 = vunpack.c.l.b16 %v3173
      %v3355 = vunpack.c.l.b16 %v3174
      %v3356 = vunpack.c.l.b16 %v3175
      %v3357 = vunpack.c.l.b16 %v3176
      %v3358 = vunpack.c.l.b16 %v3177
      %v3359 = vunpack.c.l.b16 %v3178
      %v3360 = vunpack.c.l.b16 %v3179
      %v3361 = vunpack.c.l.b16 %v3180
      %v3362 = vunpack.c.l.b16 %v3181
      %v3363 = vunpack.c.l.b16 %v3182
      %v3364 = vunpack.c.l.b16 %v3183
      %v3365 = vpack.c.b16 %v3350, %v3349
      %v3366 = vpack.c.b16 %v3352, %v3351
      %v3367 = vpack.c.b16 %v3354, %v3353
      %v3368 = vpack.c.b16 %v3356, %v3355
      %v3369 = vpack.c.b16 %v3358, %v3357
      %v3370 = vpack.c.b16 %v3360, %v3359
      %v3371 = vpack.c.b16 %v3362, %v3361
      %v3372 = vpack.c.b16 %v3364, %v3363
      %3381 = vmatprep.subr.bf16.mxu0 0
      %3382 = vmatpush1.bf16.msra.mxu0 %v3372
      %3383 = vmatprep.subr.bf16.mxu0 0
      %3384 = vmatpush1.bf16.msra.mxu0 %v3371
      %3385 = vmatprep.subr.bf16.mxu0 0
      %3386 = vmatpush1.bf16.msra.mxu0 %v3370
      %3387 = vmatprep.subr.bf16.mxu0 0
      %3388 = vmatpush1.bf16.msra.mxu0 %v3369
      %3389 = vmatprep.subr.bf16.mxu0 0
      %3390 = vmatpush1.bf16.msra.mxu0 %v3368
      %3391 = vmatprep.subr.bf16.mxu0 0
      %3392 = vmatpush1.bf16.msra.mxu0 %v3367
      %3393 = vmatprep.subr.bf16.mxu0 0
      %3394 = vmatpush1.bf16.msra.mxu0 %v3366
      %3395 = vmatprep.subr.bf16.mxu0 0
      %3396 = vmatpush1.bf16.msra.mxu0 %v3365
      %3397 = vmatprep.subr.bf16.mxu0 0
      %3398 = vmatpush2.bf16.msra.mxu0 0
      %3399 = vmatprep.subr.bf16.mxu0 0
      %3400 = vmatpush2.bf16.msra.mxu0 0
      %3401 = vmatprep.subr.bf16.mxu0 0
      %3402 = vmatpush2.bf16.msra.mxu0 0
      %3403 = vmatprep.subr.bf16.mxu0 0
      %3404 = vmatpush2.bf16.msra.mxu0 0
      %3405 = vmatprep.subr.bf16.mxu0 0
      %3406 = vmatpush2.bf16.msra.mxu0 0
      %3407 = vmatprep.subr.bf16.mxu0 0
      %3408 = vmatpush2.bf16.msra.mxu0 0
      %3409 = vmatprep.subr.bf16.mxu0 0
      %3410 = vmatpush2.bf16.msra.mxu0 0
      %3411 = vmatprep.subr.bf16.mxu0 0
      %3412 = vmatpush2.bf16.msra.mxu0 0
      %3413 = vmatprep.mubr.bf16.mxu0 0
      %3414 = vmatmul.mubr.bf16.gmra.mxu0 %v3280
      %v3415 = vpop.f32.mrf.mxu0
      %v3416 = vadd.f32 0.0, %v3415
      %v3417 = vpop.f32.mrf.mxu0
      %v3418 = vpop.f32.mrf.mxu0
      %v3419 = vadd.f32 0.0, %v3418
      %v3420 = vpop.f32.mrf.mxu0
      %3421 = vmatprep.mubr.bf16.mxu0 0
      %3422 = vmatmul.mubr.bf16.gmra.mxu0 %v3282
      %v3423 = vpop.f32.mrf.mxu0
      %v3424 = vadd.f32 0.0, %v3423
      %v3425 = vpop.f32.mrf.mxu0
      %v3426 = vpop.f32.mrf.mxu0
      %v3427 = vadd.f32 0.0, %v3426
      %v3428 = vpop.f32.mrf.mxu0
      %3429 = vmatprep.mubr.bf16.mxu0 0
      %3430 = vmatmul.mubr.bf16.gmra.mxu0 %v3284
      %v3431 = vpop.f32.mrf.mxu0
      %v3432 = vadd.f32 0.0, %v3431
      %v3433 = vpop.f32.mrf.mxu0
      %v3434 = vpop.f32.mrf.mxu0
      %v3435 = vadd.f32 0.0, %v3434
      %v3436 = vpop.f32.mrf.mxu0
      %3437 = vmatprep.mubr.bf16.mxu0 0
      %3438 = vmatmul.mubr.bf16.gmra.mxu0 %v3286
      %v3439 = vpop.f32.mrf.mxu0
      %v3440 = vadd.f32 0.0, %v3439
      %v3441 = vpop.f32.mrf.mxu0
      %v3442 = vpop.f32.mrf.mxu0
      %v3443 = vadd.f32 0.0, %v3442
      %v3444 = vpop.f32.mrf.mxu0
      %3445 = vmatprep.mubr.bf16.mxu0 0
      %3446 = vmatmul.mubr.bf16.gmra.mxu0 %v3288
      %v3447 = vpop.f32.mrf.mxu0
      %v3448 = vadd.f32 0.0, %v3447
      %v3449 = vpop.f32.mrf.mxu0
      %v3450 = vpop.f32.mrf.mxu0
      %v3451 = vadd.f32 0.0, %v3450
      %v3452 = vpop.f32.mrf.mxu0
      %3453 = vmatprep.mubr.bf16.mxu0 0
      %3454 = vmatmul.mubr.bf16.gmra.mxu0 %v3290
      %v3455 = vpop.f32.mrf.mxu0
      %v3456 = vadd.f32 0.0, %v3455
      %v3457 = vpop.f32.mrf.mxu0
      %v3458 = vpop.f32.mrf.mxu0
      %v3459 = vadd.f32 0.0, %v3458
      %v3460 = vpop.f32.mrf.mxu0
      %3461 = vmatprep.mubr.bf16.mxu0 0
      %3462 = vmatmul.mubr.bf16.gmra.mxu0 %v3292
      %v3463 = vpop.f32.mrf.mxu0
      %v3464 = vadd.f32 0.0, %v3463
      %v3465 = vpop.f32.mrf.mxu0
      %v3466 = vpop.f32.mrf.mxu0
      %v3467 = vadd.f32 0.0, %v3466
      %v3468 = vpop.f32.mrf.mxu0
      %3469 = vmatprep.mubr.bf16.mxu0 0
      %3470 = vmatmul.mubr.bf16.gmra.mxu0 %v3294
      %v3471 = vpop.f32.mrf.mxu0
      %v3472 = vadd.f32 0.0, %v3471
      %v3473 = vpop.f32.mrf.mxu0
      %v3474 = vpop.f32.mrf.mxu0
      %v3475 = vadd.f32 0.0, %v3474
      %v3476 = vpop.f32.mrf.mxu0
      %3477 = vmatprep.mubr.bf16.mxu0 0
      %3478 = vmatmul.mubr.bf16.gmra.mxu0 %v3296
      %v3479 = vpop.f32.mrf.mxu0
      %v3480 = vadd.f32 0.0, %v3479
      %v3481 = vpop.f32.mrf.mxu0
      %v3482 = vpop.f32.mrf.mxu0
      %v3483 = vadd.f32 0.0, %v3482
      %v3484 = vpop.f32.mrf.mxu0
      %3485 = vmatprep.mubr.bf16.mxu0 0
      %3486 = vmatmul.mubr.bf16.gmra.mxu0 %v3298
      %v3487 = vpop.f32.mrf.mxu0
      %v3488 = vadd.f32 0.0, %v3487
      %v3489 = vpop.f32.mrf.mxu0
      %v3490 = vpop.f32.mrf.mxu0
      %v3491 = vadd.f32 0.0, %v3490
      %v3492 = vpop.f32.mrf.mxu0
      %3493 = vmatprep.mubr.bf16.mxu0 0
      %3494 = vmatmul.mubr.bf16.gmra.mxu0 %v3300
      %v3495 = vpop.f32.mrf.mxu0
      %v3496 = vadd.f32 0.0, %v3495
      %v3497 = vpop.f32.mrf.mxu0
      %v3498 = vpop.f32.mrf.mxu0
      %v3499 = vadd.f32 0.0, %v3498
      %v3500 = vpop.f32.mrf.mxu0
      %3501 = vmatprep.mubr.bf16.mxu0 0
      %3502 = vmatmul.mubr.bf16.gmra.mxu0 %v3302
      %v3503 = vpop.f32.mrf.mxu0
      %v3504 = vadd.f32 0.0, %v3503
      %v3505 = vpop.f32.mrf.mxu0
      %v3506 = vpop.f32.mrf.mxu0
      %v3507 = vadd.f32 0.0, %v3506
      %v3508 = vpop.f32.mrf.mxu0
      %3509 = vmatprep.mubr.bf16.mxu0 0
      %3510 = vmatmul.mubr.bf16.gmra.mxu0 %v3304
      %v3511 = vpop.f32.mrf.mxu0
      %v3512 = vadd.f32 0.0, %v3511
      %v3513 = vpop.f32.mrf.mxu0
      %v3514 = vpop.f32.mrf.mxu0
      %v3515 = vadd.f32 0.0, %v3514
      %v3516 = vpop.f32.mrf.mxu0
      %3517 = vmatprep.mubr.bf16.mxu0 0
      %3518 = vmatmul.mubr.bf16.gmra.mxu0 %v3306
      %v3519 = vpop.f32.mrf.mxu0
      %v3520 = vadd.f32 0.0, %v3519
      %v3521 = vpop.f32.mrf.mxu0
      %v3522 = vpop.f32.mrf.mxu0
      %v3523 = vadd.f32 0.0, %v3522
      %v3524 = vpop.f32.mrf.mxu0
      %3525 = vmatprep.mubr.bf16.mxu0 0
      %3526 = vmatmul.mubr.bf16.gmra.mxu0 %v3308
      %v3527 = vpop.f32.mrf.mxu0
      %v3528 = vadd.f32 0.0, %v3527
      %v3529 = vpop.f32.mrf.mxu0
      %v3530 = vpop.f32.mrf.mxu0
      %v3531 = vadd.f32 0.0, %v3530
      %v3532 = vpop.f32.mrf.mxu0
      %3533 = vmatprep.mubr.bf16.mxu0 0
      %3534 = vmatmul.mubr.bf16.gmra.mxu0 %v3310
      %v3535 = vpop.f32.mrf.mxu0
      %v3536 = vadd.f32 0.0, %v3535
      %v3537 = vpop.f32.mrf.mxu0
      %v3538 = vpop.f32.mrf.mxu0
      %v3539 = vadd.f32 0.0, %v3538
      %v3540 = vpop.f32.mrf.mxu0
      %3541 = vmatprep.mubr.bf16.mxu0 0
      %3542 = vmatmul.mubr.bf16.gmra.mxu0 %v3312
      %v3543 = vpop.f32.mrf.mxu0
      %v3544 = vadd.f32 0.0, %v3543
      %v3545 = vpop.f32.mrf.mxu0
      %v3546 = vpop.f32.mrf.mxu0
      %v3547 = vadd.f32 0.0, %v3546
      %v3548 = vpop.f32.mrf.mxu0
      %3549 = vmatprep.mubr.bf16.mxu0 0
      %3550 = vmatmul.mubr.bf16.gmra.mxu0 %v3314
      %v3551 = vpop.f32.mrf.mxu0
      %v3552 = vadd.f32 0.0, %v3551
      %v3553 = vpop.f32.mrf.mxu0
      %v3554 = vpop.f32.mrf.mxu0
      %v3555 = vadd.f32 0.0, %v3554
      %v3556 = vpop.f32.mrf.mxu0
      %3557 = vdwg.mxu0
      %v3558 = vld [vmem:[#allocation2] sm:$0xff]
      %v3559 = vld [vmem:[#allocation2 + $0x8] sm:$0xff]
      %v3560 = vld [vmem:[#allocation2 + $0x10] sm:$0xff]
      %v3561 = vld [vmem:[#allocation2 + $0x18] sm:$0xff]
      %v3562 = vld [vmem:[#allocation2 + $0x20] sm:$0xff]
      %v3563 = vld [vmem:[#allocation2 + $0x28] sm:$0xff]
      %v3564 = vld [vmem:[#allocation2 + $0x30] sm:$0xff]
      %v3565 = vld [vmem:[#allocation2 + $0x38] sm:$0xff]
      %v3566 = vld [vmem:[#allocation2 + $0x40] sm:$0xff]
      %v3567 = vld [vmem:[#allocation2 + $0x48] sm:$0xff]
      %v3568 = vld [vmem:[#allocation2 + $0x50] sm:$0xff]
      %v3569 = vld [vmem:[#allocation2 + $0x58] sm:$0xff]
      %v3570 = vld [vmem:[#allocation2 + $0x60] sm:$0xff]
      %v3571 = vld [vmem:[#allocation2 + $0x68] sm:$0xff]
      %v3572 = vld [vmem:[#allocation2 + $0x70] sm:$0xff]
      %v3573 = vld [vmem:[#allocation2 + $0x78] sm:$0xff]
      %v3574 = vld [vmem:[#allocation2 + $0x80] sm:$0xff]
      %v3575 = vld [vmem:[#allocation2 + $0x88] sm:$0xff]
      %v3576 = vld [vmem:[#allocation2 + $0x90] sm:$0xff]
      %v3577 = vld [vmem:[#allocation2 + $0x98] sm:$0xff]
      %v3578 = vld [vmem:[#allocation2 + $0xa0] sm:$0xff]
      %v3579 = vld [vmem:[#allocation2 + $0xa8] sm:$0xff]
      %v3580 = vld [vmem:[#allocation2 + $0xb0] sm:$0xff]
      %v3581 = vld [vmem:[#allocation2 + $0xb8] sm:$0xff]
      %v3582 = vld [vmem:[#allocation2 + $0xc0] sm:$0xff]
      %v3583 = vld [vmem:[#allocation2 + $0xc8] sm:$0xff]
      %v3584 = vld [vmem:[#allocation2 + $0xd0] sm:$0xff]
      %v3585 = vld [vmem:[#allocation2 + $0xd8] sm:$0xff]
      %v3586 = vld [vmem:[#allocation2 + $0xe0] sm:$0xff]
      %v3587 = vld [vmem:[#allocation2 + $0xe8] sm:$0xff]
      %v3588 = vld [vmem:[#allocation2 + $0xf0] sm:$0xff]
      %v3589 = vld [vmem:[#allocation2 + $0xf8] sm:$0xff]
      %v3590 = vld [vmem:[#allocation2 + $0x100] sm:$0xff]
      %v3591 = vld [vmem:[#allocation2 + $0x108] sm:$0xff]
      %v3592 = vld [vmem:[#allocation2 + $0x110] sm:$0xff]
      %v3593 = vld [vmem:[#allocation2 + $0x118] sm:$0xff]
      %v3594 = vadd.f32 %v3558, %v3416
      %v3595 = vadd.f32 %v3559, %v3419
      %v3596 = vadd.f32 %v3560, %v3424
      %v3597 = vadd.f32 %v3561, %v3427
      %v3598 = vadd.f32 %v3562, %v3432
      %v3599 = vadd.f32 %v3563, %v3435
      %v3600 = vadd.f32 %v3564, %v3440
      %v3601 = vadd.f32 %v3565, %v3443
      %v3602 = vadd.f32 %v3566, %v3448
      %v3603 = vadd.f32 %v3567, %v3451
      %v3604 = vadd.f32 %v3568, %v3456
      %v3605 = vadd.f32 %v3569, %v3459
      %v3606 = vadd.f32 %v3570, %v3464
      %v3607 = vadd.f32 %v3571, %v3467
      %v3608 = vadd.f32 %v3572, %v3472
      %v3609 = vadd.f32 %v3573, %v3475
      %v3610 = vadd.f32 %v3574, %v3480
      %v3611 = vadd.f32 %v3575, %v3483
      %v3612 = vadd.f32 %v3576, %v3488
      %v3613 = vadd.f32 %v3577, %v3491
      %v3614 = vadd.f32 %v3578, %v3496
      %v3615 = vadd.f32 %v3579, %v3499
      %v3616 = vadd.f32 %v3580, %v3504
      %v3617 = vadd.f32 %v3581, %v3507
      %v3618 = vadd.f32 %v3582, %v3512
      %v3619 = vadd.f32 %v3583, %v3515
      %v3620 = vadd.f32 %v3584, %v3520
      %v3621 = vadd.f32 %v3585, %v3523
      %v3622 = vadd.f32 %v3586, %v3528
      %v3623 = vadd.f32 %v3587, %v3531
      %v3624 = vadd.f32 %v3588, %v3536
      %v3625 = vadd.f32 %v3589, %v3539
      %v3626 = vadd.f32 %v3590, %v3544
      %v3627 = vadd.f32 %v3591, %v3547
      %v3628 = vadd.f32 %v3592, %v3552
      %v3629 = vadd.f32 %v3593, %v3555
      %3630 = vst [vmem:[#allocation2] sm:$0xff] %v3594
      %3631 = vst [vmem:[#allocation2 + $0x8] sm:$0xff] %v3595
      %3632 = vst [vmem:[#allocation2 + $0x10] sm:$0xff] %v3596
      %3633 = vst [vmem:[#allocation2 + $0x18] sm:$0xff] %v3597
      %3634 = vst [vmem:[#allocation2 + $0x20] sm:$0xff] %v3598
      %3635 = vst [vmem:[#allocation2 + $0x28] sm:$0xff] %v3599
      %3636 = vst [vmem:[#allocation2 + $0x30] sm:$0xff] %v3600
      %3637 = vst [vmem:[#allocation2 + $0x38] sm:$0xff] %v3601
      %3638 = vst [vmem:[#allocation2 + $0x40] sm:$0xff] %v3602
      %3639 = vst [vmem:[#allocation2 + $0x48] sm:$0xff] %v3603
      %3640 = vst [vmem:[#allocation2 + $0x50] sm:$0xff] %v3604
      %3641 = vst [vmem:[#allocation2 + $0x58] sm:$0xff] %v3605
      %3642 = vst [vmem:[#allocation2 + $0x60] sm:$0xff] %v3606
      %3643 = vst [vmem:[#allocation2 + $0x68] sm:$0xff] %v3607
      %3644 = vst [vmem:[#allocation2 + $0x70] sm:$0xff] %v3608
      %3645 = vst [vmem:[#allocation2 + $0x78] sm:$0xff] %v3609
      %3646 = vst [vmem:[#allocation2 + $0x80] sm:$0xff] %v3610
      %3647 = vst [vmem:[#allocation2 + $0x88] sm:$0xff] %v3611
      %3648 = vst [vmem:[#allocation2 + $0x90] sm:$0xff] %v3612
      %3649 = vst [vmem:[#allocation2 + $0x98] sm:$0xff] %v3613
      %3650 = vst [vmem:[#allocation2 + $0xa0] sm:$0xff] %v3614
      %3651 = vst [vmem:[#allocation2 + $0xa8] sm:$0xff] %v3615
      %3652 = vst [vmem:[#allocation2 + $0xb0] sm:$0xff] %v3616
      %3653 = vst [vmem:[#allocation2 + $0xb8] sm:$0xff] %v3617
      %3654 = vst [vmem:[#allocation2 + $0xc0] sm:$0xff] %v3618
      %3655 = vst [vmem:[#allocation2 + $0xc8] sm:$0xff] %v3619
      %3656 = vst [vmem:[#allocation2 + $0xd0] sm:$0xff] %v3620
      %3657 = vst [vmem:[#allocation2 + $0xd8] sm:$0xff] %v3621
      %3658 = vst [vmem:[#allocation2 + $0xe0] sm:$0xff] %v3622
      %3659 = vst [vmem:[#allocation2 + $0xe8] sm:$0xff] %v3623
      %3660 = vst [vmem:[#allocation2 + $0xf0] sm:$0xff] %v3624
      %3661 = vst [vmem:[#allocation2 + $0xf8] sm:$0xff] %v3625
      %3662 = vst [vmem:[#allocation2 + $0x100] sm:$0xff] %v3626
      %3663 = vst [vmem:[#allocation2 + $0x108] sm:$0xff] %v3627
      %3664 = vst [vmem:[#allocation2 + $0x110] sm:$0xff] %v3628
      %3665 = vst [vmem:[#allocation2 + $0x118] sm:$0xff] %v3629
      %v3666 = vld [vmem:[%s294 + $0x10] sm:$0xc]
      %v3667 = vld [vmem:[%s294 + $0x14] sm:$0xf]
      %v3668 = vld [vmem:[%s294 + $0x18] sm:$0xf]
      %v3669 = vld [vmem:[%s294 + $0x1c] sm:$0xf]
      %v3670 = vld [vmem:[%s294 + $0x20] sm:$0xf]
      %v3671 = vld [vmem:[%s294 + $0x24] sm:$0xf]
      %v3672 = vld [vmem:[%s294 + $0x28] sm:$0xf]
      %v3673 = vld [vmem:[%s294 + $0x2c] sm:$0xf]
      %v3674 = vld [vmem:[%s294 + $0x30] sm:$0xf]
      %v3675 = vld [vmem:[%s294 + $0x34] sm:$0xf]
      %v3676 = vld [vmem:[%s294 + $0x38] sm:$0xf]
      %v3677 = vld [vmem:[%s294 + $0x3c] sm:$0xf]
      %v3678 = vld [vmem:[%s294 + $0x40] sm:$0xf]
      %v3679 = vld [vmem:[%s294 + $0x44] sm:$0xf]
      %v3680 = vld [vmem:[%s294 + $0x48] sm:$0xf]
      %v3681 = vld [vmem:[%s294 + $0x4c] sm:$0xf]
      %v3682 = vld [vmem:[%s294 + $0x50] sm:$0xf]
      %v3683 = vld [vmem:[%s294 + $0x54] sm:$0xf]
      %v3684 = vld [vmem:[%s294 + $0x58] sm:$0xf]
      %v3685 = vld [vmem:[%s294 + $0x5c] sm:$0xf]
      %v3686 = vld [vmem:[%s294 + $0x60] sm:$0xf]
      %v3687 = vld [vmem:[%s294 + $0x64] sm:$0xf]
      %v3688 = vld [vmem:[%s294 + $0x68] sm:$0xf]
      %v3689 = vld [vmem:[%s294 + $0x6c] sm:$0xf]
      %v3690 = vld [vmem:[%s294 + $0x70] sm:$0xf]
      %v3691 = vld [vmem:[%s294 + $0x74] sm:$0xf]
      %v3692 = vld [vmem:[%s294 + $0x78] sm:$0xf]
      %v3693 = vld [vmem:[%s294 + $0x7c] sm:$0xf]
      %v3694 = vld [vmem:[%s294 + $0x80] sm:$0xf]
      %v3695 = vld [vmem:[%s294 + $0x84] sm:$0xf]
      %v3696 = vld [vmem:[%s294 + $0x88] sm:$0xf]
      %v3697 = vld [vmem:[%s294 + $0x8c] sm:$0xf]
      %v3698 = vld [vmem:[%s294 + $0x90] sm:$0xf]
      %v3699 = vld [vmem:[%s294 + $0x94] sm:$0xf]
      %v3700 = vld [vmem:[%s294 + $0x98] sm:$0xf]
      %v3701 = vld [vmem:[%s294 + $0x9c] sm:$0xf]
      %v3702 = vld [vmem:[%s294 + $0xa0] sm:$0x3]
      %s3703 = scalar_lea.vmem %s298, 384
      %v3704 = vld [vmem:[%s3703] sm:$0xf]
      %v3705 = vld [vmem:[%s3703 + $0x4] sm:$0xf]
      %v3706 = vld [vmem:[%s3703 + $0x8] sm:$0xf]
      %v3707 = vld [vmem:[%s3703 + $0xc] sm:$0xf]
      %v3708 = vld [vmem:[%s3703 + $0x10] sm:$0xf]
      %v3709 = vld [vmem:[%s3703 + $0x14] sm:$0xf]
      %v3710 = vld [vmem:[%s3703 + $0x18] sm:$0xf]
      %v3711 = vld [vmem:[%s3703 + $0x1c] sm:$0xf]
      %v3712 = vld [vmem:[%s3703 + $0x20] sm:$0xf]
      %v3713 = vld [vmem:[%s3703 + $0x24] sm:$0xf]
      %v3714 = vld [vmem:[%s3703 + $0x28] sm:$0xf]
      %v3715 = vld [vmem:[%s3703 + $0x2c] sm:$0xf]
      %v3716 = vld [vmem:[%s3703 + $0x30] sm:$0xf]
      %v3717 = vld [vmem:[%s3703 + $0x34] sm:$0xf]
      %v3718 = vld [vmem:[%s3703 + $0x38] sm:$0xf]
      %v3719 = vld [vmem:[%s3703 + $0x3c] sm:$0xf]
      %v3757 = vunpack.c.l.b16 %v3666
      %v3758 = vunpack.c.l.b16 %v3667
      %v3759 = vunpack.c.l.b16 %v3668
      %v3760 = vunpack.c.l.b16 %v3669
      %v3761 = vunpack.c.l.b16 %v3670
      %v3762 = vunpack.c.l.b16 %v3671
      %v3763 = vunpack.c.l.b16 %v3672
      %v3764 = vunpack.c.l.b16 %v3673
      %v3765 = vunpack.c.l.b16 %v3674
      %v3766 = vunpack.c.l.b16 %v3675
      %v3767 = vunpack.c.l.b16 %v3676
      %v3768 = vunpack.c.l.b16 %v3677
      %v3769 = vunpack.c.l.b16 %v3678
      %v3770 = vunpack.c.l.b16 %v3679
      %v3771 = vunpack.c.l.b16 %v3680
      %v3772 = vunpack.c.l.b16 %v3681
      %v3773 = vunpack.c.l.b16 %v3682
      %v3774 = vunpack.c.l.b16 %v3683
      %v3775 = vunpack.c.l.b16 %v3684
      %v3776 = vunpack.c.l.b16 %v3685
      %v3777 = vunpack.c.l.b16 %v3686
      %v3778 = vunpack.c.l.b16 %v3687
      %v3779 = vunpack.c.l.b16 %v3688
      %v3780 = vunpack.c.l.b16 %v3689
      %v3781 = vunpack.c.l.b16 %v3690
      %v3782 = vunpack.c.l.b16 %v3691
      %v3783 = vunpack.c.l.b16 %v3692
      %v3784 = vunpack.c.l.b16 %v3693
      %v3785 = vunpack.c.l.b16 %v3694
      %v3786 = vunpack.c.l.b16 %v3695
      %v3787 = vunpack.c.l.b16 %v3696
      %v3788 = vunpack.c.l.b16 %v3697
      %v3789 = vunpack.c.l.b16 %v3698
      %v3790 = vunpack.c.l.b16 %v3699
      %v3791 = vunpack.c.l.b16 %v3700
      %v3792 = vunpack.c.l.b16 %v3701
      %v3793 = vunpack.c.l.b16 %v3702
      %v3794 = vpack.c.b16 %v3758, %v3757
      %v3795 = vpack.c.b16 %v3760, %v3759
      %v3796 = vpack.c.b16 %v3762, %v3761
      %v3797 = vpack.c.b16 %v3764, %v3763
      %v3798 = vpack.c.b16 %v3766, %v3765
      %v3799 = vpack.c.b16 %v3768, %v3767
      %v3800 = vpack.c.b16 %v3770, %v3769
      %v3801 = vpack.c.b16 %v3772, %v3771
      %v3802 = vpack.c.b16 %v3774, %v3773
      %v3803 = vpack.c.b16 %v3776, %v3775
      %v3804 = vpack.c.b16 %v3778, %v3777
      %v3805 = vpack.c.b16 %v3780, %v3779
      %v3806 = vpack.c.b16 %v3782, %v3781
      %v3807 = vpack.c.b16 %v3784, %v3783
      %v3808 = vpack.c.b16 %v3786, %v3785
      %v3809 = vpack.c.b16 %v3788, %v3787
      %v3810 = vpack.c.b16 %v3790, %v3789
      %v3811 = vpack.c.b16 %v3792, %v3791
      %v3812 = vpack.c.b16 %v3793, %v3793
      %v3813 = vrot.slane %v3794, 2
      %v3814 = vrot.slane %v3795, 2
      %v3815 = vsel %vm3277, %v3813, %v3814
      %v3816 = vrot.slane %v3796, 2
      %v3817 = vsel %vm3277, %v3814, %v3816
      %v3818 = vrot.slane %v3797, 2
      %v3819 = vsel %vm3277, %v3816, %v3818
      %v3820 = vrot.slane %v3798, 2
      %v3821 = vsel %vm3277, %v3818, %v3820
      %v3822 = vrot.slane %v3799, 2
      %v3823 = vsel %vm3277, %v3820, %v3822
      %v3824 = vrot.slane %v3800, 2
      %v3825 = vsel %vm3277, %v3822, %v3824
      %v3826 = vrot.slane %v3801, 2
      %v3827 = vsel %vm3277, %v3824, %v3826
      %v3828 = vrot.slane %v3802, 2
      %v3829 = vsel %vm3277, %v3826, %v3828
      %v3830 = vrot.slane %v3803, 2
      %v3831 = vsel %vm3277, %v3828, %v3830
      %v3832 = vrot.slane %v3804, 2
      %v3833 = vsel %vm3277, %v3830, %v3832
      %v3834 = vrot.slane %v3805, 2
      %v3835 = vsel %vm3277, %v3832, %v3834
      %v3836 = vrot.slane %v3806, 2
      %v3837 = vsel %vm3277, %v3834, %v3836
      %v3838 = vrot.slane %v3807, 2
      %v3839 = vsel %vm3277, %v3836, %v3838
      %v3840 = vrot.slane %v3808, 2
      %v3841 = vsel %vm3277, %v3838, %v3840
      %v3842 = vrot.slane %v3809, 2
      %v3843 = vsel %vm3277, %v3840, %v3842
      %v3844 = vrot.slane %v3810, 2
      %v3845 = vsel %vm3277, %v3842, %v3844
      %v3846 = vrot.slane %v3811, 2
      %v3847 = vsel %vm3277, %v3844, %v3846
      %v3848 = vrot.slane %v3812, 2
      %v3849 = vsel %vm3277, %v3846, %v3848
      %v3884 = vunpack.c.l.b16 %v3704
      %v3885 = vunpack.c.l.b16 %v3705
      %v3886 = vunpack.c.l.b16 %v3706
      %v3887 = vunpack.c.l.b16 %v3707
      %v3888 = vunpack.c.l.b16 %v3708
      %v3889 = vunpack.c.l.b16 %v3709
      %v3890 = vunpack.c.l.b16 %v3710
      %v3891 = vunpack.c.l.b16 %v3711
      %v3892 = vunpack.c.l.b16 %v3712
      %v3893 = vunpack.c.l.b16 %v3713
      %v3894 = vunpack.c.l.b16 %v3714
      %v3895 = vunpack.c.l.b16 %v3715
      %v3896 = vunpack.c.l.b16 %v3716
      %v3897 = vunpack.c.l.b16 %v3717
      %v3898 = vunpack.c.l.b16 %v3718
      %v3899 = vunpack.c.l.b16 %v3719
      %v3900 = vpack.c.b16 %v3885, %v3884
      %v3901 = vpack.c.b16 %v3887, %v3886
      %v3902 = vpack.c.b16 %v3889, %v3888
      %v3903 = vpack.c.b16 %v3891, %v3890
      %v3904 = vpack.c.b16 %v3893, %v3892
      %v3905 = vpack.c.b16 %v3895, %v3894
      %v3906 = vpack.c.b16 %v3897, %v3896
      %v3907 = vpack.c.b16 %v3899, %v3898
      %3916 = vmatprep.subr.bf16.mxu0 0
      %3917 = vmatpush1.bf16.msra.mxu0 %v3907
      %3918 = vmatprep.subr.bf16.mxu0 0
      %3919 = vmatpush1.bf16.msra.mxu0 %v3906
      %3920 = vmatprep.subr.bf16.mxu0 0
      %3921 = vmatpush1.bf16.msra.mxu0 %v3905
      %3922 = vmatprep.subr.bf16.mxu0 0
      %3923 = vmatpush1.bf16.msra.mxu0 %v3904
      %3924 = vmatprep.subr.bf16.mxu0 0
      %3925 = vmatpush1.bf16.msra.mxu0 %v3903
      %3926 = vmatprep.subr.bf16.mxu0 0
      %3927 = vmatpush1.bf16.msra.mxu0 %v3902
      %3928 = vmatprep.subr.bf16.mxu0 0
      %3929 = vmatpush1.bf16.msra.mxu0 %v3901
      %3930 = vmatprep.subr.bf16.mxu0 0
      %3931 = vmatpush1.bf16.msra.mxu0 %v3900
      %3932 = vmatprep.subr.bf16.mxu0 0
      %3933 = vmatpush2.bf16.msra.mxu0 0
      %3934 = vmatprep.subr.bf16.mxu0 0
      %3935 = vmatpush2.bf16.msra.mxu0 0
      %3936 = vmatprep.subr.bf16.mxu0 0
      %3937 = vmatpush2.bf16.msra.mxu0 0
      %3938 = vmatprep.subr.bf16.mxu0 0
      %3939 = vmatpush2.bf16.msra.mxu0 0
      %3940 = vmatprep.subr.bf16.mxu0 0
      %3941 = vmatpush2.bf16.msra.mxu0 0
      %3942 = vmatprep.subr.bf16.mxu0 0
      %3943 = vmatpush2.bf16.msra.mxu0 0
      %3944 = vmatprep.subr.bf16.mxu0 0
      %3945 = vmatpush2.bf16.msra.mxu0 0
      %3946 = vmatprep.subr.bf16.mxu0 0
      %3947 = vmatpush2.bf16.msra.mxu0 0
      %3948 = vmatprep.mubr.bf16.mxu0 0
      %3949 = vmatmul.mubr.bf16.gmra.mxu0 %v3815
      %v3950 = vpop.f32.mrf.mxu0
      %v3951 = vadd.f32 0.0, %v3950
      %v3952 = vpop.f32.mrf.mxu0
      %v3953 = vpop.f32.mrf.mxu0
      %v3954 = vadd.f32 0.0, %v3953
      %v3955 = vpop.f32.mrf.mxu0
      %3956 = vmatprep.mubr.bf16.mxu0 0
      %3957 = vmatmul.mubr.bf16.gmra.mxu0 %v3817
      %v3958 = vpop.f32.mrf.mxu0
      %v3959 = vadd.f32 0.0, %v3958
      %v3960 = vpop.f32.mrf.mxu0
      %v3961 = vpop.f32.mrf.mxu0
      %v3962 = vadd.f32 0.0, %v3961
      %v3963 = vpop.f32.mrf.mxu0
      %3964 = vmatprep.mubr.bf16.mxu0 0
      %3965 = vmatmul.mubr.bf16.gmra.mxu0 %v3819
      %v3966 = vpop.f32.mrf.mxu0
      %v3967 = vadd.f32 0.0, %v3966
      %v3968 = vpop.f32.mrf.mxu0
      %v3969 = vpop.f32.mrf.mxu0
      %v3970 = vadd.f32 0.0, %v3969
      %v3971 = vpop.f32.mrf.mxu0
      %3972 = vmatprep.mubr.bf16.mxu0 0
      %3973 = vmatmul.mubr.bf16.gmra.mxu0 %v3821
      %v3974 = vpop.f32.mrf.mxu0
      %v3975 = vadd.f32 0.0, %v3974
      %v3976 = vpop.f32.mrf.mxu0
      %v3977 = vpop.f32.mrf.mxu0
      %v3978 = vadd.f32 0.0, %v3977
      %v3979 = vpop.f32.mrf.mxu0
      %3980 = vmatprep.mubr.bf16.mxu0 0
      %3981 = vmatmul.mubr.bf16.gmra.mxu0 %v3823
      %v3982 = vpop.f32.mrf.mxu0
      %v3983 = vadd.f32 0.0, %v3982
      %v3984 = vpop.f32.mrf.mxu0
      %v3985 = vpop.f32.mrf.mxu0
      %v3986 = vadd.f32 0.0, %v3985
      %v3987 = vpop.f32.mrf.mxu0
      %3988 = vmatprep.mubr.bf16.mxu0 0
      %3989 = vmatmul.mubr.bf16.gmra.mxu0 %v3825
      %v3990 = vpop.f32.mrf.mxu0
      %v3991 = vadd.f32 0.0, %v3990
      %v3992 = vpop.f32.mrf.mxu0
      %v3993 = vpop.f32.mrf.mxu0
      %v3994 = vadd.f32 0.0, %v3993
      %v3995 = vpop.f32.mrf.mxu0
      %3996 = vmatprep.mubr.bf16.mxu0 0
      %3997 = vmatmul.mubr.bf16.gmra.mxu0 %v3827
      %v3998 = vpop.f32.mrf.mxu0
      %v3999 = vadd.f32 0.0, %v3998
      %v4000 = vpop.f32.mrf.mxu0
      %v4001 = vpop.f32.mrf.mxu0
      %v4002 = vadd.f32 0.0, %v4001
      %v4003 = vpop.f32.mrf.mxu0
      %4004 = vmatprep.mubr.bf16.mxu0 0
      %4005 = vmatmul.mubr.bf16.gmra.mxu0 %v3829
      %v4006 = vpop.f32.mrf.mxu0
      %v4007 = vadd.f32 0.0, %v4006
      %v4008 = vpop.f32.mrf.mxu0
      %v4009 = vpop.f32.mrf.mxu0
      %v4010 = vadd.f32 0.0, %v4009
      %v4011 = vpop.f32.mrf.mxu0
      %4012 = vmatprep.mubr.bf16.mxu0 0
      %4013 = vmatmul.mubr.bf16.gmra.mxu0 %v3831
      %v4014 = vpop.f32.mrf.mxu0
      %v4015 = vadd.f32 0.0, %v4014
      %v4016 = vpop.f32.mrf.mxu0
      %v4017 = vpop.f32.mrf.mxu0
      %v4018 = vadd.f32 0.0, %v4017
      %v4019 = vpop.f32.mrf.mxu0
      %4020 = vmatprep.mubr.bf16.mxu0 0
      %4021 = vmatmul.mubr.bf16.gmra.mxu0 %v3833
      %v4022 = vpop.f32.mrf.mxu0
      %v4023 = vadd.f32 0.0, %v4022
      %v4024 = vpop.f32.mrf.mxu0
      %v4025 = vpop.f32.mrf.mxu0
      %v4026 = vadd.f32 0.0, %v4025
      %v4027 = vpop.f32.mrf.mxu0
      %4028 = vmatprep.mubr.bf16.mxu0 0
      %4029 = vmatmul.mubr.bf16.gmra.mxu0 %v3835
      %v4030 = vpop.f32.mrf.mxu0
      %v4031 = vadd.f32 0.0, %v4030
      %v4032 = vpop.f32.mrf.mxu0
      %v4033 = vpop.f32.mrf.mxu0
      %v4034 = vadd.f32 0.0, %v4033
      %v4035 = vpop.f32.mrf.mxu0
      %4036 = vmatprep.mubr.bf16.mxu0 0
      %4037 = vmatmul.mubr.bf16.gmra.mxu0 %v3837
      %v4038 = vpop.f32.mrf.mxu0
      %v4039 = vadd.f32 0.0, %v4038
      %v4040 = vpop.f32.mrf.mxu0
      %v4041 = vpop.f32.mrf.mxu0
      %v4042 = vadd.f32 0.0, %v4041
      %v4043 = vpop.f32.mrf.mxu0
      %4044 = vmatprep.mubr.bf16.mxu0 0
      %4045 = vmatmul.mubr.bf16.gmra.mxu0 %v3839
      %v4046 = vpop.f32.mrf.mxu0
      %v4047 = vadd.f32 0.0, %v4046
      %v4048 = vpop.f32.mrf.mxu0
      %v4049 = vpop.f32.mrf.mxu0
      %v4050 = vadd.f32 0.0, %v4049
      %v4051 = vpop.f32.mrf.mxu0
      %4052 = vmatprep.mubr.bf16.mxu0 0
      %4053 = vmatmul.mubr.bf16.gmra.mxu0 %v3841
      %v4054 = vpop.f32.mrf.mxu0
      %v4055 = vadd.f32 0.0, %v4054
      %v4056 = vpop.f32.mrf.mxu0
      %v4057 = vpop.f32.mrf.mxu0
      %v4058 = vadd.f32 0.0, %v4057
      %v4059 = vpop.f32.mrf.mxu0
      %4060 = vmatprep.mubr.bf16.mxu0 0
      %4061 = vmatmul.mubr.bf16.gmra.mxu0 %v3843
      %v4062 = vpop.f32.mrf.mxu0
      %v4063 = vadd.f32 0.0, %v4062
      %v4064 = vpop.f32.mrf.mxu0
      %v4065 = vpop.f32.mrf.mxu0
      %v4066 = vadd.f32 0.0, %v4065
      %v4067 = vpop.f32.mrf.mxu0
      %4068 = vmatprep.mubr.bf16.mxu0 0
      %4069 = vmatmul.mubr.bf16.gmra.mxu0 %v3845
      %v4070 = vpop.f32.mrf.mxu0
      %v4071 = vadd.f32 0.0, %v4070
      %v4072 = vpop.f32.mrf.mxu0
      %v4073 = vpop.f32.mrf.mxu0
      %v4074 = vadd.f32 0.0, %v4073
      %v4075 = vpop.f32.mrf.mxu0
      %4076 = vmatprep.mubr.bf16.mxu0 0
      %4077 = vmatmul.mubr.bf16.gmra.mxu0 %v3847
      %v4078 = vpop.f32.mrf.mxu0
      %v4079 = vadd.f32 0.0, %v4078
      %v4080 = vpop.f32.mrf.mxu0
      %v4081 = vpop.f32.mrf.mxu0
      %v4082 = vadd.f32 0.0, %v4081
      %v4083 = vpop.f32.mrf.mxu0
      %4084 = vmatprep.mubr.bf16.mxu0 0
      %4085 = vmatmul.mubr.bf16.gmra.mxu0 %v3849
      %v4086 = vpop.f32.mrf.mxu0
      %v4087 = vadd.f32 0.0, %v4086
      %v4088 = vpop.f32.mrf.mxu0
      %v4089 = vpop.f32.mrf.mxu0
      %v4090 = vadd.f32 0.0, %v4089
      %v4091 = vpop.f32.mrf.mxu0
      %4092 = vdwg.mxu0
      %v4093 = vld [vmem:[#allocation2] sm:$0xff]
      %v4094 = vld [vmem:[#allocation2 + $0x8] sm:$0xff]
      %v4095 = vld [vmem:[#allocation2 + $0x10] sm:$0xff]
      %v4096 = vld [vmem:[#allocation2 + $0x18] sm:$0xff]
      %v4097 = vld [vmem:[#allocation2 + $0x20] sm:$0xff]
      %v4098 = vld [vmem:[#allocation2 + $0x28] sm:$0xff]
      %v4099 = vld [vmem:[#allocation2 + $0x30] sm:$0xff]
      %v4100 = vld [vmem:[#allocation2 + $0x38] sm:$0xff]
      %v4101 = vld [vmem:[#allocation2 + $0x40] sm:$0xff]
      %v4102 = vld [vmem:[#allocation2 + $0x48] sm:$0xff]
      %v4103 = vld [vmem:[#allocation2 + $0x50] sm:$0xff]
      %v4104 = vld [vmem:[#allocation2 + $0x58] sm:$0xff]
      %v4105 = vld [vmem:[#allocation2 + $0x60] sm:$0xff]
      %v4106 = vld [vmem:[#allocation2 + $0x68] sm:$0xff]
      %v4107 = vld [vmem:[#allocation2 + $0x70] sm:$0xff]
      %v4108 = vld [vmem:[#allocation2 + $0x78] sm:$0xff]
      %v4109 = vld [vmem:[#allocation2 + $0x80] sm:$0xff]
      %v4110 = vld [vmem:[#allocation2 + $0x88] sm:$0xff]
      %v4111 = vld [vmem:[#allocation2 + $0x90] sm:$0xff]
      %v4112 = vld [vmem:[#allocation2 + $0x98] sm:$0xff]
      %v4113 = vld [vmem:[#allocation2 + $0xa0] sm:$0xff]
      %v4114 = vld [vmem:[#allocation2 + $0xa8] sm:$0xff]
      %v4115 = vld [vmem:[#allocation2 + $0xb0] sm:$0xff]
      %v4116 = vld [vmem:[#allocation2 + $0xb8] sm:$0xff]
      %v4117 = vld [vmem:[#allocation2 + $0xc0] sm:$0xff]
      %v4118 = vld [vmem:[#allocation2 + $0xc8] sm:$0xff]
      %v4119 = vld [vmem:[#allocation2 + $0xd0] sm:$0xff]
      %v4120 = vld [vmem:[#allocation2 + $0xd8] sm:$0xff]
      %v4121 = vld [vmem:[#allocation2 + $0xe0] sm:$0xff]
      %v4122 = vld [vmem:[#allocation2 + $0xe8] sm:$0xff]
      %v4123 = vld [vmem:[#allocation2 + $0xf0] sm:$0xff]
      %v4124 = vld [vmem:[#allocation2 + $0xf8] sm:$0xff]
      %v4125 = vld [vmem:[#allocation2 + $0x100] sm:$0xff]
      %v4126 = vld [vmem:[#allocation2 + $0x108] sm:$0xff]
      %v4127 = vld [vmem:[#allocation2 + $0x110] sm:$0xff]
      %v4128 = vld [vmem:[#allocation2 + $0x118] sm:$0xff]
      %v4129 = vadd.f32 %v4093, %v3951
      %v4130 = vadd.f32 %v4094, %v3954
      %v4131 = vadd.f32 %v4095, %v3959
      %v4132 = vadd.f32 %v4096, %v3962
      %v4133 = vadd.f32 %v4097, %v3967
      %v4134 = vadd.f32 %v4098, %v3970
      %v4135 = vadd.f32 %v4099, %v3975
      %v4136 = vadd.f32 %v4100, %v3978
      %v4137 = vadd.f32 %v4101, %v3983
      %v4138 = vadd.f32 %v4102, %v3986
      %v4139 = vadd.f32 %v4103, %v3991
      %v4140 = vadd.f32 %v4104, %v3994
      %v4141 = vadd.f32 %v4105, %v3999
      %v4142 = vadd.f32 %v4106, %v4002
      %v4143 = vadd.f32 %v4107, %v4007
      %v4144 = vadd.f32 %v4108, %v4010
      %v4145 = vadd.f32 %v4109, %v4015
      %v4146 = vadd.f32 %v4110, %v4018
      %v4147 = vadd.f32 %v4111, %v4023
      %v4148 = vadd.f32 %v4112, %v4026
      %v4149 = vadd.f32 %v4113, %v4031
      %v4150 = vadd.f32 %v4114, %v4034
      %v4151 = vadd.f32 %v4115, %v4039
      %v4152 = vadd.f32 %v4116, %v4042
      %v4153 = vadd.f32 %v4117, %v4047
      %v4154 = vadd.f32 %v4118, %v4050
      %v4155 = vadd.f32 %v4119, %v4055
      %v4156 = vadd.f32 %v4120, %v4058
      %v4157 = vadd.f32 %v4121, %v4063
      %v4158 = vadd.f32 %v4122, %v4066
      %v4159 = vadd.f32 %v4123, %v4071
      %v4160 = vadd.f32 %v4124, %v4074
      %v4161 = vadd.f32 %v4125, %v4079
      %v4162 = vadd.f32 %v4126, %v4082
      %v4163 = vadd.f32 %v4127, %v4087
      %v4164 = vadd.f32 %v4128, %v4090
      %4165 = vst [vmem:[#allocation2] sm:$0xff] %v4129
      %4166 = vst [vmem:[#allocation2 + $0x8] sm:$0xff] %v4130
      %4167 = vst [vmem:[#allocation2 + $0x10] sm:$0xff] %v4131
      %4168 = vst [vmem:[#allocation2 + $0x18] sm:$0xff] %v4132
      %4169 = vst [vmem:[#allocation2 + $0x20] sm:$0xff] %v4133
      %4170 = vst [vmem:[#allocation2 + $0x28] sm:$0xff] %v4134
      %4171 = vst [vmem:[#allocation2 + $0x30] sm:$0xff] %v4135
      %4172 = vst [vmem:[#allocation2 + $0x38] sm:$0xff] %v4136
      %4173 = vst [vmem:[#allocation2 + $0x40] sm:$0xff] %v4137
      %4174 = vst [vmem:[#allocation2 + $0x48] sm:$0xff] %v4138
      %4175 = vst [vmem:[#allocation2 + $0x50] sm:$0xff] %v4139
      %4176 = vst [vmem:[#allocation2 + $0x58] sm:$0xff] %v4140
      %4177 = vst [vmem:[#allocation2 + $0x60] sm:$0xff] %v4141
      %4178 = vst [vmem:[#allocation2 + $0x68] sm:$0xff] %v4142
      %4179 = vst [vmem:[#allocation2 + $0x70] sm:$0xff] %v4143
      %4180 = vst [vmem:[#allocation2 + $0x78] sm:$0xff] %v4144
      %4181 = vst [vmem:[#allocation2 + $0x80] sm:$0xff] %v4145
      %4182 = vst [vmem:[#allocation2 + $0x88] sm:$0xff] %v4146
      %4183 = vst [vmem:[#allocation2 + $0x90] sm:$0xff] %v4147
      %4184 = vst [vmem:[#allocation2 + $0x98] sm:$0xff] %v4148
      %4185 = vst [vmem:[#allocation2 + $0xa0] sm:$0xff] %v4149
      %4186 = vst [vmem:[#allocation2 + $0xa8] sm:$0xff] %v4150
      %4187 = vst [vmem:[#allocation2 + $0xb0] sm:$0xff] %v4151
      %4188 = vst [vmem:[#allocation2 + $0xb8] sm:$0xff] %v4152
      %4189 = vst [vmem:[#allocation2 + $0xc0] sm:$0xff] %v4153
      %4190 = vst [vmem:[#allocation2 + $0xc8] sm:$0xff] %v4154
      %4191 = vst [vmem:[#allocation2 + $0xd0] sm:$0xff] %v4155
      %4192 = vst [vmem:[#allocation2 + $0xd8] sm:$0xff] %v4156
      %4193 = vst [vmem:[#allocation2 + $0xe0] sm:$0xff] %v4157
      %4194 = vst [vmem:[#allocation2 + $0xe8] sm:$0xff] %v4158
      %4195 = vst [vmem:[#allocation2 + $0xf0] sm:$0xff] %v4159
      %4196 = vst [vmem:[#allocation2 + $0xf8] sm:$0xff] %v4160
      %4197 = vst [vmem:[#allocation2 + $0x100] sm:$0xff] %v4161
      %4198 = vst [vmem:[#allocation2 + $0x108] sm:$0xff] %v4162
      %4199 = vst [vmem:[#allocation2 + $0x110] sm:$0xff] %v4163
      %4200 = vst [vmem:[#allocation2 + $0x118] sm:$0xff] %v4164
      %v4201 = vld [vmem:[%s294 + $0x10] sm:$0xc]
      %v4202 = vld [vmem:[%s294 + $0x14] sm:$0xf]
      %v4203 = vld [vmem:[%s294 + $0x18] sm:$0xf]
      %v4204 = vld [vmem:[%s294 + $0x1c] sm:$0xf]
      %v4205 = vld [vmem:[%s294 + $0x20] sm:$0xf]
      %v4206 = vld [vmem:[%s294 + $0x24] sm:$0xf]
      %v4207 = vld [vmem:[%s294 + $0x28] sm:$0xf]
      %v4208 = vld [vmem:[%s294 + $0x2c] sm:$0xf]
      %v4209 = vld [vmem:[%s294 + $0x30] sm:$0xf]
      %v4210 = vld [vmem:[%s294 + $0x34] sm:$0xf]
      %v4211 = vld [vmem:[%s294 + $0x38] sm:$0xf]
      %v4212 = vld [vmem:[%s294 + $0x3c] sm:$0xf]
      %v4213 = vld [vmem:[%s294 + $0x40] sm:$0xf]
      %v4214 = vld [vmem:[%s294 + $0x44] sm:$0xf]
      %v4215 = vld [vmem:[%s294 + $0x48] sm:$0xf]
      %v4216 = vld [vmem:[%s294 + $0x4c] sm:$0xf]
      %v4217 = vld [vmem:[%s294 + $0x50] sm:$0xf]
      %v4218 = vld [vmem:[%s294 + $0x54] sm:$0xf]
      %v4219 = vld [vmem:[%s294 + $0x58] sm:$0xf]
      %v4220 = vld [vmem:[%s294 + $0x5c] sm:$0xf]
      %v4221 = vld [vmem:[%s294 + $0x60] sm:$0xf]
      %v4222 = vld [vmem:[%s294 + $0x64] sm:$0xf]
      %v4223 = vld [vmem:[%s294 + $0x68] sm:$0xf]
      %v4224 = vld [vmem:[%s294 + $0x6c] sm:$0xf]
      %v4225 = vld [vmem:[%s294 + $0x70] sm:$0xf]
      %v4226 = vld [vmem:[%s294 + $0x74] sm:$0xf]
      %v4227 = vld [vmem:[%s294 + $0x78] sm:$0xf]
      %v4228 = vld [vmem:[%s294 + $0x7c] sm:$0xf]
      %v4229 = vld [vmem:[%s294 + $0x80] sm:$0xf]
      %v4230 = vld [vmem:[%s294 + $0x84] sm:$0xf]
      %v4231 = vld [vmem:[%s294 + $0x88] sm:$0xf]
      %v4232 = vld [vmem:[%s294 + $0x8c] sm:$0xf]
      %v4233 = vld [vmem:[%s294 + $0x90] sm:$0xf]
      %v4234 = vld [vmem:[%s294 + $0x94] sm:$0xf]
      %v4235 = vld [vmem:[%s294 + $0x98] sm:$0xf]
      %v4236 = vld [vmem:[%s294 + $0x9c] sm:$0xf]
      %v4237 = vld [vmem:[%s294 + $0xa0] sm:$0x7]
      %s4238 = scalar_lea.vmem %s298, 448
      %v4239 = vld [vmem:[%s4238] sm:$0xf]
      %v4240 = vld [vmem:[%s4238 + $0x4] sm:$0xf]
      %v4241 = vld [vmem:[%s4238 + $0x8] sm:$0xf]
      %v4242 = vld [vmem:[%s4238 + $0xc] sm:$0xf]
      %v4243 = vld [vmem:[%s4238 + $0x10] sm:$0xf]
      %v4244 = vld [vmem:[%s4238 + $0x14] sm:$0xf]
      %v4245 = vld [vmem:[%s4238 + $0x18] sm:$0xf]
      %v4246 = vld [vmem:[%s4238 + $0x1c] sm:$0xf]
      %v4247 = vld [vmem:[%s4238 + $0x20] sm:$0xf]
      %v4248 = vld [vmem:[%s4238 + $0x24] sm:$0xf]
      %v4249 = vld [vmem:[%s4238 + $0x28] sm:$0xf]
      %v4250 = vld [vmem:[%s4238 + $0x2c] sm:$0xf]
      %v4251 = vld [vmem:[%s4238 + $0x30] sm:$0xf]
      %v4252 = vld [vmem:[%s4238 + $0x34] sm:$0xf]
      %v4253 = vld [vmem:[%s4238 + $0x38] sm:$0xf]
      %v4254 = vld [vmem:[%s4238 + $0x3c] sm:$0xf]
      %v4292 = vunpack.c.l.b16 %v4201
      %v4293 = vunpack.c.l.b16 %v4202
      %v4294 = vunpack.c.l.b16 %v4203
      %v4295 = vunpack.c.l.b16 %v4204
      %v4296 = vunpack.c.l.b16 %v4205
      %v4297 = vunpack.c.l.b16 %v4206
      %v4298 = vunpack.c.l.b16 %v4207
      %v4299 = vunpack.c.l.b16 %v4208
      %v4300 = vunpack.c.l.b16 %v4209
      %v4301 = vunpack.c.l.b16 %v4210
      %v4302 = vunpack.c.l.b16 %v4211
      %v4303 = vunpack.c.l.b16 %v4212
      %v4304 = vunpack.c.l.b16 %v4213
      %v4305 = vunpack.c.l.b16 %v4214
      %v4306 = vunpack.c.l.b16 %v4215
      %v4307 = vunpack.c.l.b16 %v4216
      %v4308 = vunpack.c.l.b16 %v4217
      %v4309 = vunpack.c.l.b16 %v4218
      %v4310 = vunpack.c.l.b16 %v4219
      %v4311 = vunpack.c.l.b16 %v4220
      %v4312 = vunpack.c.l.b16 %v4221
      %v4313 = vunpack.c.l.b16 %v4222
      %v4314 = vunpack.c.l.b16 %v4223
      %v4315 = vunpack.c.l.b16 %v4224
      %v4316 = vunpack.c.l.b16 %v4225
      %v4317 = vunpack.c.l.b16 %v4226
      %v4318 = vunpack.c.l.b16 %v4227
      %v4319 = vunpack.c.l.b16 %v4228
      %v4320 = vunpack.c.l.b16 %v4229
      %v4321 = vunpack.c.l.b16 %v4230
      %v4322 = vunpack.c.l.b16 %v4231
      %v4323 = vunpack.c.l.b16 %v4232
      %v4324 = vunpack.c.l.b16 %v4233
      %v4325 = vunpack.c.l.b16 %v4234
      %v4326 = vunpack.c.l.b16 %v4235
      %v4327 = vunpack.c.l.b16 %v4236
      %v4328 = vunpack.c.l.b16 %v4237
      %v4329 = vpack.c.b16 %v4293, %v4292
      %v4330 = vpack.c.b16 %v4295, %v4294
      %v4331 = vpack.c.b16 %v4297, %v4296
      %v4332 = vpack.c.b16 %v4299, %v4298
      %v4333 = vpack.c.b16 %v4301, %v4300
      %v4334 = vpack.c.b16 %v4303, %v4302
      %v4335 = vpack.c.b16 %v4305, %v4304
      %v4336 = vpack.c.b16 %v4307, %v4306
      %v4337 = vpack.c.b16 %v4309, %v4308
      %v4338 = vpack.c.b16 %v4311, %v4310
      %v4339 = vpack.c.b16 %v4313, %v4312
      %v4340 = vpack.c.b16 %v4315, %v4314
      %v4341 = vpack.c.b16 %v4317, %v4316
      %v4342 = vpack.c.b16 %v4319, %v4318
      %v4343 = vpack.c.b16 %v4321, %v4320
      %v4344 = vpack.c.b16 %v4323, %v4322
      %v4345 = vpack.c.b16 %v4325, %v4324
      %v4346 = vpack.c.b16 %v4327, %v4326
      %v4347 = vpack.c.b16 %v4328, %v4328
      %vm4348 = vsmask.f32 5376
      %v4350 = vshrl.u32 %v4329, 16
      %v4352 = vrot.slane %v4350, 2
      %v4353 = vshll.u32 %v4329, 16
      %v4355 = vrot.slane %v4353, 3
      %v4356 = vor.u32 %v4352, %v4355
      %v4358 = vshrl.u32 %v4330, 16
      %v4360 = vrot.slane %v4358, 2
      %v4361 = vshll.u32 %v4330, 16
      %v4363 = vrot.slane %v4361, 3
      %v4364 = vor.u32 %v4360, %v4363
      %v4365 = vsel %vm4348, %v4356, %v4364
      %v4367 = vshrl.u32 %v4331, 16
      %v4369 = vrot.slane %v4367, 2
      %v4370 = vshll.u32 %v4331, 16
      %v4372 = vrot.slane %v4370, 3
      %v4373 = vor.u32 %v4369, %v4372
      %v4374 = vsel %vm4348, %v4364, %v4373
      %v4376 = vshrl.u32 %v4332, 16
      %v4378 = vrot.slane %v4376, 2
      %v4379 = vshll.u32 %v4332, 16
      %v4381 = vrot.slane %v4379, 3
      %v4382 = vor.u32 %v4378, %v4381
      %v4383 = vsel %vm4348, %v4373, %v4382
      %v4385 = vshrl.u32 %v4333, 16
      %v4387 = vrot.slane %v4385, 2
      %v4388 = vshll.u32 %v4333, 16
      %v4390 = vrot.slane %v4388, 3
      %v4391 = vor.u32 %v4387, %v4390
      %v4392 = vsel %vm4348, %v4382, %v4391
      %v4394 = vshrl.u32 %v4334, 16
      %v4396 = vrot.slane %v4394, 2
      %v4397 = vshll.u32 %v4334, 16
      %v4399 = vrot.slane %v4397, 3
      %v4400 = vor.u32 %v4396, %v4399
      %v4401 = vsel %vm4348, %v4391, %v4400
      %v4403 = vshrl.u32 %v4335, 16
      %v4405 = vrot.slane %v4403, 2
      %v4406 = vshll.u32 %v4335, 16
      %v4408 = vrot.slane %v4406, 3
      %v4409 = vor.u32 %v4405, %v4408
      %v4410 = vsel %vm4348, %v4400, %v4409
      %v4412 = vshrl.u32 %v4336, 16
      %v4414 = vrot.slane %v4412, 2
      %v4415 = vshll.u32 %v4336, 16
      %v4417 = vrot.slane %v4415, 3
      %v4418 = vor.u32 %v4414, %v4417
      %v4419 = vsel %vm4348, %v4409, %v4418
      %v4421 = vshrl.u32 %v4337, 16
      %v4423 = vrot.slane %v4421, 2
      %v4424 = vshll.u32 %v4337, 16
      %v4426 = vrot.slane %v4424, 3
      %v4427 = vor.u32 %v4423, %v4426
      %v4428 = vsel %vm4348, %v4418, %v4427
      %v4430 = vshrl.u32 %v4338, 16
      %v4432 = vrot.slane %v4430, 2
      %v4433 = vshll.u32 %v4338, 16
      %v4435 = vrot.slane %v4433, 3
      %v4436 = vor.u32 %v4432, %v4435
      %v4437 = vsel %vm4348, %v4427, %v4436
      %v4439 = vshrl.u32 %v4339, 16
      %v4441 = vrot.slane %v4439, 2
      %v4442 = vshll.u32 %v4339, 16
      %v4444 = vrot.slane %v4442, 3
      %v4445 = vor.u32 %v4441, %v4444
      %v4446 = vsel %vm4348, %v4436, %v4445
      %v4448 = vshrl.u32 %v4340, 16
      %v4450 = vrot.slane %v4448, 2
      %v4451 = vshll.u32 %v4340, 16
      %v4453 = vrot.slane %v4451, 3
      %v4454 = vor.u32 %v4450, %v4453
      %v4455 = vsel %vm4348, %v4445, %v4454
      %v4457 = vshrl.u32 %v4341, 16
      %v4459 = vrot.slane %v4457, 2
      %v4460 = vshll.u32 %v4341, 16
      %v4462 = vrot.slane %v4460, 3
      %v4463 = vor.u32 %v4459, %v4462
      %v4464 = vsel %vm4348, %v4454, %v4463
      %v4466 = vshrl.u32 %v4342, 16
      %v4468 = vrot.slane %v4466, 2
      %v4469 = vshll.u32 %v4342, 16
      %v4471 = vrot.slane %v4469, 3
      %v4472 = vor.u32 %v4468, %v4471
      %v4473 = vsel %vm4348, %v4463, %v4472
      %v4475 = vshrl.u32 %v4343, 16
      %v4477 = vrot.slane %v4475, 2
      %v4478 = vshll.u32 %v4343, 16
      %v4480 = vrot.slane %v4478, 3
      %v4481 = vor.u32 %v4477, %v4480
      %v4482 = vsel %vm4348, %v4472, %v4481
      %v4484 = vshrl.u32 %v4344, 16
      %v4486 = vrot.slane %v4484, 2
      %v4487 = vshll.u32 %v4344, 16
      %v4489 = vrot.slane %v4487, 3
      %v4490 = vor.u32 %v4486, %v4489
      %v4491 = vsel %vm4348, %v4481, %v4490
      %v4493 = vshrl.u32 %v4345, 16
      %v4495 = vrot.slane %v4493, 2
      %v4496 = vshll.u32 %v4345, 16
      %v4498 = vrot.slane %v4496, 3
      %v4499 = vor.u32 %v4495, %v4498
      %v4500 = vsel %vm4348, %v4490, %v4499
      %v4502 = vshrl.u32 %v4346, 16
      %v4504 = vrot.slane %v4502, 2
      %v4505 = vshll.u32 %v4346, 16
      %v4507 = vrot.slane %v4505, 3
      %v4508 = vor.u32 %v4504, %v4507
      %v4509 = vsel %vm4348, %v4499, %v4508
      %v4511 = vshrl.u32 %v4347, 16
      %v4513 = vrot.slane %v4511, 2
      %v4514 = vshll.u32 %v4347, 16
      %v4516 = vrot.slane %v4514, 3
      %v4517 = vor.u32 %v4513, %v4516
      %v4518 = vsel %vm4348, %v4508, %v4517
      %v4553 = vunpack.c.l.b16 %v4239
      %v4554 = vunpack.c.l.b16 %v4240
      %v4555 = vunpack.c.l.b16 %v4241
      %v4556 = vunpack.c.l.b16 %v4242
      %v4557 = vunpack.c.l.b16 %v4243
      %v4558 = vunpack.c.l.b16 %v4244
      %v4559 = vunpack.c.l.b16 %v4245
      %v4560 = vunpack.c.l.b16 %v4246
      %v4561 = vunpack.c.l.b16 %v4247
      %v4562 = vunpack.c.l.b16 %v4248
      %v4563 = vunpack.c.l.b16 %v4249
      %v4564 = vunpack.c.l.b16 %v4250
      %v4565 = vunpack.c.l.b16 %v4251
      %v4566 = vunpack.c.l.b16 %v4252
      %v4567 = vunpack.c.l.b16 %v4253
      %v4568 = vunpack.c.l.b16 %v4254
      %v4569 = vpack.c.b16 %v4554, %v4553
      %v4570 = vpack.c.b16 %v4556, %v4555
      %v4571 = vpack.c.b16 %v4558, %v4557
      %v4572 = vpack.c.b16 %v4560, %v4559
      %v4573 = vpack.c.b16 %v4562, %v4561
      %v4574 = vpack.c.b16 %v4564, %v4563
      %v4575 = vpack.c.b16 %v4566, %v4565
      %v4576 = vpack.c.b16 %v4568, %v4567
      %4585 = vmatprep.subr.bf16.mxu0 0
      %4586 = vmatpush1.bf16.msra.mxu0 %v4576
      %4587 = vmatprep.subr.bf16.mxu0 0
      %4588 = vmatpush1.bf16.msra.mxu0 %v4575
      %4589 = vmatprep.subr.bf16.mxu0 0
      %4590 = vmatpush1.bf16.msra.mxu0 %v4574
      %4591 = vmatprep.subr.bf16.mxu0 0
      %4592 = vmatpush1.bf16.msra.mxu0 %v4573
      %4593 = vmatprep.subr.bf16.mxu0 0
      %4594 = vmatpush1.bf16.msra.mxu0 %v4572
      %4595 = vmatprep.subr.bf16.mxu0 0
      %4596 = vmatpush1.bf16.msra.mxu0 %v4571
      %4597 = vmatprep.subr.bf16.mxu0 0
      %4598 = vmatpush1.bf16.msra.mxu0 %v4570
      %4599 = vmatprep.subr.bf16.mxu0 0
      %4600 = vmatpush1.bf16.msra.mxu0 %v4569
      %4601 = vmatprep.subr.bf16.mxu0 0
      %4602 = vmatpush2.bf16.msra.mxu0 0
      %4603 = vmatprep.subr.bf16.mxu0 0
      %4604 = vmatpush2.bf16.msra.mxu0 0
      %4605 = vmatprep.subr.bf16.mxu0 0
      %4606 = vmatpush2.bf16.msra.mxu0 0
      %4607 = vmatprep.subr.bf16.mxu0 0
      %4608 = vmatpush2.bf16.msra.mxu0 0
      %4609 = vmatprep.subr.bf16.mxu0 0
      %4610 = vmatpush2.bf16.msra.mxu0 0
      %4611 = vmatprep.subr.bf16.mxu0 0
      %4612 = vmatpush2.bf16.msra.mxu0 0
      %4613 = vmatprep.subr.bf16.mxu0 0
      %4614 = vmatpush2.bf16.msra.mxu0 0
      %4615 = vmatprep.subr.bf16.mxu0 0
      %4616 = vmatpush2.bf16.msra.mxu0 0
      %4617 = vmatprep.mubr.bf16.mxu0 0
      %4618 = vmatmul.mubr.bf16.gmra.mxu0 %v4365
      %v4619 = vpop.f32.mrf.mxu0
      %v4620 = vadd.f32 0.0, %v4619
      %v4621 = vpop.f32.mrf.mxu0
      %v4622 = vpop.f32.mrf.mxu0
      %v4623 = vadd.f32 0.0, %v4622
      %v4624 = vpop.f32.mrf.mxu0
      %4625 = vmatprep.mubr.bf16.mxu0 0
      %4626 = vmatmul.mubr.bf16.gmra.mxu0 %v4374
      %v4627 = vpop.f32.mrf.mxu0
      %v4628 = vadd.f32 0.0, %v4627
      %v4629 = vpop.f32.mrf.mxu0
      %v4630 = vpop.f32.mrf.mxu0
      %v4631 = vadd.f32 0.0, %v4630
      %v4632 = vpop.f32.mrf.mxu0
      %4633 = vmatprep.mubr.bf16.mxu0 0
      %4634 = vmatmul.mubr.bf16.gmra.mxu0 %v4383
      %v4635 = vpop.f32.mrf.mxu0
      %v4636 = vadd.f32 0.0, %v4635
      %v4637 = vpop.f32.mrf.mxu0
      %v4638 = vpop.f32.mrf.mxu0
      %v4639 = vadd.f32 0.0, %v4638
      %v4640 = vpop.f32.mrf.mxu0
      %4641 = vmatprep.mubr.bf16.mxu0 0
      %4642 = vmatmul.mubr.bf16.gmra.mxu0 %v4392
      %v4643 = vpop.f32.mrf.mxu0
      %v4644 = vadd.f32 0.0, %v4643
      %v4645 = vpop.f32.mrf.mxu0
      %v4646 = vpop.f32.mrf.mxu0
      %v4647 = vadd.f32 0.0, %v4646
      %v4648 = vpop.f32.mrf.mxu0
      %4649 = vmatprep.mubr.bf16.mxu0 0
      %4650 = vmatmul.mubr.bf16.gmra.mxu0 %v4401
      %v4651 = vpop.f32.mrf.mxu0
      %v4652 = vadd.f32 0.0, %v4651
      %v4653 = vpop.f32.mrf.mxu0
      %v4654 = vpop.f32.mrf.mxu0
      %v4655 = vadd.f32 0.0, %v4654
      %v4656 = vpop.f32.mrf.mxu0
      %4657 = vmatprep.mubr.bf16.mxu0 0
      %4658 = vmatmul.mubr.bf16.gmra.mxu0 %v4410
      %v4659 = vpop.f32.mrf.mxu0
      %v4660 = vadd.f32 0.0, %v4659
      %v4661 = vpop.f32.mrf.mxu0
      %v4662 = vpop.f32.mrf.mxu0
      %v4663 = vadd.f32 0.0, %v4662
      %v4664 = vpop.f32.mrf.mxu0
      %4665 = vmatprep.mubr.bf16.mxu0 0
      %4666 = vmatmul.mubr.bf16.gmra.mxu0 %v4419
      %v4667 = vpop.f32.mrf.mxu0
      %v4668 = vadd.f32 0.0, %v4667
      %v4669 = vpop.f32.mrf.mxu0
      %v4670 = vpop.f32.mrf.mxu0
      %v4671 = vadd.f32 0.0, %v4670
      %v4672 = vpop.f32.mrf.mxu0
      %4673 = vmatprep.mubr.bf16.mxu0 0
      %4674 = vmatmul.mubr.bf16.gmra.mxu0 %v4428
      %v4675 = vpop.f32.mrf.mxu0
      %v4676 = vadd.f32 0.0, %v4675
      %v4677 = vpop.f32.mrf.mxu0
      %v4678 = vpop.f32.mrf.mxu0
      %v4679 = vadd.f32 0.0, %v4678
      %v4680 = vpop.f32.mrf.mxu0
      %4681 = vmatprep.mubr.bf16.mxu0 0
      %4682 = vmatmul.mubr.bf16.gmra.mxu0 %v4437
      %v4683 = vpop.f32.mrf.mxu0
      %v4684 = vadd.f32 0.0, %v4683
      %v4685 = vpop.f32.mrf.mxu0
      %v4686 = vpop.f32.mrf.mxu0
      %v4687 = vadd.f32 0.0, %v4686
      %v4688 = vpop.f32.mrf.mxu0
      %4689 = vmatprep.mubr.bf16.mxu0 0
      %4690 = vmatmul.mubr.bf16.gmra.mxu0 %v4446
      %v4691 = vpop.f32.mrf.mxu0
      %v4692 = vadd.f32 0.0, %v4691
      %v4693 = vpop.f32.mrf.mxu0
      %v4694 = vpop.f32.mrf.mxu0
      %v4695 = vadd.f32 0.0, %v4694
      %v4696 = vpop.f32.mrf.mxu0
      %4697 = vmatprep.mubr.bf16.mxu0 0
      %4698 = vmatmul.mubr.bf16.gmra.mxu0 %v4455
      %v4699 = vpop.f32.mrf.mxu0
      %v4700 = vadd.f32 0.0, %v4699
      %v4701 = vpop.f32.mrf.mxu0
      %v4702 = vpop.f32.mrf.mxu0
      %v4703 = vadd.f32 0.0, %v4702
      %v4704 = vpop.f32.mrf.mxu0
      %4705 = vmatprep.mubr.bf16.mxu0 0
      %4706 = vmatmul.mubr.bf16.gmra.mxu0 %v4464
      %v4707 = vpop.f32.mrf.mxu0
      %v4708 = vadd.f32 0.0, %v4707
      %v4709 = vpop.f32.mrf.mxu0
      %v4710 = vpop.f32.mrf.mxu0
      %v4711 = vadd.f32 0.0, %v4710
      %v4712 = vpop.f32.mrf.mxu0
      %4713 = vmatprep.mubr.bf16.mxu0 0
      %4714 = vmatmul.mubr.bf16.gmra.mxu0 %v4473
      %v4715 = vpop.f32.mrf.mxu0
      %v4716 = vadd.f32 0.0, %v4715
      %v4717 = vpop.f32.mrf.mxu0
      %v4718 = vpop.f32.mrf.mxu0
      %v4719 = vadd.f32 0.0, %v4718
      %v4720 = vpop.f32.mrf.mxu0
      %4721 = vmatprep.mubr.bf16.mxu0 0
      %4722 = vmatmul.mubr.bf16.gmra.mxu0 %v4482
      %v4723 = vpop.f32.mrf.mxu0
      %v4724 = vadd.f32 0.0, %v4723
      %v4725 = vpop.f32.mrf.mxu0
      %v4726 = vpop.f32.mrf.mxu0
      %v4727 = vadd.f32 0.0, %v4726
      %v4728 = vpop.f32.mrf.mxu0
      %4729 = vmatprep.mubr.bf16.mxu0 0
      %4730 = vmatmul.mubr.bf16.gmra.mxu0 %v4491
      %v4731 = vpop.f32.mrf.mxu0
      %v4732 = vadd.f32 0.0, %v4731
      %v4733 = vpop.f32.mrf.mxu0
      %v4734 = vpop.f32.mrf.mxu0
      %v4735 = vadd.f32 0.0, %v4734
      %v4736 = vpop.f32.mrf.mxu0
      %4737 = vmatprep.mubr.bf16.mxu0 0
      %4738 = vmatmul.mubr.bf16.gmra.mxu0 %v4500
      %v4739 = vpop.f32.mrf.mxu0
      %v4740 = vadd.f32 0.0, %v4739
      %v4741 = vpop.f32.mrf.mxu0
      %v4742 = vpop.f32.mrf.mxu0
      %v4743 = vadd.f32 0.0, %v4742
      %v4744 = vpop.f32.mrf.mxu0
      %4745 = vmatprep.mubr.bf16.mxu0 0
      %4746 = vmatmul.mubr.bf16.gmra.mxu0 %v4509
      %v4747 = vpop.f32.mrf.mxu0
      %v4748 = vadd.f32 0.0, %v4747
      %v4749 = vpop.f32.mrf.mxu0
      %v4750 = vpop.f32.mrf.mxu0
      %v4751 = vadd.f32 0.0, %v4750
      %v4752 = vpop.f32.mrf.mxu0
      %4753 = vmatprep.mubr.bf16.mxu0 0
      %4754 = vmatmul.mubr.bf16.gmra.mxu0 %v4518
      %v4755 = vpop.f32.mrf.mxu0
      %v4756 = vadd.f32 0.0, %v4755
      %v4757 = vpop.f32.mrf.mxu0
      %v4758 = vpop.f32.mrf.mxu0
      %v4759 = vadd.f32 0.0, %v4758
      %v4760 = vpop.f32.mrf.mxu0
      %4761 = vdwg.mxu0
      %v4762 = vld [vmem:[#allocation2] sm:$0xff]
      %v4763 = vld [vmem:[#allocation2 + $0x8] sm:$0xff]
      %v4764 = vld [vmem:[#allocation2 + $0x10] sm:$0xff]
      %v4765 = vld [vmem:[#allocation2 + $0x18] sm:$0xff]
      %v4766 = vld [vmem:[#allocation2 + $0x20] sm:$0xff]
      %v4767 = vld [vmem:[#allocation2 + $0x28] sm:$0xff]
      %v4768 = vld [vmem:[#allocation2 + $0x30] sm:$0xff]
      %v4769 = vld [vmem:[#allocation2 + $0x38] sm:$0xff]
      %v4770 = vld [vmem:[#allocation2 + $0x40] sm:$0xff]
      %v4771 = vld [vmem:[#allocation2 + $0x48] sm:$0xff]
      %v4772 = vld [vmem:[#allocation2 + $0x50] sm:$0xff]
      %v4773 = vld [vmem:[#allocation2 + $0x58] sm:$0xff]
      %v4774 = vld [vmem:[#allocation2 + $0x60] sm:$0xff]
      %v4775 = vld [vmem:[#allocation2 + $0x68] sm:$0xff]
      %v4776 = vld [vmem:[#allocation2 + $0x70] sm:$0xff]
      %v4777 = vld [vmem:[#allocation2 + $0x78] sm:$0xff]
      %v4778 = vld [vmem:[#allocation2 + $0x80] sm:$0xff]
      %v4779 = vld [vmem:[#allocation2 + $0x88] sm:$0xff]
      %v4780 = vld [vmem:[#allocation2 + $0x90] sm:$0xff]
      %v4781 = vld [vmem:[#allocation2 + $0x98] sm:$0xff]
      %v4782 = vld [vmem:[#allocation2 + $0xa0] sm:$0xff]
      %v4783 = vld [vmem:[#allocation2 + $0xa8] sm:$0xff]
      %v4784 = vld [vmem:[#allocation2 + $0xb0] sm:$0xff]
      %v4785 = vld [vmem:[#allocation2 + $0xb8] sm:$0xff]
      %v4786 = vld [vmem:[#allocation2 + $0xc0] sm:$0xff]
      %v4787 = vld [vmem:[#allocation2 + $0xc8] sm:$0xff]
      %v4788 = vld [vmem:[#allocation2 + $0xd0] sm:$0xff]
      %v4789 = vld [vmem:[#allocation2 + $0xd8] sm:$0xff]
      %v4790 = vld [vmem:[#allocation2 + $0xe0] sm:$0xff]
      %v4791 = vld [vmem:[#allocation2 + $0xe8] sm:$0xff]
      %v4792 = vld [vmem:[#allocation2 + $0xf0] sm:$0xff]
      %v4793 = vld [vmem:[#allocation2 + $0xf8] sm:$0xff]
      %v4794 = vld [vmem:[#allocation2 + $0x100] sm:$0xff]
      %v4795 = vld [vmem:[#allocation2 + $0x108] sm:$0xff]
      %v4796 = vld [vmem:[#allocation2 + $0x110] sm:$0xff]
      %v4797 = vld [vmem:[#allocation2 + $0x118] sm:$0xff]
      %v4798 = vadd.f32 %v4762, %v4620
      %v4799 = vadd.f32 %v4763, %v4623
      %v4800 = vadd.f32 %v4764, %v4628
      %v4801 = vadd.f32 %v4765, %v4631
      %v4802 = vadd.f32 %v4766, %v4636
      %v4803 = vadd.f32 %v4767, %v4639
      %v4804 = vadd.f32 %v4768, %v4644
      %v4805 = vadd.f32 %v4769, %v4647
      %v4806 = vadd.f32 %v4770, %v4652
      %v4807 = vadd.f32 %v4771, %v4655
      %v4808 = vadd.f32 %v4772, %v4660
      %v4809 = vadd.f32 %v4773, %v4663
      %v4810 = vadd.f32 %v4774, %v4668
      %v4811 = vadd.f32 %v4775, %v4671
      %v4812 = vadd.f32 %v4776, %v4676
      %v4813 = vadd.f32 %v4777, %v4679
      %v4814 = vadd.f32 %v4778, %v4684
      %v4815 = vadd.f32 %v4779, %v4687
      %v4816 = vadd.f32 %v4780, %v4692
      %v4817 = vadd.f32 %v4781, %v4695
      %v4818 = vadd.f32 %v4782, %v4700
      %v4819 = vadd.f32 %v4783, %v4703
      %v4820 = vadd.f32 %v4784, %v4708
      %v4821 = vadd.f32 %v4785, %v4711
      %v4822 = vadd.f32 %v4786, %v4716
      %v4823 = vadd.f32 %v4787, %v4719
      %v4824 = vadd.f32 %v4788, %v4724
      %v4825 = vadd.f32 %v4789, %v4727
      %v4826 = vadd.f32 %v4790, %v4732
      %v4827 = vadd.f32 %v4791, %v4735
      %v4828 = vadd.f32 %v4792, %v4740
      %v4829 = vadd.f32 %v4793, %v4743
      %v4830 = vadd.f32 %v4794, %v4748
      %v4831 = vadd.f32 %v4795, %v4751
      %v4832 = vadd.f32 %v4796, %v4756
      %v4833 = vadd.f32 %v4797, %v4759
      %4834 = vst [vmem:[#allocation2] sm:$0xff] %v4798
      %4835 = vst [vmem:[#allocation2 + $0x8] sm:$0xff] %v4799
      %4836 = vst [vmem:[#allocation2 + $0x10] sm:$0xff] %v4800
      %4837 = vst [vmem:[#allocation2 + $0x18] sm:$0xff] %v4801
      %4838 = vst [vmem:[#allocation2 + $0x20] sm:$0xff] %v4802
      %4839 = vst [vmem:[#allocation2 + $0x28] sm:$0xff] %v4803
      %4840 = vst [vmem:[#allocation2 + $0x30] sm:$0xff] %v4804
      %4841 = vst [vmem:[#allocation2 + $0x38] sm:$0xff] %v4805
      %4842 = vst [vmem:[#allocation2 + $0x40] sm:$0xff] %v4806
      %4843 = vst [vmem:[#allocation2 + $0x48] sm:$0xff] %v4807
      %4844 = vst [vmem:[#allocation2 + $0x50] sm:$0xff] %v4808
      %4845 = vst [vmem:[#allocation2 + $0x58] sm:$0xff] %v4809
      %4846 = vst [vmem:[#allocation2 + $0x60] sm:$0xff] %v4810
      %4847 = vst [vmem:[#allocation2 + $0x68] sm:$0xff] %v4811
      %4848 = vst [vmem:[#allocation2 + $0x70] sm:$0xff] %v4812
      %4849 = vst [vmem:[#allocation2 + $0x78] sm:$0xff] %v4813
      %4850 = vst [vmem:[#allocation2 + $0x80] sm:$0xff] %v4814
      %4851 = vst [vmem:[#allocation2 + $0x88] sm:$0xff] %v4815
      %4852 = vst [vmem:[#allocation2 + $0x90] sm:$0xff] %v4816
      %4853 = vst [vmem:[#allocation2 + $0x98] sm:$0xff] %v4817
      %4854 = vst [vmem:[#allocation2 + $0xa0] sm:$0xff] %v4818
      %4855 = vst [vmem:[#allocation2 + $0xa8] sm:$0xff] %v4819
      %4856 = vst [vmem:[#allocation2 + $0xb0] sm:$0xff] %v4820
      %4857 = vst [vmem:[#allocation2 + $0xb8] sm:$0xff] %v4821
      %4858 = vst [vmem:[#allocation2 + $0xc0] sm:$0xff] %v4822
      %4859 = vst [vmem:[#allocation2 + $0xc8] sm:$0xff] %v4823
      %4860 = vst [vmem:[#allocation2 + $0xd0] sm:$0xff] %v4824
      %4861 = vst [vmem:[#allocation2 + $0xd8] sm:$0xff] %v4825
      %4862 = vst [vmem:[#allocation2 + $0xe0] sm:$0xff] %v4826
      %4863 = vst [vmem:[#allocation2 + $0xe8] sm:$0xff] %v4827
      %4864 = vst [vmem:[#allocation2 + $0xf0] sm:$0xff] %v4828
      %4865 = vst [vmem:[#allocation2 + $0xf8] sm:$0xff] %v4829
      %4866 = vst [vmem:[#allocation2 + $0x100] sm:$0xff] %v4830
      %4867 = vst [vmem:[#allocation2 + $0x108] sm:$0xff] %v4831
      %4868 = vst [vmem:[#allocation2 + $0x110] sm:$0xff] %v4832
      %4869 = vst [vmem:[#allocation2 + $0x118] sm:$0xff] %v4833
      %v4870 = vld [vmem:[%s294 + $0x10] sm:$0x8]
      %v4871 = vld [vmem:[%s294 + $0x14] sm:$0xf]
      %v4872 = vld [vmem:[%s294 + $0x18] sm:$0xf]
      %v4873 = vld [vmem:[%s294 + $0x1c] sm:$0xf]
      %v4874 = vld [vmem:[%s294 + $0x20] sm:$0xf]
      %v4875 = vld [vmem:[%s294 + $0x24] sm:$0xf]
      %v4876 = vld [vmem:[%s294 + $0x28] sm:$0xf]
      %v4877 = vld [vmem:[%s294 + $0x2c] sm:$0xf]
      %v4878 = vld [vmem:[%s294 + $0x30] sm:$0xf]
      %v4879 = vld [vmem:[%s294 + $0x34] sm:$0xf]
      %v4880 = vld [vmem:[%s294 + $0x38] sm:$0xf]
      %v4881 = vld [vmem:[%s294 + $0x3c] sm:$0xf]
      %v4882 = vld [vmem:[%s294 + $0x40] sm:$0xf]
      %v4883 = vld [vmem:[%s294 + $0x44] sm:$0xf]
      %v4884 = vld [vmem:[%s294 + $0x48] sm:$0xf]
      %v4885 = vld [vmem:[%s294 + $0x4c] sm:$0xf]
      %v4886 = vld [vmem:[%s294 + $0x50] sm:$0xf]
      %v4887 = vld [vmem:[%s294 + $0x54] sm:$0xf]
      %v4888 = vld [vmem:[%s294 + $0x58] sm:$0xf]
      %v4889 = vld [vmem:[%s294 + $0x5c] sm:$0xf]
      %v4890 = vld [vmem:[%s294 + $0x60] sm:$0xf]
      %v4891 = vld [vmem:[%s294 + $0x64] sm:$0xf]
      %v4892 = vld [vmem:[%s294 + $0x68] sm:$0xf]
      %v4893 = vld [vmem:[%s294 + $0x6c] sm:$0xf]
      %v4894 = vld [vmem:[%s294 + $0x70] sm:$0xf]
      %v4895 = vld [vmem:[%s294 + $0x74] sm:$0xf]
      %v4896 = vld [vmem:[%s294 + $0x78] sm:$0xf]
      %v4897 = vld [vmem:[%s294 + $0x7c] sm:$0xf]
      %v4898 = vld [vmem:[%s294 + $0x80] sm:$0xf]
      %v4899 = vld [vmem:[%s294 + $0x84] sm:$0xf]
      %v4900 = vld [vmem:[%s294 + $0x88] sm:$0xf]
      %v4901 = vld [vmem:[%s294 + $0x8c] sm:$0xf]
      %v4902 = vld [vmem:[%s294 + $0x90] sm:$0xf]
      %v4903 = vld [vmem:[%s294 + $0x94] sm:$0xf]
      %v4904 = vld [vmem:[%s294 + $0x98] sm:$0xf]
      %v4905 = vld [vmem:[%s294 + $0x9c] sm:$0xf]
      %v4906 = vld [vmem:[%s294 + $0xa0] sm:$0x7]
      %s4907 = scalar_lea.vmem %s298, 512
      %v4908 = vld [vmem:[%s4907] sm:$0xf]
      %v4909 = vld [vmem:[%s4907 + $0x4] sm:$0xf]
      %v4910 = vld [vmem:[%s4907 + $0x8] sm:$0xf]
      %v4911 = vld [vmem:[%s4907 + $0xc] sm:$0xf]
      %v4912 = vld [vmem:[%s4907 + $0x10] sm:$0xf]
      %v4913 = vld [vmem:[%s4907 + $0x14] sm:$0xf]
      %v4914 = vld [vmem:[%s4907 + $0x18] sm:$0xf]
      %v4915 = vld [vmem:[%s4907 + $0x1c] sm:$0xf]
      %v4916 = vld [vmem:[%s4907 + $0x20] sm:$0xf]
      %v4917 = vld [vmem:[%s4907 + $0x24] sm:$0xf]
      %v4918 = vld [vmem:[%s4907 + $0x28] sm:$0xf]
      %v4919 = vld [vmem:[%s4907 + $0x2c] sm:$0xf]
      %v4920 = vld [vmem:[%s4907 + $0x30] sm:$0xf]
      %v4921 = vld [vmem:[%s4907 + $0x34] sm:$0xf]
      %v4922 = vld [vmem:[%s4907 + $0x38] sm:$0xf]
      %v4923 = vld [vmem:[%s4907 + $0x3c] sm:$0xf]
      %v4961 = vunpack.c.l.b16 %v4870
      %v4962 = vunpack.c.l.b16 %v4871
      %v4963 = vunpack.c.l.b16 %v4872
      %v4964 = vunpack.c.l.b16 %v4873
      %v4965 = vunpack.c.l.b16 %v4874
      %v4966 = vunpack.c.l.b16 %v4875
      %v4967 = vunpack.c.l.b16 %v4876
      %v4968 = vunpack.c.l.b16 %v4877
      %v4969 = vunpack.c.l.b16 %v4878
      %v4970 = vunpack.c.l.b16 %v4879
      %v4971 = vunpack.c.l.b16 %v4880
      %v4972 = vunpack.c.l.b16 %v4881
      %v4973 = vunpack.c.l.b16 %v4882
      %v4974 = vunpack.c.l.b16 %v4883
      %v4975 = vunpack.c.l.b16 %v4884
      %v4976 = vunpack.c.l.b16 %v4885
      %v4977 = vunpack.c.l.b16 %v4886
      %v4978 = vunpack.c.l.b16 %v4887
      %v4979 = vunpack.c.l.b16 %v4888
      %v4980 = vunpack.c.l.b16 %v4889
      %v4981 = vunpack.c.l.b16 %v4890
      %v4982 = vunpack.c.l.b16 %v4891
      %v4983 = vunpack.c.l.b16 %v4892
      %v4984 = vunpack.c.l.b16 %v4893
      %v4985 = vunpack.c.l.b16 %v4894
      %v4986 = vunpack.c.l.b16 %v4895
      %v4987 = vunpack.c.l.b16 %v4896
      %v4988 = vunpack.c.l.b16 %v4897
      %v4989 = vunpack.c.l.b16 %v4898
      %v4990 = vunpack.c.l.b16 %v4899
      %v4991 = vunpack.c.l.b16 %v4900
      %v4992 = vunpack.c.l.b16 %v4901
      %v4993 = vunpack.c.l.b16 %v4902
      %v4994 = vunpack.c.l.b16 %v4903
      %v4995 = vunpack.c.l.b16 %v4904
      %v4996 = vunpack.c.l.b16 %v4905
      %v4997 = vunpack.c.l.b16 %v4906
      %v4998 = vpack.c.b16 %v4962, %v4961
      %v4999 = vpack.c.b16 %v4964, %v4963
      %v5000 = vpack.c.b16 %v4966, %v4965
      %v5001 = vpack.c.b16 %v4968, %v4967
      %v5002 = vpack.c.b16 %v4970, %v4969
      %v5003 = vpack.c.b16 %v4972, %v4971
      %v5004 = vpack.c.b16 %v4974, %v4973
      %v5005 = vpack.c.b16 %v4976, %v4975
      %v5006 = vpack.c.b16 %v4978, %v4977
      %v5007 = vpack.c.b16 %v4980, %v4979
      %v5008 = vpack.c.b16 %v4982, %v4981
      %v5009 = vpack.c.b16 %v4984, %v4983
      %v5010 = vpack.c.b16 %v4986, %v4985
      %v5011 = vpack.c.b16 %v4988, %v4987
      %v5012 = vpack.c.b16 %v4990, %v4989
      %v5013 = vpack.c.b16 %v4992, %v4991
      %v5014 = vpack.c.b16 %v4994, %v4993
      %v5015 = vpack.c.b16 %v4996, %v4995
      %v5016 = vpack.c.b16 %v4997, %v4997
      %vm5017 = vcmask 1044480
      %v5018 = vrot.slane %v4998, 3
      %v5019 = vrot.slane %v4999, 3
      %v5020 = vsel %vm5017, %v5018, %v5019
      %v5021 = vrot.slane %v5000, 3
      %v5022 = vsel %vm5017, %v5019, %v5021
      %v5023 = vrot.slane %v5001, 3
      %v5024 = vsel %vm5017, %v5021, %v5023
      %v5025 = vrot.slane %v5002, 3
      %v5026 = vsel %vm5017, %v5023, %v5025
      %v5027 = vrot.slane %v5003, 3
      %v5028 = vsel %vm5017, %v5025, %v5027
      %v5029 = vrot.slane %v5004, 3
      %v5030 = vsel %vm5017, %v5027, %v5029
      %v5031 = vrot.slane %v5005, 3
      %v5032 = vsel %vm5017, %v5029, %v5031
      %v5033 = vrot.slane %v5006, 3
      %v5034 = vsel %vm5017, %v5031, %v5033
      %v5035 = vrot.slane %v5007, 3
      %v5036 = vsel %vm5017, %v5033, %v5035
      %v5037 = vrot.slane %v5008, 3
      %v5038 = vsel %vm5017, %v5035, %v5037
      %v5039 = vrot.slane %v5009, 3
      %v5040 = vsel %vm5017, %v5037, %v5039
      %v5041 = vrot.slane %v5010, 3
      %v5042 = vsel %vm5017, %v5039, %v5041
      %v5043 = vrot.slane %v5011, 3
      %v5044 = vsel %vm5017, %v5041, %v5043
      %v5045 = vrot.slane %v5012, 3
      %v5046 = vsel %vm5017, %v5043, %v5045
      %v5047 = vrot.slane %v5013, 3
      %v5048 = vsel %vm5017, %v5045, %v5047
      %v5049 = vrot.slane %v5014, 3
      %v5050 = vsel %vm5017, %v5047, %v5049
      %v5051 = vrot.slane %v5015, 3
      %v5052 = vsel %vm5017, %v5049, %v5051
      %v5053 = vrot.slane %v5016, 3
      %v5054 = vsel %vm5017, %v5051, %v5053
      %v5089 = vunpack.c.l.b16 %v4908
      %v5090 = vunpack.c.l.b16 %v4909
      %v5091 = vunpack.c.l.b16 %v4910
      %v5092 = vunpack.c.l.b16 %v4911
      %v5093 = vunpack.c.l.b16 %v4912
      %v5094 = vunpack.c.l.b16 %v4913
      %v5095 = vunpack.c.l.b16 %v4914
      %v5096 = vunpack.c.l.b16 %v4915
      %v5097 = vunpack.c.l.b16 %v4916
      %v5098 = vunpack.c.l.b16 %v4917
      %v5099 = vunpack.c.l.b16 %v4918
      %v5100 = vunpack.c.l.b16 %v4919
      %v5101 = vunpack.c.l.b16 %v4920
      %v5102 = vunpack.c.l.b16 %v4921
      %v5103 = vunpack.c.l.b16 %v4922
      %v5104 = vunpack.c.l.b16 %v4923
      %v5105 = vpack.c.b16 %v5090, %v5089
      %v5106 = vpack.c.b16 %v5092, %v5091
      %v5107 = vpack.c.b16 %v5094, %v5093
      %v5108 = vpack.c.b16 %v5096, %v5095
      %v5109 = vpack.c.b16 %v5098, %v5097
      %v5110 = vpack.c.b16 %v5100, %v5099
      %v5111 = vpack.c.b16 %v5102, %v5101
      %v5112 = vpack.c.b16 %v5104, %v5103
      %5121 = vmatprep.subr.bf16.mxu0 0
      %5122 = vmatpush1.bf16.msra.mxu0 %v5112
      %5123 = vmatprep.subr.bf16.mxu0 0
      %5124 = vmatpush1.bf16.msra.mxu0 %v5111
      %5125 = vmatprep.subr.bf16.mxu0 0
      %5126 = vmatpush1.bf16.msra.mxu0 %v5110
      %5127 = vmatprep.subr.bf16.mxu0 0
      %5128 = vmatpush1.bf16.msra.mxu0 %v5109
      %5129 = vmatprep.subr.bf16.mxu0 0
      %5130 = vmatpush1.bf16.msra.mxu0 %v5108
      %5131 = vmatprep.subr.bf16.mxu0 0
      %5132 = vmatpush1.bf16.msra.mxu0 %v5107
      %5133 = vmatprep.subr.bf16.mxu0 0
      %5134 = vmatpush1.bf16.msra.mxu0 %v5106
      %5135 = vmatprep.subr.bf16.mxu0 0
      %5136 = vmatpush1.bf16.msra.mxu0 %v5105
      %5137 = vmatprep.subr.bf16.mxu0 0
      %5138 = vmatpush2.bf16.msra.mxu0 0
      %5139 = vmatprep.subr.bf16.mxu0 0
      %5140 = vmatpush2.bf16.msra.mxu0 0
      %5141 = vmatprep.subr.bf16.mxu0 0
      %5142 = vmatpush2.bf16.msra.mxu0 0
      %5143 = vmatprep.subr.bf16.mxu0 0
      %5144 = vmatpush2.bf16.msra.mxu0 0
      %5145 = vmatprep.subr.bf16.mxu0 0
      %5146 = vmatpush2.bf16.msra.mxu0 0
      %5147 = vmatprep.subr.bf16.mxu0 0
      %5148 = vmatpush2.bf16.msra.mxu0 0
      %5149 = vmatprep.subr.bf16.mxu0 0
      %5150 = vmatpush2.bf16.msra.mxu0 0
      %5151 = vmatprep.subr.bf16.mxu0 0
      %5152 = vmatpush2.bf16.msra.mxu0 0
      %5153 = vmatprep.mubr.bf16.mxu0 0
      %5154 = vmatmul.mubr.bf16.gmra.mxu0 %v5020
      %v5155 = vpop.f32.mrf.mxu0
      %v5156 = vadd.f32 0.0, %v5155
      %v5157 = vpop.f32.mrf.mxu0
      %v5158 = vpop.f32.mrf.mxu0
      %v5159 = vadd.f32 0.0, %v5158
      %v5160 = vpop.f32.mrf.mxu0
      %5161 = vmatprep.mubr.bf16.mxu0 0
      %5162 = vmatmul.mubr.bf16.gmra.mxu0 %v5022
      %v5163 = vpop.f32.mrf.mxu0
      %v5164 = vadd.f32 0.0, %v5163
      %v5165 = vpop.f32.mrf.mxu0
      %v5166 = vpop.f32.mrf.mxu0
      %v5167 = vadd.f32 0.0, %v5166
      %v5168 = vpop.f32.mrf.mxu0
      %5169 = vmatprep.mubr.bf16.mxu0 0
      %5170 = vmatmul.mubr.bf16.gmra.mxu0 %v5024
      %v5171 = vpop.f32.mrf.mxu0
      %v5172 = vadd.f32 0.0, %v5171
      %v5173 = vpop.f32.mrf.mxu0
      %v5174 = vpop.f32.mrf.mxu0
      %v5175 = vadd.f32 0.0, %v5174
      %v5176 = vpop.f32.mrf.mxu0
      %5177 = vmatprep.mubr.bf16.mxu0 0
      %5178 = vmatmul.mubr.bf16.gmra.mxu0 %v5026
      %v5179 = vpop.f32.mrf.mxu0
      %v5180 = vadd.f32 0.0, %v5179
      %v5181 = vpop.f32.mrf.mxu0
      %v5182 = vpop.f32.mrf.mxu0
      %v5183 = vadd.f32 0.0, %v5182
      %v5184 = vpop.f32.mrf.mxu0
      %5185 = vmatprep.mubr.bf16.mxu0 0
      %5186 = vmatmul.mubr.bf16.gmra.mxu0 %v5028
      %v5187 = vpop.f32.mrf.mxu0
      %v5188 = vadd.f32 0.0, %v5187
      %v5189 = vpop.f32.mrf.mxu0
      %v5190 = vpop.f32.mrf.mxu0
      %v5191 = vadd.f32 0.0, %v5190
      %v5192 = vpop.f32.mrf.mxu0
      %5193 = vmatprep.mubr.bf16.mxu0 0
      %5194 = vmatmul.mubr.bf16.gmra.mxu0 %v5030
      %v5195 = vpop.f32.mrf.mxu0
      %v5196 = vadd.f32 0.0, %v5195
      %v5197 = vpop.f32.mrf.mxu0
      %v5198 = vpop.f32.mrf.mxu0
      %v5199 = vadd.f32 0.0, %v5198
      %v5200 = vpop.f32.mrf.mxu0
      %5201 = vmatprep.mubr.bf16.mxu0 0
      %5202 = vmatmul.mubr.bf16.gmra.mxu0 %v5032
      %v5203 = vpop.f32.mrf.mxu0
      %v5204 = vadd.f32 0.0, %v5203
      %v5205 = vpop.f32.mrf.mxu0
      %v5206 = vpop.f32.mrf.mxu0
      %v5207 = vadd.f32 0.0, %v5206
      %v5208 = vpop.f32.mrf.mxu0
      %5209 = vmatprep.mubr.bf16.mxu0 0
      %5210 = vmatmul.mubr.bf16.gmra.mxu0 %v5034
      %v5211 = vpop.f32.mrf.mxu0
      %v5212 = vadd.f32 0.0, %v5211
      %v5213 = vpop.f32.mrf.mxu0
      %v5214 = vpop.f32.mrf.mxu0
      %v5215 = vadd.f32 0.0, %v5214
      %v5216 = vpop.f32.mrf.mxu0
      %5217 = vmatprep.mubr.bf16.mxu0 0
      %5218 = vmatmul.mubr.bf16.gmra.mxu0 %v5036
      %v5219 = vpop.f32.mrf.mxu0
      %v5220 = vadd.f32 0.0, %v5219
      %v5221 = vpop.f32.mrf.mxu0
      %v5222 = vpop.f32.mrf.mxu0
      %v5223 = vadd.f32 0.0, %v5222
      %v5224 = vpop.f32.mrf.mxu0
      %5225 = vmatprep.mubr.bf16.mxu0 0
      %5226 = vmatmul.mubr.bf16.gmra.mxu0 %v5038
      %v5227 = vpop.f32.mrf.mxu0
      %v5228 = vadd.f32 0.0, %v5227
      %v5229 = vpop.f32.mrf.mxu0
      %v5230 = vpop.f32.mrf.mxu0
      %v5231 = vadd.f32 0.0, %v5230
      %v5232 = vpop.f32.mrf.mxu0
      %5233 = vmatprep.mubr.bf16.mxu0 0
      %5234 = vmatmul.mubr.bf16.gmra.mxu0 %v5040
      %v5235 = vpop.f32.mrf.mxu0
      %v5236 = vadd.f32 0.0, %v5235
      %v5237 = vpop.f32.mrf.mxu0
      %v5238 = vpop.f32.mrf.mxu0
      %v5239 = vadd.f32 0.0, %v5238
      %v5240 = vpop.f32.mrf.mxu0
      %5241 = vmatprep.mubr.bf16.mxu0 0
      %5242 = vmatmul.mubr.bf16.gmra.mxu0 %v5042
      %v5243 = vpop.f32.mrf.mxu0
      %v5244 = vadd.f32 0.0, %v5243
      %v5245 = vpop.f32.mrf.mxu0
      %v5246 = vpop.f32.mrf.mxu0
      %v5247 = vadd.f32 0.0, %v5246
      %v5248 = vpop.f32.mrf.mxu0
      %5249 = vmatprep.mubr.bf16.mxu0 0
      %5250 = vmatmul.mubr.bf16.gmra.mxu0 %v5044
      %v5251 = vpop.f32.mrf.mxu0
      %v5252 = vadd.f32 0.0, %v5251
      %v5253 = vpop.f32.mrf.mxu0
      %v5254 = vpop.f32.mrf.mxu0
      %v5255 = vadd.f32 0.0, %v5254
      %v5256 = vpop.f32.mrf.mxu0
      %5257 = vmatprep.mubr.bf16.mxu0 0
      %5258 = vmatmul.mubr.bf16.gmra.mxu0 %v5046
      %v5259 = vpop.f32.mrf.mxu0
      %v5260 = vadd.f32 0.0, %v5259
      %v5261 = vpop.f32.mrf.mxu0
      %v5262 = vpop.f32.mrf.mxu0
      %v5263 = vadd.f32 0.0, %v5262
      %v5264 = vpop.f32.mrf.mxu0
      %5265 = vmatprep.mubr.bf16.mxu0 0
      %5266 = vmatmul.mubr.bf16.gmra.mxu0 %v5048
      %v5267 = vpop.f32.mrf.mxu0
      %v5268 = vadd.f32 0.0, %v5267
      %v5269 = vpop.f32.mrf.mxu0
      %v5270 = vpop.f32.mrf.mxu0
      %v5271 = vadd.f32 0.0, %v5270
      %v5272 = vpop.f32.mrf.mxu0
      %5273 = vmatprep.mubr.bf16.mxu0 0
      %5274 = vmatmul.mubr.bf16.gmra.mxu0 %v5050
      %v5275 = vpop.f32.mrf.mxu0
      %v5276 = vadd.f32 0.0, %v5275
      %v5277 = vpop.f32.mrf.mxu0
      %v5278 = vpop.f32.mrf.mxu0
      %v5279 = vadd.f32 0.0, %v5278
      %v5280 = vpop.f32.mrf.mxu0
      %5281 = vmatprep.mubr.bf16.mxu0 0
      %5282 = vmatmul.mubr.bf16.gmra.mxu0 %v5052
      %v5283 = vpop.f32.mrf.mxu0
      %v5284 = vadd.f32 0.0, %v5283
      %v5285 = vpop.f32.mrf.mxu0
      %v5286 = vpop.f32.mrf.mxu0
      %v5287 = vadd.f32 0.0, %v5286
      %v5288 = vpop.f32.mrf.mxu0
      %5289 = vmatprep.mubr.bf16.mxu0 0
      %5290 = vmatmul.mubr.bf16.gmra.mxu0 %v5054
      %v5291 = vpop.f32.mrf.mxu0
      %v5292 = vadd.f32 0.0, %v5291
      %v5293 = vpop.f32.mrf.mxu0
      %v5294 = vpop.f32.mrf.mxu0
      %v5295 = vadd.f32 0.0, %v5294
      %v5296 = vpop.f32.mrf.mxu0
      %5297 = vdwg.mxu0
      %v5298 = vld [vmem:[#allocation2] sm:$0xff]
      %v5299 = vld [vmem:[#allocation2 + $0x8] sm:$0xff]
      %v5300 = vld [vmem:[#allocation2 + $0x10] sm:$0xff]
      %v5301 = vld [vmem:[#allocation2 + $0x18] sm:$0xff]
      %v5302 = vld [vmem:[#allocation2 + $0x20] sm:$0xff]
      %v5303 = vld [vmem:[#allocation2 + $0x28] sm:$0xff]
      %v5304 = vld [vmem:[#allocation2 + $0x30] sm:$0xff]
      %v5305 = vld [vmem:[#allocation2 + $0x38] sm:$0xff]
      %v5306 = vld [vmem:[#allocation2 + $0x40] sm:$0xff]
      %v5307 = vld [vmem:[#allocation2 + $0x48] sm:$0xff]
      %v5308 = vld [vmem:[#allocation2 + $0x50] sm:$0xff]
      %v5309 = vld [vmem:[#allocation2 + $0x58] sm:$0xff]
      %v5310 = vld [vmem:[#allocation2 + $0x60] sm:$0xff]
      %v5311 = vld [vmem:[#allocation2 + $0x68] sm:$0xff]
      %v5312 = vld [vmem:[#allocation2 + $0x70] sm:$0xff]
      %v5313 = vld [vmem:[#allocation2 + $0x78] sm:$0xff]
      %v5314 = vld [vmem:[#allocation2 + $0x80] sm:$0xff]
      %v5315 = vld [vmem:[#allocation2 + $0x88] sm:$0xff]
      %v5316 = vld [vmem:[#allocation2 + $0x90] sm:$0xff]
      %v5317 = vld [vmem:[#allocation2 + $0x98] sm:$0xff]
      %v5318 = vld [vmem:[#allocation2 + $0xa0] sm:$0xff]
      %v5319 = vld [vmem:[#allocation2 + $0xa8] sm:$0xff]
      %v5320 = vld [vmem:[#allocation2 + $0xb0] sm:$0xff]
      %v5321 = vld [vmem:[#allocation2 + $0xb8] sm:$0xff]
      %v5322 = vld [vmem:[#allocation2 + $0xc0] sm:$0xff]
      %v5323 = vld [vmem:[#allocation2 + $0xc8] sm:$0xff]
      %v5324 = vld [vmem:[#allocation2 + $0xd0] sm:$0xff]
      %v5325 = vld [vmem:[#allocation2 + $0xd8] sm:$0xff]
      %v5326 = vld [vmem:[#allocation2 + $0xe0] sm:$0xff]
      %v5327 = vld [vmem:[#allocation2 + $0xe8] sm:$0xff]
      %v5328 = vld [vmem:[#allocation2 + $0xf0] sm:$0xff]
      %v5329 = vld [vmem:[#allocation2 + $0xf8] sm:$0xff]
      %v5330 = vld [vmem:[#allocation2 + $0x100] sm:$0xff]
      %v5331 = vld [vmem:[#allocation2 + $0x108] sm:$0xff]
      %v5332 = vld [vmem:[#allocation2 + $0x110] sm:$0xff]
      %v5333 = vld [vmem:[#allocation2 + $0x118] sm:$0xff]
      %v5334 = vadd.f32 %v5298, %v5156
      %v5335 = vadd.f32 %v5299, %v5159
      %v5336 = vadd.f32 %v5300, %v5164
      %v5337 = vadd.f32 %v5301, %v5167
      %v5338 = vadd.f32 %v5302, %v5172
      %v5339 = vadd.f32 %v5303, %v5175
      %v5340 = vadd.f32 %v5304, %v5180
      %v5341 = vadd.f32 %v5305, %v5183
      %v5342 = vadd.f32 %v5306, %v5188
      %v5343 = vadd.f32 %v5307, %v5191
      %v5344 = vadd.f32 %v5308, %v5196
      %v5345 = vadd.f32 %v5309, %v5199
      %v5346 = vadd.f32 %v5310, %v5204
      %v5347 = vadd.f32 %v5311, %v5207
      %v5348 = vadd.f32 %v5312, %v5212
      %v5349 = vadd.f32 %v5313, %v5215
      %v5350 = vadd.f32 %v5314, %v5220
      %v5351 = vadd.f32 %v5315, %v5223
      %v5352 = vadd.f32 %v5316, %v5228
      %v5353 = vadd.f32 %v5317, %v5231
      %v5354 = vadd.f32 %v5318, %v5236
      %v5355 = vadd.f32 %v5319, %v5239
      %v5356 = vadd.f32 %v5320, %v5244
      %v5357 = vadd.f32 %v5321, %v5247
      %v5358 = vadd.f32 %v5322, %v5252
      %v5359 = vadd.f32 %v5323, %v5255
      %v5360 = vadd.f32 %v5324, %v5260
      %v5361 = vadd.f32 %v5325, %v5263
      %v5362 = vadd.f32 %v5326, %v5268
      %v5363 = vadd.f32 %v5327, %v5271
      %v5364 = vadd.f32 %v5328, %v5276
      %v5365 = vadd.f32 %v5329, %v5279
      %v5366 = vadd.f32 %v5330, %v5284
      %v5367 = vadd.f32 %v5331, %v5287
      %v5368 = vadd.f32 %v5332, %v5292
      %v5369 = vadd.f32 %v5333, %v5295
      %5370 = vst [vmem:[#allocation2] sm:$0xff] %v5334
      %5371 = vst [vmem:[#allocation2 + $0x8] sm:$0xff] %v5335
      %5372 = vst [vmem:[#allocation2 + $0x10] sm:$0xff] %v5336
      %5373 = vst [vmem:[#allocation2 + $0x18] sm:$0xff] %v5337
      %5374 = vst [vmem:[#allocation2 + $0x20] sm:$0xff] %v5338
      %5375 = vst [vmem:[#allocation2 + $0x28] sm:$0xff] %v5339
      %5376 = vst [vmem:[#allocation2 + $0x30] sm:$0xff] %v5340
      %5377 = vst [vmem:[#allocation2 + $0x38] sm:$0xff] %v5341
      %5378 = vst [vmem:[#allocation2 + $0x40] sm:$0xff] %v5342
      %5379 = vst [vmem:[#allocation2 + $0x48] sm:$0xff] %v5343
      %5380 = vst [vmem:[#allocation2 + $0x50] sm:$0xff] %v5344
      %5381 = vst [vmem:[#allocation2 + $0x58] sm:$0xff] %v5345
      %5382 = vst [vmem:[#allocation2 + $0x60] sm:$0xff] %v5346
      %5383 = vst [vmem:[#allocation2 + $0x68] sm:$0xff] %v5347
      %5384 = vst [vmem:[#allocation2 + $0x70] sm:$0xff] %v5348
      %5385 = vst [vmem:[#allocation2 + $0x78] sm:$0xff] %v5349
      %5386 = vst [vmem:[#allocation2 + $0x80] sm:$0xff] %v5350
      %5387 = vst [vmem:[#allocation2 + $0x88] sm:$0xff] %v5351
      %5388 = vst [vmem:[#allocation2 + $0x90] sm:$0xff] %v5352
      %5389 = vst [vmem:[#allocation2 + $0x98] sm:$0xff] %v5353
      %5390 = vst [vmem:[#allocation2 + $0xa0] sm:$0xff] %v5354
      %5391 = vst [vmem:[#allocation2 + $0xa8] sm:$0xff] %v5355
      %5392 = vst [vmem:[#allocation2 + $0xb0] sm:$0xff] %v5356
      %5393 = vst [vmem:[#allocation2 + $0xb8] sm:$0xff] %v5357
      %5394 = vst [vmem:[#allocation2 + $0xc0] sm:$0xff] %v5358
      %5395 = vst [vmem:[#allocation2 + $0xc8] sm:$0xff] %v5359
      %5396 = vst [vmem:[#allocation2 + $0xd0] sm:$0xff] %v5360
      %5397 = vst [vmem:[#allocation2 + $0xd8] sm:$0xff] %v5361
      %5398 = vst [vmem:[#allocation2 + $0xe0] sm:$0xff] %v5362
      %5399 = vst [vmem:[#allocation2 + $0xe8] sm:$0xff] %v5363
      %5400 = vst [vmem:[#allocation2 + $0xf0] sm:$0xff] %v5364
      %5401 = vst [vmem:[#allocation2 + $0xf8] sm:$0xff] %v5365
      %5402 = vst [vmem:[#allocation2 + $0x100] sm:$0xff] %v5366
      %5403 = vst [vmem:[#allocation2 + $0x108] sm:$0xff] %v5367
      %5404 = vst [vmem:[#allocation2 + $0x110] sm:$0xff] %v5368
      %5405 = vst [vmem:[#allocation2 + $0x118] sm:$0xff] %v5369
      %v5406 = vld [vmem:[#allocation2] sm:$0xff]
      %v5407 = vld [vmem:[#allocation2 + $0x8] sm:$0xff]
      %v5408 = vld [vmem:[#allocation2 + $0x10] sm:$0xff]
      %v5409 = vld [vmem:[#allocation2 + $0x18] sm:$0xff]
      %v5410 = vld [vmem:[#allocation2 + $0x20] sm:$0xff]
      %v5411 = vld [vmem:[#allocation2 + $0x28] sm:$0xff]
      %v5412 = vld [vmem:[#allocation2 + $0x30] sm:$0xff]
      %v5413 = vld [vmem:[#allocation2 + $0x38] sm:$0xff]
      %v5414 = vld [vmem:[#allocation2 + $0x40] sm:$0xff]
      %v5415 = vld [vmem:[#allocation2 + $0x48] sm:$0xff]
      %v5416 = vld [vmem:[#allocation2 + $0x50] sm:$0xff]
      %v5417 = vld [vmem:[#allocation2 + $0x58] sm:$0xff]
      %v5418 = vld [vmem:[#allocation2 + $0x60] sm:$0xff]
      %v5419 = vld [vmem:[#allocation2 + $0x68] sm:$0xff]
      %v5420 = vld [vmem:[#allocation2 + $0x70] sm:$0xff]
      %v5421 = vld [vmem:[#allocation2 + $0x78] sm:$0xff]
      %v5422 = vld [vmem:[#allocation2 + $0x80] sm:$0xff]
      %v5423 = vld [vmem:[#allocation2 + $0x88] sm:$0xff]
      %v5424 = vld [vmem:[#allocation2 + $0x90] sm:$0xff]
      %v5425 = vld [vmem:[#allocation2 + $0x98] sm:$0xff]
      %v5426 = vld [vmem:[#allocation2 + $0xa0] sm:$0xff]
      %v5427 = vld [vmem:[#allocation2 + $0xa8] sm:$0xff]
      %v5428 = vld [vmem:[#allocation2 + $0xb0] sm:$0xff]
      %v5429 = vld [vmem:[#allocation2 + $0xb8] sm:$0xff]
      %v5430 = vld [vmem:[#allocation2 + $0xc0] sm:$0xff]
      %v5431 = vld [vmem:[#allocation2 + $0xc8] sm:$0xff]
      %v5432 = vld [vmem:[#allocation2 + $0xd0] sm:$0xff]
      %v5433 = vld [vmem:[#allocation2 + $0xd8] sm:$0xff]
      %v5434 = vld [vmem:[#allocation2 + $0xe0] sm:$0xff]
      %v5435 = vld [vmem:[#allocation2 + $0xe8] sm:$0xff]
      %v5436 = vld [vmem:[#allocation2 + $0xf0] sm:$0xff]
      %v5437 = vld [vmem:[#allocation2 + $0xf8] sm:$0xff]
      %v5438 = vld [vmem:[#allocation2 + $0x100] sm:$0xff]
      %v5439 = vld [vmem:[#allocation2 + $0x108] sm:$0xff]
      %v5440 = vld [vmem:[#allocation2 + $0x110] sm:$0xff]
      %v5441 = vld [vmem:[#allocation2 + $0x118] sm:$0xff]
      %v5442 = vld [vmem:[%s301] sm:$0x1]
      %v5444 = vlaneseq
      %v5445 = vshrl.u32 %v5444, 7
      %v5446 = vsub.s32 0, %v5445
      %v5447 = vrot.slane %v5442, %v5446
      %v5449 = vmul.f32 %v5406, %v5447
      %v5450 = vmul.f32 %v5407, %v5447
      %v5451 = vmul.f32 %v5408, %v5447
      %v5452 = vmul.f32 %v5409, %v5447
      %v5453 = vmul.f32 %v5410, %v5447
      %v5454 = vmul.f32 %v5411, %v5447
      %v5455 = vmul.f32 %v5412, %v5447
      %v5456 = vmul.f32 %v5413, %v5447
      %v5457 = vmul.f32 %v5414, %v5447
      %v5458 = vmul.f32 %v5415, %v5447
      %v5459 = vmul.f32 %v5416, %v5447
      %v5460 = vmul.f32 %v5417, %v5447
      %v5461 = vmul.f32 %v5418, %v5447
      %v5462 = vmul.f32 %v5419, %v5447
      %v5463 = vmul.f32 %v5420, %v5447
      %v5464 = vmul.f32 %v5421, %v5447
      %v5465 = vmul.f32 %v5422, %v5447
      %v5466 = vmul.f32 %v5423, %v5447
      %v5467 = vmul.f32 %v5424, %v5447
      %v5468 = vmul.f32 %v5425, %v5447
      %v5469 = vmul.f32 %v5426, %v5447
      %v5470 = vmul.f32 %v5427, %v5447
      %v5471 = vmul.f32 %v5428, %v5447
      %v5472 = vmul.f32 %v5429, %v5447
      %v5473 = vmul.f32 %v5430, %v5447
      %v5474 = vmul.f32 %v5431, %v5447
      %v5475 = vmul.f32 %v5432, %v5447
      %v5476 = vmul.f32 %v5433, %v5447
      %v5477 = vmul.f32 %v5434, %v5447
      %v5478 = vmul.f32 %v5435, %v5447
      %v5479 = vmul.f32 %v5436, %v5447
      %v5480 = vmul.f32 %v5437, %v5447
      %v5481 = vmul.f32 %v5438, %v5447
      %v5482 = vmul.f32 %v5439, %v5447
      %v5483 = vmul.f32 %v5440, %v5447
      %v5484 = vmul.f32 %v5441, %v5447
      %v5485 = vld [vmem:[%s304] sm:$0x1]
      %v5487 = vlaneseq
      %v5488 = vshrl.u32 %v5487, 7
      %v5489 = vsub.s32 0, %v5488
      %v5490 = vrot.slane %v5485, %v5489
      %v5492 = vadd.f32 %v5449, %v5490
      %v5493 = vadd.f32 %v5450, %v5490
      %v5494 = vadd.f32 %v5451, %v5490
      %v5495 = vadd.f32 %v5452, %v5490
      %v5496 = vadd.f32 %v5453, %v5490
      %v5497 = vadd.f32 %v5454, %v5490
      %v5498 = vadd.f32 %v5455, %v5490
      %v5499 = vadd.f32 %v5456, %v5490
      %v5500 = vadd.f32 %v5457, %v5490
      %v5501 = vadd.f32 %v5458, %v5490
      %v5502 = vadd.f32 %v5459, %v5490
      %v5503 = vadd.f32 %v5460, %v5490
      %v5504 = vadd.f32 %v5461, %v5490
      %v5505 = vadd.f32 %v5462, %v5490
      %v5506 = vadd.f32 %v5463, %v5490
      %v5507 = vadd.f32 %v5464, %v5490
      %v5508 = vadd.f32 %v5465, %v5490
      %v5509 = vadd.f32 %v5466, %v5490
      %v5510 = vadd.f32 %v5467, %v5490
      %v5511 = vadd.f32 %v5468, %v5490
      %v5512 = vadd.f32 %v5469, %v5490
      %v5513 = vadd.f32 %v5470, %v5490
      %v5514 = vadd.f32 %v5471, %v5490
      %v5515 = vadd.f32 %v5472, %v5490
      %v5516 = vadd.f32 %v5473, %v5490
      %v5517 = vadd.f32 %v5474, %v5490
      %v5518 = vadd.f32 %v5475, %v5490
      %v5519 = vadd.f32 %v5476, %v5490
      %v5520 = vadd.f32 %v5477, %v5490
      %v5521 = vadd.f32 %v5478, %v5490
      %v5522 = vadd.f32 %v5479, %v5490
      %v5523 = vadd.f32 %v5480, %v5490
      %v5524 = vadd.f32 %v5481, %v5490
      %v5525 = vadd.f32 %v5482, %v5490
      %v5526 = vadd.f32 %v5483, %v5490
      %v5527 = vadd.f32 %v5484, %v5490
      %v5528 = vld [vmem:[%s312] sm:$0xff]
      %v5529 = vld [vmem:[%s312 + $0x8] sm:$0xff]
      %v5530 = vld [vmem:[%s312 + $0x10] sm:$0xff]
      %v5531 = vld [vmem:[%s312 + $0x18] sm:$0xff]
      %v5532 = vld [vmem:[%s312 + $0x20] sm:$0xff]
      %v5533 = vld [vmem:[%s312 + $0x28] sm:$0xff]
      %v5534 = vld [vmem:[%s312 + $0x30] sm:$0xff]
      %v5535 = vld [vmem:[%s312 + $0x38] sm:$0xff]
      %v5536 = vld [vmem:[%s312 + $0x40] sm:$0xff]
      %v5537 = vld [vmem:[%s312 + $0x48] sm:$0xff]
      %v5538 = vld [vmem:[%s312 + $0x50] sm:$0xff]
      %v5539 = vld [vmem:[%s312 + $0x58] sm:$0xff]
      %v5540 = vld [vmem:[%s312 + $0x60] sm:$0xff]
      %v5541 = vld [vmem:[%s312 + $0x68] sm:$0xff]
      %v5542 = vld [vmem:[%s312 + $0x70] sm:$0xff]
      %v5543 = vld [vmem:[%s312 + $0x78] sm:$0xff]
      %v5544 = vld [vmem:[%s312 + $0x80] sm:$0xff]
      %v5545 = vld [vmem:[%s312 + $0x88] sm:$0xff]
      %v5546 = vld [vmem:[%s312 + $0x90] sm:$0xff]
      %v5547 = vld [vmem:[%s312 + $0x98] sm:$0xff]
      %v5548 = vld [vmem:[%s312 + $0xa0] sm:$0xff]
      %v5549 = vld [vmem:[%s312 + $0xa8] sm:$0xff]
      %v5550 = vld [vmem:[%s312 + $0xb0] sm:$0xff]
      %v5551 = vld [vmem:[%s312 + $0xb8] sm:$0xff]
      %v5552 = vld [vmem:[%s312 + $0xc0] sm:$0xff]
      %v5553 = vld [vmem:[%s312 + $0xc8] sm:$0xff]
      %v5554 = vld [vmem:[%s312 + $0xd0] sm:$0xff]
      %v5555 = vld [vmem:[%s312 + $0xd8] sm:$0xff]
      %v5556 = vld [vmem:[%s312 + $0xe0] sm:$0xff]
      %v5557 = vld [vmem:[%s312 + $0xe8] sm:$0xff]
      %v5558 = vld [vmem:[%s312 + $0xf0] sm:$0xff]
      %v5559 = vld [vmem:[%s312 + $0xf8] sm:$0xff]
      %v5560 = vld [vmem:[%s312 + $0x100] sm:$0xff]
      %v5561 = vld [vmem:[%s312 + $0x108] sm:$0xff]
      %v5562 = vld [vmem:[%s312 + $0x110] sm:$0xff]
      %v5563 = vld [vmem:[%s312 + $0x118] sm:$0xff]
      %v5564 = vadd.f32 %v5492, %v5528
      %v5565 = vadd.f32 %v5493, %v5529
      %v5566 = vadd.f32 %v5494, %v5530
      %v5567 = vadd.f32 %v5495, %v5531
      %v5568 = vadd.f32 %v5496, %v5532
      %v5569 = vadd.f32 %v5497, %v5533
      %v5570 = vadd.f32 %v5498, %v5534
      %v5571 = vadd.f32 %v5499, %v5535
      %v5572 = vadd.f32 %v5500, %v5536
      %v5573 = vadd.f32 %v5501, %v5537
      %v5574 = vadd.f32 %v5502, %v5538
      %v5575 = vadd.f32 %v5503, %v5539
      %v5576 = vadd.f32 %v5504, %v5540
      %v5577 = vadd.f32 %v5505, %v5541
      %v5578 = vadd.f32 %v5506, %v5542
      %v5579 = vadd.f32 %v5507, %v5543
      %v5580 = vadd.f32 %v5508, %v5544
      %v5581 = vadd.f32 %v5509, %v5545
      %v5582 = vadd.f32 %v5510, %v5546
      %v5583 = vadd.f32 %v5511, %v5547
      %v5584 = vadd.f32 %v5512, %v5548
      %v5585 = vadd.f32 %v5513, %v5549
      %v5586 = vadd.f32 %v5514, %v5550
      %v5587 = vadd.f32 %v5515, %v5551
      %v5588 = vadd.f32 %v5516, %v5552
      %v5589 = vadd.f32 %v5517, %v5553
      %v5590 = vadd.f32 %v5518, %v5554
      %v5591 = vadd.f32 %v5519, %v5555
      %v5592 = vadd.f32 %v5520, %v5556
      %v5593 = vadd.f32 %v5521, %v5557
      %v5594 = vadd.f32 %v5522, %v5558
      %v5595 = vadd.f32 %v5523, %v5559
      %v5596 = vadd.f32 %v5524, %v5560
      %v5597 = vadd.f32 %v5525, %v5561
      %v5598 = vadd.f32 %v5526, %v5562
      %v5599 = vadd.f32 %v5527, %v5563
      %v5600 = vmax.f32 %v5564, 0.0
      %v5601 = vmax.f32 %v5565, 0.0
      %v5602 = vmax.f32 %v5566, 0.0
      %v5603 = vmax.f32 %v5567, 0.0
      %v5604 = vmax.f32 %v5568, 0.0
      %v5605 = vmax.f32 %v5569, 0.0
      %v5606 = vmax.f32 %v5570, 0.0
      %v5607 = vmax.f32 %v5571, 0.0
      %v5608 = vmax.f32 %v5572, 0.0
      %v5609 = vmax.f32 %v5573, 0.0
      %v5610 = vmax.f32 %v5574, 0.0
      %v5611 = vmax.f32 %v5575, 0.0
      %v5612 = vmax.f32 %v5576, 0.0
      %v5613 = vmax.f32 %v5577, 0.0
      %v5614 = vmax.f32 %v5578, 0.0
      %v5615 = vmax.f32 %v5579, 0.0
      %v5616 = vmax.f32 %v5580, 0.0
      %v5617 = vmax.f32 %v5581, 0.0
      %v5618 = vmax.f32 %v5582, 0.0
      %v5619 = vmax.f32 %v5583, 0.0
      %v5620 = vmax.f32 %v5584, 0.0
      %v5621 = vmax.f32 %v5585, 0.0
      %v5622 = vmax.f32 %v5586, 0.0
      %v5623 = vmax.f32 %v5587, 0.0
      %v5624 = vmax.f32 %v5588, 0.0
      %v5625 = vmax.f32 %v5589, 0.0
      %v5626 = vmax.f32 %v5590, 0.0
      %v5627 = vmax.f32 %v5591, 0.0
      %v5628 = vmax.f32 %v5592, 0.0
      %v5629 = vmax.f32 %v5593, 0.0
      %v5630 = vmax.f32 %v5594, 0.0
      %v5631 = vmax.f32 %v5595, 0.0
      %v5632 = vmax.f32 %v5596, 0.0
      %v5633 = vmax.f32 %v5597, 0.0
      %v5634 = vmax.f32 %v5598, 0.0
      %v5635 = vmax.f32 %v5599, 0.0
      %5636 = vst [vmem:[%s320] sm:$0xff] %v5600
      %5637 = vst [vmem:[%s320 + $0x8] sm:$0xff] %v5601
      %5638 = vst [vmem:[%s320 + $0x10] sm:$0xff] %v5602
      %5639 = vst [vmem:[%s320 + $0x18] sm:$0xff] %v5603
      %5640 = vst [vmem:[%s320 + $0x20] sm:$0xff] %v5604
      %5641 = vst [vmem:[%s320 + $0x28] sm:$0xff] %v5605
      %5642 = vst [vmem:[%s320 + $0x30] sm:$0xff] %v5606
      %5643 = vst [vmem:[%s320 + $0x38] sm:$0xff] %v5607
      %5644 = vst [vmem:[%s320 + $0x40] sm:$0xff] %v5608
      %5645 = vst [vmem:[%s320 + $0x48] sm:$0xff] %v5609
      %5646 = vst [vmem:[%s320 + $0x50] sm:$0xff] %v5610
      %5647 = vst [vmem:[%s320 + $0x58] sm:$0xff] %v5611
      %5648 = vst [vmem:[%s320 + $0x60] sm:$0xff] %v5612
      %5649 = vst [vmem:[%s320 + $0x68] sm:$0xff] %v5613
      %5650 = vst [vmem:[%s320 + $0x70] sm:$0xff] %v5614
      %5651 = vst [vmem:[%s320 + $0x78] sm:$0xff] %v5615
      %5652 = vst [vmem:[%s320 + $0x80] sm:$0xff] %v5616
      %5653 = vst [vmem:[%s320 + $0x88] sm:$0xff] %v5617
      %5654 = vst [vmem:[%s320 + $0x90] sm:$0xff] %v5618
      %5655 = vst [vmem:[%s320 + $0x98] sm:$0xff] %v5619
      %5656 = vst [vmem:[%s320 + $0xa0] sm:$0xff] %v5620
      %5657 = vst [vmem:[%s320 + $0xa8] sm:$0xff] %v5621
      %5658 = vst [vmem:[%s320 + $0xb0] sm:$0xff] %v5622
      %5659 = vst [vmem:[%s320 + $0xb8] sm:$0xff] %v5623
      %5660 = vst [vmem:[%s320 + $0xc0] sm:$0xff] %v5624
      %5661 = vst [vmem:[%s320 + $0xc8] sm:$0xff] %v5625
      %5662 = vst [vmem:[%s320 + $0xd0] sm:$0xff] %v5626
      %5663 = vst [vmem:[%s320 + $0xd8] sm:$0xff] %v5627
      %5664 = vst [vmem:[%s320 + $0xe0] sm:$0xff] %v5628
      %5665 = vst [vmem:[%s320 + $0xe8] sm:$0xff] %v5629
      %5666 = vst [vmem:[%s320 + $0xf0] sm:$0xff] %v5630
      %5667 = vst [vmem:[%s320 + $0xf8] sm:$0xff] %v5631
      %5668 = vst [vmem:[%s320 + $0x100] sm:$0xff] %v5632
      %5669 = vst [vmem:[%s320 + $0x108] sm:$0xff] %v5633
      %5670 = vst [vmem:[%s320 + $0x110] sm:$0xff] %v5634
      %5671 = vst [vmem:[%s320 + $0x118] sm:$0xff] %v5635
      %p5672 = scmp.lt.s32.totalorder %s20, 1
      %s5673 = scalar_select %p5672, %s20, 1
      %p5674 = scmp.lt.s32.totalorder %s21, 0
      %s5675 = scalar_select %p5674, %s21, 0
      %s5676 = smul.addr %s5673, 36
      %s5677 = sadd.s32 %s5675, %s5676
      %s5678 = smul.addr %s5677, 8
      %s5679 = scalar_lea.vmem %s5, %s5678
      // Predicated region
      $region41: #{residual_block_forward.3} parent=39 // pred_check
        %p5680 = pneg %p180
      $region42: #{residual_block_forward.3} parent=39 // pred_check_branch
        %5682 = sbr.rel (%p5680) target = $region44
      $region43: #{residual_block_forward.3} parent=39 // pred_region
        _
      $region44: #{residual_block_forward.3} parent=39 // pred_fallthru
        _
    $region40: #{residual_block_forward.3} parent=5 // pred_fallthru
      _
    %p5683 = scmp.le.s32.totalorder 2, %s11
    // Predicated region
    $region45: #{residual_block_forward.3} parent=5 // pred_check
      %p5684 = pneg %p5683
    $region46: #{residual_block_forward.3} parent=5 // pred_check_branch
      %5686 = sbr.rel (%p5684) target = $region48
    $region47: #{residual_block_forward.3} parent=5 // pred_region
      %s5687 = ssub.s32 %s11, 2
      // Predicated region
      $region49: #{residual_block_forward.3} parent=47 // pred_check
        %p5688 = pneg %p186
      $region50: #{residual_block_forward.3} parent=47 // pred_check_branch
        %5690 = sbr.rel (%p5688) target = $region52
      $region51: #{residual_block_forward.3} parent=47 // pred_region
        %p5691 = scmp.lt.s32.totalorder %s22, 1
        %s5692 = scalar_select %p5691, %s22, 1
        %p5693 = scmp.lt.s32.totalorder %s23, 0
        %s5694 = scalar_select %p5693, %s23, 0
        %s5695 = smul.addr %s5692, 36
        %s5696 = sadd.s32 %s5694, %s5695
        %s5697 = smul.addr %s5696, 8
        %s5698 = scalar_lea.vmem %s5, %s5697
      $region52: #{residual_block_forward.3} parent=47 // pred_fallthru
        _
    $region48: #{residual_block_forward.3} parent=5 // pred_fallthru
      _
  $region6: #{residual_block_forward.3} parent=0 // loop_footer
    %s15 = sadd.s32 1, %s11
  $region7: #{residual_block_forward.3} parent=0 // loop_footer_branch
    %10 = sbr.rel target = $region3
  $region8: #{residual_block_forward.3} parent=0 // loop_exit
    _

</llo_original>
